<compile_context>
chip_gen: v7x
topology: tpu7x:2x2x1
jax: 0.10.0
libtpu: 0.0.40
codegen_flags: <defaults>
</compile_context>

<pallas_src>
import functools

import jax
import jax.numpy as jnp
from jax import lax
from jax.experimental import pallas as pl
from jax.experimental.pallas import tpu as pltpu


def _round_up(a, b):
    return (a + b - 1) // b * b


def _vmem_limit_bytes():
    """Generation-aware VMEM budget: ~3/4 of capacity (v7x 64 MiB, v5e/v6e 128 MiB)."""
    try:
        cap = int(getattr(pltpu.get_tpu_info(), "vmem_capacity_bytes", 0))
    except Exception:
        cap = 0
    if cap <= 0:
        cap = 64 * 1024 * 1024
    return max(32 * 1024 * 1024, (cap * 3) // 4)


# ----------------------------- Pallas kernels -----------------------------

def _build_slab(xps_ref, slab_ref, *, tap_row_offsets, wo, p_out):
    """Pack all KH*KW shifted windows (compact output layout) into the slab scratch.

    xps_ref:  (1, C_in, flat_pad)  phase-split padded input image (resident, f32)
    slab_ref: (KH*KW*C_in, P_out_pad) f32 scratch; row block t holds tap t's window.
    All copies are static-offset, contiguous, VMEM-resident (no HBM traffic).
    """
    c_in = xps_ref.shape[1]
    t_cin, p_out_pad = slab_ref.shape
    if p_out_pad > p_out:  # zero lane-padding tail so it contributes 0 downstream
        slab_ref[:, p_out:] = jnp.zeros((t_cin, p_out_pad - p_out), slab_ref.dtype)
    for t, row_offs in enumerate(tap_row_offsets):
        r0 = t * c_in
        for ro, off in enumerate(row_offs):
            slab_ref[r0:r0 + c_in, ro * wo:(ro + 1) * wo] = xps_ref[0, :, off:off + wo]


def _conv_stats_kernel(xps_ref, w_ref, stats_ref, slab_ref, *,
                       tap_row_offsets, wo, p_out, compute_dtype):
    """Conv via one stacked matmul + per-image BN partial stats (sum, sumsq)."""
    _build_slab(xps_ref, slab_ref, tap_row_offsets=tap_row_offsets, wo=wo,
                p_out=p_out)
    conv = jnp.dot(w_ref[...], slab_ref[...].astype(compute_dtype),
                   preferred_element_type=jnp.float32)        # (C_out, P_out_pad)
    stats_ref[0, :, 0:1] = jnp.sum(conv, axis=-1, keepdims=True)
    stats_ref[0, :, 1:2] = jnp.sum(conv * conv, axis=-1, keepdims=True)


def _conv_bn_act_kernel(xps_ref, w_ref, scale_ref, bias_ref, o_ref, slab_ref, *,
                        tap_row_offsets, wo, p_out, neg_slope, compute_dtype,
                        residual_rows):
    """Recompute conv (resident) + BN affine + LeakyReLU (+ residual); single write."""
    _build_slab(xps_ref, slab_ref, tap_row_offsets=tap_row_offsets, wo=wo,
                p_out=p_out)
    conv = jnp.dot(w_ref[...], slab_ref[...].astype(compute_dtype),
                   preferred_element_type=jnp.float32)        # (C_out, P_out_pad)
    y = conv * scale_ref[0] + bias_ref[0]
    act = jnp.where(y > 0, y, neg_slope * y)
    if residual_rows is not None:
        r0, r1 = residual_rows
        act = act + slab_ref[r0:r1, :]     # residual = centre-tap window, exact f32
    o_ref[0] = act


# ------------------------------ forward wrapper -----------------------------

def conv_block_forward(x, weight, gamma, beta, *, stride=1, padding=None,
                       neg_slope=0.1, shortcut=False, eps=1e-3,
                       compute_dtype=jnp.float32):
    """ConvBlock forward. x: [N, C_in, H, W] (NCHW), weight: [C_out, C_in, KH, KW]."""
    n, c_in, h, w = x.shape
    c_out, c_in_w, kh, kw = weight.shape
    assert c_in_w == c_in
    s = int(stride)
    pad_h = kh // 2 if padding is None else padding            # utils.autopad
    pad_w = kw // 2 if padding is None else padding

    hp, wp = h + 2 * pad_h, w + 2 * pad_w
    ho = (hp - kh) // s + 1
    wo = (wp - kw) // s + 1
    p_out = ho * wo
    p_out_pad = _round_up(p_out, 128)                          # lane-dense output

    # ---- phase-split, padded, flattened input: single f32 copy in HBM.
    # Phase (pi, pj) holds xp[:, :, pi::s, pj::s]; with this layout every tap window
    # for the *strided* output is a contiguous slice (no strided in-kernel loads).
    hp_s, wp_s = _round_up(hp, s), _round_up(wp, s)
    hph, wph = hp_s // s, wp_s // s
    phase_size = hph * wph
    flat_len = s * s * phase_size
    flat_pad = _round_up(flat_len, 128)

    xp = jnp.pad(x.astype(jnp.float32),
                 ((0, 0), (0, 0),
                  (pad_h, hp_s - h - pad_h), (pad_w, wp_s - w - pad_w)))
    xps = (xp.reshape(n, c_in, hph, s, wph, s)
             .transpose(0, 1, 3, 5, 2, 4)                     # (n, c, pi, pj, hph, wph)
             .reshape(n, c_in, flat_len))
    xps = jnp.pad(xps, ((0, 0), (0, 0), (0, flat_pad - flat_len)))

    # Static per-(tap, output-row) source offsets into the phase-split input.
    tap_row_offsets = []
    for di in range(kh):
        for dj in range(kw):
            base = ((di % s) * s + (dj % s)) * phase_size
            rsh, csh = di // s, dj // s
            tap_row_offsets.append(tuple(base + (ro + rsh) * wph + csh
                                         for ro in range(ho)))
    tap_row_offsets = tuple(tap_row_offsets)

    # Flattened weights (C_out, KH*KW*C_in), tap-major / C_in-minor (matches slab rows).
    w_flat = jnp.transpose(weight, (0, 2, 3, 1)).reshape(c_out, kh * kw * c_in)
    w_flat = w_flat.astype(compute_dtype)

    vmem_limit = _vmem_limit_bytes()

    # --- kernel 1: per-image BN partial stats over the conv output (no conv->HBM) ---
    stats = pl.pallas_call(
        functools.partial(_conv_stats_kernel, tap_row_offsets=tap_row_offsets,
                          wo=wo, p_out=p_out, compute_dtype=compute_dtype),
        out_shape=jax.ShapeDtypeStruct((n, c_out, 2), jnp.float32),
        grid_spec=pltpu.PrefetchScalarGridSpec(
            num_scalar_prefetch=0, grid=(n,),
            in_specs=[
                pl.BlockSpec((1, c_in, flat_pad), lambda i: (i, 0, 0)),
                pl.BlockSpec((c_out, kh * kw * c_in), lambda i: (0, 0)),
            ],
            out_specs=pl.BlockSpec((1, c_out, 2), lambda i: (i, 0, 0)),
            scratch_shapes=[pltpu.VMEM((kh * kw * c_in, p_out_pad), jnp.float32)]),
        compiler_params=pltpu.CompilerParams(
            dimension_semantics=("parallel",), vmem_limit_bytes=vmem_limit),
    )(xps, w_flat)

    # --- finalize training-mode BatchNorm statistics (biased var, per channel) ---
    count = float(n * ho * wo)
    s1 = jnp.sum(stats[:, :, 0], axis=0)                       # (C_out,)
    s2 = jnp.sum(stats[:, :, 1], axis=0)
    mean = s1 / count
    var = jnp.maximum(s2 / count - mean * mean, 0.0)           # clamp cancellation
    inv = gamma.astype(jnp.float32) * lax.rsqrt(var + eps)
    scale = inv.reshape(1, c_out, 1)
    bias = (beta.astype(jnp.float32) - mean * inv).reshape(1, c_out, 1)

    # --- kernel 2: recompute conv + BN affine + LeakyReLU (+ residual), write once ---
    residual_rows = None
    if shortcut:
        assert c_in == c_out and s == 1 and (ho, wo) == (h, w), (
            "shortcut requires a shape-preserving conv")
        tc = pad_h * kw + pad_w                 # centre tap == identity window on x
        residual_rows = (tc * c_in, (tc + 1) * c_in)

    out_flat = pl.pallas_call(
        functools.partial(_conv_bn_act_kernel, tap_row_offsets=tap_row_offsets,
                          wo=wo, p_out=p_out, neg_slope=neg_slope,
                          compute_dtype=compute_dtype, residual_rows=residual_rows),
        out_shape=jax.ShapeDtypeStruct((n, c_out, p_out_pad), jnp.float32),
        grid_spec=pltpu.PrefetchScalarGridSpec(
            num_scalar_prefetch=0, grid=(n,),
            in_specs=[
                pl.BlockSpec((1, c_in, flat_pad), lambda i: (i, 0, 0)),
                pl.BlockSpec((c_out, kh * kw * c_in), lambda i: (0, 0)),
                pl.BlockSpec((1, c_out, 1), lambda i: (0, 0, 0)),
                pl.BlockSpec((1, c_out, 1), lambda i: (0, 0, 0)),
            ],
            out_specs=pl.BlockSpec((1, c_out, p_out_pad), lambda i: (i, 0, 0)),
            scratch_shapes=[pltpu.VMEM((kh * kw * c_in, p_out_pad), jnp.float32)]),
        compiler_params=pltpu.CompilerParams(
            dimension_semantics=("parallel",), vmem_limit_bytes=vmem_limit),
    )(xps, w_flat, scale, bias)

    # Output is already compact (strided + cropped) and NCHW-flat. If ho*wo happens
    # to be a multiple of 128 this reshape is free; otherwise it is a tiny lane crop
    # of the final output only.
    return out_flat[:, :, :p_out].reshape(n, c_out, ho, wo)


conv_block = jax.jit(
    conv_block_forward,
    static_argnames=("stride", "padding", "neg_slope", "shortcut", "eps",
                     "compute_dtype"))


# ------------------------------ pure-JAX reference --------------------------

def conv_block_reference(x, weight, gamma, beta, *, stride=1, padding=None,
                         neg_slope=0.1, shortcut=False, eps=1e-3):
    pad = weight.shape[2] // 2 if padding is None else padding
    y = jax.lax.conv_general_dilated(
        x, weight, window_strides=(stride, stride),
        padding=((pad, pad), (pad, pad)),
        dimension_numbers=("NCHW", "OIHW", "NCHW"))
    mean = jnp.mean(y, axis=(0, 2, 3), keepdims=True)
    var = jnp.mean((y - mean) ** 2, axis=(0, 2, 3), keepdims=True)
    yn = (y - mean) / jnp.sqrt(var + eps)
    yn = yn * gamma.reshape(1, -1, 1, 1) + beta.reshape(1, -1, 1, 1)
    act = jnp.where(yn > 0, yn, neg_slope * yn)
    return x + act if shortcut else act


# ----------------------------------- main ------------------------------------

if __name__ == "__main__":
    # ConvBlock(input_channels=4, output_channels=4, kernel_size=3, stride=1,
    #           padding=None -> autopad=1, act='leaky', shortcut=True)
    # nn.BatchNorm2d(momentum=0.97, eps=0.001) -> eps default 1e-3 matches the spec.
    N, C_IN, C_OUT, H, W, K = 2, 4, 4, 16, 16, 3
    key = jax.random.PRNGKey(0)
    kx, kw_ = jax.random.split(key)

    x = jax.random.normal(kx, (N, C_IN, H, W), dtype=jnp.float32)
    weight = jax.random.normal(kw_, (C_OUT, C_IN, K, K), dtype=jnp.float32) * 0.1
    gamma = 1.0 + 0.05 * jnp.arange(C_OUT, dtype=jnp.float32)
    beta = 0.02 * jnp.arange(C_OUT, dtype=jnp.float32)

    # Case 1: shortcut=True, stride=1 (the residual ConvBlock config), f32 MXU path.
    out = jax.block_until_ready(
        conv_block(x, weight, gamma, beta, stride=1, padding=None,
                   neg_slope=0.1, shortcut=True))
    ref = conv_block_reference(x, weight, gamma, beta, stride=1, padding=None,
                               neg_slope=0.1, shortcut=True)
    assert out.shape == (N, C_OUT, H, W)
    assert jnp.allclose(out, ref, atol=1e-4, rtol=1e-4), (
        float(jnp.max(jnp.abs(out - ref))))

    # Case 2: shortcut=False, stride=2, wider C_out — exercises the phase-split
    # strided path (only strided positions computed) and the no-residual kernel.
    C_OUT2 = 8
    weight2 = jax.random.normal(jax.random.PRNGKey(1),
                                (C_OUT2, C_IN, K, K), dtype=jnp.float32) * 0.1
    gamma2 = 1.0 + 0.03 * jnp.arange(C_OUT2, dtype=jnp.float32)
    beta2 = 0.01 * jnp.arange(C_OUT2, dtype=jnp.float32)
    out2 = jax.block_until_ready(
        conv_block(x, weight2, gamma2, beta2, stride=2, shortcut=False))
    ref2 = conv_block_reference(x, weight2, gamma2, beta2, stride=2,
                                shortcut=False)
    assert out2.shape == (N, C_OUT2, H // 2, W // 2)
    assert jnp.allclose(out2, ref2, atol=1e-4, rtol=1e-4), (
        float(jnp.max(jnp.abs(out2 - ref2))))

    # Case 3: bf16 MXU operands (v6e/v7x fast path), f32 accumulation + f32 epilogue.
    # bf16 operands change the BN batch statistics slightly -> loose 0.1 tolerance.
    out3 = jax.block_until_ready(
        conv_block(x, weight, gamma, beta, stride=1, shortcut=True,
                   compute_dtype=jnp.bfloat16))
    assert float(jnp.max(jnp.abs(out3 - ref))) < 0.1

    print("KERNEL_OK")
</pallas_src>

<mosaic_0001>
module attributes {stable_mosaic.version = 11 : i64} {
  func.func @_conv_bn_act_kernel(%arg0: i32, %arg1: memref<1x4x384xf32, #tpu.memory_space<vmem>>, %arg2: memref<4x36xf32, #tpu.memory_space<vmem>>, %arg3: memref<1x4x1xf32, #tpu.memory_space<vmem>>, %arg4: memref<1x4x1xf32, #tpu.memory_space<vmem>>, %arg5: memref<1x4x256xf32, #tpu.memory_space<vmem>>, %arg6: memref<36x256xf32, #tpu.memory_space<vmem>>) attributes {dimension_semantics = [#tpu.dimension_semantics<parallel>], iteration_bounds = array<i64: 2>, scalar_prefetch = 0 : i64, scratch_operands = 1 : i64, tpu.core_type = #tpu.core_type<tc>, window_params = [{transform_indices = @transform_0, window_bounds = array<i64: 1, 4, 384>}, {pipeline_mode = #tpu.pipeline_mode<synchronous>, transform_indices = @transform_1, window_bounds = array<i64: 4, 36>}, {pipeline_mode = #tpu.pipeline_mode<synchronous>, transform_indices = @transform_2, window_bounds = array<i64: 1, 4, 1>}, {pipeline_mode = #tpu.pipeline_mode<synchronous>, transform_indices = @transform_3, window_bounds = array<i64: 1, 4, 1>}, {transform_indices = @transform_4, window_bounds = array<i64: 1, 4, 256>}]} {
    %c0 = arith.constant 0 : index
    %c0_0 = arith.constant 0 : index
    %c0_1 = arith.constant 0 : index
    %0 = vector.load %arg1[%c0, %c0_0, %c0_1] : memref<1x4x384xf32, #tpu.memory_space<vmem>>, vector<1x4x16xf32>
    %1 = vector.shape_cast %0 : vector<1x4x16xf32> to vector<4x16xf32>
    %c0_2 = arith.constant 0 : index
    %c0_3 = arith.constant 0 : index
    %2 = vector.load %arg6[%c0_2, %c0_3] : memref<36x256xf32, #tpu.memory_space<vmem>>, vector<4x16xf32>
    tpu.vector_store %arg6[%c0_2, %c0_3], %1 {strides = array<i32>} : memref<36x256xf32, #tpu.memory_space<vmem>>, vector<4x16xf32>,
    %c0_4 = arith.constant 0 : index
    %c0_5 = arith.constant 0 : index
    %c18 = arith.constant 18 : index
    %3 = vector.load %arg1[%c0_4, %c0_5, %c18] : memref<1x4x384xf32, #tpu.memory_space<vmem>>, vector<1x4x16xf32>
    %4 = vector.shape_cast %3 : vector<1x4x16xf32> to vector<4x16xf32>
    %c0_6 = arith.constant 0 : index
    %c16 = arith.constant 16 : index
    %5 = vector.load %arg6[%c0_6, %c16] : memref<36x256xf32, #tpu.memory_space<vmem>>, vector<4x16xf32>
    tpu.vector_store %arg6[%c0_6, %c16], %4 {strides = array<i32>} : memref<36x256xf32, #tpu.memory_space<vmem>>, vector<4x16xf32>,
    %c0_7 = arith.constant 0 : index
    %c0_8 = arith.constant 0 : index
    %c36 = arith.constant 36 : index
    %6 = vector.load %arg1[%c0_7, %c0_8, %c36] : memref<1x4x384xf32, #tpu.memory_space<vmem>>, vector<1x4x16xf32>
    %7 = vector.shape_cast %6 : vector<1x4x16xf32> to vector<4x16xf32>
    %c0_9 = arith.constant 0 : index
    %c32 = arith.constant 32 : index
    %8 = vector.load %arg6[%c0_9, %c32] : memref<36x256xf32, #tpu.memory_space<vmem>>, vector<4x16xf32>
    tpu.vector_store %arg6[%c0_9, %c32], %7 {strides = array<i32>} : memref<36x256xf32, #tpu.memory_space<vmem>>, vector<4x16xf32>,
    %c0_10 = arith.constant 0 : index
    %c0_11 = arith.constant 0 : index
    %c54 = arith.constant 54 : index
    %9 = vector.load %arg1[%c0_10, %c0_11, %c54] : memref<1x4x384xf32, #tpu.memory_space<vmem>>, vector<1x4x16xf32>
    %10 = vector.shape_cast %9 : vector<1x4x16xf32> to vector<4x16xf32>
    %c0_12 = arith.constant 0 : index
    %c48 = arith.constant 48 : index
    %11 = vector.load %arg6[%c0_12, %c48] : memref<36x256xf32, #tpu.memory_space<vmem>>, vector<4x16xf32>
    tpu.vector_store %arg6[%c0_12, %c48], %10 {strides = array<i32>} : memref<36x256xf32, #tpu.memory_space<vmem>>, vector<4x16xf32>,
    %c0_13 = arith.constant 0 : index
    %c0_14 = arith.constant 0 : index
    %c72 = arith.constant 72 : index
    %12 = vector.load %arg1[%c0_13, %c0_14, %c72] : memref<1x4x384xf32, #tpu.memory_space<vmem>>, vector<1x4x16xf32>
    %13 = vector.shape_cast %12 : vector<1x4x16xf32> to vector<4x16xf32>
    %c0_15 = arith.constant 0 : index
    %c64 = arith.constant 64 : index
    %14 = vector.load %arg6[%c0_15, %c64] : memref<36x256xf32, #tpu.memory_space<vmem>>, vector<4x16xf32>
    tpu.vector_store %arg6[%c0_15, %c64], %13 {strides = array<i32>} : memref<36x256xf32, #tpu.memory_space<vmem>>, vector<4x16xf32>,
    %c0_16 = arith.constant 0 : index
    %c0_17 = arith.constant 0 : index
    %c90 = arith.constant 90 : index
    %15 = vector.load %arg1[%c0_16, %c0_17, %c90] : memref<1x4x384xf32, #tpu.memory_space<vmem>>, vector<1x4x16xf32>
    %16 = vector.shape_cast %15 : vector<1x4x16xf32> to vector<4x16xf32>
    %c0_18 = arith.constant 0 : index
    %c80 = arith.constant 80 : index
    %17 = vector.load %arg6[%c0_18, %c80] : memref<36x256xf32, #tpu.memory_space<vmem>>, vector<4x16xf32>
    tpu.vector_store %arg6[%c0_18, %c80], %16 {strides = array<i32>} : memref<36x256xf32, #tpu.memory_space<vmem>>, vector<4x16xf32>,
    %c0_19 = arith.constant 0 : index
    %c0_20 = arith.constant 0 : index
    %c108 = arith.constant 108 : index
    %18 = vector.load %arg1[%c0_19, %c0_20, %c108] : memref<1x4x384xf32, #tpu.memory_space<vmem>>, vector<1x4x16xf32>
    %19 = vector.shape_cast %18 : vector<1x4x16xf32> to vector<4x16xf32>
    %c0_21 = arith.constant 0 : index
    %c96 = arith.constant 96 : index
    %20 = vector.load %arg6[%c0_21, %c96] : memref<36x256xf32, #tpu.memory_space<vmem>>, vector<4x16xf32>
    tpu.vector_store %arg6[%c0_21, %c96], %19 {strides = array<i32>} : memref<36x256xf32, #tpu.memory_space<vmem>>, vector<4x16xf32>,
    %c0_22 = arith.constant 0 : index
    %c0_23 = arith.constant 0 : index
    %c126 = arith.constant 126 : index
    %21 = vector.load %arg1[%c0_22, %c0_23, %c126] : memref<1x4x384xf32, #tpu.memory_space<vmem>>, vector<1x4x16xf32>
    %22 = vector.shape_cast %21 : vector<1x4x16xf32> to vector<4x16xf32>
    %c0_24 = arith.constant 0 : index
    %c112 = arith.constant 112 : index
    %23 = vector.load %arg6[%c0_24, %c112] : memref<36x256xf32, #tpu.memory_space<vmem>>, vector<4x16xf32>
    tpu.vector_store %arg6[%c0_24, %c112], %22 {strides = array<i32>} : memref<36x256xf32, #tpu.memory_space<vmem>>, vector<4x16xf32>,
    %c0_25 = arith.constant 0 : index
    %c0_26 = arith.constant 0 : index
    %c144 = arith.constant 144 : index
    %24 = vector.load %arg1[%c0_25, %c0_26, %c144] : memref<1x4x384xf32, #tpu.memory_space<vmem>>, vector<1x4x16xf32>
    %25 = vector.shape_cast %24 : vector<1x4x16xf32> to vector<4x16xf32>
    %c0_27 = arith.constant 0 : index
    %c128 = arith.constant 128 : index
    %26 = vector.load %arg6[%c0_27, %c128] : memref<36x256xf32, #tpu.memory_space<vmem>>, vector<4x16xf32>
    tpu.vector_store %arg6[%c0_27, %c128], %25 {strides = array<i32>} : memref<36x256xf32, #tpu.memory_space<vmem>>, vector<4x16xf32>,
    %c0_28 = arith.constant 0 : index
    %c0_29 = arith.constant 0 : index
    %c162 = arith.constant 162 : index
    %27 = vector.load %arg1[%c0_28, %c0_29, %c162] : memref<1x4x384xf32, #tpu.memory_space<vmem>>, vector<1x4x16xf32>
    %28 = vector.shape_cast %27 : vector<1x4x16xf32> to vector<4x16xf32>
    %c0_30 = arith.constant 0 : index
    %c144_31 = arith.constant 144 : index
    %29 = vector.load %arg6[%c0_30, %c144_31] : memref<36x256xf32, #tpu.memory_space<vmem>>, vector<4x16xf32>
    tpu.vector_store %arg6[%c0_30, %c144_31], %28 {strides = array<i32>} : memref<36x256xf32, #tpu.memory_space<vmem>>, vector<4x16xf32>,
    %c0_32 = arith.constant 0 : index
    %c0_33 = arith.constant 0 : index
    %c180 = arith.constant 180 : index
    %30 = vector.load %arg1[%c0_32, %c0_33, %c180] : memref<1x4x384xf32, #tpu.memory_space<vmem>>, vector<1x4x16xf32>
    %31 = vector.shape_cast %30 : vector<1x4x16xf32> to vector<4x16xf32>
    %c0_34 = arith.constant 0 : index
    %c160 = arith.constant 160 : index
    %32 = vector.load %arg6[%c0_34, %c160] : memref<36x256xf32, #tpu.memory_space<vmem>>, vector<4x16xf32>
    tpu.vector_store %arg6[%c0_34, %c160], %31 {strides = array<i32>} : memref<36x256xf32, #tpu.memory_space<vmem>>, vector<4x16xf32>,
    %c0_35 = arith.constant 0 : index
    %c0_36 = arith.constant 0 : index
    %c198 = arith.constant 198 : index
    %33 = vector.load %arg1[%c0_35, %c0_36, %c198] : memref<1x4x384xf32, #tpu.memory_space<vmem>>, vector<1x4x16xf32>
    %34 = vector.shape_cast %33 : vector<1x4x16xf32> to vector<4x16xf32>
    %c0_37 = arith.constant 0 : index
    %c176 = arith.constant 176 : index
    %35 = vector.load %arg6[%c0_37, %c176] : memref<36x256xf32, #tpu.memory_space<vmem>>, vector<4x16xf32>
    tpu.vector_store %arg6[%c0_37, %c176], %34 {strides = array<i32>} : memref<36x256xf32, #tpu.memory_space<vmem>>, vector<4x16xf32>,
    %c0_38 = arith.constant 0 : index
    %c0_39 = arith.constant 0 : index
    %c216 = arith.constant 216 : index
    %36 = vector.load %arg1[%c0_38, %c0_39, %c216] : memref<1x4x384xf32, #tpu.memory_space<vmem>>, vector<1x4x16xf32>
    %37 = vector.shape_cast %36 : vector<1x4x16xf32> to vector<4x16xf32>
    %c0_40 = arith.constant 0 : index
    %c192 = arith.constant 192 : index
    %38 = vector.load %arg6[%c0_40, %c192] : memref<36x256xf32, #tpu.memory_space<vmem>>, vector<4x16xf32>
    tpu.vector_store %arg6[%c0_40, %c192], %37 {strides = array<i32>} : memref<36x256xf32, #tpu.memory_space<vmem>>, vector<4x16xf32>,
    %c0_41 = arith.constant 0 : index
    %c0_42 = arith.constant 0 : index
    %c234 = arith.constant 234 : index
    %39 = vector.load %arg1[%c0_41, %c0_42, %c234] : memref<1x4x384xf32, #tpu.memory_space<vmem>>, vector<1x4x16xf32>
    %40 = vector.shape_cast %39 : vector<1x4x16xf32> to vector<4x16xf32>
    %c0_43 = arith.constant 0 : index
    %c208 = arith.constant 208 : index
    %41 = vector.load %arg6[%c0_43, %c208] : memref<36x256xf32, #tpu.memory_space<vmem>>, vector<4x16xf32>
    tpu.vector_store %arg6[%c0_43, %c208], %40 {strides = array<i32>} : memref<36x256xf32, #tpu.memory_space<vmem>>, vector<4x16xf32>,
    %c0_44 = arith.constant 0 : index
    %c0_45 = arith.constant 0 : index
    %c252 = arith.constant 252 : index
    %42 = vector.load %arg1[%c0_44, %c0_45, %c252] : memref<1x4x384xf32, #tpu.memory_space<vmem>>, vector<1x4x16xf32>
    %43 = vector.shape_cast %42 : vector<1x4x16xf32> to vector<4x16xf32>
    %c0_46 = arith.constant 0 : index
    %c224 = arith.constant 224 : index
    %44 = vector.load %arg6[%c0_46, %c224] : memref<36x256xf32, #tpu.memory_space<vmem>>, vector<4x16xf32>
    tpu.vector_store %arg6[%c0_46, %c224], %43 {strides = array<i32>} : memref<36x256xf32, #tpu.memory_space<vmem>>, vector<4x16xf32>,
    %c0_47 = arith.constant 0 : index
    %c0_48 = arith.constant 0 : index
    %c270 = arith.constant 270 : index
    %45 = vector.load %arg1[%c0_47, %c0_48, %c270] : memref<1x4x384xf32, #tpu.memory_space<vmem>>, vector<1x4x16xf32>
    %46 = vector.shape_cast %45 : vector<1x4x16xf32> to vector<4x16xf32>
    %c0_49 = arith.constant 0 : index
    %c240 = arith.constant 240 : index
    %47 = vector.load %arg6[%c0_49, %c240] : memref<36x256xf32, #tpu.memory_space<vmem>>, vector<4x16xf32>
    tpu.vector_store %arg6[%c0_49, %c240], %46 {strides = array<i32>} : memref<36x256xf32, #tpu.memory_space<vmem>>, vector<4x16xf32>,
    %c0_50 = arith.constant 0 : index
    %c0_51 = arith.constant 0 : index
    %c1 = arith.constant 1 : index
    %48 = vector.load %arg1[%c0_50, %c0_51, %c1] : memref<1x4x384xf32, #tpu.memory_space<vmem>>, vector<1x4x16xf32>
    %49 = vector.shape_cast %48 : vector<1x4x16xf32> to vector<4x16xf32>
    %c4 = arith.constant 4 : index
    %c0_52 = arith.constant 0 : index
    %50 = vector.load %arg6[%c4, %c0_52] : memref<36x256xf32, #tpu.memory_space<vmem>>, vector<4x16xf32>
    tpu.vector_store %arg6[%c4, %c0_52], %49 {strides = array<i32>} : memref<36x256xf32, #tpu.memory_space<vmem>>, vector<4x16xf32>,
    %c0_53 = arith.constant 0 : index
    %c0_54 = arith.constant 0 : index
    %c19 = arith.constant 19 : index
    %51 = vector.load %arg1[%c0_53, %c0_54, %c19] : memref<1x4x384xf32, #tpu.memory_space<vmem>>, vector<1x4x16xf32>
    %52 = vector.shape_cast %51 : vector<1x4x16xf32> to vector<4x16xf32>
    %c4_55 = arith.constant 4 : index
    %c16_56 = arith.constant 16 : index
    %53 = vector.load %arg6[%c4_55, %c16_56] : memref<36x256xf32, #tpu.memory_space<vmem>>, vector<4x16xf32>
    tpu.vector_store %arg6[%c4_55, %c16_56], %52 {strides = array<i32>} : memref<36x256xf32, #tpu.memory_space<vmem>>, vector<4x16xf32>,
    %c0_57 = arith.constant 0 : index
    %c0_58 = arith.constant 0 : index
    %c37 = arith.constant 37 : index
    %54 = vector.load %arg1[%c0_57, %c0_58, %c37] : memref<1x4x384xf32, #tpu.memory_space<vmem>>, vector<1x4x16xf32>
    %55 = vector.shape_cast %54 : vector<1x4x16xf32> to vector<4x16xf32>
    %c4_59 = arith.constant 4 : index
    %c32_60 = arith.constant 32 : index
    %56 = vector.load %arg6[%c4_59, %c32_60] : memref<36x256xf32, #tpu.memory_space<vmem>>, vector<4x16xf32>
    tpu.vector_store %arg6[%c4_59, %c32_60], %55 {strides = array<i32>} : memref<36x256xf32, #tpu.memory_space<vmem>>, vector<4x16xf32>,
    %c0_61 = arith.constant 0 : index
    %c0_62 = arith.constant 0 : index
    %c55 = arith.constant 55 : index
    %57 = vector.load %arg1[%c0_61, %c0_62, %c55] : memref<1x4x384xf32, #tpu.memory_space<vmem>>, vector<1x4x16xf32>
    %58 = vector.shape_cast %57 : vector<1x4x16xf32> to vector<4x16xf32>
    %c4_63 = arith.constant 4 : index
    %c48_64 = arith.constant 48 : index
    %59 = vector.load %arg6[%c4_63, %c48_64] : memref<36x256xf32, #tpu.memory_space<vmem>>, vector<4x16xf32>
    tpu.vector_store %arg6[%c4_63, %c48_64], %58 {strides = array<i32>} : memref<36x256xf32, #tpu.memory_space<vmem>>, vector<4x16xf32>,
    %c0_65 = arith.constant 0 : index
    %c0_66 = arith.constant 0 : index
    %c73 = arith.constant 73 : index
    %60 = vector.load %arg1[%c0_65, %c0_66, %c73] : memref<1x4x384xf32, #tpu.memory_space<vmem>>, vector<1x4x16xf32>
    %61 = vector.shape_cast %60 : vector<1x4x16xf32> to vector<4x16xf32>
    %c4_67 = arith.constant 4 : index
    %c64_68 = arith.constant 64 : index
    %62 = vector.load %arg6[%c4_67, %c64_68] : memref<36x256xf32, #tpu.memory_space<vmem>>, vector<4x16xf32>
    tpu.vector_store %arg6[%c4_67, %c64_68], %61 {strides = array<i32>} : memref<36x256xf32, #tpu.memory_space<vmem>>, vector<4x16xf32>,
    %c0_69 = arith.constant 0 : index
    %c0_70 = arith.constant 0 : index
    %c91 = arith.constant 91 : index
    %63 = vector.load %arg1[%c0_69, %c0_70, %c91] : memref<1x4x384xf32, #tpu.memory_space<vmem>>, vector<1x4x16xf32>
    %64 = vector.shape_cast %63 : vector<1x4x16xf32> to vector<4x16xf32>
    %c4_71 = arith.constant 4 : index
    %c80_72 = arith.constant 80 : index
    %65 = vector.load %arg6[%c4_71, %c80_72] : memref<36x256xf32, #tpu.memory_space<vmem>>, vector<4x16xf32>
    tpu.vector_store %arg6[%c4_71, %c80_72], %64 {strides = array<i32>} : memref<36x256xf32, #tpu.memory_space<vmem>>, vector<4x16xf32>,
    %c0_73 = arith.constant 0 : index
    %c0_74 = arith.constant 0 : index
    %c109 = arith.constant 109 : index
    %66 = vector.load %arg1[%c0_73, %c0_74, %c109] : memref<1x4x384xf32, #tpu.memory_space<vmem>>, vector<1x4x16xf32>
    %67 = vector.shape_cast %66 : vector<1x4x16xf32> to vector<4x16xf32>
    %c4_75 = arith.constant 4 : index
    %c96_76 = arith.constant 96 : index
    %68 = vector.load %arg6[%c4_75, %c96_76] : memref<36x256xf32, #tpu.memory_space<vmem>>, vector<4x16xf32>
    tpu.vector_store %arg6[%c4_75, %c96_76], %67 {strides = array<i32>} : memref<36x256xf32, #tpu.memory_space<vmem>>, vector<4x16xf32>,
    %c0_77 = arith.constant 0 : index
    %c0_78 = arith.constant 0 : index
    %c127 = arith.constant 127 : index
    %69 = vector.load %arg1[%c0_77, %c0_78, %c127] : memref<1x4x384xf32, #tpu.memory_space<vmem>>, vector<1x4x16xf32>
    %70 = vector.shape_cast %69 : vector<1x4x16xf32> to vector<4x16xf32>
    %c4_79 = arith.constant 4 : index
    %c112_80 = arith.constant 112 : index
    %71 = vector.load %arg6[%c4_79, %c112_80] : memref<36x256xf32, #tpu.memory_space<vmem>>, vector<4x16xf32>
    tpu.vector_store %arg6[%c4_79, %c112_80], %70 {strides = array<i32>} : memref<36x256xf32, #tpu.memory_space<vmem>>, vector<4x16xf32>,
    %c0_81 = arith.constant 0 : index
    %c0_82 = arith.constant 0 : index
    %c145 = arith.constant 145 : index
    %72 = vector.load %arg1[%c0_81, %c0_82, %c145] : memref<1x4x384xf32, #tpu.memory_space<vmem>>, vector<1x4x16xf32>
    %73 = vector.shape_cast %72 : vector<1x4x16xf32> to vector<4x16xf32>
    %c4_83 = arith.constant 4 : index
    %c128_84 = arith.constant 128 : index
    %74 = vector.load %arg6[%c4_83, %c128_84] : memref<36x256xf32, #tpu.memory_space<vmem>>, vector<4x16xf32>
    tpu.vector_store %arg6[%c4_83, %c128_84], %73 {strides = array<i32>} : memref<36x256xf32, #tpu.memory_space<vmem>>, vector<4x16xf32>,
    %c0_85 = arith.constant 0 : index
    %c0_86 = arith.constant 0 : index
    %c163 = arith.constant 163 : index
    %75 = vector.load %arg1[%c0_85, %c0_86, %c163] : memref<1x4x384xf32, #tpu.memory_space<vmem>>, vector<1x4x16xf32>
    %76 = vector.shape_cast %75 : vector<1x4x16xf32> to vector<4x16xf32>
    %c4_87 = arith.constant 4 : index
    %c144_88 = arith.constant 144 : index
    %77 = vector.load %arg6[%c4_87, %c144_88] : memref<36x256xf32, #tpu.memory_space<vmem>>, vector<4x16xf32>
    tpu.vector_store %arg6[%c4_87, %c144_88], %76 {strides = array<i32>} : memref<36x256xf32, #tpu.memory_space<vmem>>, vector<4x16xf32>,
    %c0_89 = arith.constant 0 : index
    %c0_90 = arith.constant 0 : index
    %c181 = arith.constant 181 : index
    %78 = vector.load %arg1[%c0_89, %c0_90, %c181] : memref<1x4x384xf32, #tpu.memory_space<vmem>>, vector<1x4x16xf32>
    %79 = vector.shape_cast %78 : vector<1x4x16xf32> to vector<4x16xf32>
    %c4_91 = arith.constant 4 : index
    %c160_92 = arith.constant 160 : index
    %80 = vector.load %arg6[%c4_91, %c160_92] : memref<36x256xf32, #tpu.memory_space<vmem>>, vector<4x16xf32>
    tpu.vector_store %arg6[%c4_91, %c160_92], %79 {strides = array<i32>} : memref<36x256xf32, #tpu.memory_space<vmem>>, vector<4x16xf32>,
    %c0_93 = arith.constant 0 : index
    %c0_94 = arith.constant 0 : index
    %c199 = arith.constant 199 : index
    %81 = vector.load %arg1[%c0_93, %c0_94, %c199] : memref<1x4x384xf32, #tpu.memory_space<vmem>>, vector<1x4x16xf32>
    %82 = vector.shape_cast %81 : vector<1x4x16xf32> to vector<4x16xf32>
    %c4_95 = arith.constant 4 : index
    %c176_96 = arith.constant 176 : index
    %83 = vector.load %arg6[%c4_95, %c176_96] : memref<36x256xf32, #tpu.memory_space<vmem>>, vector<4x16xf32>
    tpu.vector_store %arg6[%c4_95, %c176_96], %82 {strides = array<i32>} : memref<36x256xf32, #tpu.memory_space<vmem>>, vector<4x16xf32>,
    %c0_97 = arith.constant 0 : index
    %c0_98 = arith.constant 0 : index
    %c217 = arith.constant 217 : index
    %84 = vector.load %arg1[%c0_97, %c0_98, %c217] : memref<1x4x384xf32, #tpu.memory_space<vmem>>, vector<1x4x16xf32>
    %85 = vector.shape_cast %84 : vector<1x4x16xf32> to vector<4x16xf32>
    %c4_99 = arith.constant 4 : index
    %c192_100 = arith.constant 192 : index
    %86 = vector.load %arg6[%c4_99, %c192_100] : memref<36x256xf32, #tpu.memory_space<vmem>>, vector<4x16xf32>
    tpu.vector_store %arg6[%c4_99, %c192_100], %85 {strides = array<i32>} : memref<36x256xf32, #tpu.memory_space<vmem>>, vector<4x16xf32>,
    %c0_101 = arith.constant 0 : index
    %c0_102 = arith.constant 0 : index
    %c235 = arith.constant 235 : index
    %87 = vector.load %arg1[%c0_101, %c0_102, %c235] : memref<1x4x384xf32, #tpu.memory_space<vmem>>, vector<1x4x16xf32>
    %88 = vector.shape_cast %87 : vector<1x4x16xf32> to vector<4x16xf32>
    %c4_103 = arith.constant 4 : index
    %c208_104 = arith.constant 208 : index
    %89 = vector.load %arg6[%c4_103, %c208_104] : memref<36x256xf32, #tpu.memory_space<vmem>>, vector<4x16xf32>
    tpu.vector_store %arg6[%c4_103, %c208_104], %88 {strides = array<i32>} : memref<36x256xf32, #tpu.memory_space<vmem>>, vector<4x16xf32>,
    %c0_105 = arith.constant 0 : index
    %c0_106 = arith.constant 0 : index
    %c253 = arith.constant 253 : index
    %90 = vector.load %arg1[%c0_105, %c0_106, %c253] : memref<1x4x384xf32, #tpu.memory_space<vmem>>, vector<1x4x16xf32>
    %91 = vector.shape_cast %90 : vector<1x4x16xf32> to vector<4x16xf32>
    %c4_107 = arith.constant 4 : index
    %c224_108 = arith.constant 224 : index
    %92 = vector.load %arg6[%c4_107, %c224_108] : memref<36x256xf32, #tpu.memory_space<vmem>>, vector<4x16xf32>
    tpu.vector_store %arg6[%c4_107, %c224_108], %91 {strides = array<i32>} : memref<36x256xf32, #tpu.memory_space<vmem>>, vector<4x16xf32>,
    %c0_109 = arith.constant 0 : index
    %c0_110 = arith.constant 0 : index
    %c271 = arith.constant 271 : index
    %93 = vector.load %arg1[%c0_109, %c0_110, %c271] : memref<1x4x384xf32, #tpu.memory_space<vmem>>, vector<1x4x16xf32>
    %94 = vector.shape_cast %93 : vector<1x4x16xf32> to vector<4x16xf32>
    %c4_111 = arith.constant 4 : index
    %c240_112 = arith.constant 240 : index
    %95 = vector.load %arg6[%c4_111, %c240_112] : memref<36x256xf32, #tpu.memory_space<vmem>>, vector<4x16xf32>
    tpu.vector_store %arg6[%c4_111, %c240_112], %94 {strides = array<i32>} : memref<36x256xf32, #tpu.memory_space<vmem>>, vector<4x16xf32>,
    %c0_113 = arith.constant 0 : index
    %c0_114 = arith.constant 0 : index
    %c2 = arith.constant 2 : index
    %96 = vector.load %arg1[%c0_113, %c0_114, %c2] : memref<1x4x384xf32, #tpu.memory_space<vmem>>, vector<1x4x16xf32>
    %97 = vector.shape_cast %96 : vector<1x4x16xf32> to vector<4x16xf32>
    %c8 = arith.constant 8 : index
    %c0_115 = arith.constant 0 : index
    %98 = vector.load %arg6[%c8, %c0_115] : memref<36x256xf32, #tpu.memory_space<vmem>>, vector<4x16xf32>
    tpu.vector_store %arg6[%c8, %c0_115], %97 {strides = array<i32>} : memref<36x256xf32, #tpu.memory_space<vmem>>, vector<4x16xf32>,
    %c0_116 = arith.constant 0 : index
    %c0_117 = arith.constant 0 : index
    %c20 = arith.constant 20 : index
    %99 = vector.load %arg1[%c0_116, %c0_117, %c20] : memref<1x4x384xf32, #tpu.memory_space<vmem>>, vector<1x4x16xf32>
    %100 = vector.shape_cast %99 : vector<1x4x16xf32> to vector<4x16xf32>
    %c8_118 = arith.constant 8 : index
    %c16_119 = arith.constant 16 : index
    %101 = vector.load %arg6[%c8_118, %c16_119] : memref<36x256xf32, #tpu.memory_space<vmem>>, vector<4x16xf32>
    tpu.vector_store %arg6[%c8_118, %c16_119], %100 {strides = array<i32>} : memref<36x256xf32, #tpu.memory_space<vmem>>, vector<4x16xf32>,
    %c0_120 = arith.constant 0 : index
    %c0_121 = arith.constant 0 : index
    %c38 = arith.constant 38 : index
    %102 = vector.load %arg1[%c0_120, %c0_121, %c38] : memref<1x4x384xf32, #tpu.memory_space<vmem>>, vector<1x4x16xf32>
    %103 = vector.shape_cast %102 : vector<1x4x16xf32> to vector<4x16xf32>
    %c8_122 = arith.constant 8 : index
    %c32_123 = arith.constant 32 : index
    %104 = vector.load %arg6[%c8_122, %c32_123] : memref<36x256xf32, #tpu.memory_space<vmem>>, vector<4x16xf32>
    tpu.vector_store %arg6[%c8_122, %c32_123], %103 {strides = array<i32>} : memref<36x256xf32, #tpu.memory_space<vmem>>, vector<4x16xf32>,
    %c0_124 = arith.constant 0 : index
    %c0_125 = arith.constant 0 : index
    %c56 = arith.constant 56 : index
    %105 = vector.load %arg1[%c0_124, %c0_125, %c56] : memref<1x4x384xf32, #tpu.memory_space<vmem>>, vector<1x4x16xf32>
    %106 = vector.shape_cast %105 : vector<1x4x16xf32> to vector<4x16xf32>
    %c8_126 = arith.constant 8 : index
    %c48_127 = arith.constant 48 : index
    %107 = vector.load %arg6[%c8_126, %c48_127] : memref<36x256xf32, #tpu.memory_space<vmem>>, vector<4x16xf32>
    tpu.vector_store %arg6[%c8_126, %c48_127], %106 {strides = array<i32>} : memref<36x256xf32, #tpu.memory_space<vmem>>, vector<4x16xf32>,
    %c0_128 = arith.constant 0 : index
    %c0_129 = arith.constant 0 : index
    %c74 = arith.constant 74 : index
    %108 = vector.load %arg1[%c0_128, %c0_129, %c74] : memref<1x4x384xf32, #tpu.memory_space<vmem>>, vector<1x4x16xf32>
    %109 = vector.shape_cast %108 : vector<1x4x16xf32> to vector<4x16xf32>
    %c8_130 = arith.constant 8 : index
    %c64_131 = arith.constant 64 : index
    %110 = vector.load %arg6[%c8_130, %c64_131] : memref<36x256xf32, #tpu.memory_space<vmem>>, vector<4x16xf32>
    tpu.vector_store %arg6[%c8_130, %c64_131], %109 {strides = array<i32>} : memref<36x256xf32, #tpu.memory_space<vmem>>, vector<4x16xf32>,
    %c0_132 = arith.constant 0 : index
    %c0_133 = arith.constant 0 : index
    %c92 = arith.constant 92 : index
    %111 = vector.load %arg1[%c0_132, %c0_133, %c92] : memref<1x4x384xf32, #tpu.memory_space<vmem>>, vector<1x4x16xf32>
    %112 = vector.shape_cast %111 : vector<1x4x16xf32> to vector<4x16xf32>
    %c8_134 = arith.constant 8 : index
    %c80_135 = arith.constant 80 : index
    %113 = vector.load %arg6[%c8_134, %c80_135] : memref<36x256xf32, #tpu.memory_space<vmem>>, vector<4x16xf32>
    tpu.vector_store %arg6[%c8_134, %c80_135], %112 {strides = array<i32>} : memref<36x256xf32, #tpu.memory_space<vmem>>, vector<4x16xf32>,
    %c0_136 = arith.constant 0 : index
    %c0_137 = arith.constant 0 : index
    %c110 = arith.constant 110 : index
    %114 = vector.load %arg1[%c0_136, %c0_137, %c110] : memref<1x4x384xf32, #tpu.memory_space<vmem>>, vector<1x4x16xf32>
    %115 = vector.shape_cast %114 : vector<1x4x16xf32> to vector<4x16xf32>
    %c8_138 = arith.constant 8 : index
    %c96_139 = arith.constant 96 : index
    %116 = vector.load %arg6[%c8_138, %c96_139] : memref<36x256xf32, #tpu.memory_space<vmem>>, vector<4x16xf32>
    tpu.vector_store %arg6[%c8_138, %c96_139], %115 {strides = array<i32>} : memref<36x256xf32, #tpu.memory_space<vmem>>, vector<4x16xf32>,
    %c0_140 = arith.constant 0 : index
    %c0_141 = arith.constant 0 : index
    %c128_142 = arith.constant 128 : index
    %117 = vector.load %arg1[%c0_140, %c0_141, %c128_142] : memref<1x4x384xf32, #tpu.memory_space<vmem>>, vector<1x4x16xf32>
    %118 = vector.shape_cast %117 : vector<1x4x16xf32> to vector<4x16xf32>
    %c8_143 = arith.constant 8 : index
    %c112_144 = arith.constant 112 : index
    %119 = vector.load %arg6[%c8_143, %c112_144] : memref<36x256xf32, #tpu.memory_space<vmem>>, vector<4x16xf32>
    tpu.vector_store %arg6[%c8_143, %c112_144], %118 {strides = array<i32>} : memref<36x256xf32, #tpu.memory_space<vmem>>, vector<4x16xf32>,
    %c0_145 = arith.constant 0 : index
    %c0_146 = arith.constant 0 : index
    %c146 = arith.constant 146 : index
    %120 = vector.load %arg1[%c0_145, %c0_146, %c146] : memref<1x4x384xf32, #tpu.memory_space<vmem>>, vector<1x4x16xf32>
    %121 = vector.shape_cast %120 : vector<1x4x16xf32> to vector<4x16xf32>
    %c8_147 = arith.constant 8 : index
    %c128_148 = arith.constant 128 : index
    %122 = vector.load %arg6[%c8_147, %c128_148] : memref<36x256xf32, #tpu.memory_space<vmem>>, vector<4x16xf32>
    tpu.vector_store %arg6[%c8_147, %c128_148], %121 {strides = array<i32>} : memref<36x256xf32, #tpu.memory_space<vmem>>, vector<4x16xf32>,
    %c0_149 = arith.constant 0 : index
    %c0_150 = arith.constant 0 : index
    %c164 = arith.constant 164 : index
    %123 = vector.load %arg1[%c0_149, %c0_150, %c164] : memref<1x4x384xf32, #tpu.memory_space<vmem>>, vector<1x4x16xf32>
    %124 = vector.shape_cast %123 : vector<1x4x16xf32> to vector<4x16xf32>
    %c8_151 = arith.constant 8 : index
    %c144_152 = arith.constant 144 : index
    %125 = vector.load %arg6[%c8_151, %c144_152] : memref<36x256xf32, #tpu.memory_space<vmem>>, vector<4x16xf32>
    tpu.vector_store %arg6[%c8_151, %c144_152], %124 {strides = array<i32>} : memref<36x256xf32, #tpu.memory_space<vmem>>, vector<4x16xf32>,
    %c0_153 = arith.constant 0 : index
    %c0_154 = arith.constant 0 : index
    %c182 = arith.constant 182 : index
    %126 = vector.load %arg1[%c0_153, %c0_154, %c182] : memref<1x4x384xf32, #tpu.memory_space<vmem>>, vector<1x4x16xf32>
    %127 = vector.shape_cast %126 : vector<1x4x16xf32> to vector<4x16xf32>
    %c8_155 = arith.constant 8 : index
    %c160_156 = arith.constant 160 : index
    %128 = vector.load %arg6[%c8_155, %c160_156] : memref<36x256xf32, #tpu.memory_space<vmem>>, vector<4x16xf32>
    tpu.vector_store %arg6[%c8_155, %c160_156], %127 {strides = array<i32>} : memref<36x256xf32, #tpu.memory_space<vmem>>, vector<4x16xf32>,
    %c0_157 = arith.constant 0 : index
    %c0_158 = arith.constant 0 : index
    %c200 = arith.constant 200 : index
    %129 = vector.load %arg1[%c0_157, %c0_158, %c200] : memref<1x4x384xf32, #tpu.memory_space<vmem>>, vector<1x4x16xf32>
    %130 = vector.shape_cast %129 : vector<1x4x16xf32> to vector<4x16xf32>
    %c8_159 = arith.constant 8 : index
    %c176_160 = arith.constant 176 : index
    %131 = vector.load %arg6[%c8_159, %c176_160] : memref<36x256xf32, #tpu.memory_space<vmem>>, vector<4x16xf32>
    tpu.vector_store %arg6[%c8_159, %c176_160], %130 {strides = array<i32>} : memref<36x256xf32, #tpu.memory_space<vmem>>, vector<4x16xf32>,
    %c0_161 = arith.constant 0 : index
    %c0_162 = arith.constant 0 : index
    %c218 = arith.constant 218 : index
    %132 = vector.load %arg1[%c0_161, %c0_162, %c218] : memref<1x4x384xf32, #tpu.memory_space<vmem>>, vector<1x4x16xf32>
    %133 = vector.shape_cast %132 : vector<1x4x16xf32> to vector<4x16xf32>
    %c8_163 = arith.constant 8 : index
    %c192_164 = arith.constant 192 : index
    %134 = vector.load %arg6[%c8_163, %c192_164] : memref<36x256xf32, #tpu.memory_space<vmem>>, vector<4x16xf32>
    tpu.vector_store %arg6[%c8_163, %c192_164], %133 {strides = array<i32>} : memref<36x256xf32, #tpu.memory_space<vmem>>, vector<4x16xf32>,
    %c0_165 = arith.constant 0 : index
    %c0_166 = arith.constant 0 : index
    %c236 = arith.constant 236 : index
    %135 = vector.load %arg1[%c0_165, %c0_166, %c236] : memref<1x4x384xf32, #tpu.memory_space<vmem>>, vector<1x4x16xf32>
    %136 = vector.shape_cast %135 : vector<1x4x16xf32> to vector<4x16xf32>
    %c8_167 = arith.constant 8 : index
    %c208_168 = arith.constant 208 : index
    %137 = vector.load %arg6[%c8_167, %c208_168] : memref<36x256xf32, #tpu.memory_space<vmem>>, vector<4x16xf32>
    tpu.vector_store %arg6[%c8_167, %c208_168], %136 {strides = array<i32>} : memref<36x256xf32, #tpu.memory_space<vmem>>, vector<4x16xf32>,
    %c0_169 = arith.constant 0 : index
    %c0_170 = arith.constant 0 : index
    %c254 = arith.constant 254 : index
    %138 = vector.load %arg1[%c0_169, %c0_170, %c254] : memref<1x4x384xf32, #tpu.memory_space<vmem>>, vector<1x4x16xf32>
    %139 = vector.shape_cast %138 : vector<1x4x16xf32> to vector<4x16xf32>
    %c8_171 = arith.constant 8 : index
    %c224_172 = arith.constant 224 : index
    %140 = vector.load %arg6[%c8_171, %c224_172] : memref<36x256xf32, #tpu.memory_space<vmem>>, vector<4x16xf32>
    tpu.vector_store %arg6[%c8_171, %c224_172], %139 {strides = array<i32>} : memref<36x256xf32, #tpu.memory_space<vmem>>, vector<4x16xf32>,
    %c0_173 = arith.constant 0 : index
    %c0_174 = arith.constant 0 : index
    %c272 = arith.constant 272 : index
    %141 = vector.load %arg1[%c0_173, %c0_174, %c272] : memref<1x4x384xf32, #tpu.memory_space<vmem>>, vector<1x4x16xf32>
    %142 = vector.shape_cast %141 : vector<1x4x16xf32> to vector<4x16xf32>
    %c8_175 = arith.constant 8 : index
    %c240_176 = arith.constant 240 : index
    %143 = vector.load %arg6[%c8_175, %c240_176] : memref<36x256xf32, #tpu.memory_space<vmem>>, vector<4x16xf32>
    tpu.vector_store %arg6[%c8_175, %c240_176], %142 {strides = array<i32>} : memref<36x256xf32, #tpu.memory_space<vmem>>, vector<4x16xf32>,
    %c0_177 = arith.constant 0 : index
    %c0_178 = arith.constant 0 : index
    %c18_179 = arith.constant 18 : index
    %144 = vector.load %arg1[%c0_177, %c0_178, %c18_179] : memref<1x4x384xf32, #tpu.memory_space<vmem>>, vector<1x4x16xf32>
    %145 = vector.shape_cast %144 : vector<1x4x16xf32> to vector<4x16xf32>
    %c12 = arith.constant 12 : index
    %c0_180 = arith.constant 0 : index
    %146 = vector.load %arg6[%c12, %c0_180] : memref<36x256xf32, #tpu.memory_space<vmem>>, vector<4x16xf32>
    tpu.vector_store %arg6[%c12, %c0_180], %145 {strides = array<i32>} : memref<36x256xf32, #tpu.memory_space<vmem>>, vector<4x16xf32>,
    %c0_181 = arith.constant 0 : index
    %c0_182 = arith.constant 0 : index
    %c36_183 = arith.constant 36 : index
    %147 = vector.load %arg1[%c0_181, %c0_182, %c36_183] : memref<1x4x384xf32, #tpu.memory_space<vmem>>, vector<1x4x16xf32>
    %148 = vector.shape_cast %147 : vector<1x4x16xf32> to vector<4x16xf32>
    %c12_184 = arith.constant 12 : index
    %c16_185 = arith.constant 16 : index
    %149 = vector.load %arg6[%c12_184, %c16_185] : memref<36x256xf32, #tpu.memory_space<vmem>>, vector<4x16xf32>
    tpu.vector_store %arg6[%c12_184, %c16_185], %148 {strides = array<i32>} : memref<36x256xf32, #tpu.memory_space<vmem>>, vector<4x16xf32>,
    %c0_186 = arith.constant 0 : index
    %c0_187 = arith.constant 0 : index
    %c54_188 = arith.constant 54 : index
    %150 = vector.load %arg1[%c0_186, %c0_187, %c54_188] : memref<1x4x384xf32, #tpu.memory_space<vmem>>, vector<1x4x16xf32>
    %151 = vector.shape_cast %150 : vector<1x4x16xf32> to vector<4x16xf32>
    %c12_189 = arith.constant 12 : index
    %c32_190 = arith.constant 32 : index
    %152 = vector.load %arg6[%c12_189, %c32_190] : memref<36x256xf32, #tpu.memory_space<vmem>>, vector<4x16xf32>
    tpu.vector_store %arg6[%c12_189, %c32_190], %151 {strides = array<i32>} : memref<36x256xf32, #tpu.memory_space<vmem>>, vector<4x16xf32>,
    %c0_191 = arith.constant 0 : index
    %c0_192 = arith.constant 0 : index
    %c72_193 = arith.constant 72 : index
    %153 = vector.load %arg1[%c0_191, %c0_192, %c72_193] : memref<1x4x384xf32, #tpu.memory_space<vmem>>, vector<1x4x16xf32>
    %154 = vector.shape_cast %153 : vector<1x4x16xf32> to vector<4x16xf32>
    %c12_194 = arith.constant 12 : index
    %c48_195 = arith.constant 48 : index
    %155 = vector.load %arg6[%c12_194, %c48_195] : memref<36x256xf32, #tpu.memory_space<vmem>>, vector<4x16xf32>
    tpu.vector_store %arg6[%c12_194, %c48_195], %154 {strides = array<i32>} : memref<36x256xf32, #tpu.memory_space<vmem>>, vector<4x16xf32>,
    %c0_196 = arith.constant 0 : index
    %c0_197 = arith.constant 0 : index
    %c90_198 = arith.constant 90 : index
    %156 = vector.load %arg1[%c0_196, %c0_197, %c90_198] : memref<1x4x384xf32, #tpu.memory_space<vmem>>, vector<1x4x16xf32>
    %157 = vector.shape_cast %156 : vector<1x4x16xf32> to vector<4x16xf32>
    %c12_199 = arith.constant 12 : index
    %c64_200 = arith.constant 64 : index
    %158 = vector.load %arg6[%c12_199, %c64_200] : memref<36x256xf32, #tpu.memory_space<vmem>>, vector<4x16xf32>
    tpu.vector_store %arg6[%c12_199, %c64_200], %157 {strides = array<i32>} : memref<36x256xf32, #tpu.memory_space<vmem>>, vector<4x16xf32>,
    %c0_201 = arith.constant 0 : index
    %c0_202 = arith.constant 0 : index
    %c108_203 = arith.constant 108 : index
    %159 = vector.load %arg1[%c0_201, %c0_202, %c108_203] : memref<1x4x384xf32, #tpu.memory_space<vmem>>, vector<1x4x16xf32>
    %160 = vector.shape_cast %159 : vector<1x4x16xf32> to vector<4x16xf32>
    %c12_204 = arith.constant 12 : index
    %c80_205 = arith.constant 80 : index
    %161 = vector.load %arg6[%c12_204, %c80_205] : memref<36x256xf32, #tpu.memory_space<vmem>>, vector<4x16xf32>
    tpu.vector_store %arg6[%c12_204, %c80_205], %160 {strides = array<i32>} : memref<36x256xf32, #tpu.memory_space<vmem>>, vector<4x16xf32>,
    %c0_206 = arith.constant 0 : index
    %c0_207 = arith.constant 0 : index
    %c126_208 = arith.constant 126 : index
    %162 = vector.load %arg1[%c0_206, %c0_207, %c126_208] : memref<1x4x384xf32, #tpu.memory_space<vmem>>, vector<1x4x16xf32>
    %163 = vector.shape_cast %162 : vector<1x4x16xf32> to vector<4x16xf32>
    %c12_209 = arith.constant 12 : index
    %c96_210 = arith.constant 96 : index
    %164 = vector.load %arg6[%c12_209, %c96_210] : memref<36x256xf32, #tpu.memory_space<vmem>>, vector<4x16xf32>
    tpu.vector_store %arg6[%c12_209, %c96_210], %163 {strides = array<i32>} : memref<36x256xf32, #tpu.memory_space<vmem>>, vector<4x16xf32>,
    %c0_211 = arith.constant 0 : index
    %c0_212 = arith.constant 0 : index
    %c144_213 = arith.constant 144 : index
    %165 = vector.load %arg1[%c0_211, %c0_212, %c144_213] : memref<1x4x384xf32, #tpu.memory_space<vmem>>, vector<1x4x16xf32>
    %166 = vector.shape_cast %165 : vector<1x4x16xf32> to vector<4x16xf32>
    %c12_214 = arith.constant 12 : index
    %c112_215 = arith.constant 112 : index
    %167 = vector.load %arg6[%c12_214, %c112_215] : memref<36x256xf32, #tpu.memory_space<vmem>>, vector<4x16xf32>
    tpu.vector_store %arg6[%c12_214, %c112_215], %166 {strides = array<i32>} : memref<36x256xf32, #tpu.memory_space<vmem>>, vector<4x16xf32>,
    %c0_216 = arith.constant 0 : index
    %c0_217 = arith.constant 0 : index
    %c162_218 = arith.constant 162 : index
    %168 = vector.load %arg1[%c0_216, %c0_217, %c162_218] : memref<1x4x384xf32, #tpu.memory_space<vmem>>, vector<1x4x16xf32>
    %169 = vector.shape_cast %168 : vector<1x4x16xf32> to vector<4x16xf32>
    %c12_219 = arith.constant 12 : index
    %c128_220 = arith.constant 128 : index
    %170 = vector.load %arg6[%c12_219, %c128_220] : memref<36x256xf32, #tpu.memory_space<vmem>>, vector<4x16xf32>
    tpu.vector_store %arg6[%c12_219, %c128_220], %169 {strides = array<i32>} : memref<36x256xf32, #tpu.memory_space<vmem>>, vector<4x16xf32>,
    %c0_221 = arith.constant 0 : index
    %c0_222 = arith.constant 0 : index
    %c180_223 = arith.constant 180 : index
    %171 = vector.load %arg1[%c0_221, %c0_222, %c180_223] : memref<1x4x384xf32, #tpu.memory_space<vmem>>, vector<1x4x16xf32>
    %172 = vector.shape_cast %171 : vector<1x4x16xf32> to vector<4x16xf32>
    %c12_224 = arith.constant 12 : index
    %c144_225 = arith.constant 144 : index
    %173 = vector.load %arg6[%c12_224, %c144_225] : memref<36x256xf32, #tpu.memory_space<vmem>>, vector<4x16xf32>
    tpu.vector_store %arg6[%c12_224, %c144_225], %172 {strides = array<i32>} : memref<36x256xf32, #tpu.memory_space<vmem>>, vector<4x16xf32>,
    %c0_226 = arith.constant 0 : index
    %c0_227 = arith.constant 0 : index
    %c198_228 = arith.constant 198 : index
    %174 = vector.load %arg1[%c0_226, %c0_227, %c198_228] : memref<1x4x384xf32, #tpu.memory_space<vmem>>, vector<1x4x16xf32>
    %175 = vector.shape_cast %174 : vector<1x4x16xf32> to vector<4x16xf32>
    %c12_229 = arith.constant 12 : index
    %c160_230 = arith.constant 160 : index
    %176 = vector.load %arg6[%c12_229, %c160_230] : memref<36x256xf32, #tpu.memory_space<vmem>>, vector<4x16xf32>
    tpu.vector_store %arg6[%c12_229, %c160_230], %175 {strides = array<i32>} : memref<36x256xf32, #tpu.memory_space<vmem>>, vector<4x16xf32>,
    %c0_231 = arith.constant 0 : index
    %c0_232 = arith.constant 0 : index
    %c216_233 = arith.constant 216 : index
    %177 = vector.load %arg1[%c0_231, %c0_232, %c216_233] : memref<1x4x384xf32, #tpu.memory_space<vmem>>, vector<1x4x16xf32>
    %178 = vector.shape_cast %177 : vector<1x4x16xf32> to vector<4x16xf32>
    %c12_234 = arith.constant 12 : index
    %c176_235 = arith.constant 176 : index
    %179 = vector.load %arg6[%c12_234, %c176_235] : memref<36x256xf32, #tpu.memory_space<vmem>>, vector<4x16xf32>
    tpu.vector_store %arg6[%c12_234, %c176_235], %178 {strides = array<i32>} : memref<36x256xf32, #tpu.memory_space<vmem>>, vector<4x16xf32>,
    %c0_236 = arith.constant 0 : index
    %c0_237 = arith.constant 0 : index
    %c234_238 = arith.constant 234 : index
    %180 = vector.load %arg1[%c0_236, %c0_237, %c234_238] : memref<1x4x384xf32, #tpu.memory_space<vmem>>, vector<1x4x16xf32>
    %181 = vector.shape_cast %180 : vector<1x4x16xf32> to vector<4x16xf32>
    %c12_239 = arith.constant 12 : index
    %c192_240 = arith.constant 192 : index
    %182 = vector.load %arg6[%c12_239, %c192_240] : memref<36x256xf32, #tpu.memory_space<vmem>>, vector<4x16xf32>
    tpu.vector_store %arg6[%c12_239, %c192_240], %181 {strides = array<i32>} : memref<36x256xf32, #tpu.memory_space<vmem>>, vector<4x16xf32>,
    %c0_241 = arith.constant 0 : index
    %c0_242 = arith.constant 0 : index
    %c252_243 = arith.constant 252 : index
    %183 = vector.load %arg1[%c0_241, %c0_242, %c252_243] : memref<1x4x384xf32, #tpu.memory_space<vmem>>, vector<1x4x16xf32>
    %184 = vector.shape_cast %183 : vector<1x4x16xf32> to vector<4x16xf32>
    %c12_244 = arith.constant 12 : index
    %c208_245 = arith.constant 208 : index
    %185 = vector.load %arg6[%c12_244, %c208_245] : memref<36x256xf32, #tpu.memory_space<vmem>>, vector<4x16xf32>
    tpu.vector_store %arg6[%c12_244, %c208_245], %184 {strides = array<i32>} : memref<36x256xf32, #tpu.memory_space<vmem>>, vector<4x16xf32>,
    %c0_246 = arith.constant 0 : index
    %c0_247 = arith.constant 0 : index
    %c270_248 = arith.constant 270 : index
    %186 = vector.load %arg1[%c0_246, %c0_247, %c270_248] : memref<1x4x384xf32, #tpu.memory_space<vmem>>, vector<1x4x16xf32>
    %187 = vector.shape_cast %186 : vector<1x4x16xf32> to vector<4x16xf32>
    %c12_249 = arith.constant 12 : index
    %c224_250 = arith.constant 224 : index
    %188 = vector.load %arg6[%c12_249, %c224_250] : memref<36x256xf32, #tpu.memory_space<vmem>>, vector<4x16xf32>
    tpu.vector_store %arg6[%c12_249, %c224_250], %187 {strides = array<i32>} : memref<36x256xf32, #tpu.memory_space<vmem>>, vector<4x16xf32>,
    %c0_251 = arith.constant 0 : index
    %c0_252 = arith.constant 0 : index
    %c288 = arith.constant 288 : index
    %189 = vector.load %arg1[%c0_251, %c0_252, %c288] : memref<1x4x384xf32, #tpu.memory_space<vmem>>, vector<1x4x16xf32>
    %190 = vector.shape_cast %189 : vector<1x4x16xf32> to vector<4x16xf32>
    %c12_253 = arith.constant 12 : index
    %c240_254 = arith.constant 240 : index
    %191 = vector.load %arg6[%c12_253, %c240_254] : memref<36x256xf32, #tpu.memory_space<vmem>>, vector<4x16xf32>
    tpu.vector_store %arg6[%c12_253, %c240_254], %190 {strides = array<i32>} : memref<36x256xf32, #tpu.memory_space<vmem>>, vector<4x16xf32>,
    %c0_255 = arith.constant 0 : index
    %c0_256 = arith.constant 0 : index
    %c19_257 = arith.constant 19 : index
    %192 = vector.load %arg1[%c0_255, %c0_256, %c19_257] : memref<1x4x384xf32, #tpu.memory_space<vmem>>, vector<1x4x16xf32>
    %193 = vector.shape_cast %192 : vector<1x4x16xf32> to vector<4x16xf32>
    %c16_258 = arith.constant 16 : index
    %c0_259 = arith.constant 0 : index
    %194 = vector.load %arg6[%c16_258, %c0_259] : memref<36x256xf32, #tpu.memory_space<vmem>>, vector<4x16xf32>
    tpu.vector_store %arg6[%c16_258, %c0_259], %193 {strides = array<i32>} : memref<36x256xf32, #tpu.memory_space<vmem>>, vector<4x16xf32>,
    %c0_260 = arith.constant 0 : index
    %c0_261 = arith.constant 0 : index
    %c37_262 = arith.constant 37 : index
    %195 = vector.load %arg1[%c0_260, %c0_261, %c37_262] : memref<1x4x384xf32, #tpu.memory_space<vmem>>, vector<1x4x16xf32>
    %196 = vector.shape_cast %195 : vector<1x4x16xf32> to vector<4x16xf32>
    %c16_263 = arith.constant 16 : index
    %c16_264 = arith.constant 16 : index
    %197 = vector.load %arg6[%c16_263, %c16_264] : memref<36x256xf32, #tpu.memory_space<vmem>>, vector<4x16xf32>
    tpu.vector_store %arg6[%c16_263, %c16_264], %196 {strides = array<i32>} : memref<36x256xf32, #tpu.memory_space<vmem>>, vector<4x16xf32>,
    %c0_265 = arith.constant 0 : index
    %c0_266 = arith.constant 0 : index
    %c55_267 = arith.constant 55 : index
    %198 = vector.load %arg1[%c0_265, %c0_266, %c55_267] : memref<1x4x384xf32, #tpu.memory_space<vmem>>, vector<1x4x16xf32>
    %199 = vector.shape_cast %198 : vector<1x4x16xf32> to vector<4x16xf32>
    %c16_268 = arith.constant 16 : index
    %c32_269 = arith.constant 32 : index
    %200 = vector.load %arg6[%c16_268, %c32_269] : memref<36x256xf32, #tpu.memory_space<vmem>>, vector<4x16xf32>
    tpu.vector_store %arg6[%c16_268, %c32_269], %199 {strides = array<i32>} : memref<36x256xf32, #tpu.memory_space<vmem>>, vector<4x16xf32>,
    %c0_270 = arith.constant 0 : index
    %c0_271 = arith.constant 0 : index
    %c73_272 = arith.constant 73 : index
    %201 = vector.load %arg1[%c0_270, %c0_271, %c73_272] : memref<1x4x384xf32, #tpu.memory_space<vmem>>, vector<1x4x16xf32>
    %202 = vector.shape_cast %201 : vector<1x4x16xf32> to vector<4x16xf32>
    %c16_273 = arith.constant 16 : index
    %c48_274 = arith.constant 48 : index
    %203 = vector.load %arg6[%c16_273, %c48_274] : memref<36x256xf32, #tpu.memory_space<vmem>>, vector<4x16xf32>
    tpu.vector_store %arg6[%c16_273, %c48_274], %202 {strides = array<i32>} : memref<36x256xf32, #tpu.memory_space<vmem>>, vector<4x16xf32>,
    %c0_275 = arith.constant 0 : index
    %c0_276 = arith.constant 0 : index
    %c91_277 = arith.constant 91 : index
    %204 = vector.load %arg1[%c0_275, %c0_276, %c91_277] : memref<1x4x384xf32, #tpu.memory_space<vmem>>, vector<1x4x16xf32>
    %205 = vector.shape_cast %204 : vector<1x4x16xf32> to vector<4x16xf32>
    %c16_278 = arith.constant 16 : index
    %c64_279 = arith.constant 64 : index
    %206 = vector.load %arg6[%c16_278, %c64_279] : memref<36x256xf32, #tpu.memory_space<vmem>>, vector<4x16xf32>
    tpu.vector_store %arg6[%c16_278, %c64_279], %205 {strides = array<i32>} : memref<36x256xf32, #tpu.memory_space<vmem>>, vector<4x16xf32>,
    %c0_280 = arith.constant 0 : index
    %c0_281 = arith.constant 0 : index
    %c109_282 = arith.constant 109 : index
    %207 = vector.load %arg1[%c0_280, %c0_281, %c109_282] : memref<1x4x384xf32, #tpu.memory_space<vmem>>, vector<1x4x16xf32>
    %208 = vector.shape_cast %207 : vector<1x4x16xf32> to vector<4x16xf32>
    %c16_283 = arith.constant 16 : index
    %c80_284 = arith.constant 80 : index
    %209 = vector.load %arg6[%c16_283, %c80_284] : memref<36x256xf32, #tpu.memory_space<vmem>>, vector<4x16xf32>
    tpu.vector_store %arg6[%c16_283, %c80_284], %208 {strides = array<i32>} : memref<36x256xf32, #tpu.memory_space<vmem>>, vector<4x16xf32>,
    %c0_285 = arith.constant 0 : index
    %c0_286 = arith.constant 0 : index
    %c127_287 = arith.constant 127 : index
    %210 = vector.load %arg1[%c0_285, %c0_286, %c127_287] : memref<1x4x384xf32, #tpu.memory_space<vmem>>, vector<1x4x16xf32>
    %211 = vector.shape_cast %210 : vector<1x4x16xf32> to vector<4x16xf32>
    %c16_288 = arith.constant 16 : index
    %c96_289 = arith.constant 96 : index
    %212 = vector.load %arg6[%c16_288, %c96_289] : memref<36x256xf32, #tpu.memory_space<vmem>>, vector<4x16xf32>
    tpu.vector_store %arg6[%c16_288, %c96_289], %211 {strides = array<i32>} : memref<36x256xf32, #tpu.memory_space<vmem>>, vector<4x16xf32>,
    %c0_290 = arith.constant 0 : index
    %c0_291 = arith.constant 0 : index
    %c145_292 = arith.constant 145 : index
    %213 = vector.load %arg1[%c0_290, %c0_291, %c145_292] : memref<1x4x384xf32, #tpu.memory_space<vmem>>, vector<1x4x16xf32>
    %214 = vector.shape_cast %213 : vector<1x4x16xf32> to vector<4x16xf32>
    %c16_293 = arith.constant 16 : index
    %c112_294 = arith.constant 112 : index
    %215 = vector.load %arg6[%c16_293, %c112_294] : memref<36x256xf32, #tpu.memory_space<vmem>>, vector<4x16xf32>
    tpu.vector_store %arg6[%c16_293, %c112_294], %214 {strides = array<i32>} : memref<36x256xf32, #tpu.memory_space<vmem>>, vector<4x16xf32>,
    %c0_295 = arith.constant 0 : index
    %c0_296 = arith.constant 0 : index
    %c163_297 = arith.constant 163 : index
    %216 = vector.load %arg1[%c0_295, %c0_296, %c163_297] : memref<1x4x384xf32, #tpu.memory_space<vmem>>, vector<1x4x16xf32>
    %217 = vector.shape_cast %216 : vector<1x4x16xf32> to vector<4x16xf32>
    %c16_298 = arith.constant 16 : index
    %c128_299 = arith.constant 128 : index
    %218 = vector.load %arg6[%c16_298, %c128_299] : memref<36x256xf32, #tpu.memory_space<vmem>>, vector<4x16xf32>
    tpu.vector_store %arg6[%c16_298, %c128_299], %217 {strides = array<i32>} : memref<36x256xf32, #tpu.memory_space<vmem>>, vector<4x16xf32>,
    %c0_300 = arith.constant 0 : index
    %c0_301 = arith.constant 0 : index
    %c181_302 = arith.constant 181 : index
    %219 = vector.load %arg1[%c0_300, %c0_301, %c181_302] : memref<1x4x384xf32, #tpu.memory_space<vmem>>, vector<1x4x16xf32>
    %220 = vector.shape_cast %219 : vector<1x4x16xf32> to vector<4x16xf32>
    %c16_303 = arith.constant 16 : index
    %c144_304 = arith.constant 144 : index
    %221 = vector.load %arg6[%c16_303, %c144_304] : memref<36x256xf32, #tpu.memory_space<vmem>>, vector<4x16xf32>
    tpu.vector_store %arg6[%c16_303, %c144_304], %220 {strides = array<i32>} : memref<36x256xf32, #tpu.memory_space<vmem>>, vector<4x16xf32>,
    %c0_305 = arith.constant 0 : index
    %c0_306 = arith.constant 0 : index
    %c199_307 = arith.constant 199 : index
    %222 = vector.load %arg1[%c0_305, %c0_306, %c199_307] : memref<1x4x384xf32, #tpu.memory_space<vmem>>, vector<1x4x16xf32>
    %223 = vector.shape_cast %222 : vector<1x4x16xf32> to vector<4x16xf32>
    %c16_308 = arith.constant 16 : index
    %c160_309 = arith.constant 160 : index
    %224 = vector.load %arg6[%c16_308, %c160_309] : memref<36x256xf32, #tpu.memory_space<vmem>>, vector<4x16xf32>
    tpu.vector_store %arg6[%c16_308, %c160_309], %223 {strides = array<i32>} : memref<36x256xf32, #tpu.memory_space<vmem>>, vector<4x16xf32>,
    %c0_310 = arith.constant 0 : index
    %c0_311 = arith.constant 0 : index
    %c217_312 = arith.constant 217 : index
    %225 = vector.load %arg1[%c0_310, %c0_311, %c217_312] : memref<1x4x384xf32, #tpu.memory_space<vmem>>, vector<1x4x16xf32>
    %226 = vector.shape_cast %225 : vector<1x4x16xf32> to vector<4x16xf32>
    %c16_313 = arith.constant 16 : index
    %c176_314 = arith.constant 176 : index
    %227 = vector.load %arg6[%c16_313, %c176_314] : memref<36x256xf32, #tpu.memory_space<vmem>>, vector<4x16xf32>
    tpu.vector_store %arg6[%c16_313, %c176_314], %226 {strides = array<i32>} : memref<36x256xf32, #tpu.memory_space<vmem>>, vector<4x16xf32>,
    %c0_315 = arith.constant 0 : index
    %c0_316 = arith.constant 0 : index
    %c235_317 = arith.constant 235 : index
    %228 = vector.load %arg1[%c0_315, %c0_316, %c235_317] : memref<1x4x384xf32, #tpu.memory_space<vmem>>, vector<1x4x16xf32>
    %229 = vector.shape_cast %228 : vector<1x4x16xf32> to vector<4x16xf32>
    %c16_318 = arith.constant 16 : index
    %c192_319 = arith.constant 192 : index
    %230 = vector.load %arg6[%c16_318, %c192_319] : memref<36x256xf32, #tpu.memory_space<vmem>>, vector<4x16xf32>
    tpu.vector_store %arg6[%c16_318, %c192_319], %229 {strides = array<i32>} : memref<36x256xf32, #tpu.memory_space<vmem>>, vector<4x16xf32>,
    %c0_320 = arith.constant 0 : index
    %c0_321 = arith.constant 0 : index
    %c253_322 = arith.constant 253 : index
    %231 = vector.load %arg1[%c0_320, %c0_321, %c253_322] : memref<1x4x384xf32, #tpu.memory_space<vmem>>, vector<1x4x16xf32>
    %232 = vector.shape_cast %231 : vector<1x4x16xf32> to vector<4x16xf32>
    %c16_323 = arith.constant 16 : index
    %c208_324 = arith.constant 208 : index
    %233 = vector.load %arg6[%c16_323, %c208_324] : memref<36x256xf32, #tpu.memory_space<vmem>>, vector<4x16xf32>
    tpu.vector_store %arg6[%c16_323, %c208_324], %232 {strides = array<i32>} : memref<36x256xf32, #tpu.memory_space<vmem>>, vector<4x16xf32>,
    %c0_325 = arith.constant 0 : index
    %c0_326 = arith.constant 0 : index
    %c271_327 = arith.constant 271 : index
    %234 = vector.load %arg1[%c0_325, %c0_326, %c271_327] : memref<1x4x384xf32, #tpu.memory_space<vmem>>, vector<1x4x16xf32>
    %235 = vector.shape_cast %234 : vector<1x4x16xf32> to vector<4x16xf32>
    %c16_328 = arith.constant 16 : index
    %c224_329 = arith.constant 224 : index
    %236 = vector.load %arg6[%c16_328, %c224_329] : memref<36x256xf32, #tpu.memory_space<vmem>>, vector<4x16xf32>
    tpu.vector_store %arg6[%c16_328, %c224_329], %235 {strides = array<i32>} : memref<36x256xf32, #tpu.memory_space<vmem>>, vector<4x16xf32>,
    %c0_330 = arith.constant 0 : index
    %c0_331 = arith.constant 0 : index
    %c289 = arith.constant 289 : index
    %237 = vector.load %arg1[%c0_330, %c0_331, %c289] : memref<1x4x384xf32, #tpu.memory_space<vmem>>, vector<1x4x16xf32>
    %238 = vector.shape_cast %237 : vector<1x4x16xf32> to vector<4x16xf32>
    %c16_332 = arith.constant 16 : index
    %c240_333 = arith.constant 240 : index
    %239 = vector.load %arg6[%c16_332, %c240_333] : memref<36x256xf32, #tpu.memory_space<vmem>>, vector<4x16xf32>
    tpu.vector_store %arg6[%c16_332, %c240_333], %238 {strides = array<i32>} : memref<36x256xf32, #tpu.memory_space<vmem>>, vector<4x16xf32>,
    %c0_334 = arith.constant 0 : index
    %c0_335 = arith.constant 0 : index
    %c20_336 = arith.constant 20 : index
    %240 = vector.load %arg1[%c0_334, %c0_335, %c20_336] : memref<1x4x384xf32, #tpu.memory_space<vmem>>, vector<1x4x16xf32>
    %241 = vector.shape_cast %240 : vector<1x4x16xf32> to vector<4x16xf32>
    %c20_337 = arith.constant 20 : index
    %c0_338 = arith.constant 0 : index
    %242 = vector.load %arg6[%c20_337, %c0_338] : memref<36x256xf32, #tpu.memory_space<vmem>>, vector<4x16xf32>
    tpu.vector_store %arg6[%c20_337, %c0_338], %241 {strides = array<i32>} : memref<36x256xf32, #tpu.memory_space<vmem>>, vector<4x16xf32>,
    %c0_339 = arith.constant 0 : index
    %c0_340 = arith.constant 0 : index
    %c38_341 = arith.constant 38 : index
    %243 = vector.load %arg1[%c0_339, %c0_340, %c38_341] : memref<1x4x384xf32, #tpu.memory_space<vmem>>, vector<1x4x16xf32>
    %244 = vector.shape_cast %243 : vector<1x4x16xf32> to vector<4x16xf32>
    %c20_342 = arith.constant 20 : index
    %c16_343 = arith.constant 16 : index
    %245 = vector.load %arg6[%c20_342, %c16_343] : memref<36x256xf32, #tpu.memory_space<vmem>>, vector<4x16xf32>
    tpu.vector_store %arg6[%c20_342, %c16_343], %244 {strides = array<i32>} : memref<36x256xf32, #tpu.memory_space<vmem>>, vector<4x16xf32>,
    %c0_344 = arith.constant 0 : index
    %c0_345 = arith.constant 0 : index
    %c56_346 = arith.constant 56 : index
    %246 = vector.load %arg1[%c0_344, %c0_345, %c56_346] : memref<1x4x384xf32, #tpu.memory_space<vmem>>, vector<1x4x16xf32>
    %247 = vector.shape_cast %246 : vector<1x4x16xf32> to vector<4x16xf32>
    %c20_347 = arith.constant 20 : index
    %c32_348 = arith.constant 32 : index
    %248 = vector.load %arg6[%c20_347, %c32_348] : memref<36x256xf32, #tpu.memory_space<vmem>>, vector<4x16xf32>
    tpu.vector_store %arg6[%c20_347, %c32_348], %247 {strides = array<i32>} : memref<36x256xf32, #tpu.memory_space<vmem>>, vector<4x16xf32>,
    %c0_349 = arith.constant 0 : index
    %c0_350 = arith.constant 0 : index
    %c74_351 = arith.constant 74 : index
    %249 = vector.load %arg1[%c0_349, %c0_350, %c74_351] : memref<1x4x384xf32, #tpu.memory_space<vmem>>, vector<1x4x16xf32>
    %250 = vector.shape_cast %249 : vector<1x4x16xf32> to vector<4x16xf32>
    %c20_352 = arith.constant 20 : index
    %c48_353 = arith.constant 48 : index
    %251 = vector.load %arg6[%c20_352, %c48_353] : memref<36x256xf32, #tpu.memory_space<vmem>>, vector<4x16xf32>
    tpu.vector_store %arg6[%c20_352, %c48_353], %250 {strides = array<i32>} : memref<36x256xf32, #tpu.memory_space<vmem>>, vector<4x16xf32>,
    %c0_354 = arith.constant 0 : index
    %c0_355 = arith.constant 0 : index
    %c92_356 = arith.constant 92 : index
    %252 = vector.load %arg1[%c0_354, %c0_355, %c92_356] : memref<1x4x384xf32, #tpu.memory_space<vmem>>, vector<1x4x16xf32>
    %253 = vector.shape_cast %252 : vector<1x4x16xf32> to vector<4x16xf32>
    %c20_357 = arith.constant 20 : index
    %c64_358 = arith.constant 64 : index
    %254 = vector.load %arg6[%c20_357, %c64_358] : memref<36x256xf32, #tpu.memory_space<vmem>>, vector<4x16xf32>
    tpu.vector_store %arg6[%c20_357, %c64_358], %253 {strides = array<i32>} : memref<36x256xf32, #tpu.memory_space<vmem>>, vector<4x16xf32>,
    %c0_359 = arith.constant 0 : index
    %c0_360 = arith.constant 0 : index
    %c110_361 = arith.constant 110 : index
    %255 = vector.load %arg1[%c0_359, %c0_360, %c110_361] : memref<1x4x384xf32, #tpu.memory_space<vmem>>, vector<1x4x16xf32>
    %256 = vector.shape_cast %255 : vector<1x4x16xf32> to vector<4x16xf32>
    %c20_362 = arith.constant 20 : index
    %c80_363 = arith.constant 80 : index
    %257 = vector.load %arg6[%c20_362, %c80_363] : memref<36x256xf32, #tpu.memory_space<vmem>>, vector<4x16xf32>
    tpu.vector_store %arg6[%c20_362, %c80_363], %256 {strides = array<i32>} : memref<36x256xf32, #tpu.memory_space<vmem>>, vector<4x16xf32>,
    %c0_364 = arith.constant 0 : index
    %c0_365 = arith.constant 0 : index
    %c128_366 = arith.constant 128 : index
    %258 = vector.load %arg1[%c0_364, %c0_365, %c128_366] : memref<1x4x384xf32, #tpu.memory_space<vmem>>, vector<1x4x16xf32>
    %259 = vector.shape_cast %258 : vector<1x4x16xf32> to vector<4x16xf32>
    %c20_367 = arith.constant 20 : index
    %c96_368 = arith.constant 96 : index
    %260 = vector.load %arg6[%c20_367, %c96_368] : memref<36x256xf32, #tpu.memory_space<vmem>>, vector<4x16xf32>
    tpu.vector_store %arg6[%c20_367, %c96_368], %259 {strides = array<i32>} : memref<36x256xf32, #tpu.memory_space<vmem>>, vector<4x16xf32>,
    %c0_369 = arith.constant 0 : index
    %c0_370 = arith.constant 0 : index
    %c146_371 = arith.constant 146 : index
    %261 = vector.load %arg1[%c0_369, %c0_370, %c146_371] : memref<1x4x384xf32, #tpu.memory_space<vmem>>, vector<1x4x16xf32>
    %262 = vector.shape_cast %261 : vector<1x4x16xf32> to vector<4x16xf32>
    %c20_372 = arith.constant 20 : index
    %c112_373 = arith.constant 112 : index
    %263 = vector.load %arg6[%c20_372, %c112_373] : memref<36x256xf32, #tpu.memory_space<vmem>>, vector<4x16xf32>
    tpu.vector_store %arg6[%c20_372, %c112_373], %262 {strides = array<i32>} : memref<36x256xf32, #tpu.memory_space<vmem>>, vector<4x16xf32>,
    %c0_374 = arith.constant 0 : index
    %c0_375 = arith.constant 0 : index
    %c164_376 = arith.constant 164 : index
    %264 = vector.load %arg1[%c0_374, %c0_375, %c164_376] : memref<1x4x384xf32, #tpu.memory_space<vmem>>, vector<1x4x16xf32>
    %265 = vector.shape_cast %264 : vector<1x4x16xf32> to vector<4x16xf32>
    %c20_377 = arith.constant 20 : index
    %c128_378 = arith.constant 128 : index
    %266 = vector.load %arg6[%c20_377, %c128_378] : memref<36x256xf32, #tpu.memory_space<vmem>>, vector<4x16xf32>
    tpu.vector_store %arg6[%c20_377, %c128_378], %265 {strides = array<i32>} : memref<36x256xf32, #tpu.memory_space<vmem>>, vector<4x16xf32>,
    %c0_379 = arith.constant 0 : index
    %c0_380 = arith.constant 0 : index
    %c182_381 = arith.constant 182 : index
    %267 = vector.load %arg1[%c0_379, %c0_380, %c182_381] : memref<1x4x384xf32, #tpu.memory_space<vmem>>, vector<1x4x16xf32>
    %268 = vector.shape_cast %267 : vector<1x4x16xf32> to vector<4x16xf32>
    %c20_382 = arith.constant 20 : index
    %c144_383 = arith.constant 144 : index
    %269 = vector.load %arg6[%c20_382, %c144_383] : memref<36x256xf32, #tpu.memory_space<vmem>>, vector<4x16xf32>
    tpu.vector_store %arg6[%c20_382, %c144_383], %268 {strides = array<i32>} : memref<36x256xf32, #tpu.memory_space<vmem>>, vector<4x16xf32>,
    %c0_384 = arith.constant 0 : index
    %c0_385 = arith.constant 0 : index
    %c200_386 = arith.constant 200 : index
    %270 = vector.load %arg1[%c0_384, %c0_385, %c200_386] : memref<1x4x384xf32, #tpu.memory_space<vmem>>, vector<1x4x16xf32>
    %271 = vector.shape_cast %270 : vector<1x4x16xf32> to vector<4x16xf32>
    %c20_387 = arith.constant 20 : index
    %c160_388 = arith.constant 160 : index
    %272 = vector.load %arg6[%c20_387, %c160_388] : memref<36x256xf32, #tpu.memory_space<vmem>>, vector<4x16xf32>
    tpu.vector_store %arg6[%c20_387, %c160_388], %271 {strides = array<i32>} : memref<36x256xf32, #tpu.memory_space<vmem>>, vector<4x16xf32>,
    %c0_389 = arith.constant 0 : index
    %c0_390 = arith.constant 0 : index
    %c218_391 = arith.constant 218 : index
    %273 = vector.load %arg1[%c0_389, %c0_390, %c218_391] : memref<1x4x384xf32, #tpu.memory_space<vmem>>, vector<1x4x16xf32>
    %274 = vector.shape_cast %273 : vector<1x4x16xf32> to vector<4x16xf32>
    %c20_392 = arith.constant 20 : index
    %c176_393 = arith.constant 176 : index
    %275 = vector.load %arg6[%c20_392, %c176_393] : memref<36x256xf32, #tpu.memory_space<vmem>>, vector<4x16xf32>
    tpu.vector_store %arg6[%c20_392, %c176_393], %274 {strides = array<i32>} : memref<36x256xf32, #tpu.memory_space<vmem>>, vector<4x16xf32>,
    %c0_394 = arith.constant 0 : index
    %c0_395 = arith.constant 0 : index
    %c236_396 = arith.constant 236 : index
    %276 = vector.load %arg1[%c0_394, %c0_395, %c236_396] : memref<1x4x384xf32, #tpu.memory_space<vmem>>, vector<1x4x16xf32>
    %277 = vector.shape_cast %276 : vector<1x4x16xf32> to vector<4x16xf32>
    %c20_397 = arith.constant 20 : index
    %c192_398 = arith.constant 192 : index
    %278 = vector.load %arg6[%c20_397, %c192_398] : memref<36x256xf32, #tpu.memory_space<vmem>>, vector<4x16xf32>
    tpu.vector_store %arg6[%c20_397, %c192_398], %277 {strides = array<i32>} : memref<36x256xf32, #tpu.memory_space<vmem>>, vector<4x16xf32>,
    %c0_399 = arith.constant 0 : index
    %c0_400 = arith.constant 0 : index
    %c254_401 = arith.constant 254 : index
    %279 = vector.load %arg1[%c0_399, %c0_400, %c254_401] : memref<1x4x384xf32, #tpu.memory_space<vmem>>, vector<1x4x16xf32>
    %280 = vector.shape_cast %279 : vector<1x4x16xf32> to vector<4x16xf32>
    %c20_402 = arith.constant 20 : index
    %c208_403 = arith.constant 208 : index
    %281 = vector.load %arg6[%c20_402, %c208_403] : memref<36x256xf32, #tpu.memory_space<vmem>>, vector<4x16xf32>
    tpu.vector_store %arg6[%c20_402, %c208_403], %280 {strides = array<i32>} : memref<36x256xf32, #tpu.memory_space<vmem>>, vector<4x16xf32>,
    %c0_404 = arith.constant 0 : index
    %c0_405 = arith.constant 0 : index
    %c272_406 = arith.constant 272 : index
    %282 = vector.load %arg1[%c0_404, %c0_405, %c272_406] : memref<1x4x384xf32, #tpu.memory_space<vmem>>, vector<1x4x16xf32>
    %283 = vector.shape_cast %282 : vector<1x4x16xf32> to vector<4x16xf32>
    %c20_407 = arith.constant 20 : index
    %c224_408 = arith.constant 224 : index
    %284 = vector.load %arg6[%c20_407, %c224_408] : memref<36x256xf32, #tpu.memory_space<vmem>>, vector<4x16xf32>
    tpu.vector_store %arg6[%c20_407, %c224_408], %283 {strides = array<i32>} : memref<36x256xf32, #tpu.memory_space<vmem>>, vector<4x16xf32>,
    %c0_409 = arith.constant 0 : index
    %c0_410 = arith.constant 0 : index
    %c290 = arith.constant 290 : index
    %285 = vector.load %arg1[%c0_409, %c0_410, %c290] : memref<1x4x384xf32, #tpu.memory_space<vmem>>, vector<1x4x16xf32>
    %286 = vector.shape_cast %285 : vector<1x4x16xf32> to vector<4x16xf32>
    %c20_411 = arith.constant 20 : index
    %c240_412 = arith.constant 240 : index
    %287 = vector.load %arg6[%c20_411, %c240_412] : memref<36x256xf32, #tpu.memory_space<vmem>>, vector<4x16xf32>
    tpu.vector_store %arg6[%c20_411, %c240_412], %286 {strides = array<i32>} : memref<36x256xf32, #tpu.memory_space<vmem>>, vector<4x16xf32>,
    %c0_413 = arith.constant 0 : index
    %c0_414 = arith.constant 0 : index
    %c36_415 = arith.constant 36 : index
    %288 = vector.load %arg1[%c0_413, %c0_414, %c36_415] : memref<1x4x384xf32, #tpu.memory_space<vmem>>, vector<1x4x16xf32>
    %289 = vector.shape_cast %288 : vector<1x4x16xf32> to vector<4x16xf32>
    %c24 = arith.constant 24 : index
    %c0_416 = arith.constant 0 : index
    %290 = vector.load %arg6[%c24, %c0_416] : memref<36x256xf32, #tpu.memory_space<vmem>>, vector<4x16xf32>
    tpu.vector_store %arg6[%c24, %c0_416], %289 {strides = array<i32>} : memref<36x256xf32, #tpu.memory_space<vmem>>, vector<4x16xf32>,
    %c0_417 = arith.constant 0 : index
    %c0_418 = arith.constant 0 : index
    %c54_419 = arith.constant 54 : index
    %291 = vector.load %arg1[%c0_417, %c0_418, %c54_419] : memref<1x4x384xf32, #tpu.memory_space<vmem>>, vector<1x4x16xf32>
    %292 = vector.shape_cast %291 : vector<1x4x16xf32> to vector<4x16xf32>
    %c24_420 = arith.constant 24 : index
    %c16_421 = arith.constant 16 : index
    %293 = vector.load %arg6[%c24_420, %c16_421] : memref<36x256xf32, #tpu.memory_space<vmem>>, vector<4x16xf32>
    tpu.vector_store %arg6[%c24_420, %c16_421], %292 {strides = array<i32>} : memref<36x256xf32, #tpu.memory_space<vmem>>, vector<4x16xf32>,
    %c0_422 = arith.constant 0 : index
    %c0_423 = arith.constant 0 : index
    %c72_424 = arith.constant 72 : index
    %294 = vector.load %arg1[%c0_422, %c0_423, %c72_424] : memref<1x4x384xf32, #tpu.memory_space<vmem>>, vector<1x4x16xf32>
    %295 = vector.shape_cast %294 : vector<1x4x16xf32> to vector<4x16xf32>
    %c24_425 = arith.constant 24 : index
    %c32_426 = arith.constant 32 : index
    %296 = vector.load %arg6[%c24_425, %c32_426] : memref<36x256xf32, #tpu.memory_space<vmem>>, vector<4x16xf32>
    tpu.vector_store %arg6[%c24_425, %c32_426], %295 {strides = array<i32>} : memref<36x256xf32, #tpu.memory_space<vmem>>, vector<4x16xf32>,
    %c0_427 = arith.constant 0 : index
    %c0_428 = arith.constant 0 : index
    %c90_429 = arith.constant 90 : index
    %297 = vector.load %arg1[%c0_427, %c0_428, %c90_429] : memref<1x4x384xf32, #tpu.memory_space<vmem>>, vector<1x4x16xf32>
    %298 = vector.shape_cast %297 : vector<1x4x16xf32> to vector<4x16xf32>
    %c24_430 = arith.constant 24 : index
    %c48_431 = arith.constant 48 : index
    %299 = vector.load %arg6[%c24_430, %c48_431] : memref<36x256xf32, #tpu.memory_space<vmem>>, vector<4x16xf32>
    tpu.vector_store %arg6[%c24_430, %c48_431], %298 {strides = array<i32>} : memref<36x256xf32, #tpu.memory_space<vmem>>, vector<4x16xf32>,
    %c0_432 = arith.constant 0 : index
    %c0_433 = arith.constant 0 : index
    %c108_434 = arith.constant 108 : index
    %300 = vector.load %arg1[%c0_432, %c0_433, %c108_434] : memref<1x4x384xf32, #tpu.memory_space<vmem>>, vector<1x4x16xf32>
    %301 = vector.shape_cast %300 : vector<1x4x16xf32> to vector<4x16xf32>
    %c24_435 = arith.constant 24 : index
    %c64_436 = arith.constant 64 : index
    %302 = vector.load %arg6[%c24_435, %c64_436] : memref<36x256xf32, #tpu.memory_space<vmem>>, vector<4x16xf32>
    tpu.vector_store %arg6[%c24_435, %c64_436], %301 {strides = array<i32>} : memref<36x256xf32, #tpu.memory_space<vmem>>, vector<4x16xf32>,
    %c0_437 = arith.constant 0 : index
    %c0_438 = arith.constant 0 : index
    %c126_439 = arith.constant 126 : index
    %303 = vector.load %arg1[%c0_437, %c0_438, %c126_439] : memref<1x4x384xf32, #tpu.memory_space<vmem>>, vector<1x4x16xf32>
    %304 = vector.shape_cast %303 : vector<1x4x16xf32> to vector<4x16xf32>
    %c24_440 = arith.constant 24 : index
    %c80_441 = arith.constant 80 : index
    %305 = vector.load %arg6[%c24_440, %c80_441] : memref<36x256xf32, #tpu.memory_space<vmem>>, vector<4x16xf32>
    tpu.vector_store %arg6[%c24_440, %c80_441], %304 {strides = array<i32>} : memref<36x256xf32, #tpu.memory_space<vmem>>, vector<4x16xf32>,
    %c0_442 = arith.constant 0 : index
    %c0_443 = arith.constant 0 : index
    %c144_444 = arith.constant 144 : index
    %306 = vector.load %arg1[%c0_442, %c0_443, %c144_444] : memref<1x4x384xf32, #tpu.memory_space<vmem>>, vector<1x4x16xf32>
    %307 = vector.shape_cast %306 : vector<1x4x16xf32> to vector<4x16xf32>
    %c24_445 = arith.constant 24 : index
    %c96_446 = arith.constant 96 : index
    %308 = vector.load %arg6[%c24_445, %c96_446] : memref<36x256xf32, #tpu.memory_space<vmem>>, vector<4x16xf32>
    tpu.vector_store %arg6[%c24_445, %c96_446], %307 {strides = array<i32>} : memref<36x256xf32, #tpu.memory_space<vmem>>, vector<4x16xf32>,
    %c0_447 = arith.constant 0 : index
    %c0_448 = arith.constant 0 : index
    %c162_449 = arith.constant 162 : index
    %309 = vector.load %arg1[%c0_447, %c0_448, %c162_449] : memref<1x4x384xf32, #tpu.memory_space<vmem>>, vector<1x4x16xf32>
    %310 = vector.shape_cast %309 : vector<1x4x16xf32> to vector<4x16xf32>
    %c24_450 = arith.constant 24 : index
    %c112_451 = arith.constant 112 : index
    %311 = vector.load %arg6[%c24_450, %c112_451] : memref<36x256xf32, #tpu.memory_space<vmem>>, vector<4x16xf32>
    tpu.vector_store %arg6[%c24_450, %c112_451], %310 {strides = array<i32>} : memref<36x256xf32, #tpu.memory_space<vmem>>, vector<4x16xf32>,
    %c0_452 = arith.constant 0 : index
    %c0_453 = arith.constant 0 : index
    %c180_454 = arith.constant 180 : index
    %312 = vector.load %arg1[%c0_452, %c0_453, %c180_454] : memref<1x4x384xf32, #tpu.memory_space<vmem>>, vector<1x4x16xf32>
    %313 = vector.shape_cast %312 : vector<1x4x16xf32> to vector<4x16xf32>
    %c24_455 = arith.constant 24 : index
    %c128_456 = arith.constant 128 : index
    %314 = vector.load %arg6[%c24_455, %c128_456] : memref<36x256xf32, #tpu.memory_space<vmem>>, vector<4x16xf32>
    tpu.vector_store %arg6[%c24_455, %c128_456], %313 {strides = array<i32>} : memref<36x256xf32, #tpu.memory_space<vmem>>, vector<4x16xf32>,
    %c0_457 = arith.constant 0 : index
    %c0_458 = arith.constant 0 : index
    %c198_459 = arith.constant 198 : index
    %315 = vector.load %arg1[%c0_457, %c0_458, %c198_459] : memref<1x4x384xf32, #tpu.memory_space<vmem>>, vector<1x4x16xf32>
    %316 = vector.shape_cast %315 : vector<1x4x16xf32> to vector<4x16xf32>
    %c24_460 = arith.constant 24 : index
    %c144_461 = arith.constant 144 : index
    %317 = vector.load %arg6[%c24_460, %c144_461] : memref<36x256xf32, #tpu.memory_space<vmem>>, vector<4x16xf32>
    tpu.vector_store %arg6[%c24_460, %c144_461], %316 {strides = array<i32>} : memref<36x256xf32, #tpu.memory_space<vmem>>, vector<4x16xf32>,
    %c0_462 = arith.constant 0 : index
    %c0_463 = arith.constant 0 : index
    %c216_464 = arith.constant 216 : index
    %318 = vector.load %arg1[%c0_462, %c0_463, %c216_464] : memref<1x4x384xf32, #tpu.memory_space<vmem>>, vector<1x4x16xf32>
    %319 = vector.shape_cast %318 : vector<1x4x16xf32> to vector<4x16xf32>
    %c24_465 = arith.constant 24 : index
    %c160_466 = arith.constant 160 : index
    %320 = vector.load %arg6[%c24_465, %c160_466] : memref<36x256xf32, #tpu.memory_space<vmem>>, vector<4x16xf32>
    tpu.vector_store %arg6[%c24_465, %c160_466], %319 {strides = array<i32>} : memref<36x256xf32, #tpu.memory_space<vmem>>, vector<4x16xf32>,
    %c0_467 = arith.constant 0 : index
    %c0_468 = arith.constant 0 : index
    %c234_469 = arith.constant 234 : index
    %321 = vector.load %arg1[%c0_467, %c0_468, %c234_469] : memref<1x4x384xf32, #tpu.memory_space<vmem>>, vector<1x4x16xf32>
    %322 = vector.shape_cast %321 : vector<1x4x16xf32> to vector<4x16xf32>
    %c24_470 = arith.constant 24 : index
    %c176_471 = arith.constant 176 : index
    %323 = vector.load %arg6[%c24_470, %c176_471] : memref<36x256xf32, #tpu.memory_space<vmem>>, vector<4x16xf32>
    tpu.vector_store %arg6[%c24_470, %c176_471], %322 {strides = array<i32>} : memref<36x256xf32, #tpu.memory_space<vmem>>, vector<4x16xf32>,
    %c0_472 = arith.constant 0 : index
    %c0_473 = arith.constant 0 : index
    %c252_474 = arith.constant 252 : index
    %324 = vector.load %arg1[%c0_472, %c0_473, %c252_474] : memref<1x4x384xf32, #tpu.memory_space<vmem>>, vector<1x4x16xf32>
    %325 = vector.shape_cast %324 : vector<1x4x16xf32> to vector<4x16xf32>
    %c24_475 = arith.constant 24 : index
    %c192_476 = arith.constant 192 : index
    %326 = vector.load %arg6[%c24_475, %c192_476] : memref<36x256xf32, #tpu.memory_space<vmem>>, vector<4x16xf32>
    tpu.vector_store %arg6[%c24_475, %c192_476], %325 {strides = array<i32>} : memref<36x256xf32, #tpu.memory_space<vmem>>, vector<4x16xf32>,
    %c0_477 = arith.constant 0 : index
    %c0_478 = arith.constant 0 : index
    %c270_479 = arith.constant 270 : index
    %327 = vector.load %arg1[%c0_477, %c0_478, %c270_479] : memref<1x4x384xf32, #tpu.memory_space<vmem>>, vector<1x4x16xf32>
    %328 = vector.shape_cast %327 : vector<1x4x16xf32> to vector<4x16xf32>
    %c24_480 = arith.constant 24 : index
    %c208_481 = arith.constant 208 : index
    %329 = vector.load %arg6[%c24_480, %c208_481] : memref<36x256xf32, #tpu.memory_space<vmem>>, vector<4x16xf32>
    tpu.vector_store %arg6[%c24_480, %c208_481], %328 {strides = array<i32>} : memref<36x256xf32, #tpu.memory_space<vmem>>, vector<4x16xf32>,
    %c0_482 = arith.constant 0 : index
    %c0_483 = arith.constant 0 : index
    %c288_484 = arith.constant 288 : index
    %330 = vector.load %arg1[%c0_482, %c0_483, %c288_484] : memref<1x4x384xf32, #tpu.memory_space<vmem>>, vector<1x4x16xf32>
    %331 = vector.shape_cast %330 : vector<1x4x16xf32> to vector<4x16xf32>
    %c24_485 = arith.constant 24 : index
    %c224_486 = arith.constant 224 : index
    %332 = vector.load %arg6[%c24_485, %c224_486] : memref<36x256xf32, #tpu.memory_space<vmem>>, vector<4x16xf32>
    tpu.vector_store %arg6[%c24_485, %c224_486], %331 {strides = array<i32>} : memref<36x256xf32, #tpu.memory_space<vmem>>, vector<4x16xf32>,
    %c0_487 = arith.constant 0 : index
    %c0_488 = arith.constant 0 : index
    %c306 = arith.constant 306 : index
    %333 = vector.load %arg1[%c0_487, %c0_488, %c306] : memref<1x4x384xf32, #tpu.memory_space<vmem>>, vector<1x4x16xf32>
    %334 = vector.shape_cast %333 : vector<1x4x16xf32> to vector<4x16xf32>
    %c24_489 = arith.constant 24 : index
    %c240_490 = arith.constant 240 : index
    %335 = vector.load %arg6[%c24_489, %c240_490] : memref<36x256xf32, #tpu.memory_space<vmem>>, vector<4x16xf32>
    tpu.vector_store %arg6[%c24_489, %c240_490], %334 {strides = array<i32>} : memref<36x256xf32, #tpu.memory_space<vmem>>, vector<4x16xf32>,
    %c0_491 = arith.constant 0 : index
    %c0_492 = arith.constant 0 : index
    %c37_493 = arith.constant 37 : index
    %336 = vector.load %arg1[%c0_491, %c0_492, %c37_493] : memref<1x4x384xf32, #tpu.memory_space<vmem>>, vector<1x4x16xf32>
    %337 = vector.shape_cast %336 : vector<1x4x16xf32> to vector<4x16xf32>
    %c28 = arith.constant 28 : index
    %c0_494 = arith.constant 0 : index
    %338 = vector.load %arg6[%c28, %c0_494] : memref<36x256xf32, #tpu.memory_space<vmem>>, vector<4x16xf32>
    tpu.vector_store %arg6[%c28, %c0_494], %337 {strides = array<i32>} : memref<36x256xf32, #tpu.memory_space<vmem>>, vector<4x16xf32>,
    %c0_495 = arith.constant 0 : index
    %c0_496 = arith.constant 0 : index
    %c55_497 = arith.constant 55 : index
    %339 = vector.load %arg1[%c0_495, %c0_496, %c55_497] : memref<1x4x384xf32, #tpu.memory_space<vmem>>, vector<1x4x16xf32>
    %340 = vector.shape_cast %339 : vector<1x4x16xf32> to vector<4x16xf32>
    %c28_498 = arith.constant 28 : index
    %c16_499 = arith.constant 16 : index
    %341 = vector.load %arg6[%c28_498, %c16_499] : memref<36x256xf32, #tpu.memory_space<vmem>>, vector<4x16xf32>
    tpu.vector_store %arg6[%c28_498, %c16_499], %340 {strides = array<i32>} : memref<36x256xf32, #tpu.memory_space<vmem>>, vector<4x16xf32>,
    %c0_500 = arith.constant 0 : index
    %c0_501 = arith.constant 0 : index
    %c73_502 = arith.constant 73 : index
    %342 = vector.load %arg1[%c0_500, %c0_501, %c73_502] : memref<1x4x384xf32, #tpu.memory_space<vmem>>, vector<1x4x16xf32>
    %343 = vector.shape_cast %342 : vector<1x4x16xf32> to vector<4x16xf32>
    %c28_503 = arith.constant 28 : index
    %c32_504 = arith.constant 32 : index
    %344 = vector.load %arg6[%c28_503, %c32_504] : memref<36x256xf32, #tpu.memory_space<vmem>>, vector<4x16xf32>
    tpu.vector_store %arg6[%c28_503, %c32_504], %343 {strides = array<i32>} : memref<36x256xf32, #tpu.memory_space<vmem>>, vector<4x16xf32>,
    %c0_505 = arith.constant 0 : index
    %c0_506 = arith.constant 0 : index
    %c91_507 = arith.constant 91 : index
    %345 = vector.load %arg1[%c0_505, %c0_506, %c91_507] : memref<1x4x384xf32, #tpu.memory_space<vmem>>, vector<1x4x16xf32>
    %346 = vector.shape_cast %345 : vector<1x4x16xf32> to vector<4x16xf32>
    %c28_508 = arith.constant 28 : index
    %c48_509 = arith.constant 48 : index
    %347 = vector.load %arg6[%c28_508, %c48_509] : memref<36x256xf32, #tpu.memory_space<vmem>>, vector<4x16xf32>
    tpu.vector_store %arg6[%c28_508, %c48_509], %346 {strides = array<i32>} : memref<36x256xf32, #tpu.memory_space<vmem>>, vector<4x16xf32>,
    %c0_510 = arith.constant 0 : index
    %c0_511 = arith.constant 0 : index
    %c109_512 = arith.constant 109 : index
    %348 = vector.load %arg1[%c0_510, %c0_511, %c109_512] : memref<1x4x384xf32, #tpu.memory_space<vmem>>, vector<1x4x16xf32>
    %349 = vector.shape_cast %348 : vector<1x4x16xf32> to vector<4x16xf32>
    %c28_513 = arith.constant 28 : index
    %c64_514 = arith.constant 64 : index
    %350 = vector.load %arg6[%c28_513, %c64_514] : memref<36x256xf32, #tpu.memory_space<vmem>>, vector<4x16xf32>
    tpu.vector_store %arg6[%c28_513, %c64_514], %349 {strides = array<i32>} : memref<36x256xf32, #tpu.memory_space<vmem>>, vector<4x16xf32>,
    %c0_515 = arith.constant 0 : index
    %c0_516 = arith.constant 0 : index
    %c127_517 = arith.constant 127 : index
    %351 = vector.load %arg1[%c0_515, %c0_516, %c127_517] : memref<1x4x384xf32, #tpu.memory_space<vmem>>, vector<1x4x16xf32>
    %352 = vector.shape_cast %351 : vector<1x4x16xf32> to vector<4x16xf32>
    %c28_518 = arith.constant 28 : index
    %c80_519 = arith.constant 80 : index
    %353 = vector.load %arg6[%c28_518, %c80_519] : memref<36x256xf32, #tpu.memory_space<vmem>>, vector<4x16xf32>
    tpu.vector_store %arg6[%c28_518, %c80_519], %352 {strides = array<i32>} : memref<36x256xf32, #tpu.memory_space<vmem>>, vector<4x16xf32>,
    %c0_520 = arith.constant 0 : index
    %c0_521 = arith.constant 0 : index
    %c145_522 = arith.constant 145 : index
    %354 = vector.load %arg1[%c0_520, %c0_521, %c145_522] : memref<1x4x384xf32, #tpu.memory_space<vmem>>, vector<1x4x16xf32>
    %355 = vector.shape_cast %354 : vector<1x4x16xf32> to vector<4x16xf32>
    %c28_523 = arith.constant 28 : index
    %c96_524 = arith.constant 96 : index
    %356 = vector.load %arg6[%c28_523, %c96_524] : memref<36x256xf32, #tpu.memory_space<vmem>>, vector<4x16xf32>
    tpu.vector_store %arg6[%c28_523, %c96_524], %355 {strides = array<i32>} : memref<36x256xf32, #tpu.memory_space<vmem>>, vector<4x16xf32>,
    %c0_525 = arith.constant 0 : index
    %c0_526 = arith.constant 0 : index
    %c163_527 = arith.constant 163 : index
    %357 = vector.load %arg1[%c0_525, %c0_526, %c163_527] : memref<1x4x384xf32, #tpu.memory_space<vmem>>, vector<1x4x16xf32>
    %358 = vector.shape_cast %357 : vector<1x4x16xf32> to vector<4x16xf32>
    %c28_528 = arith.constant 28 : index
    %c112_529 = arith.constant 112 : index
    %359 = vector.load %arg6[%c28_528, %c112_529] : memref<36x256xf32, #tpu.memory_space<vmem>>, vector<4x16xf32>
    tpu.vector_store %arg6[%c28_528, %c112_529], %358 {strides = array<i32>} : memref<36x256xf32, #tpu.memory_space<vmem>>, vector<4x16xf32>,
    %c0_530 = arith.constant 0 : index
    %c0_531 = arith.constant 0 : index
    %c181_532 = arith.constant 181 : index
    %360 = vector.load %arg1[%c0_530, %c0_531, %c181_532] : memref<1x4x384xf32, #tpu.memory_space<vmem>>, vector<1x4x16xf32>
    %361 = vector.shape_cast %360 : vector<1x4x16xf32> to vector<4x16xf32>
    %c28_533 = arith.constant 28 : index
    %c128_534 = arith.constant 128 : index
    %362 = vector.load %arg6[%c28_533, %c128_534] : memref<36x256xf32, #tpu.memory_space<vmem>>, vector<4x16xf32>
    tpu.vector_store %arg6[%c28_533, %c128_534], %361 {strides = array<i32>} : memref<36x256xf32, #tpu.memory_space<vmem>>, vector<4x16xf32>,
    %c0_535 = arith.constant 0 : index
    %c0_536 = arith.constant 0 : index
    %c199_537 = arith.constant 199 : index
    %363 = vector.load %arg1[%c0_535, %c0_536, %c199_537] : memref<1x4x384xf32, #tpu.memory_space<vmem>>, vector<1x4x16xf32>
    %364 = vector.shape_cast %363 : vector<1x4x16xf32> to vector<4x16xf32>
    %c28_538 = arith.constant 28 : index
    %c144_539 = arith.constant 144 : index
    %365 = vector.load %arg6[%c28_538, %c144_539] : memref<36x256xf32, #tpu.memory_space<vmem>>, vector<4x16xf32>
    tpu.vector_store %arg6[%c28_538, %c144_539], %364 {strides = array<i32>} : memref<36x256xf32, #tpu.memory_space<vmem>>, vector<4x16xf32>,
    %c0_540 = arith.constant 0 : index
    %c0_541 = arith.constant 0 : index
    %c217_542 = arith.constant 217 : index
    %366 = vector.load %arg1[%c0_540, %c0_541, %c217_542] : memref<1x4x384xf32, #tpu.memory_space<vmem>>, vector<1x4x16xf32>
    %367 = vector.shape_cast %366 : vector<1x4x16xf32> to vector<4x16xf32>
    %c28_543 = arith.constant 28 : index
    %c160_544 = arith.constant 160 : index
    %368 = vector.load %arg6[%c28_543, %c160_544] : memref<36x256xf32, #tpu.memory_space<vmem>>, vector<4x16xf32>
    tpu.vector_store %arg6[%c28_543, %c160_544], %367 {strides = array<i32>} : memref<36x256xf32, #tpu.memory_space<vmem>>, vector<4x16xf32>,
    %c0_545 = arith.constant 0 : index
    %c0_546 = arith.constant 0 : index
    %c235_547 = arith.constant 235 : index
    %369 = vector.load %arg1[%c0_545, %c0_546, %c235_547] : memref<1x4x384xf32, #tpu.memory_space<vmem>>, vector<1x4x16xf32>
    %370 = vector.shape_cast %369 : vector<1x4x16xf32> to vector<4x16xf32>
    %c28_548 = arith.constant 28 : index
    %c176_549 = arith.constant 176 : index
    %371 = vector.load %arg6[%c28_548, %c176_549] : memref<36x256xf32, #tpu.memory_space<vmem>>, vector<4x16xf32>
    tpu.vector_store %arg6[%c28_548, %c176_549], %370 {strides = array<i32>} : memref<36x256xf32, #tpu.memory_space<vmem>>, vector<4x16xf32>,
    %c0_550 = arith.constant 0 : index
    %c0_551 = arith.constant 0 : index
    %c253_552 = arith.constant 253 : index
    %372 = vector.load %arg1[%c0_550, %c0_551, %c253_552] : memref<1x4x384xf32, #tpu.memory_space<vmem>>, vector<1x4x16xf32>
    %373 = vector.shape_cast %372 : vector<1x4x16xf32> to vector<4x16xf32>
    %c28_553 = arith.constant 28 : index
    %c192_554 = arith.constant 192 : index
    %374 = vector.load %arg6[%c28_553, %c192_554] : memref<36x256xf32, #tpu.memory_space<vmem>>, vector<4x16xf32>
    tpu.vector_store %arg6[%c28_553, %c192_554], %373 {strides = array<i32>} : memref<36x256xf32, #tpu.memory_space<vmem>>, vector<4x16xf32>,
    %c0_555 = arith.constant 0 : index
    %c0_556 = arith.constant 0 : index
    %c271_557 = arith.constant 271 : index
    %375 = vector.load %arg1[%c0_555, %c0_556, %c271_557] : memref<1x4x384xf32, #tpu.memory_space<vmem>>, vector<1x4x16xf32>
    %376 = vector.shape_cast %375 : vector<1x4x16xf32> to vector<4x16xf32>
    %c28_558 = arith.constant 28 : index
    %c208_559 = arith.constant 208 : index
    %377 = vector.load %arg6[%c28_558, %c208_559] : memref<36x256xf32, #tpu.memory_space<vmem>>, vector<4x16xf32>
    tpu.vector_store %arg6[%c28_558, %c208_559], %376 {strides = array<i32>} : memref<36x256xf32, #tpu.memory_space<vmem>>, vector<4x16xf32>,
    %c0_560 = arith.constant 0 : index
    %c0_561 = arith.constant 0 : index
    %c289_562 = arith.constant 289 : index
    %378 = vector.load %arg1[%c0_560, %c0_561, %c289_562] : memref<1x4x384xf32, #tpu.memory_space<vmem>>, vector<1x4x16xf32>
    %379 = vector.shape_cast %378 : vector<1x4x16xf32> to vector<4x16xf32>
    %c28_563 = arith.constant 28 : index
    %c224_564 = arith.constant 224 : index
    %380 = vector.load %arg6[%c28_563, %c224_564] : memref<36x256xf32, #tpu.memory_space<vmem>>, vector<4x16xf32>
    tpu.vector_store %arg6[%c28_563, %c224_564], %379 {strides = array<i32>} : memref<36x256xf32, #tpu.memory_space<vmem>>, vector<4x16xf32>,
    %c0_565 = arith.constant 0 : index
    %c0_566 = arith.constant 0 : index
    %c307 = arith.constant 307 : index
    %381 = vector.load %arg1[%c0_565, %c0_566, %c307] : memref<1x4x384xf32, #tpu.memory_space<vmem>>, vector<1x4x16xf32>
    %382 = vector.shape_cast %381 : vector<1x4x16xf32> to vector<4x16xf32>
    %c28_567 = arith.constant 28 : index
    %c240_568 = arith.constant 240 : index
    %383 = vector.load %arg6[%c28_567, %c240_568] : memref<36x256xf32, #tpu.memory_space<vmem>>, vector<4x16xf32>
    tpu.vector_store %arg6[%c28_567, %c240_568], %382 {strides = array<i32>} : memref<36x256xf32, #tpu.memory_space<vmem>>, vector<4x16xf32>,
    %c0_569 = arith.constant 0 : index
    %c0_570 = arith.constant 0 : index
    %c38_571 = arith.constant 38 : index
    %384 = vector.load %arg1[%c0_569, %c0_570, %c38_571] : memref<1x4x384xf32, #tpu.memory_space<vmem>>, vector<1x4x16xf32>
    %385 = vector.shape_cast %384 : vector<1x4x16xf32> to vector<4x16xf32>
    %c32_572 = arith.constant 32 : index
    %c0_573 = arith.constant 0 : index
    %386 = vector.load %arg6[%c32_572, %c0_573] : memref<36x256xf32, #tpu.memory_space<vmem>>, vector<4x16xf32>
    tpu.vector_store %arg6[%c32_572, %c0_573], %385 {strides = array<i32>} : memref<36x256xf32, #tpu.memory_space<vmem>>, vector<4x16xf32>,
    %c0_574 = arith.constant 0 : index
    %c0_575 = arith.constant 0 : index
    %c56_576 = arith.constant 56 : index
    %387 = vector.load %arg1[%c0_574, %c0_575, %c56_576] : memref<1x4x384xf32, #tpu.memory_space<vmem>>, vector<1x4x16xf32>
    %388 = vector.shape_cast %387 : vector<1x4x16xf32> to vector<4x16xf32>
    %c32_577 = arith.constant 32 : index
    %c16_578 = arith.constant 16 : index
    %389 = vector.load %arg6[%c32_577, %c16_578] : memref<36x256xf32, #tpu.memory_space<vmem>>, vector<4x16xf32>
    tpu.vector_store %arg6[%c32_577, %c16_578], %388 {strides = array<i32>} : memref<36x256xf32, #tpu.memory_space<vmem>>, vector<4x16xf32>,
    %c0_579 = arith.constant 0 : index
    %c0_580 = arith.constant 0 : index
    %c74_581 = arith.constant 74 : index
    %390 = vector.load %arg1[%c0_579, %c0_580, %c74_581] : memref<1x4x384xf32, #tpu.memory_space<vmem>>, vector<1x4x16xf32>
    %391 = vector.shape_cast %390 : vector<1x4x16xf32> to vector<4x16xf32>
    %c32_582 = arith.constant 32 : index
    %c32_583 = arith.constant 32 : index
    %392 = vector.load %arg6[%c32_582, %c32_583] : memref<36x256xf32, #tpu.memory_space<vmem>>, vector<4x16xf32>
    tpu.vector_store %arg6[%c32_582, %c32_583], %391 {strides = array<i32>} : memref<36x256xf32, #tpu.memory_space<vmem>>, vector<4x16xf32>,
    %c0_584 = arith.constant 0 : index
    %c0_585 = arith.constant 0 : index
    %c92_586 = arith.constant 92 : index
    %393 = vector.load %arg1[%c0_584, %c0_585, %c92_586] : memref<1x4x384xf32, #tpu.memory_space<vmem>>, vector<1x4x16xf32>
    %394 = vector.shape_cast %393 : vector<1x4x16xf32> to vector<4x16xf32>
    %c32_587 = arith.constant 32 : index
    %c48_588 = arith.constant 48 : index
    %395 = vector.load %arg6[%c32_587, %c48_588] : memref<36x256xf32, #tpu.memory_space<vmem>>, vector<4x16xf32>
    tpu.vector_store %arg6[%c32_587, %c48_588], %394 {strides = array<i32>} : memref<36x256xf32, #tpu.memory_space<vmem>>, vector<4x16xf32>,
    %c0_589 = arith.constant 0 : index
    %c0_590 = arith.constant 0 : index
    %c110_591 = arith.constant 110 : index
    %396 = vector.load %arg1[%c0_589, %c0_590, %c110_591] : memref<1x4x384xf32, #tpu.memory_space<vmem>>, vector<1x4x16xf32>
    %397 = vector.shape_cast %396 : vector<1x4x16xf32> to vector<4x16xf32>
    %c32_592 = arith.constant 32 : index
    %c64_593 = arith.constant 64 : index
    %398 = vector.load %arg6[%c32_592, %c64_593] : memref<36x256xf32, #tpu.memory_space<vmem>>, vector<4x16xf32>
    tpu.vector_store %arg6[%c32_592, %c64_593], %397 {strides = array<i32>} : memref<36x256xf32, #tpu.memory_space<vmem>>, vector<4x16xf32>,
    %c0_594 = arith.constant 0 : index
    %c0_595 = arith.constant 0 : index
    %c128_596 = arith.constant 128 : index
    %399 = vector.load %arg1[%c0_594, %c0_595, %c128_596] : memref<1x4x384xf32, #tpu.memory_space<vmem>>, vector<1x4x16xf32>
    %400 = vector.shape_cast %399 : vector<1x4x16xf32> to vector<4x16xf32>
    %c32_597 = arith.constant 32 : index
    %c80_598 = arith.constant 80 : index
    %401 = vector.load %arg6[%c32_597, %c80_598] : memref<36x256xf32, #tpu.memory_space<vmem>>, vector<4x16xf32>
    tpu.vector_store %arg6[%c32_597, %c80_598], %400 {strides = array<i32>} : memref<36x256xf32, #tpu.memory_space<vmem>>, vector<4x16xf32>,
    %c0_599 = arith.constant 0 : index
    %c0_600 = arith.constant 0 : index
    %c146_601 = arith.constant 146 : index
    %402 = vector.load %arg1[%c0_599, %c0_600, %c146_601] : memref<1x4x384xf32, #tpu.memory_space<vmem>>, vector<1x4x16xf32>
    %403 = vector.shape_cast %402 : vector<1x4x16xf32> to vector<4x16xf32>
    %c32_602 = arith.constant 32 : index
    %c96_603 = arith.constant 96 : index
    %404 = vector.load %arg6[%c32_602, %c96_603] : memref<36x256xf32, #tpu.memory_space<vmem>>, vector<4x16xf32>
    tpu.vector_store %arg6[%c32_602, %c96_603], %403 {strides = array<i32>} : memref<36x256xf32, #tpu.memory_space<vmem>>, vector<4x16xf32>,
    %c0_604 = arith.constant 0 : index
    %c0_605 = arith.constant 0 : index
    %c164_606 = arith.constant 164 : index
    %405 = vector.load %arg1[%c0_604, %c0_605, %c164_606] : memref<1x4x384xf32, #tpu.memory_space<vmem>>, vector<1x4x16xf32>
    %406 = vector.shape_cast %405 : vector<1x4x16xf32> to vector<4x16xf32>
    %c32_607 = arith.constant 32 : index
    %c112_608 = arith.constant 112 : index
    %407 = vector.load %arg6[%c32_607, %c112_608] : memref<36x256xf32, #tpu.memory_space<vmem>>, vector<4x16xf32>
    tpu.vector_store %arg6[%c32_607, %c112_608], %406 {strides = array<i32>} : memref<36x256xf32, #tpu.memory_space<vmem>>, vector<4x16xf32>,
    %c0_609 = arith.constant 0 : index
    %c0_610 = arith.constant 0 : index
    %c182_611 = arith.constant 182 : index
    %408 = vector.load %arg1[%c0_609, %c0_610, %c182_611] : memref<1x4x384xf32, #tpu.memory_space<vmem>>, vector<1x4x16xf32>
    %409 = vector.shape_cast %408 : vector<1x4x16xf32> to vector<4x16xf32>
    %c32_612 = arith.constant 32 : index
    %c128_613 = arith.constant 128 : index
    %410 = vector.load %arg6[%c32_612, %c128_613] : memref<36x256xf32, #tpu.memory_space<vmem>>, vector<4x16xf32>
    tpu.vector_store %arg6[%c32_612, %c128_613], %409 {strides = array<i32>} : memref<36x256xf32, #tpu.memory_space<vmem>>, vector<4x16xf32>,
    %c0_614 = arith.constant 0 : index
    %c0_615 = arith.constant 0 : index
    %c200_616 = arith.constant 200 : index
    %411 = vector.load %arg1[%c0_614, %c0_615, %c200_616] : memref<1x4x384xf32, #tpu.memory_space<vmem>>, vector<1x4x16xf32>
    %412 = vector.shape_cast %411 : vector<1x4x16xf32> to vector<4x16xf32>
    %c32_617 = arith.constant 32 : index
    %c144_618 = arith.constant 144 : index
    %413 = vector.load %arg6[%c32_617, %c144_618] : memref<36x256xf32, #tpu.memory_space<vmem>>, vector<4x16xf32>
    tpu.vector_store %arg6[%c32_617, %c144_618], %412 {strides = array<i32>} : memref<36x256xf32, #tpu.memory_space<vmem>>, vector<4x16xf32>,
    %c0_619 = arith.constant 0 : index
    %c0_620 = arith.constant 0 : index
    %c218_621 = arith.constant 218 : index
    %414 = vector.load %arg1[%c0_619, %c0_620, %c218_621] : memref<1x4x384xf32, #tpu.memory_space<vmem>>, vector<1x4x16xf32>
    %415 = vector.shape_cast %414 : vector<1x4x16xf32> to vector<4x16xf32>
    %c32_622 = arith.constant 32 : index
    %c160_623 = arith.constant 160 : index
    %416 = vector.load %arg6[%c32_622, %c160_623] : memref<36x256xf32, #tpu.memory_space<vmem>>, vector<4x16xf32>
    tpu.vector_store %arg6[%c32_622, %c160_623], %415 {strides = array<i32>} : memref<36x256xf32, #tpu.memory_space<vmem>>, vector<4x16xf32>,
    %c0_624 = arith.constant 0 : index
    %c0_625 = arith.constant 0 : index
    %c236_626 = arith.constant 236 : index
    %417 = vector.load %arg1[%c0_624, %c0_625, %c236_626] : memref<1x4x384xf32, #tpu.memory_space<vmem>>, vector<1x4x16xf32>
    %418 = vector.shape_cast %417 : vector<1x4x16xf32> to vector<4x16xf32>
    %c32_627 = arith.constant 32 : index
    %c176_628 = arith.constant 176 : index
    %419 = vector.load %arg6[%c32_627, %c176_628] : memref<36x256xf32, #tpu.memory_space<vmem>>, vector<4x16xf32>
    tpu.vector_store %arg6[%c32_627, %c176_628], %418 {strides = array<i32>} : memref<36x256xf32, #tpu.memory_space<vmem>>, vector<4x16xf32>,
    %c0_629 = arith.constant 0 : index
    %c0_630 = arith.constant 0 : index
    %c254_631 = arith.constant 254 : index
    %420 = vector.load %arg1[%c0_629, %c0_630, %c254_631] : memref<1x4x384xf32, #tpu.memory_space<vmem>>, vector<1x4x16xf32>
    %421 = vector.shape_cast %420 : vector<1x4x16xf32> to vector<4x16xf32>
    %c32_632 = arith.constant 32 : index
    %c192_633 = arith.constant 192 : index
    %422 = vector.load %arg6[%c32_632, %c192_633] : memref<36x256xf32, #tpu.memory_space<vmem>>, vector<4x16xf32>
    tpu.vector_store %arg6[%c32_632, %c192_633], %421 {strides = array<i32>} : memref<36x256xf32, #tpu.memory_space<vmem>>, vector<4x16xf32>,
    %c0_634 = arith.constant 0 : index
    %c0_635 = arith.constant 0 : index
    %c272_636 = arith.constant 272 : index
    %423 = vector.load %arg1[%c0_634, %c0_635, %c272_636] : memref<1x4x384xf32, #tpu.memory_space<vmem>>, vector<1x4x16xf32>
    %424 = vector.shape_cast %423 : vector<1x4x16xf32> to vector<4x16xf32>
    %c32_637 = arith.constant 32 : index
    %c208_638 = arith.constant 208 : index
    %425 = vector.load %arg6[%c32_637, %c208_638] : memref<36x256xf32, #tpu.memory_space<vmem>>, vector<4x16xf32>
    tpu.vector_store %arg6[%c32_637, %c208_638], %424 {strides = array<i32>} : memref<36x256xf32, #tpu.memory_space<vmem>>, vector<4x16xf32>,
    %c0_639 = arith.constant 0 : index
    %c0_640 = arith.constant 0 : index
    %c290_641 = arith.constant 290 : index
    %426 = vector.load %arg1[%c0_639, %c0_640, %c290_641] : memref<1x4x384xf32, #tpu.memory_space<vmem>>, vector<1x4x16xf32>
    %427 = vector.shape_cast %426 : vector<1x4x16xf32> to vector<4x16xf32>
    %c32_642 = arith.constant 32 : index
    %c224_643 = arith.constant 224 : index
    %428 = vector.load %arg6[%c32_642, %c224_643] : memref<36x256xf32, #tpu.memory_space<vmem>>, vector<4x16xf32>
    tpu.vector_store %arg6[%c32_642, %c224_643], %427 {strides = array<i32>} : memref<36x256xf32, #tpu.memory_space<vmem>>, vector<4x16xf32>,
    %c0_644 = arith.constant 0 : index
    %c0_645 = arith.constant 0 : index
    %c308 = arith.constant 308 : index
    %429 = vector.load %arg1[%c0_644, %c0_645, %c308] : memref<1x4x384xf32, #tpu.memory_space<vmem>>, vector<1x4x16xf32>
    %430 = vector.shape_cast %429 : vector<1x4x16xf32> to vector<4x16xf32>
    %c32_646 = arith.constant 32 : index
    %c240_647 = arith.constant 240 : index
    %431 = vector.load %arg6[%c32_646, %c240_647] : memref<36x256xf32, #tpu.memory_space<vmem>>, vector<4x16xf32>
    tpu.vector_store %arg6[%c32_646, %c240_647], %430 {strides = array<i32>} : memref<36x256xf32, #tpu.memory_space<vmem>>, vector<4x16xf32>,
    %c0_648 = arith.constant 0 : index
    %c0_649 = arith.constant 0 : index
    %432 = vector.load %arg2[%c0_648, %c0_649] : memref<4x36xf32, #tpu.memory_space<vmem>>, vector<4x36xf32>
    %c0_650 = arith.constant 0 : index
    %c0_651 = arith.constant 0 : index
    %433 = vector.load %arg6[%c0_650, %c0_651] : memref<36x256xf32, #tpu.memory_space<vmem>>, vector<36x256xf32>
    %cst = arith.constant dense<0.000000e+00> : vector<4x256xf32>
    %434 = tpu.matmul %432, %433, %cst {dimension_numbers = #tpu.dot_dimension_numbers<[1], [0], [0], [1], [0, 0, 1, 1], [], []>} : vector<4x36xf32>, vector<36x256xf32>, vector<4x256xf32> -> vector<4x256xf32>
    %c0_652 = arith.constant 0 : index
    %c0_653 = arith.constant 0 : index
    %c0_654 = arith.constant 0 : index
    %435 = vector.load %arg3[%c0_652, %c0_653, %c0_654] : memref<1x4x1xf32, #tpu.memory_space<vmem>>, vector<1x4x1xf32>
    %436 = vector.shape_cast %435 : vector<1x4x1xf32> to vector<4x1xf32>
    %437 = vector.broadcast %436 : vector<4x1xf32> to vector<4x256xf32>
    %438 = arith.mulf %434, %437 : vector<4x256xf32>
    %c0_655 = arith.constant 0 : index
    %c0_656 = arith.constant 0 : index
    %c0_657 = arith.constant 0 : index
    %439 = vector.load %arg4[%c0_655, %c0_656, %c0_657] : memref<1x4x1xf32, #tpu.memory_space<vmem>>, vector<1x4x1xf32>
    %440 = vector.shape_cast %439 : vector<1x4x1xf32> to vector<4x1xf32>
    %441 = vector.broadcast %440 : vector<4x1xf32> to vector<4x256xf32>
    %442 = arith.addf %438, %441 : vector<4x256xf32>
    %cst_658 = arith.constant 0.000000e+00 : f32
    %443 = vector.broadcast %cst_658 : f32 to vector<4x256xf32>
    %444 = arith.cmpf ogt, %442, %443 : vector<4x256xf32>
    %cst_659 = arith.constant 1.000000e-01 : f32
    %445 = vector.broadcast %cst_659 : f32 to vector<4x256xf32>
    %446 = arith.mulf %445, %442 : vector<4x256xf32>
    %447 = arith.select %444, %442, %446 : vector<4x256xi1>, vector<4x256xf32>
    %c16_660 = arith.constant 16 : index
    %c0_661 = arith.constant 0 : index
    %448 = vector.load %arg6[%c16_660, %c0_661] : memref<36x256xf32, #tpu.memory_space<vmem>>, vector<4x256xf32>
    %449 = arith.addf %447, %448 : vector<4x256xf32>
    %c0_662 = arith.constant 0 : index
    %c0_663 = arith.constant 0 : index
    %c0_664 = arith.constant 0 : index
    %450 = vector.load %arg5[%c0_662, %c0_663, %c0_664] : memref<1x4x256xf32, #tpu.memory_space<vmem>>, vector<1x4x256xf32>
    %451 = vector.shape_cast %450 : vector<1x4x256xf32> to vector<4x256xf32>
    %452 = vector.shape_cast %449 : vector<4x256xf32> to vector<1x4x256xf32>
    tpu.vector_store %arg5[%c0_662, %c0_663, %c0_664], %452 {strides = array<i32>} : memref<1x4x256xf32, #tpu.memory_space<vmem>>, vector<1x4x256xf32>,
    return
  }
  func.func @transform_0(%arg0: i32) -> (i32, i32, i32) {
    %c0_i32 = arith.constant 0 : i32
    %c0_i32_0 = arith.constant 0 : i32
    %c0_i32_1 = arith.constant 0 : i32
    return %arg0, %c0_i32, %c0_i32_0 : i32, i32, i32
  }
  func.func @transform_1(%arg0: i32) -> (i32, i32) {
    %c0_i32 = arith.constant 0 : i32
    %c0_i32_0 = arith.constant 0 : i32
    %c0_i32_1 = arith.constant 0 : i32
    return %c0_i32, %c0_i32_0 : i32, i32
  }
  func.func @transform_2(%arg0: i32) -> (i32, i32, i32) {
    %c0_i32 = arith.constant 0 : i32
    %c0_i32_0 = arith.constant 0 : i32
    %c0_i32_1 = arith.constant 0 : i32
    %c0_i32_2 = arith.constant 0 : i32
    return %c0_i32, %c0_i32_0, %c0_i32_1 : i32, i32, i32
  }
  func.func @transform_3(%arg0: i32) -> (i32, i32, i32) {
    %c0_i32 = arith.constant 0 : i32
    %c0_i32_0 = arith.constant 0 : i32
    %c0_i32_1 = arith.constant 0 : i32
    %c0_i32_2 = arith.constant 0 : i32
    return %c0_i32, %c0_i32_0, %c0_i32_1 : i32, i32, i32
  }
  func.func @transform_4(%arg0: i32) -> (i32, i32, i32) {
    %c0_i32 = arith.constant 0 : i32
    %c0_i32_0 = arith.constant 0 : i32
    %c0_i32_1 = arith.constant 0 : i32
    return %arg0, %c0_i32, %c0_i32_0 : i32, i32, i32
  }
}

module attributes {stable_mosaic.version = 11 : i64} {
  func.func @_conv_stats_kernel(%arg0: i32, %arg1: memref<1x4x384xf32, #tpu.memory_space<vmem>>, %arg2: memref<4x36xf32, #tpu.memory_space<vmem>>, %arg3: memref<1x4x2xf32, #tpu.memory_space<vmem>>, %arg4: memref<36x256xf32, #tpu.memory_space<vmem>>) attributes {dimension_semantics = [#tpu.dimension_semantics<parallel>], iteration_bounds = array<i64: 2>, scalar_prefetch = 0 : i64, scratch_operands = 1 : i64, tpu.core_type = #tpu.core_type<tc>, window_params = [{transform_indices = @transform_0, window_bounds = array<i64: 1, 4, 384>}, {pipeline_mode = #tpu.pipeline_mode<synchronous>, transform_indices = @transform_1, window_bounds = array<i64: 4, 36>}, {transform_indices = @transform_2, window_bounds = array<i64: 1, 4, 2>}]} {
    %c0 = arith.constant 0 : index
    %c0_0 = arith.constant 0 : index
    %c0_1 = arith.constant 0 : index
    %0 = vector.load %arg1[%c0, %c0_0, %c0_1] : memref<1x4x384xf32, #tpu.memory_space<vmem>>, vector<1x4x16xf32>
    %1 = vector.shape_cast %0 : vector<1x4x16xf32> to vector<4x16xf32>
    %c0_2 = arith.constant 0 : index
    %c0_3 = arith.constant 0 : index
    %2 = vector.load %arg4[%c0_2, %c0_3] : memref<36x256xf32, #tpu.memory_space<vmem>>, vector<4x16xf32>
    tpu.vector_store %arg4[%c0_2, %c0_3], %1 {strides = array<i32>} : memref<36x256xf32, #tpu.memory_space<vmem>>, vector<4x16xf32>,
    %c0_4 = arith.constant 0 : index
    %c0_5 = arith.constant 0 : index
    %c18 = arith.constant 18 : index
    %3 = vector.load %arg1[%c0_4, %c0_5, %c18] : memref<1x4x384xf32, #tpu.memory_space<vmem>>, vector<1x4x16xf32>
    %4 = vector.shape_cast %3 : vector<1x4x16xf32> to vector<4x16xf32>
    %c0_6 = arith.constant 0 : index
    %c16 = arith.constant 16 : index
    %5 = vector.load %arg4[%c0_6, %c16] : memref<36x256xf32, #tpu.memory_space<vmem>>, vector<4x16xf32>
    tpu.vector_store %arg4[%c0_6, %c16], %4 {strides = array<i32>} : memref<36x256xf32, #tpu.memory_space<vmem>>, vector<4x16xf32>,
    %c0_7 = arith.constant 0 : index
    %c0_8 = arith.constant 0 : index
    %c36 = arith.constant 36 : index
    %6 = vector.load %arg1[%c0_7, %c0_8, %c36] : memref<1x4x384xf32, #tpu.memory_space<vmem>>, vector<1x4x16xf32>
    %7 = vector.shape_cast %6 : vector<1x4x16xf32> to vector<4x16xf32>
    %c0_9 = arith.constant 0 : index
    %c32 = arith.constant 32 : index
    %8 = vector.load %arg4[%c0_9, %c32] : memref<36x256xf32, #tpu.memory_space<vmem>>, vector<4x16xf32>
    tpu.vector_store %arg4[%c0_9, %c32], %7 {strides = array<i32>} : memref<36x256xf32, #tpu.memory_space<vmem>>, vector<4x16xf32>,
    %c0_10 = arith.constant 0 : index
    %c0_11 = arith.constant 0 : index
    %c54 = arith.constant 54 : index
    %9 = vector.load %arg1[%c0_10, %c0_11, %c54] : memref<1x4x384xf32, #tpu.memory_space<vmem>>, vector<1x4x16xf32>
    %10 = vector.shape_cast %9 : vector<1x4x16xf32> to vector<4x16xf32>
    %c0_12 = arith.constant 0 : index
    %c48 = arith.constant 48 : index
    %11 = vector.load %arg4[%c0_12, %c48] : memref<36x256xf32, #tpu.memory_space<vmem>>, vector<4x16xf32>
    tpu.vector_store %arg4[%c0_12, %c48], %10 {strides = array<i32>} : memref<36x256xf32, #tpu.memory_space<vmem>>, vector<4x16xf32>,
    %c0_13 = arith.constant 0 : index
    %c0_14 = arith.constant 0 : index
    %c72 = arith.constant 72 : index
    %12 = vector.load %arg1[%c0_13, %c0_14, %c72] : memref<1x4x384xf32, #tpu.memory_space<vmem>>, vector<1x4x16xf32>
    %13 = vector.shape_cast %12 : vector<1x4x16xf32> to vector<4x16xf32>
    %c0_15 = arith.constant 0 : index
    %c64 = arith.constant 64 : index
    %14 = vector.load %arg4[%c0_15, %c64] : memref<36x256xf32, #tpu.memory_space<vmem>>, vector<4x16xf32>
    tpu.vector_store %arg4[%c0_15, %c64], %13 {strides = array<i32>} : memref<36x256xf32, #tpu.memory_space<vmem>>, vector<4x16xf32>,
    %c0_16 = arith.constant 0 : index
    %c0_17 = arith.constant 0 : index
    %c90 = arith.constant 90 : index
    %15 = vector.load %arg1[%c0_16, %c0_17, %c90] : memref<1x4x384xf32, #tpu.memory_space<vmem>>, vector<1x4x16xf32>
    %16 = vector.shape_cast %15 : vector<1x4x16xf32> to vector<4x16xf32>
    %c0_18 = arith.constant 0 : index
    %c80 = arith.constant 80 : index
    %17 = vector.load %arg4[%c0_18, %c80] : memref<36x256xf32, #tpu.memory_space<vmem>>, vector<4x16xf32>
    tpu.vector_store %arg4[%c0_18, %c80], %16 {strides = array<i32>} : memref<36x256xf32, #tpu.memory_space<vmem>>, vector<4x16xf32>,
    %c0_19 = arith.constant 0 : index
    %c0_20 = arith.constant 0 : index
    %c108 = arith.constant 108 : index
    %18 = vector.load %arg1[%c0_19, %c0_20, %c108] : memref<1x4x384xf32, #tpu.memory_space<vmem>>, vector<1x4x16xf32>
    %19 = vector.shape_cast %18 : vector<1x4x16xf32> to vector<4x16xf32>
    %c0_21 = arith.constant 0 : index
    %c96 = arith.constant 96 : index
    %20 = vector.load %arg4[%c0_21, %c96] : memref<36x256xf32, #tpu.memory_space<vmem>>, vector<4x16xf32>
    tpu.vector_store %arg4[%c0_21, %c96], %19 {strides = array<i32>} : memref<36x256xf32, #tpu.memory_space<vmem>>, vector<4x16xf32>,
    %c0_22 = arith.constant 0 : index
    %c0_23 = arith.constant 0 : index
    %c126 = arith.constant 126 : index
    %21 = vector.load %arg1[%c0_22, %c0_23, %c126] : memref<1x4x384xf32, #tpu.memory_space<vmem>>, vector<1x4x16xf32>
    %22 = vector.shape_cast %21 : vector<1x4x16xf32> to vector<4x16xf32>
    %c0_24 = arith.constant 0 : index
    %c112 = arith.constant 112 : index
    %23 = vector.load %arg4[%c0_24, %c112] : memref<36x256xf32, #tpu.memory_space<vmem>>, vector<4x16xf32>
    tpu.vector_store %arg4[%c0_24, %c112], %22 {strides = array<i32>} : memref<36x256xf32, #tpu.memory_space<vmem>>, vector<4x16xf32>,
    %c0_25 = arith.constant 0 : index
    %c0_26 = arith.constant 0 : index
    %c144 = arith.constant 144 : index
    %24 = vector.load %arg1[%c0_25, %c0_26, %c144] : memref<1x4x384xf32, #tpu.memory_space<vmem>>, vector<1x4x16xf32>
    %25 = vector.shape_cast %24 : vector<1x4x16xf32> to vector<4x16xf32>
    %c0_27 = arith.constant 0 : index
    %c128 = arith.constant 128 : index
    %26 = vector.load %arg4[%c0_27, %c128] : memref<36x256xf32, #tpu.memory_space<vmem>>, vector<4x16xf32>
    tpu.vector_store %arg4[%c0_27, %c128], %25 {strides = array<i32>} : memref<36x256xf32, #tpu.memory_space<vmem>>, vector<4x16xf32>,
    %c0_28 = arith.constant 0 : index
    %c0_29 = arith.constant 0 : index
    %c162 = arith.constant 162 : index
    %27 = vector.load %arg1[%c0_28, %c0_29, %c162] : memref<1x4x384xf32, #tpu.memory_space<vmem>>, vector<1x4x16xf32>
    %28 = vector.shape_cast %27 : vector<1x4x16xf32> to vector<4x16xf32>
    %c0_30 = arith.constant 0 : index
    %c144_31 = arith.constant 144 : index
    %29 = vector.load %arg4[%c0_30, %c144_31] : memref<36x256xf32, #tpu.memory_space<vmem>>, vector<4x16xf32>
    tpu.vector_store %arg4[%c0_30, %c144_31], %28 {strides = array<i32>} : memref<36x256xf32, #tpu.memory_space<vmem>>, vector<4x16xf32>,
    %c0_32 = arith.constant 0 : index
    %c0_33 = arith.constant 0 : index
    %c180 = arith.constant 180 : index
    %30 = vector.load %arg1[%c0_32, %c0_33, %c180] : memref<1x4x384xf32, #tpu.memory_space<vmem>>, vector<1x4x16xf32>
    %31 = vector.shape_cast %30 : vector<1x4x16xf32> to vector<4x16xf32>
    %c0_34 = arith.constant 0 : index
    %c160 = arith.constant 160 : index
    %32 = vector.load %arg4[%c0_34, %c160] : memref<36x256xf32, #tpu.memory_space<vmem>>, vector<4x16xf32>
    tpu.vector_store %arg4[%c0_34, %c160], %31 {strides = array<i32>} : memref<36x256xf32, #tpu.memory_space<vmem>>, vector<4x16xf32>,
    %c0_35 = arith.constant 0 : index
    %c0_36 = arith.constant 0 : index
    %c198 = arith.constant 198 : index
    %33 = vector.load %arg1[%c0_35, %c0_36, %c198] : memref<1x4x384xf32, #tpu.memory_space<vmem>>, vector<1x4x16xf32>
    %34 = vector.shape_cast %33 : vector<1x4x16xf32> to vector<4x16xf32>
    %c0_37 = arith.constant 0 : index
    %c176 = arith.constant 176 : index
    %35 = vector.load %arg4[%c0_37, %c176] : memref<36x256xf32, #tpu.memory_space<vmem>>, vector<4x16xf32>
    tpu.vector_store %arg4[%c0_37, %c176], %34 {strides = array<i32>} : memref<36x256xf32, #tpu.memory_space<vmem>>, vector<4x16xf32>,
    %c0_38 = arith.constant 0 : index
    %c0_39 = arith.constant 0 : index
    %c216 = arith.constant 216 : index
    %36 = vector.load %arg1[%c0_38, %c0_39, %c216] : memref<1x4x384xf32, #tpu.memory_space<vmem>>, vector<1x4x16xf32>
    %37 = vector.shape_cast %36 : vector<1x4x16xf32> to vector<4x16xf32>
    %c0_40 = arith.constant 0 : index
    %c192 = arith.constant 192 : index
    %38 = vector.load %arg4[%c0_40, %c192] : memref<36x256xf32, #tpu.memory_space<vmem>>, vector<4x16xf32>
    tpu.vector_store %arg4[%c0_40, %c192], %37 {strides = array<i32>} : memref<36x256xf32, #tpu.memory_space<vmem>>, vector<4x16xf32>,
    %c0_41 = arith.constant 0 : index
    %c0_42 = arith.constant 0 : index
    %c234 = arith.constant 234 : index
    %39 = vector.load %arg1[%c0_41, %c0_42, %c234] : memref<1x4x384xf32, #tpu.memory_space<vmem>>, vector<1x4x16xf32>
    %40 = vector.shape_cast %39 : vector<1x4x16xf32> to vector<4x16xf32>
    %c0_43 = arith.constant 0 : index
    %c208 = arith.constant 208 : index
    %41 = vector.load %arg4[%c0_43, %c208] : memref<36x256xf32, #tpu.memory_space<vmem>>, vector<4x16xf32>
    tpu.vector_store %arg4[%c0_43, %c208], %40 {strides = array<i32>} : memref<36x256xf32, #tpu.memory_space<vmem>>, vector<4x16xf32>,
    %c0_44 = arith.constant 0 : index
    %c0_45 = arith.constant 0 : index
    %c252 = arith.constant 252 : index
    %42 = vector.load %arg1[%c0_44, %c0_45, %c252] : memref<1x4x384xf32, #tpu.memory_space<vmem>>, vector<1x4x16xf32>
    %43 = vector.shape_cast %42 : vector<1x4x16xf32> to vector<4x16xf32>
    %c0_46 = arith.constant 0 : index
    %c224 = arith.constant 224 : index
    %44 = vector.load %arg4[%c0_46, %c224] : memref<36x256xf32, #tpu.memory_space<vmem>>, vector<4x16xf32>
    tpu.vector_store %arg4[%c0_46, %c224], %43 {strides = array<i32>} : memref<36x256xf32, #tpu.memory_space<vmem>>, vector<4x16xf32>,
    %c0_47 = arith.constant 0 : index
    %c0_48 = arith.constant 0 : index
    %c270 = arith.constant 270 : index
    %45 = vector.load %arg1[%c0_47, %c0_48, %c270] : memref<1x4x384xf32, #tpu.memory_space<vmem>>, vector<1x4x16xf32>
    %46 = vector.shape_cast %45 : vector<1x4x16xf32> to vector<4x16xf32>
    %c0_49 = arith.constant 0 : index
    %c240 = arith.constant 240 : index
    %47 = vector.load %arg4[%c0_49, %c240] : memref<36x256xf32, #tpu.memory_space<vmem>>, vector<4x16xf32>
    tpu.vector_store %arg4[%c0_49, %c240], %46 {strides = array<i32>} : memref<36x256xf32, #tpu.memory_space<vmem>>, vector<4x16xf32>,
    %c0_50 = arith.constant 0 : index
    %c0_51 = arith.constant 0 : index
    %c1 = arith.constant 1 : index
    %48 = vector.load %arg1[%c0_50, %c0_51, %c1] : memref<1x4x384xf32, #tpu.memory_space<vmem>>, vector<1x4x16xf32>
    %49 = vector.shape_cast %48 : vector<1x4x16xf32> to vector<4x16xf32>
    %c4 = arith.constant 4 : index
    %c0_52 = arith.constant 0 : index
    %50 = vector.load %arg4[%c4, %c0_52] : memref<36x256xf32, #tpu.memory_space<vmem>>, vector<4x16xf32>
    tpu.vector_store %arg4[%c4, %c0_52], %49 {strides = array<i32>} : memref<36x256xf32, #tpu.memory_space<vmem>>, vector<4x16xf32>,
    %c0_53 = arith.constant 0 : index
    %c0_54 = arith.constant 0 : index
    %c19 = arith.constant 19 : index
    %51 = vector.load %arg1[%c0_53, %c0_54, %c19] : memref<1x4x384xf32, #tpu.memory_space<vmem>>, vector<1x4x16xf32>
    %52 = vector.shape_cast %51 : vector<1x4x16xf32> to vector<4x16xf32>
    %c4_55 = arith.constant 4 : index
    %c16_56 = arith.constant 16 : index
    %53 = vector.load %arg4[%c4_55, %c16_56] : memref<36x256xf32, #tpu.memory_space<vmem>>, vector<4x16xf32>
    tpu.vector_store %arg4[%c4_55, %c16_56], %52 {strides = array<i32>} : memref<36x256xf32, #tpu.memory_space<vmem>>, vector<4x16xf32>,
    %c0_57 = arith.constant 0 : index
    %c0_58 = arith.constant 0 : index
    %c37 = arith.constant 37 : index
    %54 = vector.load %arg1[%c0_57, %c0_58, %c37] : memref<1x4x384xf32, #tpu.memory_space<vmem>>, vector<1x4x16xf32>
    %55 = vector.shape_cast %54 : vector<1x4x16xf32> to vector<4x16xf32>
    %c4_59 = arith.constant 4 : index
    %c32_60 = arith.constant 32 : index
    %56 = vector.load %arg4[%c4_59, %c32_60] : memref<36x256xf32, #tpu.memory_space<vmem>>, vector<4x16xf32>
    tpu.vector_store %arg4[%c4_59, %c32_60], %55 {strides = array<i32>} : memref<36x256xf32, #tpu.memory_space<vmem>>, vector<4x16xf32>,
    %c0_61 = arith.constant 0 : index
    %c0_62 = arith.constant 0 : index
    %c55 = arith.constant 55 : index
    %57 = vector.load %arg1[%c0_61, %c0_62, %c55] : memref<1x4x384xf32, #tpu.memory_space<vmem>>, vector<1x4x16xf32>
    %58 = vector.shape_cast %57 : vector<1x4x16xf32> to vector<4x16xf32>
    %c4_63 = arith.constant 4 : index
    %c48_64 = arith.constant 48 : index
    %59 = vector.load %arg4[%c4_63, %c48_64] : memref<36x256xf32, #tpu.memory_space<vmem>>, vector<4x16xf32>
    tpu.vector_store %arg4[%c4_63, %c48_64], %58 {strides = array<i32>} : memref<36x256xf32, #tpu.memory_space<vmem>>, vector<4x16xf32>,
    %c0_65 = arith.constant 0 : index
    %c0_66 = arith.constant 0 : index
    %c73 = arith.constant 73 : index
    %60 = vector.load %arg1[%c0_65, %c0_66, %c73] : memref<1x4x384xf32, #tpu.memory_space<vmem>>, vector<1x4x16xf32>
    %61 = vector.shape_cast %60 : vector<1x4x16xf32> to vector<4x16xf32>
    %c4_67 = arith.constant 4 : index
    %c64_68 = arith.constant 64 : index
    %62 = vector.load %arg4[%c4_67, %c64_68] : memref<36x256xf32, #tpu.memory_space<vmem>>, vector<4x16xf32>
    tpu.vector_store %arg4[%c4_67, %c64_68], %61 {strides = array<i32>} : memref<36x256xf32, #tpu.memory_space<vmem>>, vector<4x16xf32>,
    %c0_69 = arith.constant 0 : index
    %c0_70 = arith.constant 0 : index
    %c91 = arith.constant 91 : index
    %63 = vector.load %arg1[%c0_69, %c0_70, %c91] : memref<1x4x384xf32, #tpu.memory_space<vmem>>, vector<1x4x16xf32>
    %64 = vector.shape_cast %63 : vector<1x4x16xf32> to vector<4x16xf32>
    %c4_71 = arith.constant 4 : index
    %c80_72 = arith.constant 80 : index
    %65 = vector.load %arg4[%c4_71, %c80_72] : memref<36x256xf32, #tpu.memory_space<vmem>>, vector<4x16xf32>
    tpu.vector_store %arg4[%c4_71, %c80_72], %64 {strides = array<i32>} : memref<36x256xf32, #tpu.memory_space<vmem>>, vector<4x16xf32>,
    %c0_73 = arith.constant 0 : index
    %c0_74 = arith.constant 0 : index
    %c109 = arith.constant 109 : index
    %66 = vector.load %arg1[%c0_73, %c0_74, %c109] : memref<1x4x384xf32, #tpu.memory_space<vmem>>, vector<1x4x16xf32>
    %67 = vector.shape_cast %66 : vector<1x4x16xf32> to vector<4x16xf32>
    %c4_75 = arith.constant 4 : index
    %c96_76 = arith.constant 96 : index
    %68 = vector.load %arg4[%c4_75, %c96_76] : memref<36x256xf32, #tpu.memory_space<vmem>>, vector<4x16xf32>
    tpu.vector_store %arg4[%c4_75, %c96_76], %67 {strides = array<i32>} : memref<36x256xf32, #tpu.memory_space<vmem>>, vector<4x16xf32>,
    %c0_77 = arith.constant 0 : index
    %c0_78 = arith.constant 0 : index
    %c127 = arith.constant 127 : index
    %69 = vector.load %arg1[%c0_77, %c0_78, %c127] : memref<1x4x384xf32, #tpu.memory_space<vmem>>, vector<1x4x16xf32>
    %70 = vector.shape_cast %69 : vector<1x4x16xf32> to vector<4x16xf32>
    %c4_79 = arith.constant 4 : index
    %c112_80 = arith.constant 112 : index
    %71 = vector.load %arg4[%c4_79, %c112_80] : memref<36x256xf32, #tpu.memory_space<vmem>>, vector<4x16xf32>
    tpu.vector_store %arg4[%c4_79, %c112_80], %70 {strides = array<i32>} : memref<36x256xf32, #tpu.memory_space<vmem>>, vector<4x16xf32>,
    %c0_81 = arith.constant 0 : index
    %c0_82 = arith.constant 0 : index
    %c145 = arith.constant 145 : index
    %72 = vector.load %arg1[%c0_81, %c0_82, %c145] : memref<1x4x384xf32, #tpu.memory_space<vmem>>, vector<1x4x16xf32>
    %73 = vector.shape_cast %72 : vector<1x4x16xf32> to vector<4x16xf32>
    %c4_83 = arith.constant 4 : index
    %c128_84 = arith.constant 128 : index
    %74 = vector.load %arg4[%c4_83, %c128_84] : memref<36x256xf32, #tpu.memory_space<vmem>>, vector<4x16xf32>
    tpu.vector_store %arg4[%c4_83, %c128_84], %73 {strides = array<i32>} : memref<36x256xf32, #tpu.memory_space<vmem>>, vector<4x16xf32>,
    %c0_85 = arith.constant 0 : index
    %c0_86 = arith.constant 0 : index
    %c163 = arith.constant 163 : index
    %75 = vector.load %arg1[%c0_85, %c0_86, %c163] : memref<1x4x384xf32, #tpu.memory_space<vmem>>, vector<1x4x16xf32>
    %76 = vector.shape_cast %75 : vector<1x4x16xf32> to vector<4x16xf32>
    %c4_87 = arith.constant 4 : index
    %c144_88 = arith.constant 144 : index
    %77 = vector.load %arg4[%c4_87, %c144_88] : memref<36x256xf32, #tpu.memory_space<vmem>>, vector<4x16xf32>
    tpu.vector_store %arg4[%c4_87, %c144_88], %76 {strides = array<i32>} : memref<36x256xf32, #tpu.memory_space<vmem>>, vector<4x16xf32>,
    %c0_89 = arith.constant 0 : index
    %c0_90 = arith.constant 0 : index
    %c181 = arith.constant 181 : index
    %78 = vector.load %arg1[%c0_89, %c0_90, %c181] : memref<1x4x384xf32, #tpu.memory_space<vmem>>, vector<1x4x16xf32>
    %79 = vector.shape_cast %78 : vector<1x4x16xf32> to vector<4x16xf32>
    %c4_91 = arith.constant 4 : index
    %c160_92 = arith.constant 160 : index
    %80 = vector.load %arg4[%c4_91, %c160_92] : memref<36x256xf32, #tpu.memory_space<vmem>>, vector<4x16xf32>
    tpu.vector_store %arg4[%c4_91, %c160_92], %79 {strides = array<i32>} : memref<36x256xf32, #tpu.memory_space<vmem>>, vector<4x16xf32>,
    %c0_93 = arith.constant 0 : index
    %c0_94 = arith.constant 0 : index
    %c199 = arith.constant 199 : index
    %81 = vector.load %arg1[%c0_93, %c0_94, %c199] : memref<1x4x384xf32, #tpu.memory_space<vmem>>, vector<1x4x16xf32>
    %82 = vector.shape_cast %81 : vector<1x4x16xf32> to vector<4x16xf32>
    %c4_95 = arith.constant 4 : index
    %c176_96 = arith.constant 176 : index
    %83 = vector.load %arg4[%c4_95, %c176_96] : memref<36x256xf32, #tpu.memory_space<vmem>>, vector<4x16xf32>
    tpu.vector_store %arg4[%c4_95, %c176_96], %82 {strides = array<i32>} : memref<36x256xf32, #tpu.memory_space<vmem>>, vector<4x16xf32>,
    %c0_97 = arith.constant 0 : index
    %c0_98 = arith.constant 0 : index
    %c217 = arith.constant 217 : index
    %84 = vector.load %arg1[%c0_97, %c0_98, %c217] : memref<1x4x384xf32, #tpu.memory_space<vmem>>, vector<1x4x16xf32>
    %85 = vector.shape_cast %84 : vector<1x4x16xf32> to vector<4x16xf32>
    %c4_99 = arith.constant 4 : index
    %c192_100 = arith.constant 192 : index
    %86 = vector.load %arg4[%c4_99, %c192_100] : memref<36x256xf32, #tpu.memory_space<vmem>>, vector<4x16xf32>
    tpu.vector_store %arg4[%c4_99, %c192_100], %85 {strides = array<i32>} : memref<36x256xf32, #tpu.memory_space<vmem>>, vector<4x16xf32>,
    %c0_101 = arith.constant 0 : index
    %c0_102 = arith.constant 0 : index
    %c235 = arith.constant 235 : index
    %87 = vector.load %arg1[%c0_101, %c0_102, %c235] : memref<1x4x384xf32, #tpu.memory_space<vmem>>, vector<1x4x16xf32>
    %88 = vector.shape_cast %87 : vector<1x4x16xf32> to vector<4x16xf32>
    %c4_103 = arith.constant 4 : index
    %c208_104 = arith.constant 208 : index
    %89 = vector.load %arg4[%c4_103, %c208_104] : memref<36x256xf32, #tpu.memory_space<vmem>>, vector<4x16xf32>
    tpu.vector_store %arg4[%c4_103, %c208_104], %88 {strides = array<i32>} : memref<36x256xf32, #tpu.memory_space<vmem>>, vector<4x16xf32>,
    %c0_105 = arith.constant 0 : index
    %c0_106 = arith.constant 0 : index
    %c253 = arith.constant 253 : index
    %90 = vector.load %arg1[%c0_105, %c0_106, %c253] : memref<1x4x384xf32, #tpu.memory_space<vmem>>, vector<1x4x16xf32>
    %91 = vector.shape_cast %90 : vector<1x4x16xf32> to vector<4x16xf32>
    %c4_107 = arith.constant 4 : index
    %c224_108 = arith.constant 224 : index
    %92 = vector.load %arg4[%c4_107, %c224_108] : memref<36x256xf32, #tpu.memory_space<vmem>>, vector<4x16xf32>
    tpu.vector_store %arg4[%c4_107, %c224_108], %91 {strides = array<i32>} : memref<36x256xf32, #tpu.memory_space<vmem>>, vector<4x16xf32>,
    %c0_109 = arith.constant 0 : index
    %c0_110 = arith.constant 0 : index
    %c271 = arith.constant 271 : index
    %93 = vector.load %arg1[%c0_109, %c0_110, %c271] : memref<1x4x384xf32, #tpu.memory_space<vmem>>, vector<1x4x16xf32>
    %94 = vector.shape_cast %93 : vector<1x4x16xf32> to vector<4x16xf32>
    %c4_111 = arith.constant 4 : index
    %c240_112 = arith.constant 240 : index
    %95 = vector.load %arg4[%c4_111, %c240_112] : memref<36x256xf32, #tpu.memory_space<vmem>>, vector<4x16xf32>
    tpu.vector_store %arg4[%c4_111, %c240_112], %94 {strides = array<i32>} : memref<36x256xf32, #tpu.memory_space<vmem>>, vector<4x16xf32>,
    %c0_113 = arith.constant 0 : index
    %c0_114 = arith.constant 0 : index
    %c2 = arith.constant 2 : index
    %96 = vector.load %arg1[%c0_113, %c0_114, %c2] : memref<1x4x384xf32, #tpu.memory_space<vmem>>, vector<1x4x16xf32>
    %97 = vector.shape_cast %96 : vector<1x4x16xf32> to vector<4x16xf32>
    %c8 = arith.constant 8 : index
    %c0_115 = arith.constant 0 : index
    %98 = vector.load %arg4[%c8, %c0_115] : memref<36x256xf32, #tpu.memory_space<vmem>>, vector<4x16xf32>
    tpu.vector_store %arg4[%c8, %c0_115], %97 {strides = array<i32>} : memref<36x256xf32, #tpu.memory_space<vmem>>, vector<4x16xf32>,
    %c0_116 = arith.constant 0 : index
    %c0_117 = arith.constant 0 : index
    %c20 = arith.constant 20 : index
    %99 = vector.load %arg1[%c0_116, %c0_117, %c20] : memref<1x4x384xf32, #tpu.memory_space<vmem>>, vector<1x4x16xf32>
    %100 = vector.shape_cast %99 : vector<1x4x16xf32> to vector<4x16xf32>
    %c8_118 = arith.constant 8 : index
    %c16_119 = arith.constant 16 : index
    %101 = vector.load %arg4[%c8_118, %c16_119] : memref<36x256xf32, #tpu.memory_space<vmem>>, vector<4x16xf32>
    tpu.vector_store %arg4[%c8_118, %c16_119], %100 {strides = array<i32>} : memref<36x256xf32, #tpu.memory_space<vmem>>, vector<4x16xf32>,
    %c0_120 = arith.constant 0 : index
    %c0_121 = arith.constant 0 : index
    %c38 = arith.constant 38 : index
    %102 = vector.load %arg1[%c0_120, %c0_121, %c38] : memref<1x4x384xf32, #tpu.memory_space<vmem>>, vector<1x4x16xf32>
    %103 = vector.shape_cast %102 : vector<1x4x16xf32> to vector<4x16xf32>
    %c8_122 = arith.constant 8 : index
    %c32_123 = arith.constant 32 : index
    %104 = vector.load %arg4[%c8_122, %c32_123] : memref<36x256xf32, #tpu.memory_space<vmem>>, vector<4x16xf32>
    tpu.vector_store %arg4[%c8_122, %c32_123], %103 {strides = array<i32>} : memref<36x256xf32, #tpu.memory_space<vmem>>, vector<4x16xf32>,
    %c0_124 = arith.constant 0 : index
    %c0_125 = arith.constant 0 : index
    %c56 = arith.constant 56 : index
    %105 = vector.load %arg1[%c0_124, %c0_125, %c56] : memref<1x4x384xf32, #tpu.memory_space<vmem>>, vector<1x4x16xf32>
    %106 = vector.shape_cast %105 : vector<1x4x16xf32> to vector<4x16xf32>
    %c8_126 = arith.constant 8 : index
    %c48_127 = arith.constant 48 : index
    %107 = vector.load %arg4[%c8_126, %c48_127] : memref<36x256xf32, #tpu.memory_space<vmem>>, vector<4x16xf32>
    tpu.vector_store %arg4[%c8_126, %c48_127], %106 {strides = array<i32>} : memref<36x256xf32, #tpu.memory_space<vmem>>, vector<4x16xf32>,
    %c0_128 = arith.constant 0 : index
    %c0_129 = arith.constant 0 : index
    %c74 = arith.constant 74 : index
    %108 = vector.load %arg1[%c0_128, %c0_129, %c74] : memref<1x4x384xf32, #tpu.memory_space<vmem>>, vector<1x4x16xf32>
    %109 = vector.shape_cast %108 : vector<1x4x16xf32> to vector<4x16xf32>
    %c8_130 = arith.constant 8 : index
    %c64_131 = arith.constant 64 : index
    %110 = vector.load %arg4[%c8_130, %c64_131] : memref<36x256xf32, #tpu.memory_space<vmem>>, vector<4x16xf32>
    tpu.vector_store %arg4[%c8_130, %c64_131], %109 {strides = array<i32>} : memref<36x256xf32, #tpu.memory_space<vmem>>, vector<4x16xf32>,
    %c0_132 = arith.constant 0 : index
    %c0_133 = arith.constant 0 : index
    %c92 = arith.constant 92 : index
    %111 = vector.load %arg1[%c0_132, %c0_133, %c92] : memref<1x4x384xf32, #tpu.memory_space<vmem>>, vector<1x4x16xf32>
    %112 = vector.shape_cast %111 : vector<1x4x16xf32> to vector<4x16xf32>
    %c8_134 = arith.constant 8 : index
    %c80_135 = arith.constant 80 : index
    %113 = vector.load %arg4[%c8_134, %c80_135] : memref<36x256xf32, #tpu.memory_space<vmem>>, vector<4x16xf32>
    tpu.vector_store %arg4[%c8_134, %c80_135], %112 {strides = array<i32>} : memref<36x256xf32, #tpu.memory_space<vmem>>, vector<4x16xf32>,
    %c0_136 = arith.constant 0 : index
    %c0_137 = arith.constant 0 : index
    %c110 = arith.constant 110 : index
    %114 = vector.load %arg1[%c0_136, %c0_137, %c110] : memref<1x4x384xf32, #tpu.memory_space<vmem>>, vector<1x4x16xf32>
    %115 = vector.shape_cast %114 : vector<1x4x16xf32> to vector<4x16xf32>
    %c8_138 = arith.constant 8 : index
    %c96_139 = arith.constant 96 : index
    %116 = vector.load %arg4[%c8_138, %c96_139] : memref<36x256xf32, #tpu.memory_space<vmem>>, vector<4x16xf32>
    tpu.vector_store %arg4[%c8_138, %c96_139], %115 {strides = array<i32>} : memref<36x256xf32, #tpu.memory_space<vmem>>, vector<4x16xf32>,
    %c0_140 = arith.constant 0 : index
    %c0_141 = arith.constant 0 : index
    %c128_142 = arith.constant 128 : index
    %117 = vector.load %arg1[%c0_140, %c0_141, %c128_142] : memref<1x4x384xf32, #tpu.memory_space<vmem>>, vector<1x4x16xf32>
    %118 = vector.shape_cast %117 : vector<1x4x16xf32> to vector<4x16xf32>
    %c8_143 = arith.constant 8 : index
    %c112_144 = arith.constant 112 : index
    %119 = vector.load %arg4[%c8_143, %c112_144] : memref<36x256xf32, #tpu.memory_space<vmem>>, vector<4x16xf32>
    tpu.vector_store %arg4[%c8_143, %c112_144], %118 {strides = array<i32>} : memref<36x256xf32, #tpu.memory_space<vmem>>, vector<4x16xf32>,
    %c0_145 = arith.constant 0 : index
    %c0_146 = arith.constant 0 : index
    %c146 = arith.constant 146 : index
    %120 = vector.load %arg1[%c0_145, %c0_146, %c146] : memref<1x4x384xf32, #tpu.memory_space<vmem>>, vector<1x4x16xf32>
    %121 = vector.shape_cast %120 : vector<1x4x16xf32> to vector<4x16xf32>
    %c8_147 = arith.constant 8 : index
    %c128_148 = arith.constant 128 : index
    %122 = vector.load %arg4[%c8_147, %c128_148] : memref<36x256xf32, #tpu.memory_space<vmem>>, vector<4x16xf32>
    tpu.vector_store %arg4[%c8_147, %c128_148], %121 {strides = array<i32>} : memref<36x256xf32, #tpu.memory_space<vmem>>, vector<4x16xf32>,
    %c0_149 = arith.constant 0 : index
    %c0_150 = arith.constant 0 : index
    %c164 = arith.constant 164 : index
    %123 = vector.load %arg1[%c0_149, %c0_150, %c164] : memref<1x4x384xf32, #tpu.memory_space<vmem>>, vector<1x4x16xf32>
    %124 = vector.shape_cast %123 : vector<1x4x16xf32> to vector<4x16xf32>
    %c8_151 = arith.constant 8 : index
    %c144_152 = arith.constant 144 : index
    %125 = vector.load %arg4[%c8_151, %c144_152] : memref<36x256xf32, #tpu.memory_space<vmem>>, vector<4x16xf32>
    tpu.vector_store %arg4[%c8_151, %c144_152], %124 {strides = array<i32>} : memref<36x256xf32, #tpu.memory_space<vmem>>, vector<4x16xf32>,
    %c0_153 = arith.constant 0 : index
    %c0_154 = arith.constant 0 : index
    %c182 = arith.constant 182 : index
    %126 = vector.load %arg1[%c0_153, %c0_154, %c182] : memref<1x4x384xf32, #tpu.memory_space<vmem>>, vector<1x4x16xf32>
    %127 = vector.shape_cast %126 : vector<1x4x16xf32> to vector<4x16xf32>
    %c8_155 = arith.constant 8 : index
    %c160_156 = arith.constant 160 : index
    %128 = vector.load %arg4[%c8_155, %c160_156] : memref<36x256xf32, #tpu.memory_space<vmem>>, vector<4x16xf32>
    tpu.vector_store %arg4[%c8_155, %c160_156], %127 {strides = array<i32>} : memref<36x256xf32, #tpu.memory_space<vmem>>, vector<4x16xf32>,
    %c0_157 = arith.constant 0 : index
    %c0_158 = arith.constant 0 : index
    %c200 = arith.constant 200 : index
    %129 = vector.load %arg1[%c0_157, %c0_158, %c200] : memref<1x4x384xf32, #tpu.memory_space<vmem>>, vector<1x4x16xf32>
    %130 = vector.shape_cast %129 : vector<1x4x16xf32> to vector<4x16xf32>
    %c8_159 = arith.constant 8 : index
    %c176_160 = arith.constant 176 : index
    %131 = vector.load %arg4[%c8_159, %c176_160] : memref<36x256xf32, #tpu.memory_space<vmem>>, vector<4x16xf32>
    tpu.vector_store %arg4[%c8_159, %c176_160], %130 {strides = array<i32>} : memref<36x256xf32, #tpu.memory_space<vmem>>, vector<4x16xf32>,
    %c0_161 = arith.constant 0 : index
    %c0_162 = arith.constant 0 : index
    %c218 = arith.constant 218 : index
    %132 = vector.load %arg1[%c0_161, %c0_162, %c218] : memref<1x4x384xf32, #tpu.memory_space<vmem>>, vector<1x4x16xf32>
    %133 = vector.shape_cast %132 : vector<1x4x16xf32> to vector<4x16xf32>
    %c8_163 = arith.constant 8 : index
    %c192_164 = arith.constant 192 : index
    %134 = vector.load %arg4[%c8_163, %c192_164] : memref<36x256xf32, #tpu.memory_space<vmem>>, vector<4x16xf32>
    tpu.vector_store %arg4[%c8_163, %c192_164], %133 {strides = array<i32>} : memref<36x256xf32, #tpu.memory_space<vmem>>, vector<4x16xf32>,
    %c0_165 = arith.constant 0 : index
    %c0_166 = arith.constant 0 : index
    %c236 = arith.constant 236 : index
    %135 = vector.load %arg1[%c0_165, %c0_166, %c236] : memref<1x4x384xf32, #tpu.memory_space<vmem>>, vector<1x4x16xf32>
    %136 = vector.shape_cast %135 : vector<1x4x16xf32> to vector<4x16xf32>
    %c8_167 = arith.constant 8 : index
    %c208_168 = arith.constant 208 : index
    %137 = vector.load %arg4[%c8_167, %c208_168] : memref<36x256xf32, #tpu.memory_space<vmem>>, vector<4x16xf32>
    tpu.vector_store %arg4[%c8_167, %c208_168], %136 {strides = array<i32>} : memref<36x256xf32, #tpu.memory_space<vmem>>, vector<4x16xf32>,
    %c0_169 = arith.constant 0 : index
    %c0_170 = arith.constant 0 : index
    %c254 = arith.constant 254 : index
    %138 = vector.load %arg1[%c0_169, %c0_170, %c254] : memref<1x4x384xf32, #tpu.memory_space<vmem>>, vector<1x4x16xf32>
    %139 = vector.shape_cast %138 : vector<1x4x16xf32> to vector<4x16xf32>
    %c8_171 = arith.constant 8 : index
    %c224_172 = arith.constant 224 : index
    %140 = vector.load %arg4[%c8_171, %c224_172] : memref<36x256xf32, #tpu.memory_space<vmem>>, vector<4x16xf32>
    tpu.vector_store %arg4[%c8_171, %c224_172], %139 {strides = array<i32>} : memref<36x256xf32, #tpu.memory_space<vmem>>, vector<4x16xf32>,
    %c0_173 = arith.constant 0 : index
    %c0_174 = arith.constant 0 : index
    %c272 = arith.constant 272 : index
    %141 = vector.load %arg1[%c0_173, %c0_174, %c272] : memref<1x4x384xf32, #tpu.memory_space<vmem>>, vector<1x4x16xf32>
    %142 = vector.shape_cast %141 : vector<1x4x16xf32> to vector<4x16xf32>
    %c8_175 = arith.constant 8 : index
    %c240_176 = arith.constant 240 : index
    %143 = vector.load %arg4[%c8_175, %c240_176] : memref<36x256xf32, #tpu.memory_space<vmem>>, vector<4x16xf32>
    tpu.vector_store %arg4[%c8_175, %c240_176], %142 {strides = array<i32>} : memref<36x256xf32, #tpu.memory_space<vmem>>, vector<4x16xf32>,
    %c0_177 = arith.constant 0 : index
    %c0_178 = arith.constant 0 : index
    %c18_179 = arith.constant 18 : index
    %144 = vector.load %arg1[%c0_177, %c0_178, %c18_179] : memref<1x4x384xf32, #tpu.memory_space<vmem>>, vector<1x4x16xf32>
    %145 = vector.shape_cast %144 : vector<1x4x16xf32> to vector<4x16xf32>
    %c12 = arith.constant 12 : index
    %c0_180 = arith.constant 0 : index
    %146 = vector.load %arg4[%c12, %c0_180] : memref<36x256xf32, #tpu.memory_space<vmem>>, vector<4x16xf32>
    tpu.vector_store %arg4[%c12, %c0_180], %145 {strides = array<i32>} : memref<36x256xf32, #tpu.memory_space<vmem>>, vector<4x16xf32>,
    %c0_181 = arith.constant 0 : index
    %c0_182 = arith.constant 0 : index
    %c36_183 = arith.constant 36 : index
    %147 = vector.load %arg1[%c0_181, %c0_182, %c36_183] : memref<1x4x384xf32, #tpu.memory_space<vmem>>, vector<1x4x16xf32>
    %148 = vector.shape_cast %147 : vector<1x4x16xf32> to vector<4x16xf32>
    %c12_184 = arith.constant 12 : index
    %c16_185 = arith.constant 16 : index
    %149 = vector.load %arg4[%c12_184, %c16_185] : memref<36x256xf32, #tpu.memory_space<vmem>>, vector<4x16xf32>
    tpu.vector_store %arg4[%c12_184, %c16_185], %148 {strides = array<i32>} : memref<36x256xf32, #tpu.memory_space<vmem>>, vector<4x16xf32>,
    %c0_186 = arith.constant 0 : index
    %c0_187 = arith.constant 0 : index
    %c54_188 = arith.constant 54 : index
    %150 = vector.load %arg1[%c0_186, %c0_187, %c54_188] : memref<1x4x384xf32, #tpu.memory_space<vmem>>, vector<1x4x16xf32>
    %151 = vector.shape_cast %150 : vector<1x4x16xf32> to vector<4x16xf32>
    %c12_189 = arith.constant 12 : index
    %c32_190 = arith.constant 32 : index
    %152 = vector.load %arg4[%c12_189, %c32_190] : memref<36x256xf32, #tpu.memory_space<vmem>>, vector<4x16xf32>
    tpu.vector_store %arg4[%c12_189, %c32_190], %151 {strides = array<i32>} : memref<36x256xf32, #tpu.memory_space<vmem>>, vector<4x16xf32>,
    %c0_191 = arith.constant 0 : index
    %c0_192 = arith.constant 0 : index
    %c72_193 = arith.constant 72 : index
    %153 = vector.load %arg1[%c0_191, %c0_192, %c72_193] : memref<1x4x384xf32, #tpu.memory_space<vmem>>, vector<1x4x16xf32>
    %154 = vector.shape_cast %153 : vector<1x4x16xf32> to vector<4x16xf32>
    %c12_194 = arith.constant 12 : index
    %c48_195 = arith.constant 48 : index
    %155 = vector.load %arg4[%c12_194, %c48_195] : memref<36x256xf32, #tpu.memory_space<vmem>>, vector<4x16xf32>
    tpu.vector_store %arg4[%c12_194, %c48_195], %154 {strides = array<i32>} : memref<36x256xf32, #tpu.memory_space<vmem>>, vector<4x16xf32>,
    %c0_196 = arith.constant 0 : index
    %c0_197 = arith.constant 0 : index
    %c90_198 = arith.constant 90 : index
    %156 = vector.load %arg1[%c0_196, %c0_197, %c90_198] : memref<1x4x384xf32, #tpu.memory_space<vmem>>, vector<1x4x16xf32>
    %157 = vector.shape_cast %156 : vector<1x4x16xf32> to vector<4x16xf32>
    %c12_199 = arith.constant 12 : index
    %c64_200 = arith.constant 64 : index
    %158 = vector.load %arg4[%c12_199, %c64_200] : memref<36x256xf32, #tpu.memory_space<vmem>>, vector<4x16xf32>
    tpu.vector_store %arg4[%c12_199, %c64_200], %157 {strides = array<i32>} : memref<36x256xf32, #tpu.memory_space<vmem>>, vector<4x16xf32>,
    %c0_201 = arith.constant 0 : index
    %c0_202 = arith.constant 0 : index
    %c108_203 = arith.constant 108 : index
    %159 = vector.load %arg1[%c0_201, %c0_202, %c108_203] : memref<1x4x384xf32, #tpu.memory_space<vmem>>, vector<1x4x16xf32>
    %160 = vector.shape_cast %159 : vector<1x4x16xf32> to vector<4x16xf32>
    %c12_204 = arith.constant 12 : index
    %c80_205 = arith.constant 80 : index
    %161 = vector.load %arg4[%c12_204, %c80_205] : memref<36x256xf32, #tpu.memory_space<vmem>>, vector<4x16xf32>
    tpu.vector_store %arg4[%c12_204, %c80_205], %160 {strides = array<i32>} : memref<36x256xf32, #tpu.memory_space<vmem>>, vector<4x16xf32>,
    %c0_206 = arith.constant 0 : index
    %c0_207 = arith.constant 0 : index
    %c126_208 = arith.constant 126 : index
    %162 = vector.load %arg1[%c0_206, %c0_207, %c126_208] : memref<1x4x384xf32, #tpu.memory_space<vmem>>, vector<1x4x16xf32>
    %163 = vector.shape_cast %162 : vector<1x4x16xf32> to vector<4x16xf32>
    %c12_209 = arith.constant 12 : index
    %c96_210 = arith.constant 96 : index
    %164 = vector.load %arg4[%c12_209, %c96_210] : memref<36x256xf32, #tpu.memory_space<vmem>>, vector<4x16xf32>
    tpu.vector_store %arg4[%c12_209, %c96_210], %163 {strides = array<i32>} : memref<36x256xf32, #tpu.memory_space<vmem>>, vector<4x16xf32>,
    %c0_211 = arith.constant 0 : index
    %c0_212 = arith.constant 0 : index
    %c144_213 = arith.constant 144 : index
    %165 = vector.load %arg1[%c0_211, %c0_212, %c144_213] : memref<1x4x384xf32, #tpu.memory_space<vmem>>, vector<1x4x16xf32>
    %166 = vector.shape_cast %165 : vector<1x4x16xf32> to vector<4x16xf32>
    %c12_214 = arith.constant 12 : index
    %c112_215 = arith.constant 112 : index
    %167 = vector.load %arg4[%c12_214, %c112_215] : memref<36x256xf32, #tpu.memory_space<vmem>>, vector<4x16xf32>
    tpu.vector_store %arg4[%c12_214, %c112_215], %166 {strides = array<i32>} : memref<36x256xf32, #tpu.memory_space<vmem>>, vector<4x16xf32>,
    %c0_216 = arith.constant 0 : index
    %c0_217 = arith.constant 0 : index
    %c162_218 = arith.constant 162 : index
    %168 = vector.load %arg1[%c0_216, %c0_217, %c162_218] : memref<1x4x384xf32, #tpu.memory_space<vmem>>, vector<1x4x16xf32>
    %169 = vector.shape_cast %168 : vector<1x4x16xf32> to vector<4x16xf32>
    %c12_219 = arith.constant 12 : index
    %c128_220 = arith.constant 128 : index
    %170 = vector.load %arg4[%c12_219, %c128_220] : memref<36x256xf32, #tpu.memory_space<vmem>>, vector<4x16xf32>
    tpu.vector_store %arg4[%c12_219, %c128_220], %169 {strides = array<i32>} : memref<36x256xf32, #tpu.memory_space<vmem>>, vector<4x16xf32>,
    %c0_221 = arith.constant 0 : index
    %c0_222 = arith.constant 0 : index
    %c180_223 = arith.constant 180 : index
    %171 = vector.load %arg1[%c0_221, %c0_222, %c180_223] : memref<1x4x384xf32, #tpu.memory_space<vmem>>, vector<1x4x16xf32>
    %172 = vector.shape_cast %171 : vector<1x4x16xf32> to vector<4x16xf32>
    %c12_224 = arith.constant 12 : index
    %c144_225 = arith.constant 144 : index
    %173 = vector.load %arg4[%c12_224, %c144_225] : memref<36x256xf32, #tpu.memory_space<vmem>>, vector<4x16xf32>
    tpu.vector_store %arg4[%c12_224, %c144_225], %172 {strides = array<i32>} : memref<36x256xf32, #tpu.memory_space<vmem>>, vector<4x16xf32>,
    %c0_226 = arith.constant 0 : index
    %c0_227 = arith.constant 0 : index
    %c198_228 = arith.constant 198 : index
    %174 = vector.load %arg1[%c0_226, %c0_227, %c198_228] : memref<1x4x384xf32, #tpu.memory_space<vmem>>, vector<1x4x16xf32>
    %175 = vector.shape_cast %174 : vector<1x4x16xf32> to vector<4x16xf32>
    %c12_229 = arith.constant 12 : index
    %c160_230 = arith.constant 160 : index
    %176 = vector.load %arg4[%c12_229, %c160_230] : memref<36x256xf32, #tpu.memory_space<vmem>>, vector<4x16xf32>
    tpu.vector_store %arg4[%c12_229, %c160_230], %175 {strides = array<i32>} : memref<36x256xf32, #tpu.memory_space<vmem>>, vector<4x16xf32>,
    %c0_231 = arith.constant 0 : index
    %c0_232 = arith.constant 0 : index
    %c216_233 = arith.constant 216 : index
    %177 = vector.load %arg1[%c0_231, %c0_232, %c216_233] : memref<1x4x384xf32, #tpu.memory_space<vmem>>, vector<1x4x16xf32>
    %178 = vector.shape_cast %177 : vector<1x4x16xf32> to vector<4x16xf32>
    %c12_234 = arith.constant 12 : index
    %c176_235 = arith.constant 176 : index
    %179 = vector.load %arg4[%c12_234, %c176_235] : memref<36x256xf32, #tpu.memory_space<vmem>>, vector<4x16xf32>
    tpu.vector_store %arg4[%c12_234, %c176_235], %178 {strides = array<i32>} : memref<36x256xf32, #tpu.memory_space<vmem>>, vector<4x16xf32>,
    %c0_236 = arith.constant 0 : index
    %c0_237 = arith.constant 0 : index
    %c234_238 = arith.constant 234 : index
    %180 = vector.load %arg1[%c0_236, %c0_237, %c234_238] : memref<1x4x384xf32, #tpu.memory_space<vmem>>, vector<1x4x16xf32>
    %181 = vector.shape_cast %180 : vector<1x4x16xf32> to vector<4x16xf32>
    %c12_239 = arith.constant 12 : index
    %c192_240 = arith.constant 192 : index
    %182 = vector.load %arg4[%c12_239, %c192_240] : memref<36x256xf32, #tpu.memory_space<vmem>>, vector<4x16xf32>
    tpu.vector_store %arg4[%c12_239, %c192_240], %181 {strides = array<i32>} : memref<36x256xf32, #tpu.memory_space<vmem>>, vector<4x16xf32>,
    %c0_241 = arith.constant 0 : index
    %c0_242 = arith.constant 0 : index
    %c252_243 = arith.constant 252 : index
    %183 = vector.load %arg1[%c0_241, %c0_242, %c252_243] : memref<1x4x384xf32, #tpu.memory_space<vmem>>, vector<1x4x16xf32>
    %184 = vector.shape_cast %183 : vector<1x4x16xf32> to vector<4x16xf32>
    %c12_244 = arith.constant 12 : index
    %c208_245 = arith.constant 208 : index
    %185 = vector.load %arg4[%c12_244, %c208_245] : memref<36x256xf32, #tpu.memory_space<vmem>>, vector<4x16xf32>
    tpu.vector_store %arg4[%c12_244, %c208_245], %184 {strides = array<i32>} : memref<36x256xf32, #tpu.memory_space<vmem>>, vector<4x16xf32>,
    %c0_246 = arith.constant 0 : index
    %c0_247 = arith.constant 0 : index
    %c270_248 = arith.constant 270 : index
    %186 = vector.load %arg1[%c0_246, %c0_247, %c270_248] : memref<1x4x384xf32, #tpu.memory_space<vmem>>, vector<1x4x16xf32>
    %187 = vector.shape_cast %186 : vector<1x4x16xf32> to vector<4x16xf32>
    %c12_249 = arith.constant 12 : index
    %c224_250 = arith.constant 224 : index
    %188 = vector.load %arg4[%c12_249, %c224_250] : memref<36x256xf32, #tpu.memory_space<vmem>>, vector<4x16xf32>
    tpu.vector_store %arg4[%c12_249, %c224_250], %187 {strides = array<i32>} : memref<36x256xf32, #tpu.memory_space<vmem>>, vector<4x16xf32>,
    %c0_251 = arith.constant 0 : index
    %c0_252 = arith.constant 0 : index
    %c288 = arith.constant 288 : index
    %189 = vector.load %arg1[%c0_251, %c0_252, %c288] : memref<1x4x384xf32, #tpu.memory_space<vmem>>, vector<1x4x16xf32>
    %190 = vector.shape_cast %189 : vector<1x4x16xf32> to vector<4x16xf32>
    %c12_253 = arith.constant 12 : index
    %c240_254 = arith.constant 240 : index
    %191 = vector.load %arg4[%c12_253, %c240_254] : memref<36x256xf32, #tpu.memory_space<vmem>>, vector<4x16xf32>
    tpu.vector_store %arg4[%c12_253, %c240_254], %190 {strides = array<i32>} : memref<36x256xf32, #tpu.memory_space<vmem>>, vector<4x16xf32>,
    %c0_255 = arith.constant 0 : index
    %c0_256 = arith.constant 0 : index
    %c19_257 = arith.constant 19 : index
    %192 = vector.load %arg1[%c0_255, %c0_256, %c19_257] : memref<1x4x384xf32, #tpu.memory_space<vmem>>, vector<1x4x16xf32>
    %193 = vector.shape_cast %192 : vector<1x4x16xf32> to vector<4x16xf32>
    %c16_258 = arith.constant 16 : index
    %c0_259 = arith.constant 0 : index
    %194 = vector.load %arg4[%c16_258, %c0_259] : memref<36x256xf32, #tpu.memory_space<vmem>>, vector<4x16xf32>
    tpu.vector_store %arg4[%c16_258, %c0_259], %193 {strides = array<i32>} : memref<36x256xf32, #tpu.memory_space<vmem>>, vector<4x16xf32>,
    %c0_260 = arith.constant 0 : index
    %c0_261 = arith.constant 0 : index
    %c37_262 = arith.constant 37 : index
    %195 = vector.load %arg1[%c0_260, %c0_261, %c37_262] : memref<1x4x384xf32, #tpu.memory_space<vmem>>, vector<1x4x16xf32>
    %196 = vector.shape_cast %195 : vector<1x4x16xf32> to vector<4x16xf32>
    %c16_263 = arith.constant 16 : index
    %c16_264 = arith.constant 16 : index
    %197 = vector.load %arg4[%c16_263, %c16_264] : memref<36x256xf32, #tpu.memory_space<vmem>>, vector<4x16xf32>
    tpu.vector_store %arg4[%c16_263, %c16_264], %196 {strides = array<i32>} : memref<36x256xf32, #tpu.memory_space<vmem>>, vector<4x16xf32>,
    %c0_265 = arith.constant 0 : index
    %c0_266 = arith.constant 0 : index
    %c55_267 = arith.constant 55 : index
    %198 = vector.load %arg1[%c0_265, %c0_266, %c55_267] : memref<1x4x384xf32, #tpu.memory_space<vmem>>, vector<1x4x16xf32>
    %199 = vector.shape_cast %198 : vector<1x4x16xf32> to vector<4x16xf32>
    %c16_268 = arith.constant 16 : index
    %c32_269 = arith.constant 32 : index
    %200 = vector.load %arg4[%c16_268, %c32_269] : memref<36x256xf32, #tpu.memory_space<vmem>>, vector<4x16xf32>
    tpu.vector_store %arg4[%c16_268, %c32_269], %199 {strides = array<i32>} : memref<36x256xf32, #tpu.memory_space<vmem>>, vector<4x16xf32>,
    %c0_270 = arith.constant 0 : index
    %c0_271 = arith.constant 0 : index
    %c73_272 = arith.constant 73 : index
    %201 = vector.load %arg1[%c0_270, %c0_271, %c73_272] : memref<1x4x384xf32, #tpu.memory_space<vmem>>, vector<1x4x16xf32>
    %202 = vector.shape_cast %201 : vector<1x4x16xf32> to vector<4x16xf32>
    %c16_273 = arith.constant 16 : index
    %c48_274 = arith.constant 48 : index
    %203 = vector.load %arg4[%c16_273, %c48_274] : memref<36x256xf32, #tpu.memory_space<vmem>>, vector<4x16xf32>
    tpu.vector_store %arg4[%c16_273, %c48_274], %202 {strides = array<i32>} : memref<36x256xf32, #tpu.memory_space<vmem>>, vector<4x16xf32>,
    %c0_275 = arith.constant 0 : index
    %c0_276 = arith.constant 0 : index
    %c91_277 = arith.constant 91 : index
    %204 = vector.load %arg1[%c0_275, %c0_276, %c91_277] : memref<1x4x384xf32, #tpu.memory_space<vmem>>, vector<1x4x16xf32>
    %205 = vector.shape_cast %204 : vector<1x4x16xf32> to vector<4x16xf32>
    %c16_278 = arith.constant 16 : index
    %c64_279 = arith.constant 64 : index
    %206 = vector.load %arg4[%c16_278, %c64_279] : memref<36x256xf32, #tpu.memory_space<vmem>>, vector<4x16xf32>
    tpu.vector_store %arg4[%c16_278, %c64_279], %205 {strides = array<i32>} : memref<36x256xf32, #tpu.memory_space<vmem>>, vector<4x16xf32>,
    %c0_280 = arith.constant 0 : index
    %c0_281 = arith.constant 0 : index
    %c109_282 = arith.constant 109 : index
    %207 = vector.load %arg1[%c0_280, %c0_281, %c109_282] : memref<1x4x384xf32, #tpu.memory_space<vmem>>, vector<1x4x16xf32>
    %208 = vector.shape_cast %207 : vector<1x4x16xf32> to vector<4x16xf32>
    %c16_283 = arith.constant 16 : index
    %c80_284 = arith.constant 80 : index
    %209 = vector.load %arg4[%c16_283, %c80_284] : memref<36x256xf32, #tpu.memory_space<vmem>>, vector<4x16xf32>
    tpu.vector_store %arg4[%c16_283, %c80_284], %208 {strides = array<i32>} : memref<36x256xf32, #tpu.memory_space<vmem>>, vector<4x16xf32>,
    %c0_285 = arith.constant 0 : index
    %c0_286 = arith.constant 0 : index
    %c127_287 = arith.constant 127 : index
    %210 = vector.load %arg1[%c0_285, %c0_286, %c127_287] : memref<1x4x384xf32, #tpu.memory_space<vmem>>, vector<1x4x16xf32>
    %211 = vector.shape_cast %210 : vector<1x4x16xf32> to vector<4x16xf32>
    %c16_288 = arith.constant 16 : index
    %c96_289 = arith.constant 96 : index
    %212 = vector.load %arg4[%c16_288, %c96_289] : memref<36x256xf32, #tpu.memory_space<vmem>>, vector<4x16xf32>
    tpu.vector_store %arg4[%c16_288, %c96_289], %211 {strides = array<i32>} : memref<36x256xf32, #tpu.memory_space<vmem>>, vector<4x16xf32>,
    %c0_290 = arith.constant 0 : index
    %c0_291 = arith.constant 0 : index
    %c145_292 = arith.constant 145 : index
    %213 = vector.load %arg1[%c0_290, %c0_291, %c145_292] : memref<1x4x384xf32, #tpu.memory_space<vmem>>, vector<1x4x16xf32>
    %214 = vector.shape_cast %213 : vector<1x4x16xf32> to vector<4x16xf32>
    %c16_293 = arith.constant 16 : index
    %c112_294 = arith.constant 112 : index
    %215 = vector.load %arg4[%c16_293, %c112_294] : memref<36x256xf32, #tpu.memory_space<vmem>>, vector<4x16xf32>
    tpu.vector_store %arg4[%c16_293, %c112_294], %214 {strides = array<i32>} : memref<36x256xf32, #tpu.memory_space<vmem>>, vector<4x16xf32>,
    %c0_295 = arith.constant 0 : index
    %c0_296 = arith.constant 0 : index
    %c163_297 = arith.constant 163 : index
    %216 = vector.load %arg1[%c0_295, %c0_296, %c163_297] : memref<1x4x384xf32, #tpu.memory_space<vmem>>, vector<1x4x16xf32>
    %217 = vector.shape_cast %216 : vector<1x4x16xf32> to vector<4x16xf32>
    %c16_298 = arith.constant 16 : index
    %c128_299 = arith.constant 128 : index
    %218 = vector.load %arg4[%c16_298, %c128_299] : memref<36x256xf32, #tpu.memory_space<vmem>>, vector<4x16xf32>
    tpu.vector_store %arg4[%c16_298, %c128_299], %217 {strides = array<i32>} : memref<36x256xf32, #tpu.memory_space<vmem>>, vector<4x16xf32>,
    %c0_300 = arith.constant 0 : index
    %c0_301 = arith.constant 0 : index
    %c181_302 = arith.constant 181 : index
    %219 = vector.load %arg1[%c0_300, %c0_301, %c181_302] : memref<1x4x384xf32, #tpu.memory_space<vmem>>, vector<1x4x16xf32>
    %220 = vector.shape_cast %219 : vector<1x4x16xf32> to vector<4x16xf32>
    %c16_303 = arith.constant 16 : index
    %c144_304 = arith.constant 144 : index
    %221 = vector.load %arg4[%c16_303, %c144_304] : memref<36x256xf32, #tpu.memory_space<vmem>>, vector<4x16xf32>
    tpu.vector_store %arg4[%c16_303, %c144_304], %220 {strides = array<i32>} : memref<36x256xf32, #tpu.memory_space<vmem>>, vector<4x16xf32>,
    %c0_305 = arith.constant 0 : index
    %c0_306 = arith.constant 0 : index
    %c199_307 = arith.constant 199 : index
    %222 = vector.load %arg1[%c0_305, %c0_306, %c199_307] : memref<1x4x384xf32, #tpu.memory_space<vmem>>, vector<1x4x16xf32>
    %223 = vector.shape_cast %222 : vector<1x4x16xf32> to vector<4x16xf32>
    %c16_308 = arith.constant 16 : index
    %c160_309 = arith.constant 160 : index
    %224 = vector.load %arg4[%c16_308, %c160_309] : memref<36x256xf32, #tpu.memory_space<vmem>>, vector<4x16xf32>
    tpu.vector_store %arg4[%c16_308, %c160_309], %223 {strides = array<i32>} : memref<36x256xf32, #tpu.memory_space<vmem>>, vector<4x16xf32>,
    %c0_310 = arith.constant 0 : index
    %c0_311 = arith.constant 0 : index
    %c217_312 = arith.constant 217 : index
    %225 = vector.load %arg1[%c0_310, %c0_311, %c217_312] : memref<1x4x384xf32, #tpu.memory_space<vmem>>, vector<1x4x16xf32>
    %226 = vector.shape_cast %225 : vector<1x4x16xf32> to vector<4x16xf32>
    %c16_313 = arith.constant 16 : index
    %c176_314 = arith.constant 176 : index
    %227 = vector.load %arg4[%c16_313, %c176_314] : memref<36x256xf32, #tpu.memory_space<vmem>>, vector<4x16xf32>
    tpu.vector_store %arg4[%c16_313, %c176_314], %226 {strides = array<i32>} : memref<36x256xf32, #tpu.memory_space<vmem>>, vector<4x16xf32>,
    %c0_315 = arith.constant 0 : index
    %c0_316 = arith.constant 0 : index
    %c235_317 = arith.constant 235 : index
    %228 = vector.load %arg1[%c0_315, %c0_316, %c235_317] : memref<1x4x384xf32, #tpu.memory_space<vmem>>, vector<1x4x16xf32>
    %229 = vector.shape_cast %228 : vector<1x4x16xf32> to vector<4x16xf32>
    %c16_318 = arith.constant 16 : index
    %c192_319 = arith.constant 192 : index
    %230 = vector.load %arg4[%c16_318, %c192_319] : memref<36x256xf32, #tpu.memory_space<vmem>>, vector<4x16xf32>
    tpu.vector_store %arg4[%c16_318, %c192_319], %229 {strides = array<i32>} : memref<36x256xf32, #tpu.memory_space<vmem>>, vector<4x16xf32>,
    %c0_320 = arith.constant 0 : index
    %c0_321 = arith.constant 0 : index
    %c253_322 = arith.constant 253 : index
    %231 = vector.load %arg1[%c0_320, %c0_321, %c253_322] : memref<1x4x384xf32, #tpu.memory_space<vmem>>, vector<1x4x16xf32>
    %232 = vector.shape_cast %231 : vector<1x4x16xf32> to vector<4x16xf32>
    %c16_323 = arith.constant 16 : index
    %c208_324 = arith.constant 208 : index
    %233 = vector.load %arg4[%c16_323, %c208_324] : memref<36x256xf32, #tpu.memory_space<vmem>>, vector<4x16xf32>
    tpu.vector_store %arg4[%c16_323, %c208_324], %232 {strides = array<i32>} : memref<36x256xf32, #tpu.memory_space<vmem>>, vector<4x16xf32>,
    %c0_325 = arith.constant 0 : index
    %c0_326 = arith.constant 0 : index
    %c271_327 = arith.constant 271 : index
    %234 = vector.load %arg1[%c0_325, %c0_326, %c271_327] : memref<1x4x384xf32, #tpu.memory_space<vmem>>, vector<1x4x16xf32>
    %235 = vector.shape_cast %234 : vector<1x4x16xf32> to vector<4x16xf32>
    %c16_328 = arith.constant 16 : index
    %c224_329 = arith.constant 224 : index
    %236 = vector.load %arg4[%c16_328, %c224_329] : memref<36x256xf32, #tpu.memory_space<vmem>>, vector<4x16xf32>
    tpu.vector_store %arg4[%c16_328, %c224_329], %235 {strides = array<i32>} : memref<36x256xf32, #tpu.memory_space<vmem>>, vector<4x16xf32>,
    %c0_330 = arith.constant 0 : index
    %c0_331 = arith.constant 0 : index
    %c289 = arith.constant 289 : index
    %237 = vector.load %arg1[%c0_330, %c0_331, %c289] : memref<1x4x384xf32, #tpu.memory_space<vmem>>, vector<1x4x16xf32>
    %238 = vector.shape_cast %237 : vector<1x4x16xf32> to vector<4x16xf32>
    %c16_332 = arith.constant 16 : index
    %c240_333 = arith.constant 240 : index
    %239 = vector.load %arg4[%c16_332, %c240_333] : memref<36x256xf32, #tpu.memory_space<vmem>>, vector<4x16xf32>
    tpu.vector_store %arg4[%c16_332, %c240_333], %238 {strides = array<i32>} : memref<36x256xf32, #tpu.memory_space<vmem>>, vector<4x16xf32>,
    %c0_334 = arith.constant 0 : index
    %c0_335 = arith.constant 0 : index
    %c20_336 = arith.constant 20 : index
    %240 = vector.load %arg1[%c0_334, %c0_335, %c20_336] : memref<1x4x384xf32, #tpu.memory_space<vmem>>, vector<1x4x16xf32>
    %241 = vector.shape_cast %240 : vector<1x4x16xf32> to vector<4x16xf32>
    %c20_337 = arith.constant 20 : index
    %c0_338 = arith.constant 0 : index
    %242 = vector.load %arg4[%c20_337, %c0_338] : memref<36x256xf32, #tpu.memory_space<vmem>>, vector<4x16xf32>
    tpu.vector_store %arg4[%c20_337, %c0_338], %241 {strides = array<i32>} : memref<36x256xf32, #tpu.memory_space<vmem>>, vector<4x16xf32>,
    %c0_339 = arith.constant 0 : index
    %c0_340 = arith.constant 0 : index
    %c38_341 = arith.constant 38 : index
    %243 = vector.load %arg1[%c0_339, %c0_340, %c38_341] : memref<1x4x384xf32, #tpu.memory_space<vmem>>, vector<1x4x16xf32>
    %244 = vector.shape_cast %243 : vector<1x4x16xf32> to vector<4x16xf32>
    %c20_342 = arith.constant 20 : index
    %c16_343 = arith.constant 16 : index
    %245 = vector.load %arg4[%c20_342, %c16_343] : memref<36x256xf32, #tpu.memory_space<vmem>>, vector<4x16xf32>
    tpu.vector_store %arg4[%c20_342, %c16_343], %244 {strides = array<i32>} : memref<36x256xf32, #tpu.memory_space<vmem>>, vector<4x16xf32>,
    %c0_344 = arith.constant 0 : index
    %c0_345 = arith.constant 0 : index
    %c56_346 = arith.constant 56 : index
    %246 = vector.load %arg1[%c0_344, %c0_345, %c56_346] : memref<1x4x384xf32, #tpu.memory_space<vmem>>, vector<1x4x16xf32>
    %247 = vector.shape_cast %246 : vector<1x4x16xf32> to vector<4x16xf32>
    %c20_347 = arith.constant 20 : index
    %c32_348 = arith.constant 32 : index
    %248 = vector.load %arg4[%c20_347, %c32_348] : memref<36x256xf32, #tpu.memory_space<vmem>>, vector<4x16xf32>
    tpu.vector_store %arg4[%c20_347, %c32_348], %247 {strides = array<i32>} : memref<36x256xf32, #tpu.memory_space<vmem>>, vector<4x16xf32>,
    %c0_349 = arith.constant 0 : index
    %c0_350 = arith.constant 0 : index
    %c74_351 = arith.constant 74 : index
    %249 = vector.load %arg1[%c0_349, %c0_350, %c74_351] : memref<1x4x384xf32, #tpu.memory_space<vmem>>, vector<1x4x16xf32>
    %250 = vector.shape_cast %249 : vector<1x4x16xf32> to vector<4x16xf32>
    %c20_352 = arith.constant 20 : index
    %c48_353 = arith.constant 48 : index
    %251 = vector.load %arg4[%c20_352, %c48_353] : memref<36x256xf32, #tpu.memory_space<vmem>>, vector<4x16xf32>
    tpu.vector_store %arg4[%c20_352, %c48_353], %250 {strides = array<i32>} : memref<36x256xf32, #tpu.memory_space<vmem>>, vector<4x16xf32>,
    %c0_354 = arith.constant 0 : index
    %c0_355 = arith.constant 0 : index
    %c92_356 = arith.constant 92 : index
    %252 = vector.load %arg1[%c0_354, %c0_355, %c92_356] : memref<1x4x384xf32, #tpu.memory_space<vmem>>, vector<1x4x16xf32>
    %253 = vector.shape_cast %252 : vector<1x4x16xf32> to vector<4x16xf32>
    %c20_357 = arith.constant 20 : index
    %c64_358 = arith.constant 64 : index
    %254 = vector.load %arg4[%c20_357, %c64_358] : memref<36x256xf32, #tpu.memory_space<vmem>>, vector<4x16xf32>
    tpu.vector_store %arg4[%c20_357, %c64_358], %253 {strides = array<i32>} : memref<36x256xf32, #tpu.memory_space<vmem>>, vector<4x16xf32>,
    %c0_359 = arith.constant 0 : index
    %c0_360 = arith.constant 0 : index
    %c110_361 = arith.constant 110 : index
    %255 = vector.load %arg1[%c0_359, %c0_360, %c110_361] : memref<1x4x384xf32, #tpu.memory_space<vmem>>, vector<1x4x16xf32>
    %256 = vector.shape_cast %255 : vector<1x4x16xf32> to vector<4x16xf32>
    %c20_362 = arith.constant 20 : index
    %c80_363 = arith.constant 80 : index
    %257 = vector.load %arg4[%c20_362, %c80_363] : memref<36x256xf32, #tpu.memory_space<vmem>>, vector<4x16xf32>
    tpu.vector_store %arg4[%c20_362, %c80_363], %256 {strides = array<i32>} : memref<36x256xf32, #tpu.memory_space<vmem>>, vector<4x16xf32>,
    %c0_364 = arith.constant 0 : index
    %c0_365 = arith.constant 0 : index
    %c128_366 = arith.constant 128 : index
    %258 = vector.load %arg1[%c0_364, %c0_365, %c128_366] : memref<1x4x384xf32, #tpu.memory_space<vmem>>, vector<1x4x16xf32>
    %259 = vector.shape_cast %258 : vector<1x4x16xf32> to vector<4x16xf32>
    %c20_367 = arith.constant 20 : index
    %c96_368 = arith.constant 96 : index
    %260 = vector.load %arg4[%c20_367, %c96_368] : memref<36x256xf32, #tpu.memory_space<vmem>>, vector<4x16xf32>
    tpu.vector_store %arg4[%c20_367, %c96_368], %259 {strides = array<i32>} : memref<36x256xf32, #tpu.memory_space<vmem>>, vector<4x16xf32>,
    %c0_369 = arith.constant 0 : index
    %c0_370 = arith.constant 0 : index
    %c146_371 = arith.constant 146 : index
    %261 = vector.load %arg1[%c0_369, %c0_370, %c146_371] : memref<1x4x384xf32, #tpu.memory_space<vmem>>, vector<1x4x16xf32>
    %262 = vector.shape_cast %261 : vector<1x4x16xf32> to vector<4x16xf32>
    %c20_372 = arith.constant 20 : index
    %c112_373 = arith.constant 112 : index
    %263 = vector.load %arg4[%c20_372, %c112_373] : memref<36x256xf32, #tpu.memory_space<vmem>>, vector<4x16xf32>
    tpu.vector_store %arg4[%c20_372, %c112_373], %262 {strides = array<i32>} : memref<36x256xf32, #tpu.memory_space<vmem>>, vector<4x16xf32>,
    %c0_374 = arith.constant 0 : index
    %c0_375 = arith.constant 0 : index
    %c164_376 = arith.constant 164 : index
    %264 = vector.load %arg1[%c0_374, %c0_375, %c164_376] : memref<1x4x384xf32, #tpu.memory_space<vmem>>, vector<1x4x16xf32>
    %265 = vector.shape_cast %264 : vector<1x4x16xf32> to vector<4x16xf32>
    %c20_377 = arith.constant 20 : index
    %c128_378 = arith.constant 128 : index
    %266 = vector.load %arg4[%c20_377, %c128_378] : memref<36x256xf32, #tpu.memory_space<vmem>>, vector<4x16xf32>
    tpu.vector_store %arg4[%c20_377, %c128_378], %265 {strides = array<i32>} : memref<36x256xf32, #tpu.memory_space<vmem>>, vector<4x16xf32>,
    %c0_379 = arith.constant 0 : index
    %c0_380 = arith.constant 0 : index
    %c182_381 = arith.constant 182 : index
    %267 = vector.load %arg1[%c0_379, %c0_380, %c182_381] : memref<1x4x384xf32, #tpu.memory_space<vmem>>, vector<1x4x16xf32>
    %268 = vector.shape_cast %267 : vector<1x4x16xf32> to vector<4x16xf32>
    %c20_382 = arith.constant 20 : index
    %c144_383 = arith.constant 144 : index
    %269 = vector.load %arg4[%c20_382, %c144_383] : memref<36x256xf32, #tpu.memory_space<vmem>>, vector<4x16xf32>
    tpu.vector_store %arg4[%c20_382, %c144_383], %268 {strides = array<i32>} : memref<36x256xf32, #tpu.memory_space<vmem>>, vector<4x16xf32>,
    %c0_384 = arith.constant 0 : index
    %c0_385 = arith.constant 0 : index
    %c200_386 = arith.constant 200 : index
    %270 = vector.load %arg1[%c0_384, %c0_385, %c200_386] : memref<1x4x384xf32, #tpu.memory_space<vmem>>, vector<1x4x16xf32>
    %271 = vector.shape_cast %270 : vector<1x4x16xf32> to vector<4x16xf32>
    %c20_387 = arith.constant 20 : index
    %c160_388 = arith.constant 160 : index
    %272 = vector.load %arg4[%c20_387, %c160_388] : memref<36x256xf32, #tpu.memory_space<vmem>>, vector<4x16xf32>
    tpu.vector_store %arg4[%c20_387, %c160_388], %271 {strides = array<i32>} : memref<36x256xf32, #tpu.memory_space<vmem>>, vector<4x16xf32>,
    %c0_389 = arith.constant 0 : index
    %c0_390 = arith.constant 0 : index
    %c218_391 = arith.constant 218 : index
    %273 = vector.load %arg1[%c0_389, %c0_390, %c218_391] : memref<1x4x384xf32, #tpu.memory_space<vmem>>, vector<1x4x16xf32>
    %274 = vector.shape_cast %273 : vector<1x4x16xf32> to vector<4x16xf32>
    %c20_392 = arith.constant 20 : index
    %c176_393 = arith.constant 176 : index
    %275 = vector.load %arg4[%c20_392, %c176_393] : memref<36x256xf32, #tpu.memory_space<vmem>>, vector<4x16xf32>
    tpu.vector_store %arg4[%c20_392, %c176_393], %274 {strides = array<i32>} : memref<36x256xf32, #tpu.memory_space<vmem>>, vector<4x16xf32>,
    %c0_394 = arith.constant 0 : index
    %c0_395 = arith.constant 0 : index
    %c236_396 = arith.constant 236 : index
    %276 = vector.load %arg1[%c0_394, %c0_395, %c236_396] : memref<1x4x384xf32, #tpu.memory_space<vmem>>, vector<1x4x16xf32>
    %277 = vector.shape_cast %276 : vector<1x4x16xf32> to vector<4x16xf32>
    %c20_397 = arith.constant 20 : index
    %c192_398 = arith.constant 192 : index
    %278 = vector.load %arg4[%c20_397, %c192_398] : memref<36x256xf32, #tpu.memory_space<vmem>>, vector<4x16xf32>
    tpu.vector_store %arg4[%c20_397, %c192_398], %277 {strides = array<i32>} : memref<36x256xf32, #tpu.memory_space<vmem>>, vector<4x16xf32>,
    %c0_399 = arith.constant 0 : index
    %c0_400 = arith.constant 0 : index
    %c254_401 = arith.constant 254 : index
    %279 = vector.load %arg1[%c0_399, %c0_400, %c254_401] : memref<1x4x384xf32, #tpu.memory_space<vmem>>, vector<1x4x16xf32>
    %280 = vector.shape_cast %279 : vector<1x4x16xf32> to vector<4x16xf32>
    %c20_402 = arith.constant 20 : index
    %c208_403 = arith.constant 208 : index
    %281 = vector.load %arg4[%c20_402, %c208_403] : memref<36x256xf32, #tpu.memory_space<vmem>>, vector<4x16xf32>
    tpu.vector_store %arg4[%c20_402, %c208_403], %280 {strides = array<i32>} : memref<36x256xf32, #tpu.memory_space<vmem>>, vector<4x16xf32>,
    %c0_404 = arith.constant 0 : index
    %c0_405 = arith.constant 0 : index
    %c272_406 = arith.constant 272 : index
    %282 = vector.load %arg1[%c0_404, %c0_405, %c272_406] : memref<1x4x384xf32, #tpu.memory_space<vmem>>, vector<1x4x16xf32>
    %283 = vector.shape_cast %282 : vector<1x4x16xf32> to vector<4x16xf32>
    %c20_407 = arith.constant 20 : index
    %c224_408 = arith.constant 224 : index
    %284 = vector.load %arg4[%c20_407, %c224_408] : memref<36x256xf32, #tpu.memory_space<vmem>>, vector<4x16xf32>
    tpu.vector_store %arg4[%c20_407, %c224_408], %283 {strides = array<i32>} : memref<36x256xf32, #tpu.memory_space<vmem>>, vector<4x16xf32>,
    %c0_409 = arith.constant 0 : index
    %c0_410 = arith.constant 0 : index
    %c290 = arith.constant 290 : index
    %285 = vector.load %arg1[%c0_409, %c0_410, %c290] : memref<1x4x384xf32, #tpu.memory_space<vmem>>, vector<1x4x16xf32>
    %286 = vector.shape_cast %285 : vector<1x4x16xf32> to vector<4x16xf32>
    %c20_411 = arith.constant 20 : index
    %c240_412 = arith.constant 240 : index
    %287 = vector.load %arg4[%c20_411, %c240_412] : memref<36x256xf32, #tpu.memory_space<vmem>>, vector<4x16xf32>
    tpu.vector_store %arg4[%c20_411, %c240_412], %286 {strides = array<i32>} : memref<36x256xf32, #tpu.memory_space<vmem>>, vector<4x16xf32>,
    %c0_413 = arith.constant 0 : index
    %c0_414 = arith.constant 0 : index
    %c36_415 = arith.constant 36 : index
    %288 = vector.load %arg1[%c0_413, %c0_414, %c36_415] : memref<1x4x384xf32, #tpu.memory_space<vmem>>, vector<1x4x16xf32>
    %289 = vector.shape_cast %288 : vector<1x4x16xf32> to vector<4x16xf32>
    %c24 = arith.constant 24 : index
    %c0_416 = arith.constant 0 : index
    %290 = vector.load %arg4[%c24, %c0_416] : memref<36x256xf32, #tpu.memory_space<vmem>>, vector<4x16xf32>
    tpu.vector_store %arg4[%c24, %c0_416], %289 {strides = array<i32>} : memref<36x256xf32, #tpu.memory_space<vmem>>, vector<4x16xf32>,
    %c0_417 = arith.constant 0 : index
    %c0_418 = arith.constant 0 : index
    %c54_419 = arith.constant 54 : index
    %291 = vector.load %arg1[%c0_417, %c0_418, %c54_419] : memref<1x4x384xf32, #tpu.memory_space<vmem>>, vector<1x4x16xf32>
    %292 = vector.shape_cast %291 : vector<1x4x16xf32> to vector<4x16xf32>
    %c24_420 = arith.constant 24 : index
    %c16_421 = arith.constant 16 : index
    %293 = vector.load %arg4[%c24_420, %c16_421] : memref<36x256xf32, #tpu.memory_space<vmem>>, vector<4x16xf32>
    tpu.vector_store %arg4[%c24_420, %c16_421], %292 {strides = array<i32>} : memref<36x256xf32, #tpu.memory_space<vmem>>, vector<4x16xf32>,
    %c0_422 = arith.constant 0 : index
    %c0_423 = arith.constant 0 : index
    %c72_424 = arith.constant 72 : index
    %294 = vector.load %arg1[%c0_422, %c0_423, %c72_424] : memref<1x4x384xf32, #tpu.memory_space<vmem>>, vector<1x4x16xf32>
    %295 = vector.shape_cast %294 : vector<1x4x16xf32> to vector<4x16xf32>
    %c24_425 = arith.constant 24 : index
    %c32_426 = arith.constant 32 : index
    %296 = vector.load %arg4[%c24_425, %c32_426] : memref<36x256xf32, #tpu.memory_space<vmem>>, vector<4x16xf32>
    tpu.vector_store %arg4[%c24_425, %c32_426], %295 {strides = array<i32>} : memref<36x256xf32, #tpu.memory_space<vmem>>, vector<4x16xf32>,
    %c0_427 = arith.constant 0 : index
    %c0_428 = arith.constant 0 : index
    %c90_429 = arith.constant 90 : index
    %297 = vector.load %arg1[%c0_427, %c0_428, %c90_429] : memref<1x4x384xf32, #tpu.memory_space<vmem>>, vector<1x4x16xf32>
    %298 = vector.shape_cast %297 : vector<1x4x16xf32> to vector<4x16xf32>
    %c24_430 = arith.constant 24 : index
    %c48_431 = arith.constant 48 : index
    %299 = vector.load %arg4[%c24_430, %c48_431] : memref<36x256xf32, #tpu.memory_space<vmem>>, vector<4x16xf32>
    tpu.vector_store %arg4[%c24_430, %c48_431], %298 {strides = array<i32>} : memref<36x256xf32, #tpu.memory_space<vmem>>, vector<4x16xf32>,
    %c0_432 = arith.constant 0 : index
    %c0_433 = arith.constant 0 : index
    %c108_434 = arith.constant 108 : index
    %300 = vector.load %arg1[%c0_432, %c0_433, %c108_434] : memref<1x4x384xf32, #tpu.memory_space<vmem>>, vector<1x4x16xf32>
    %301 = vector.shape_cast %300 : vector<1x4x16xf32> to vector<4x16xf32>
    %c24_435 = arith.constant 24 : index
    %c64_436 = arith.constant 64 : index
    %302 = vector.load %arg4[%c24_435, %c64_436] : memref<36x256xf32, #tpu.memory_space<vmem>>, vector<4x16xf32>
    tpu.vector_store %arg4[%c24_435, %c64_436], %301 {strides = array<i32>} : memref<36x256xf32, #tpu.memory_space<vmem>>, vector<4x16xf32>,
    %c0_437 = arith.constant 0 : index
    %c0_438 = arith.constant 0 : index
    %c126_439 = arith.constant 126 : index
    %303 = vector.load %arg1[%c0_437, %c0_438, %c126_439] : memref<1x4x384xf32, #tpu.memory_space<vmem>>, vector<1x4x16xf32>
    %304 = vector.shape_cast %303 : vector<1x4x16xf32> to vector<4x16xf32>
    %c24_440 = arith.constant 24 : index
    %c80_441 = arith.constant 80 : index
    %305 = vector.load %arg4[%c24_440, %c80_441] : memref<36x256xf32, #tpu.memory_space<vmem>>, vector<4x16xf32>
    tpu.vector_store %arg4[%c24_440, %c80_441], %304 {strides = array<i32>} : memref<36x256xf32, #tpu.memory_space<vmem>>, vector<4x16xf32>,
    %c0_442 = arith.constant 0 : index
    %c0_443 = arith.constant 0 : index
    %c144_444 = arith.constant 144 : index
    %306 = vector.load %arg1[%c0_442, %c0_443, %c144_444] : memref<1x4x384xf32, #tpu.memory_space<vmem>>, vector<1x4x16xf32>
    %307 = vector.shape_cast %306 : vector<1x4x16xf32> to vector<4x16xf32>
    %c24_445 = arith.constant 24 : index
    %c96_446 = arith.constant 96 : index
    %308 = vector.load %arg4[%c24_445, %c96_446] : memref<36x256xf32, #tpu.memory_space<vmem>>, vector<4x16xf32>
    tpu.vector_store %arg4[%c24_445, %c96_446], %307 {strides = array<i32>} : memref<36x256xf32, #tpu.memory_space<vmem>>, vector<4x16xf32>,
    %c0_447 = arith.constant 0 : index
    %c0_448 = arith.constant 0 : index
    %c162_449 = arith.constant 162 : index
    %309 = vector.load %arg1[%c0_447, %c0_448, %c162_449] : memref<1x4x384xf32, #tpu.memory_space<vmem>>, vector<1x4x16xf32>
    %310 = vector.shape_cast %309 : vector<1x4x16xf32> to vector<4x16xf32>
    %c24_450 = arith.constant 24 : index
    %c112_451 = arith.constant 112 : index
    %311 = vector.load %arg4[%c24_450, %c112_451] : memref<36x256xf32, #tpu.memory_space<vmem>>, vector<4x16xf32>
    tpu.vector_store %arg4[%c24_450, %c112_451], %310 {strides = array<i32>} : memref<36x256xf32, #tpu.memory_space<vmem>>, vector<4x16xf32>,
    %c0_452 = arith.constant 0 : index
    %c0_453 = arith.constant 0 : index
    %c180_454 = arith.constant 180 : index
    %312 = vector.load %arg1[%c0_452, %c0_453, %c180_454] : memref<1x4x384xf32, #tpu.memory_space<vmem>>, vector<1x4x16xf32>
    %313 = vector.shape_cast %312 : vector<1x4x16xf32> to vector<4x16xf32>
    %c24_455 = arith.constant 24 : index
    %c128_456 = arith.constant 128 : index
    %314 = vector.load %arg4[%c24_455, %c128_456] : memref<36x256xf32, #tpu.memory_space<vmem>>, vector<4x16xf32>
    tpu.vector_store %arg4[%c24_455, %c128_456], %313 {strides = array<i32>} : memref<36x256xf32, #tpu.memory_space<vmem>>, vector<4x16xf32>,
    %c0_457 = arith.constant 0 : index
    %c0_458 = arith.constant 0 : index
    %c198_459 = arith.constant 198 : index
    %315 = vector.load %arg1[%c0_457, %c0_458, %c198_459] : memref<1x4x384xf32, #tpu.memory_space<vmem>>, vector<1x4x16xf32>
    %316 = vector.shape_cast %315 : vector<1x4x16xf32> to vector<4x16xf32>
    %c24_460 = arith.constant 24 : index
    %c144_461 = arith.constant 144 : index
    %317 = vector.load %arg4[%c24_460, %c144_461] : memref<36x256xf32, #tpu.memory_space<vmem>>, vector<4x16xf32>
    tpu.vector_store %arg4[%c24_460, %c144_461], %316 {strides = array<i32>} : memref<36x256xf32, #tpu.memory_space<vmem>>, vector<4x16xf32>,
    %c0_462 = arith.constant 0 : index
    %c0_463 = arith.constant 0 : index
    %c216_464 = arith.constant 216 : index
    %318 = vector.load %arg1[%c0_462, %c0_463, %c216_464] : memref<1x4x384xf32, #tpu.memory_space<vmem>>, vector<1x4x16xf32>
    %319 = vector.shape_cast %318 : vector<1x4x16xf32> to vector<4x16xf32>
    %c24_465 = arith.constant 24 : index
    %c160_466 = arith.constant 160 : index
    %320 = vector.load %arg4[%c24_465, %c160_466] : memref<36x256xf32, #tpu.memory_space<vmem>>, vector<4x16xf32>
    tpu.vector_store %arg4[%c24_465, %c160_466], %319 {strides = array<i32>} : memref<36x256xf32, #tpu.memory_space<vmem>>, vector<4x16xf32>,
    %c0_467 = arith.constant 0 : index
    %c0_468 = arith.constant 0 : index
    %c234_469 = arith.constant 234 : index
    %321 = vector.load %arg1[%c0_467, %c0_468, %c234_469] : memref<1x4x384xf32, #tpu.memory_space<vmem>>, vector<1x4x16xf32>
    %322 = vector.shape_cast %321 : vector<1x4x16xf32> to vector<4x16xf32>
    %c24_470 = arith.constant 24 : index
    %c176_471 = arith.constant 176 : index
    %323 = vector.load %arg4[%c24_470, %c176_471] : memref<36x256xf32, #tpu.memory_space<vmem>>, vector<4x16xf32>
    tpu.vector_store %arg4[%c24_470, %c176_471], %322 {strides = array<i32>} : memref<36x256xf32, #tpu.memory_space<vmem>>, vector<4x16xf32>,
    %c0_472 = arith.constant 0 : index
    %c0_473 = arith.constant 0 : index
    %c252_474 = arith.constant 252 : index
    %324 = vector.load %arg1[%c0_472, %c0_473, %c252_474] : memref<1x4x384xf32, #tpu.memory_space<vmem>>, vector<1x4x16xf32>
    %325 = vector.shape_cast %324 : vector<1x4x16xf32> to vector<4x16xf32>
    %c24_475 = arith.constant 24 : index
    %c192_476 = arith.constant 192 : index
    %326 = vector.load %arg4[%c24_475, %c192_476] : memref<36x256xf32, #tpu.memory_space<vmem>>, vector<4x16xf32>
    tpu.vector_store %arg4[%c24_475, %c192_476], %325 {strides = array<i32>} : memref<36x256xf32, #tpu.memory_space<vmem>>, vector<4x16xf32>,
    %c0_477 = arith.constant 0 : index
    %c0_478 = arith.constant 0 : index
    %c270_479 = arith.constant 270 : index
    %327 = vector.load %arg1[%c0_477, %c0_478, %c270_479] : memref<1x4x384xf32, #tpu.memory_space<vmem>>, vector<1x4x16xf32>
    %328 = vector.shape_cast %327 : vector<1x4x16xf32> to vector<4x16xf32>
    %c24_480 = arith.constant 24 : index
    %c208_481 = arith.constant 208 : index
    %329 = vector.load %arg4[%c24_480, %c208_481] : memref<36x256xf32, #tpu.memory_space<vmem>>, vector<4x16xf32>
    tpu.vector_store %arg4[%c24_480, %c208_481], %328 {strides = array<i32>} : memref<36x256xf32, #tpu.memory_space<vmem>>, vector<4x16xf32>,
    %c0_482 = arith.constant 0 : index
    %c0_483 = arith.constant 0 : index
    %c288_484 = arith.constant 288 : index
    %330 = vector.load %arg1[%c0_482, %c0_483, %c288_484] : memref<1x4x384xf32, #tpu.memory_space<vmem>>, vector<1x4x16xf32>
    %331 = vector.shape_cast %330 : vector<1x4x16xf32> to vector<4x16xf32>
    %c24_485 = arith.constant 24 : index
    %c224_486 = arith.constant 224 : index
    %332 = vector.load %arg4[%c24_485, %c224_486] : memref<36x256xf32, #tpu.memory_space<vmem>>, vector<4x16xf32>
    tpu.vector_store %arg4[%c24_485, %c224_486], %331 {strides = array<i32>} : memref<36x256xf32, #tpu.memory_space<vmem>>, vector<4x16xf32>,
    %c0_487 = arith.constant 0 : index
    %c0_488 = arith.constant 0 : index
    %c306 = arith.constant 306 : index
    %333 = vector.load %arg1[%c0_487, %c0_488, %c306] : memref<1x4x384xf32, #tpu.memory_space<vmem>>, vector<1x4x16xf32>
    %334 = vector.shape_cast %333 : vector<1x4x16xf32> to vector<4x16xf32>
    %c24_489 = arith.constant 24 : index
    %c240_490 = arith.constant 240 : index
    %335 = vector.load %arg4[%c24_489, %c240_490] : memref<36x256xf32, #tpu.memory_space<vmem>>, vector<4x16xf32>
    tpu.vector_store %arg4[%c24_489, %c240_490], %334 {strides = array<i32>} : memref<36x256xf32, #tpu.memory_space<vmem>>, vector<4x16xf32>,
    %c0_491 = arith.constant 0 : index
    %c0_492 = arith.constant 0 : index
    %c37_493 = arith.constant 37 : index
    %336 = vector.load %arg1[%c0_491, %c0_492, %c37_493] : memref<1x4x384xf32, #tpu.memory_space<vmem>>, vector<1x4x16xf32>
    %337 = vector.shape_cast %336 : vector<1x4x16xf32> to vector<4x16xf32>
    %c28 = arith.constant 28 : index
    %c0_494 = arith.constant 0 : index
    %338 = vector.load %arg4[%c28, %c0_494] : memref<36x256xf32, #tpu.memory_space<vmem>>, vector<4x16xf32>
    tpu.vector_store %arg4[%c28, %c0_494], %337 {strides = array<i32>} : memref<36x256xf32, #tpu.memory_space<vmem>>, vector<4x16xf32>,
    %c0_495 = arith.constant 0 : index
    %c0_496 = arith.constant 0 : index
    %c55_497 = arith.constant 55 : index
    %339 = vector.load %arg1[%c0_495, %c0_496, %c55_497] : memref<1x4x384xf32, #tpu.memory_space<vmem>>, vector<1x4x16xf32>
    %340 = vector.shape_cast %339 : vector<1x4x16xf32> to vector<4x16xf32>
    %c28_498 = arith.constant 28 : index
    %c16_499 = arith.constant 16 : index
    %341 = vector.load %arg4[%c28_498, %c16_499] : memref<36x256xf32, #tpu.memory_space<vmem>>, vector<4x16xf32>
    tpu.vector_store %arg4[%c28_498, %c16_499], %340 {strides = array<i32>} : memref<36x256xf32, #tpu.memory_space<vmem>>, vector<4x16xf32>,
    %c0_500 = arith.constant 0 : index
    %c0_501 = arith.constant 0 : index
    %c73_502 = arith.constant 73 : index
    %342 = vector.load %arg1[%c0_500, %c0_501, %c73_502] : memref<1x4x384xf32, #tpu.memory_space<vmem>>, vector<1x4x16xf32>
    %343 = vector.shape_cast %342 : vector<1x4x16xf32> to vector<4x16xf32>
    %c28_503 = arith.constant 28 : index
    %c32_504 = arith.constant 32 : index
    %344 = vector.load %arg4[%c28_503, %c32_504] : memref<36x256xf32, #tpu.memory_space<vmem>>, vector<4x16xf32>
    tpu.vector_store %arg4[%c28_503, %c32_504], %343 {strides = array<i32>} : memref<36x256xf32, #tpu.memory_space<vmem>>, vector<4x16xf32>,
    %c0_505 = arith.constant 0 : index
    %c0_506 = arith.constant 0 : index
    %c91_507 = arith.constant 91 : index
    %345 = vector.load %arg1[%c0_505, %c0_506, %c91_507] : memref<1x4x384xf32, #tpu.memory_space<vmem>>, vector<1x4x16xf32>
    %346 = vector.shape_cast %345 : vector<1x4x16xf32> to vector<4x16xf32>
    %c28_508 = arith.constant 28 : index
    %c48_509 = arith.constant 48 : index
    %347 = vector.load %arg4[%c28_508, %c48_509] : memref<36x256xf32, #tpu.memory_space<vmem>>, vector<4x16xf32>
    tpu.vector_store %arg4[%c28_508, %c48_509], %346 {strides = array<i32>} : memref<36x256xf32, #tpu.memory_space<vmem>>, vector<4x16xf32>,
    %c0_510 = arith.constant 0 : index
    %c0_511 = arith.constant 0 : index
    %c109_512 = arith.constant 109 : index
    %348 = vector.load %arg1[%c0_510, %c0_511, %c109_512] : memref<1x4x384xf32, #tpu.memory_space<vmem>>, vector<1x4x16xf32>
    %349 = vector.shape_cast %348 : vector<1x4x16xf32> to vector<4x16xf32>
    %c28_513 = arith.constant 28 : index
    %c64_514 = arith.constant 64 : index
    %350 = vector.load %arg4[%c28_513, %c64_514] : memref<36x256xf32, #tpu.memory_space<vmem>>, vector<4x16xf32>
    tpu.vector_store %arg4[%c28_513, %c64_514], %349 {strides = array<i32>} : memref<36x256xf32, #tpu.memory_space<vmem>>, vector<4x16xf32>,
    %c0_515 = arith.constant 0 : index
    %c0_516 = arith.constant 0 : index
    %c127_517 = arith.constant 127 : index
    %351 = vector.load %arg1[%c0_515, %c0_516, %c127_517] : memref<1x4x384xf32, #tpu.memory_space<vmem>>, vector<1x4x16xf32>
    %352 = vector.shape_cast %351 : vector<1x4x16xf32> to vector<4x16xf32>
    %c28_518 = arith.constant 28 : index
    %c80_519 = arith.constant 80 : index
    %353 = vector.load %arg4[%c28_518, %c80_519] : memref<36x256xf32, #tpu.memory_space<vmem>>, vector<4x16xf32>
    tpu.vector_store %arg4[%c28_518, %c80_519], %352 {strides = array<i32>} : memref<36x256xf32, #tpu.memory_space<vmem>>, vector<4x16xf32>,
    %c0_520 = arith.constant 0 : index
    %c0_521 = arith.constant 0 : index
    %c145_522 = arith.constant 145 : index
    %354 = vector.load %arg1[%c0_520, %c0_521, %c145_522] : memref<1x4x384xf32, #tpu.memory_space<vmem>>, vector<1x4x16xf32>
    %355 = vector.shape_cast %354 : vector<1x4x16xf32> to vector<4x16xf32>
    %c28_523 = arith.constant 28 : index
    %c96_524 = arith.constant 96 : index
    %356 = vector.load %arg4[%c28_523, %c96_524] : memref<36x256xf32, #tpu.memory_space<vmem>>, vector<4x16xf32>
    tpu.vector_store %arg4[%c28_523, %c96_524], %355 {strides = array<i32>} : memref<36x256xf32, #tpu.memory_space<vmem>>, vector<4x16xf32>,
    %c0_525 = arith.constant 0 : index
    %c0_526 = arith.constant 0 : index
    %c163_527 = arith.constant 163 : index
    %357 = vector.load %arg1[%c0_525, %c0_526, %c163_527] : memref<1x4x384xf32, #tpu.memory_space<vmem>>, vector<1x4x16xf32>
    %358 = vector.shape_cast %357 : vector<1x4x16xf32> to vector<4x16xf32>
    %c28_528 = arith.constant 28 : index
    %c112_529 = arith.constant 112 : index
    %359 = vector.load %arg4[%c28_528, %c112_529] : memref<36x256xf32, #tpu.memory_space<vmem>>, vector<4x16xf32>
    tpu.vector_store %arg4[%c28_528, %c112_529], %358 {strides = array<i32>} : memref<36x256xf32, #tpu.memory_space<vmem>>, vector<4x16xf32>,
    %c0_530 = arith.constant 0 : index
    %c0_531 = arith.constant 0 : index
    %c181_532 = arith.constant 181 : index
    %360 = vector.load %arg1[%c0_530, %c0_531, %c181_532] : memref<1x4x384xf32, #tpu.memory_space<vmem>>, vector<1x4x16xf32>
    %361 = vector.shape_cast %360 : vector<1x4x16xf32> to vector<4x16xf32>
    %c28_533 = arith.constant 28 : index
    %c128_534 = arith.constant 128 : index
    %362 = vector.load %arg4[%c28_533, %c128_534] : memref<36x256xf32, #tpu.memory_space<vmem>>, vector<4x16xf32>
    tpu.vector_store %arg4[%c28_533, %c128_534], %361 {strides = array<i32>} : memref<36x256xf32, #tpu.memory_space<vmem>>, vector<4x16xf32>,
    %c0_535 = arith.constant 0 : index
    %c0_536 = arith.constant 0 : index
    %c199_537 = arith.constant 199 : index
    %363 = vector.load %arg1[%c0_535, %c0_536, %c199_537] : memref<1x4x384xf32, #tpu.memory_space<vmem>>, vector<1x4x16xf32>
    %364 = vector.shape_cast %363 : vector<1x4x16xf32> to vector<4x16xf32>
    %c28_538 = arith.constant 28 : index
    %c144_539 = arith.constant 144 : index
    %365 = vector.load %arg4[%c28_538, %c144_539] : memref<36x256xf32, #tpu.memory_space<vmem>>, vector<4x16xf32>
    tpu.vector_store %arg4[%c28_538, %c144_539], %364 {strides = array<i32>} : memref<36x256xf32, #tpu.memory_space<vmem>>, vector<4x16xf32>,
    %c0_540 = arith.constant 0 : index
    %c0_541 = arith.constant 0 : index
    %c217_542 = arith.constant 217 : index
    %366 = vector.load %arg1[%c0_540, %c0_541, %c217_542] : memref<1x4x384xf32, #tpu.memory_space<vmem>>, vector<1x4x16xf32>
    %367 = vector.shape_cast %366 : vector<1x4x16xf32> to vector<4x16xf32>
    %c28_543 = arith.constant 28 : index
    %c160_544 = arith.constant 160 : index
    %368 = vector.load %arg4[%c28_543, %c160_544] : memref<36x256xf32, #tpu.memory_space<vmem>>, vector<4x16xf32>
    tpu.vector_store %arg4[%c28_543, %c160_544], %367 {strides = array<i32>} : memref<36x256xf32, #tpu.memory_space<vmem>>, vector<4x16xf32>,
    %c0_545 = arith.constant 0 : index
    %c0_546 = arith.constant 0 : index
    %c235_547 = arith.constant 235 : index
    %369 = vector.load %arg1[%c0_545, %c0_546, %c235_547] : memref<1x4x384xf32, #tpu.memory_space<vmem>>, vector<1x4x16xf32>
    %370 = vector.shape_cast %369 : vector<1x4x16xf32> to vector<4x16xf32>
    %c28_548 = arith.constant 28 : index
    %c176_549 = arith.constant 176 : index
    %371 = vector.load %arg4[%c28_548, %c176_549] : memref<36x256xf32, #tpu.memory_space<vmem>>, vector<4x16xf32>
    tpu.vector_store %arg4[%c28_548, %c176_549], %370 {strides = array<i32>} : memref<36x256xf32, #tpu.memory_space<vmem>>, vector<4x16xf32>,
    %c0_550 = arith.constant 0 : index
    %c0_551 = arith.constant 0 : index
    %c253_552 = arith.constant 253 : index
    %372 = vector.load %arg1[%c0_550, %c0_551, %c253_552] : memref<1x4x384xf32, #tpu.memory_space<vmem>>, vector<1x4x16xf32>
    %373 = vector.shape_cast %372 : vector<1x4x16xf32> to vector<4x16xf32>
    %c28_553 = arith.constant 28 : index
    %c192_554 = arith.constant 192 : index
    %374 = vector.load %arg4[%c28_553, %c192_554] : memref<36x256xf32, #tpu.memory_space<vmem>>, vector<4x16xf32>
    tpu.vector_store %arg4[%c28_553, %c192_554], %373 {strides = array<i32>} : memref<36x256xf32, #tpu.memory_space<vmem>>, vector<4x16xf32>,
    %c0_555 = arith.constant 0 : index
    %c0_556 = arith.constant 0 : index
    %c271_557 = arith.constant 271 : index
    %375 = vector.load %arg1[%c0_555, %c0_556, %c271_557] : memref<1x4x384xf32, #tpu.memory_space<vmem>>, vector<1x4x16xf32>
    %376 = vector.shape_cast %375 : vector<1x4x16xf32> to vector<4x16xf32>
    %c28_558 = arith.constant 28 : index
    %c208_559 = arith.constant 208 : index
    %377 = vector.load %arg4[%c28_558, %c208_559] : memref<36x256xf32, #tpu.memory_space<vmem>>, vector<4x16xf32>
    tpu.vector_store %arg4[%c28_558, %c208_559], %376 {strides = array<i32>} : memref<36x256xf32, #tpu.memory_space<vmem>>, vector<4x16xf32>,
    %c0_560 = arith.constant 0 : index
    %c0_561 = arith.constant 0 : index
    %c289_562 = arith.constant 289 : index
    %378 = vector.load %arg1[%c0_560, %c0_561, %c289_562] : memref<1x4x384xf32, #tpu.memory_space<vmem>>, vector<1x4x16xf32>
    %379 = vector.shape_cast %378 : vector<1x4x16xf32> to vector<4x16xf32>
    %c28_563 = arith.constant 28 : index
    %c224_564 = arith.constant 224 : index
    %380 = vector.load %arg4[%c28_563, %c224_564] : memref<36x256xf32, #tpu.memory_space<vmem>>, vector<4x16xf32>
    tpu.vector_store %arg4[%c28_563, %c224_564], %379 {strides = array<i32>} : memref<36x256xf32, #tpu.memory_space<vmem>>, vector<4x16xf32>,
    %c0_565 = arith.constant 0 : index
    %c0_566 = arith.constant 0 : index
    %c307 = arith.constant 307 : index
    %381 = vector.load %arg1[%c0_565, %c0_566, %c307] : memref<1x4x384xf32, #tpu.memory_space<vmem>>, vector<1x4x16xf32>
    %382 = vector.shape_cast %381 : vector<1x4x16xf32> to vector<4x16xf32>
    %c28_567 = arith.constant 28 : index
    %c240_568 = arith.constant 240 : index
    %383 = vector.load %arg4[%c28_567, %c240_568] : memref<36x256xf32, #tpu.memory_space<vmem>>, vector<4x16xf32>
    tpu.vector_store %arg4[%c28_567, %c240_568], %382 {strides = array<i32>} : memref<36x256xf32, #tpu.memory_space<vmem>>, vector<4x16xf32>,
    %c0_569 = arith.constant 0 : index
    %c0_570 = arith.constant 0 : index
    %c38_571 = arith.constant 38 : index
    %384 = vector.load %arg1[%c0_569, %c0_570, %c38_571] : memref<1x4x384xf32, #tpu.memory_space<vmem>>, vector<1x4x16xf32>
    %385 = vector.shape_cast %384 : vector<1x4x16xf32> to vector<4x16xf32>
    %c32_572 = arith.constant 32 : index
    %c0_573 = arith.constant 0 : index
    %386 = vector.load %arg4[%c32_572, %c0_573] : memref<36x256xf32, #tpu.memory_space<vmem>>, vector<4x16xf32>
    tpu.vector_store %arg4[%c32_572, %c0_573], %385 {strides = array<i32>} : memref<36x256xf32, #tpu.memory_space<vmem>>, vector<4x16xf32>,
    %c0_574 = arith.constant 0 : index
    %c0_575 = arith.constant 0 : index
    %c56_576 = arith.constant 56 : index
    %387 = vector.load %arg1[%c0_574, %c0_575, %c56_576] : memref<1x4x384xf32, #tpu.memory_space<vmem>>, vector<1x4x16xf32>
    %388 = vector.shape_cast %387 : vector<1x4x16xf32> to vector<4x16xf32>
    %c32_577 = arith.constant 32 : index
    %c16_578 = arith.constant 16 : index
    %389 = vector.load %arg4[%c32_577, %c16_578] : memref<36x256xf32, #tpu.memory_space<vmem>>, vector<4x16xf32>
    tpu.vector_store %arg4[%c32_577, %c16_578], %388 {strides = array<i32>} : memref<36x256xf32, #tpu.memory_space<vmem>>, vector<4x16xf32>,
    %c0_579 = arith.constant 0 : index
    %c0_580 = arith.constant 0 : index
    %c74_581 = arith.constant 74 : index
    %390 = vector.load %arg1[%c0_579, %c0_580, %c74_581] : memref<1x4x384xf32, #tpu.memory_space<vmem>>, vector<1x4x16xf32>
    %391 = vector.shape_cast %390 : vector<1x4x16xf32> to vector<4x16xf32>
    %c32_582 = arith.constant 32 : index
    %c32_583 = arith.constant 32 : index
    %392 = vector.load %arg4[%c32_582, %c32_583] : memref<36x256xf32, #tpu.memory_space<vmem>>, vector<4x16xf32>
    tpu.vector_store %arg4[%c32_582, %c32_583], %391 {strides = array<i32>} : memref<36x256xf32, #tpu.memory_space<vmem>>, vector<4x16xf32>,
    %c0_584 = arith.constant 0 : index
    %c0_585 = arith.constant 0 : index
    %c92_586 = arith.constant 92 : index
    %393 = vector.load %arg1[%c0_584, %c0_585, %c92_586] : memref<1x4x384xf32, #tpu.memory_space<vmem>>, vector<1x4x16xf32>
    %394 = vector.shape_cast %393 : vector<1x4x16xf32> to vector<4x16xf32>
    %c32_587 = arith.constant 32 : index
    %c48_588 = arith.constant 48 : index
    %395 = vector.load %arg4[%c32_587, %c48_588] : memref<36x256xf32, #tpu.memory_space<vmem>>, vector<4x16xf32>
    tpu.vector_store %arg4[%c32_587, %c48_588], %394 {strides = array<i32>} : memref<36x256xf32, #tpu.memory_space<vmem>>, vector<4x16xf32>,
    %c0_589 = arith.constant 0 : index
    %c0_590 = arith.constant 0 : index
    %c110_591 = arith.constant 110 : index
    %396 = vector.load %arg1[%c0_589, %c0_590, %c110_591] : memref<1x4x384xf32, #tpu.memory_space<vmem>>, vector<1x4x16xf32>
    %397 = vector.shape_cast %396 : vector<1x4x16xf32> to vector<4x16xf32>
    %c32_592 = arith.constant 32 : index
    %c64_593 = arith.constant 64 : index
    %398 = vector.load %arg4[%c32_592, %c64_593] : memref<36x256xf32, #tpu.memory_space<vmem>>, vector<4x16xf32>
    tpu.vector_store %arg4[%c32_592, %c64_593], %397 {strides = array<i32>} : memref<36x256xf32, #tpu.memory_space<vmem>>, vector<4x16xf32>,
    %c0_594 = arith.constant 0 : index
    %c0_595 = arith.constant 0 : index
    %c128_596 = arith.constant 128 : index
    %399 = vector.load %arg1[%c0_594, %c0_595, %c128_596] : memref<1x4x384xf32, #tpu.memory_space<vmem>>, vector<1x4x16xf32>
    %400 = vector.shape_cast %399 : vector<1x4x16xf32> to vector<4x16xf32>
    %c32_597 = arith.constant 32 : index
    %c80_598 = arith.constant 80 : index
    %401 = vector.load %arg4[%c32_597, %c80_598] : memref<36x256xf32, #tpu.memory_space<vmem>>, vector<4x16xf32>
    tpu.vector_store %arg4[%c32_597, %c80_598], %400 {strides = array<i32>} : memref<36x256xf32, #tpu.memory_space<vmem>>, vector<4x16xf32>,
    %c0_599 = arith.constant 0 : index
    %c0_600 = arith.constant 0 : index
    %c146_601 = arith.constant 146 : index
    %402 = vector.load %arg1[%c0_599, %c0_600, %c146_601] : memref<1x4x384xf32, #tpu.memory_space<vmem>>, vector<1x4x16xf32>
    %403 = vector.shape_cast %402 : vector<1x4x16xf32> to vector<4x16xf32>
    %c32_602 = arith.constant 32 : index
    %c96_603 = arith.constant 96 : index
    %404 = vector.load %arg4[%c32_602, %c96_603] : memref<36x256xf32, #tpu.memory_space<vmem>>, vector<4x16xf32>
    tpu.vector_store %arg4[%c32_602, %c96_603], %403 {strides = array<i32>} : memref<36x256xf32, #tpu.memory_space<vmem>>, vector<4x16xf32>,
    %c0_604 = arith.constant 0 : index
    %c0_605 = arith.constant 0 : index
    %c164_606 = arith.constant 164 : index
    %405 = vector.load %arg1[%c0_604, %c0_605, %c164_606] : memref<1x4x384xf32, #tpu.memory_space<vmem>>, vector<1x4x16xf32>
    %406 = vector.shape_cast %405 : vector<1x4x16xf32> to vector<4x16xf32>
    %c32_607 = arith.constant 32 : index
    %c112_608 = arith.constant 112 : index
    %407 = vector.load %arg4[%c32_607, %c112_608] : memref<36x256xf32, #tpu.memory_space<vmem>>, vector<4x16xf32>
    tpu.vector_store %arg4[%c32_607, %c112_608], %406 {strides = array<i32>} : memref<36x256xf32, #tpu.memory_space<vmem>>, vector<4x16xf32>,
    %c0_609 = arith.constant 0 : index
    %c0_610 = arith.constant 0 : index
    %c182_611 = arith.constant 182 : index
    %408 = vector.load %arg1[%c0_609, %c0_610, %c182_611] : memref<1x4x384xf32, #tpu.memory_space<vmem>>, vector<1x4x16xf32>
    %409 = vector.shape_cast %408 : vector<1x4x16xf32> to vector<4x16xf32>
    %c32_612 = arith.constant 32 : index
    %c128_613 = arith.constant 128 : index
    %410 = vector.load %arg4[%c32_612, %c128_613] : memref<36x256xf32, #tpu.memory_space<vmem>>, vector<4x16xf32>
    tpu.vector_store %arg4[%c32_612, %c128_613], %409 {strides = array<i32>} : memref<36x256xf32, #tpu.memory_space<vmem>>, vector<4x16xf32>,
    %c0_614 = arith.constant 0 : index
    %c0_615 = arith.constant 0 : index
    %c200_616 = arith.constant 200 : index
    %411 = vector.load %arg1[%c0_614, %c0_615, %c200_616] : memref<1x4x384xf32, #tpu.memory_space<vmem>>, vector<1x4x16xf32>
    %412 = vector.shape_cast %411 : vector<1x4x16xf32> to vector<4x16xf32>
    %c32_617 = arith.constant 32 : index
    %c144_618 = arith.constant 144 : index
    %413 = vector.load %arg4[%c32_617, %c144_618] : memref<36x256xf32, #tpu.memory_space<vmem>>, vector<4x16xf32>
    tpu.vector_store %arg4[%c32_617, %c144_618], %412 {strides = array<i32>} : memref<36x256xf32, #tpu.memory_space<vmem>>, vector<4x16xf32>,
    %c0_619 = arith.constant 0 : index
    %c0_620 = arith.constant 0 : index
    %c218_621 = arith.constant 218 : index
    %414 = vector.load %arg1[%c0_619, %c0_620, %c218_621] : memref<1x4x384xf32, #tpu.memory_space<vmem>>, vector<1x4x16xf32>
    %415 = vector.shape_cast %414 : vector<1x4x16xf32> to vector<4x16xf32>
    %c32_622 = arith.constant 32 : index
    %c160_623 = arith.constant 160 : index
    %416 = vector.load %arg4[%c32_622, %c160_623] : memref<36x256xf32, #tpu.memory_space<vmem>>, vector<4x16xf32>
    tpu.vector_store %arg4[%c32_622, %c160_623], %415 {strides = array<i32>} : memref<36x256xf32, #tpu.memory_space<vmem>>, vector<4x16xf32>,
    %c0_624 = arith.constant 0 : index
    %c0_625 = arith.constant 0 : index
    %c236_626 = arith.constant 236 : index
    %417 = vector.load %arg1[%c0_624, %c0_625, %c236_626] : memref<1x4x384xf32, #tpu.memory_space<vmem>>, vector<1x4x16xf32>
    %418 = vector.shape_cast %417 : vector<1x4x16xf32> to vector<4x16xf32>
    %c32_627 = arith.constant 32 : index
    %c176_628 = arith.constant 176 : index
    %419 = vector.load %arg4[%c32_627, %c176_628] : memref<36x256xf32, #tpu.memory_space<vmem>>, vector<4x16xf32>
    tpu.vector_store %arg4[%c32_627, %c176_628], %418 {strides = array<i32>} : memref<36x256xf32, #tpu.memory_space<vmem>>, vector<4x16xf32>,
    %c0_629 = arith.constant 0 : index
    %c0_630 = arith.constant 0 : index
    %c254_631 = arith.constant 254 : index
    %420 = vector.load %arg1[%c0_629, %c0_630, %c254_631] : memref<1x4x384xf32, #tpu.memory_space<vmem>>, vector<1x4x16xf32>
    %421 = vector.shape_cast %420 : vector<1x4x16xf32> to vector<4x16xf32>
    %c32_632 = arith.constant 32 : index
    %c192_633 = arith.constant 192 : index
    %422 = vector.load %arg4[%c32_632, %c192_633] : memref<36x256xf32, #tpu.memory_space<vmem>>, vector<4x16xf32>
    tpu.vector_store %arg4[%c32_632, %c192_633], %421 {strides = array<i32>} : memref<36x256xf32, #tpu.memory_space<vmem>>, vector<4x16xf32>,
    %c0_634 = arith.constant 0 : index
    %c0_635 = arith.constant 0 : index
    %c272_636 = arith.constant 272 : index
    %423 = vector.load %arg1[%c0_634, %c0_635, %c272_636] : memref<1x4x384xf32, #tpu.memory_space<vmem>>, vector<1x4x16xf32>
    %424 = vector.shape_cast %423 : vector<1x4x16xf32> to vector<4x16xf32>
    %c32_637 = arith.constant 32 : index
    %c208_638 = arith.constant 208 : index
    %425 = vector.load %arg4[%c32_637, %c208_638] : memref<36x256xf32, #tpu.memory_space<vmem>>, vector<4x16xf32>
    tpu.vector_store %arg4[%c32_637, %c208_638], %424 {strides = array<i32>} : memref<36x256xf32, #tpu.memory_space<vmem>>, vector<4x16xf32>,
    %c0_639 = arith.constant 0 : index
    %c0_640 = arith.constant 0 : index
    %c290_641 = arith.constant 290 : index
    %426 = vector.load %arg1[%c0_639, %c0_640, %c290_641] : memref<1x4x384xf32, #tpu.memory_space<vmem>>, vector<1x4x16xf32>
    %427 = vector.shape_cast %426 : vector<1x4x16xf32> to vector<4x16xf32>
    %c32_642 = arith.constant 32 : index
    %c224_643 = arith.constant 224 : index
    %428 = vector.load %arg4[%c32_642, %c224_643] : memref<36x256xf32, #tpu.memory_space<vmem>>, vector<4x16xf32>
    tpu.vector_store %arg4[%c32_642, %c224_643], %427 {strides = array<i32>} : memref<36x256xf32, #tpu.memory_space<vmem>>, vector<4x16xf32>,
    %c0_644 = arith.constant 0 : index
    %c0_645 = arith.constant 0 : index
    %c308 = arith.constant 308 : index
    %429 = vector.load %arg1[%c0_644, %c0_645, %c308] : memref<1x4x384xf32, #tpu.memory_space<vmem>>, vector<1x4x16xf32>
    %430 = vector.shape_cast %429 : vector<1x4x16xf32> to vector<4x16xf32>
    %c32_646 = arith.constant 32 : index
    %c240_647 = arith.constant 240 : index
    %431 = vector.load %arg4[%c32_646, %c240_647] : memref<36x256xf32, #tpu.memory_space<vmem>>, vector<4x16xf32>
    tpu.vector_store %arg4[%c32_646, %c240_647], %430 {strides = array<i32>} : memref<36x256xf32, #tpu.memory_space<vmem>>, vector<4x16xf32>,
    %c0_648 = arith.constant 0 : index
    %c0_649 = arith.constant 0 : index
    %432 = vector.load %arg2[%c0_648, %c0_649] : memref<4x36xf32, #tpu.memory_space<vmem>>, vector<4x36xf32>
    %c0_650 = arith.constant 0 : index
    %c0_651 = arith.constant 0 : index
    %433 = vector.load %arg4[%c0_650, %c0_651] : memref<36x256xf32, #tpu.memory_space<vmem>>, vector<36x256xf32>
    %cst = arith.constant dense<0.000000e+00> : vector<4x256xf32>
    %434 = tpu.matmul %432, %433, %cst {dimension_numbers = #tpu.dot_dimension_numbers<[1], [0], [0], [1], [0, 0, 1, 1], [], []>} : vector<4x36xf32>, vector<36x256xf32>, vector<4x256xf32> -> vector<4x256xf32>
    %cst_652 = arith.constant dense<0.000000e+00> : vector<4xf32>
    %435 = vector.multi_reduction <add>, %434, %cst_652 [1] : vector<4x256xf32> to vector<4xf32>
    %436 = vector.shape_cast %435 : vector<4xf32> to vector<4x1xf32>
    %c0_653 = arith.constant 0 : index
    %c0_654 = arith.constant 0 : index
    %c0_655 = arith.constant 0 : index
    %437 = vector.load %arg3[%c0_653, %c0_654, %c0_655] : memref<1x4x2xf32, #tpu.memory_space<vmem>>, vector<1x4x1xf32>
    %438 = vector.shape_cast %437 : vector<1x4x1xf32> to vector<4x1xf32>
    %439 = vector.shape_cast %436 : vector<4x1xf32> to vector<1x4x1xf32>
    tpu.vector_store %arg3[%c0_653, %c0_654, %c0_655], %439 {strides = array<i32>} : memref<1x4x2xf32, #tpu.memory_space<vmem>>, vector<1x4x1xf32>,
    %440 = arith.mulf %434, %434 : vector<4x256xf32>
    %cst_656 = arith.constant dense<0.000000e+00> : vector<4xf32>
    %441 = vector.multi_reduction <add>, %440, %cst_656 [1] : vector<4x256xf32> to vector<4xf32>
    %442 = vector.shape_cast %441 : vector<4xf32> to vector<4x1xf32>
    %c0_657 = arith.constant 0 : index
    %c0_658 = arith.constant 0 : index
    %c1_659 = arith.constant 1 : index
    %443 = vector.load %arg3[%c0_657, %c0_658, %c1_659] : memref<1x4x2xf32, #tpu.memory_space<vmem>>, vector<1x4x1xf32>
    %444 = vector.shape_cast %443 : vector<1x4x1xf32> to vector<4x1xf32>
    %445 = vector.shape_cast %442 : vector<4x1xf32> to vector<1x4x1xf32>
    tpu.vector_store %arg3[%c0_657, %c0_658, %c1_659], %445 {strides = array<i32>} : memref<1x4x2xf32, #tpu.memory_space<vmem>>, vector<1x4x1xf32>,
    return
  }
  func.func @transform_0(%arg0: i32) -> (i32, i32, i32) {
    %c0_i32 = arith.constant 0 : i32
    %c0_i32_0 = arith.constant 0 : i32
    %c0_i32_1 = arith.constant 0 : i32
    return %arg0, %c0_i32, %c0_i32_0 : i32, i32, i32
  }
  func.func @transform_1(%arg0: i32) -> (i32, i32) {
    %c0_i32 = arith.constant 0 : i32
    %c0_i32_0 = arith.constant 0 : i32
    %c0_i32_1 = arith.constant 0 : i32
    return %c0_i32, %c0_i32_0 : i32, i32
  }
  func.func @transform_2(%arg0: i32) -> (i32, i32, i32) {
    %c0_i32 = arith.constant 0 : i32
    %c0_i32_0 = arith.constant 0 : i32
    %c0_i32_1 = arith.constant 0 : i32
    return %arg0, %c0_i32, %c0_i32_0 : i32, i32, i32
  }
}

</mosaic_0001>

<llo_original>
// kernel: conv_block_forward.3
$region0: #{conv_block_forward.3}
  #allocation0 [shape = 'u32[]', space=smem, size = 0x4, offset = 0x4, fixed_abs, tag = 'smem constant byte address 0x4 - core index']
  #allocation1 [shape = 'u32[144,128]{1,0:T(1,128)}', space=vmem, size = 0x12000, scoped, tag = 'internal scratch']
  #allocation2 [shape = 'f32[36,256]{1,0:T(8,128)}', space=vmem, size = 0xa000, scoped, tag = 'scratch operand']
  %s0 = inlined_call_operand.vmem [shape: f32[2,4,384], index: 0, kind: input, shape index: {}]
  %s1 = inlined_call_operand.vmem [shape: f32[4,36], index: 1, kind: input, shape index: {}]
  %s2 = inlined_call_operand.vmem [shape: f32[1,4,1], index: 2, kind: input, shape index: {}]
  %s3 = inlined_call_operand.vmem [shape: f32[1,4,1], index: 3, kind: input, shape index: {}]
  %s4 = inlined_call_operand.vmem [shape: f32[2,4,256], index: 4, kind: output, shape index: {}]
  %s5 = sld [smem:[#allocation0]]
  $region49: #{conv_block_forward.3} parent=0
    _
  %s7 = ssub.s32 1, %s5
  %s8 = scalar_select 0, %s7, %s5
  loop: start=0, step=1, limit=4
  $region2: #{conv_block_forward.3} parent=0 // loop_pre_header
    _
  $region3: #{conv_block_forward.3} parent=0 // loop_header
    %s10 = sphi 0, %s14
    %p11 = scmp.ge.s32.totalorder %s10, 4
    %s20 = sphi 0, %s22
    %s23 = sphi 0, %s20
    %s24 = sphi 0, %s23
    %s40 = sphi 0, %s24
    %s44 = sphi 0, %s44
    %s46 = sphi 0, %s44
    %s47 = sphi 0, %s46
    %s61 = sphi 0, %s47
    %s65 = sphi 0, %s65
    %s67 = sphi 0, %s65
    %s68 = sphi 0, %s67
    %s82 = sphi 0, %s68
    %s86 = sphi 0, %s86
    %s88 = sphi 0, %s86
    %s89 = sphi 0, %s88
    %s103 = sphi 0, %s89
    %s109 = sphi 0, %s111
    %s112 = sphi 0, %s109
    %s113 = sphi 0, %s112
    %s129 = sphi 0, %s113
  $region4: #{conv_block_forward.3} parent=0 // loop_header_branch
    %13 = sbr.rel (%p11) target = $region8
  $region5: #{conv_block_forward.3} parent=0 // loop_body
    %s15 = ssub.s32 %s10, 1
    %s16 = ssub.s32 %s10, 2
    %s17 = sadd.s32 %s10, 1
    %s18 = ssub.s32 %s10, %s17
    %p19 = scmp.eq.s32.totalorder %s18, 0
    %s21 = sadd.s32 %s20, 1
    %s22 = scalar_select %p19, %s20, %s21
    %p25 = pneg %p19
    %p26 = scmp.eq.s32.totalorder %s10, 1
    %p27 = por %p25, %p26
    %p28 = scmp.ne.s32.totalorder %s20, %s23
    %p29 = scmp.eq.s32.totalorder %s10, 0
    %p30 = por %p28, %p29
    %p31 = scmp.ne.s32.totalorder %s20, %s23
    %p32 = scmp.eq.s32.totalorder %s15, 1
    %p33 = por %p31, %p32
    %p34 = scmp.ne.s32.totalorder %s23, %s24
    %p35 = scmp.eq.s32.totalorder %s15, 0
    %p36 = por %p34, %p35
    %p37 = scmp.ne.s32.totalorder %s23, %s24
    %p38 = scmp.eq.s32.totalorder %s16, 1
    %p39 = por %p37, %p38
    %p41 = scmp.ne.s32.totalorder %s24, %s40
    %p42 = scmp.eq.s32.totalorder %s16, 0
    %p43 = por %p41, %p42
    %s45 = sadd.s32 %s44, 1
    %p48 = scmp.eq.s32.totalorder %s10, 1
    %p49 = scmp.ne.s32.totalorder %s44, %s46
    %p50 = scmp.eq.s32.totalorder %s10, 0
    %p51 = por %p49, %p50
    %p52 = scmp.ne.s32.totalorder %s44, %s46
    %p53 = scmp.eq.s32.totalorder %s15, 1
    %p54 = por %p52, %p53
    %p55 = scmp.ne.s32.totalorder %s46, %s47
    %p56 = scmp.eq.s32.totalorder %s15, 0
    %p57 = por %p55, %p56
    %p58 = scmp.ne.s32.totalorder %s46, %s47
    %p59 = scmp.eq.s32.totalorder %s16, 1
    %p60 = por %p58, %p59
    %p62 = scmp.ne.s32.totalorder %s47, %s61
    %p63 = scmp.eq.s32.totalorder %s16, 0
    %p64 = por %p62, %p63
    %s66 = sadd.s32 %s65, 1
    %p69 = scmp.eq.s32.totalorder %s10, 1
    %p70 = scmp.ne.s32.totalorder %s65, %s67
    %p71 = scmp.eq.s32.totalorder %s10, 0
    %p72 = por %p70, %p71
    %p73 = scmp.ne.s32.totalorder %s65, %s67
    %p74 = scmp.eq.s32.totalorder %s15, 1
    %p75 = por %p73, %p74
    %p76 = scmp.ne.s32.totalorder %s67, %s68
    %p77 = scmp.eq.s32.totalorder %s15, 0
    %p78 = por %p76, %p77
    %p79 = scmp.ne.s32.totalorder %s67, %s68
    %p80 = scmp.eq.s32.totalorder %s16, 1
    %p81 = por %p79, %p80
    %p83 = scmp.ne.s32.totalorder %s68, %s82
    %p84 = scmp.eq.s32.totalorder %s16, 0
    %p85 = por %p83, %p84
    %s87 = sadd.s32 %s86, 1
    %p90 = scmp.eq.s32.totalorder %s10, 1
    %p91 = scmp.ne.s32.totalorder %s86, %s88
    %p92 = scmp.eq.s32.totalorder %s10, 0
    %p93 = por %p91, %p92
    %p94 = scmp.ne.s32.totalorder %s86, %s88
    %p95 = scmp.eq.s32.totalorder %s15, 1
    %p96 = por %p94, %p95
    %p97 = scmp.ne.s32.totalorder %s88, %s89
    %p98 = scmp.eq.s32.totalorder %s15, 0
    %p99 = por %p97, %p98
    %p100 = scmp.ne.s32.totalorder %s88, %s89
    %p101 = scmp.eq.s32.totalorder %s16, 1
    %p102 = por %p100, %p101
    %p104 = scmp.ne.s32.totalorder %s89, %s103
    %p105 = scmp.eq.s32.totalorder %s16, 0
    %p106 = por %p104, %p105
    %s107 = ssub.s32 %s10, %s17
    %p108 = scmp.eq.s32.totalorder %s107, 0
    %s110 = sadd.s32 %s109, 1
    %s111 = scalar_select %p108, %s109, %s110
    %p114 = pneg %p108
    %p115 = scmp.eq.s32.totalorder %s10, 1
    %p116 = por %p114, %p115
    %p117 = scmp.ne.s32.totalorder %s109, %s112
    %p118 = scmp.eq.s32.totalorder %s10, 0
    %p119 = por %p117, %p118
    %p120 = scmp.ne.s32.totalorder %s109, %s112
    %p121 = scmp.eq.s32.totalorder %s15, 1
    %p122 = por %p120, %p121
    %p123 = scmp.ne.s32.totalorder %s112, %s113
    %p124 = scmp.eq.s32.totalorder %s15, 0
    %p125 = por %p123, %p124
    %p126 = scmp.ne.s32.totalorder %s112, %s113
    %p127 = scmp.eq.s32.totalorder %s16, 1
    %p128 = por %p126, %p127
    %p130 = scmp.ne.s32.totalorder %s113, %s129
    %p131 = scmp.eq.s32.totalorder %s16, 0
    %p132 = por %p130, %p131
    %p133 = scmp.le.s32.totalorder 1, %s10
    %p134 = scmp.lt.s32.totalorder %s10, 3
    %p135 = pnand %p133, %p134
    %p136 = pneg %p135
    // Predicated region
    $region9: #{conv_block_forward.3} parent=5 // pred_check
      _
    $region10: #{conv_block_forward.3} parent=5 // pred_check_branch
      %138 = sbr.rel (%p135) target = $region12
    $region11: #{conv_block_forward.3} parent=5 // pred_region
      %s139 = ssub.s32 %s10, 1
      // Predicated region
      $region13: #{conv_block_forward.3} parent=11 // pred_check
        %p140 = pneg %p57
      $region14: #{conv_block_forward.3} parent=11 // pred_check_branch
        %142 = sbr.rel (%p140) target = $region16
      $region15: #{conv_block_forward.3} parent=11 // pred_region
        _
      $region16: #{conv_block_forward.3} parent=11 // pred_fallthru
        _
      // Predicated region
      $region17: #{conv_block_forward.3} parent=11 // pred_check
        %p143 = pneg %p78
      $region18: #{conv_block_forward.3} parent=11 // pred_check_branch
        %145 = sbr.rel (%p143) target = $region20
      $region19: #{conv_block_forward.3} parent=11 // pred_region
        _
      $region20: #{conv_block_forward.3} parent=11 // pred_fallthru
        _
      // Predicated region
      $region21: #{conv_block_forward.3} parent=11 // pred_check
        %p146 = pneg %p99
      $region22: #{conv_block_forward.3} parent=11 // pred_check_branch
        %148 = sbr.rel (%p146) target = $region24
      $region23: #{conv_block_forward.3} parent=11 // pred_region
        _
      $region24: #{conv_block_forward.3} parent=11 // pred_fallthru
        _
    $region12: #{conv_block_forward.3} parent=5 // pred_fallthru
      _
    %p149 = scmp.lt.s32.totalorder %s10, 2
    // Predicated region
    $region25: #{conv_block_forward.3} parent=5 // pred_check
      %p150 = pneg %p149
    $region26: #{conv_block_forward.3} parent=5 // pred_check_branch
      %152 = sbr.rel (%p150) target = $region28
    $region27: #{conv_block_forward.3} parent=5 // pred_region
      // Predicated region
      $region29: #{conv_block_forward.3} parent=27 // pred_check
        %p153 = pneg %p30
      $region30: #{conv_block_forward.3} parent=27 // pred_check_branch
        %155 = sbr.rel (%p153) target = $region32
      $region31: #{conv_block_forward.3} parent=27 // pred_region
        %p156 = scmp.lt.s32.totalorder %s10, 1
        %s157 = scalar_select %p156, %s10, 1
        %s158 = smul.addr %s157, 3
        %s159 = smul.addr %s158, 4
        %s160 = scalar_lea.vmem %s0, %s159
      $region32: #{conv_block_forward.3} parent=27 // pred_fallthru
        _
    $region28: #{conv_block_forward.3} parent=5 // pred_fallthru
      _
    %p161 = scmp.le.s32.totalorder 1, %s10
    %p162 = scmp.lt.s32.totalorder %s10, 3
    %p163 = pnand %p161, %p162
    %p164 = pneg %p163
    // Predicated region
    $region33: #{conv_block_forward.3} parent=5 // pred_check
      _
    $region34: #{conv_block_forward.3} parent=5 // pred_check_branch
      %166 = sbr.rel (%p163) target = $region36
    $region35: #{conv_block_forward.3} parent=5 // pred_region
      %s167 = ssub.s32 %s10, 1
      %p168 = scmp.lt.s32.totalorder %s15, 1
      %s169 = scalar_select %p168, %s15, 1
      %s170 = smul.addr %s169, 3
      %s171 = smul.addr %s170, 4
      %s172 = scalar_lea.vmem %s0, %s171
      %p173 = pneg %p36
      %p174 = pneg %p33
      %p175 = pneg %p57
      %p176 = pneg %p54
      %p177 = pneg %p78
      %p178 = pneg %p75
      %p179 = pneg %p99
      %p180 = pneg %p96
      %p181 = pneg %p125
      %p182 = pneg %p122
      %p183 = scmp.lt.s32.totalorder %s15, 1
      %s184 = scalar_select %p183, %s15, 1
      %s185 = smul.addr %s184, 2
      %s186 = smul.addr %s185, 4
      %s187 = scalar_lea.vmem %s4, %s186
      %p188 = scmp.lt.s32.totalorder %s15, 1
      %s189 = scalar_select %p188, %s15, 1
      %s190 = smul.addr %s189, 3
      %s191 = smul.addr %s190, 4
      %s192 = scalar_lea.vmem %s0, %s191
      %p193 = scmp.lt.s32.totalorder %s15, 1
      %s194 = scalar_select %p193, %s15, 1
      %s195 = smul.addr %s194, 2
      %s196 = smul.addr %s195, 4
      %s197 = scalar_lea.vmem %s4, %s196
      %v198 = vld [vmem:[%s192] sm:$0xf]
      %vm199 = vcmask 125952
      %200 = vst.msk [vmem:[#allocation2] sm:$0xf] %vm199, %v198
      %v201 = vld [vmem:[%s192] sm:$0xf]
      %203 = vrot.lane.b32.xlu0 %v201, 126
      %v204 = vpop.permute.xlu0 %203
      %vm206 = vcmask 257152
      %207 = vst.msk [vmem:[#allocation2] sm:$0xf] %vm206, %v204
      %v208 = vld [vmem:[%s192] sm:$0xf]
      %210 = vrot.lane.b32.xlu0 %v208, 124
      %v211 = vpop.permute.xlu0 %210
      %vm213 = vcmask 388352
      %214 = vst.msk [vmem:[#allocation2] sm:$0xf] %vm213, %v211
      %v215 = vld [vmem:[%s192] sm:$0xf]
      %217 = vrot.lane.b32.xlu0 %v215, 122
      %v218 = vpop.permute.xlu0 %217
      %vm220 = vcmask 519552
      %221 = vst.msk [vmem:[#allocation2] sm:$0xf] %vm220, %v218
      %v222 = vld [vmem:[%s192] sm:$0xf]
      %224 = vrot.lane.b32.xlu0 %v222, 120
      %v225 = vpop.permute.xlu0 %224
      %vm227 = vcmask 650752
      %228 = vst.msk [vmem:[#allocation2] sm:$0xf] %vm227, %v225
      %v229 = vld [vmem:[%s192] sm:$0xf]
      %231 = vrot.lane.b32.xlu0 %v229, 118
      %v232 = vpop.permute.xlu0 %231
      %vm234 = vcmask 781952
      %235 = vst.msk [vmem:[#allocation2] sm:$0xf] %vm234, %v232
      %v236 = vld [vmem:[%s192] sm:$0xf]
      %238 = vrot.lane.b32.xlu0 %v236, 116
      %v239 = vpop.permute.xlu0 %238
      %vm241 = vcmask 913152
      %242 = vst.msk [vmem:[#allocation2] sm:$0xf] %vm241, %v239
      %v243 = vld [vmem:[%s192] sm:$0xff]
      %v245 = vcombine.high %v243, %v243
      %246 = vrot.lane.b32.xlu0 %v243, 114
      %v247 = vpop.permute.xlu0 %246
      %248 = vrot.lane.b32.xlu0 %v245, 114
      %v249 = vpop.permute.xlu0 %248
      %vm250 = vcmask 932864
      %v251 = vsel %vm250, %v247, %v249
      %vm253 = vcmask 1044352
      %254 = vst.msk [vmem:[#allocation2] sm:$0xf] %vm253, %v251
      %v255 = vld [vmem:[%s192 + $0x4] sm:$0xf]
      %257 = vrot.lane.b32.xlu0 %v255, 112
      %v258 = vpop.permute.xlu0 %257
      %260 = vst.msk [vmem:[#allocation2 + $0x8] sm:$0xf] %vm199, %v258
      %v261 = vld [vmem:[%s192 + $0x4] sm:$0xf]
      %263 = vrot.lane.b32.xlu0 %v261, 110
      %v264 = vpop.permute.xlu0 %263
      %266 = vst.msk [vmem:[#allocation2 + $0x8] sm:$0xf] %vm206, %v264
      %v267 = vld [vmem:[%s192 + $0x4] sm:$0xf]
      %269 = vrot.lane.b32.xlu0 %v267, 108
      %v270 = vpop.permute.xlu0 %269
      %272 = vst.msk [vmem:[#allocation2 + $0x8] sm:$0xf] %vm213, %v270
      %v273 = vld [vmem:[%s192 + $0x4] sm:$0xf]
      %275 = vrot.lane.b32.xlu0 %v273, 106
      %v276 = vpop.permute.xlu0 %275
      %278 = vst.msk [vmem:[#allocation2 + $0x8] sm:$0xf] %vm220, %v276
      %v279 = vld [vmem:[%s192 + $0x4] sm:$0xf]
      %281 = vrot.lane.b32.xlu0 %v279, 104
      %v282 = vpop.permute.xlu0 %281
      %284 = vst.msk [vmem:[#allocation2 + $0x8] sm:$0xf] %vm227, %v282
      %v285 = vld [vmem:[%s192 + $0x4] sm:$0xf]
      %287 = vrot.lane.b32.xlu0 %v285, 102
      %v288 = vpop.permute.xlu0 %287
      %290 = vst.msk [vmem:[#allocation2 + $0x8] sm:$0xf] %vm234, %v288
      %v291 = vld [vmem:[%s192 + $0x4] sm:$0xff]
      %v293 = vcombine.high %v291, %v291
      %294 = vrot.lane.b32.xlu0 %v291, 100
      %v295 = vpop.permute.xlu0 %294
      %296 = vrot.lane.b32.xlu0 %v293, 100
      %v297 = vpop.permute.xlu0 %296
      %vm298 = vcmask 818176
      %v299 = vsel %vm298, %v295, %v297
      %301 = vst.msk [vmem:[#allocation2 + $0x8] sm:$0xf] %vm241, %v299
      %v302 = vld [vmem:[%s192 + $0x8] sm:$0xf]
      %304 = vrot.lane.b32.xlu0 %v302, 98
      %v305 = vpop.permute.xlu0 %304
      %307 = vst.msk [vmem:[#allocation2 + $0x8] sm:$0xf] %vm253, %v305
      %v308 = vld [vmem:[%s192] sm:$0xf]
      %v310 = vcombine.low %v308, %v308
      %311 = vrot.lane.b32.xlu0 %v310, 127
      %v312 = vpop.permute.xlu0 %311
      %vm314 = vcmask 130052
      %315 = vst.msk [vmem:[#allocation2] sm:$0xf0] %vm314, %v312
      %v316 = vld [vmem:[%s192] sm:$0xf]
      %v318 = vcombine.low %v316, %v316
      %319 = vrot.lane.b32.xlu0 %v318, 125
      %v320 = vpop.permute.xlu0 %319
      %vm322 = vcmask 261252
      %323 = vst.msk [vmem:[#allocation2] sm:$0xf0] %vm322, %v320
      %v324 = vld [vmem:[%s192] sm:$0xf]
      %v326 = vcombine.low %v324, %v324
      %327 = vrot.lane.b32.xlu0 %v326, 123
      %v328 = vpop.permute.xlu0 %327
      %vm330 = vcmask 392452
      %331 = vst.msk [vmem:[#allocation2] sm:$0xf0] %vm330, %v328
      %v332 = vld [vmem:[%s192] sm:$0xf]
      %v334 = vcombine.low %v332, %v332
      %335 = vrot.lane.b32.xlu0 %v334, 121
      %v336 = vpop.permute.xlu0 %335
      %vm338 = vcmask 523652
      %339 = vst.msk [vmem:[#allocation2] sm:$0xf0] %vm338, %v336
      %v340 = vld [vmem:[%s192] sm:$0xf]
      %v342 = vcombine.low %v340, %v340
      %343 = vrot.lane.b32.xlu0 %v342, 119
      %v344 = vpop.permute.xlu0 %343
      %vm346 = vcmask 654852
      %347 = vst.msk [vmem:[#allocation2] sm:$0xf0] %vm346, %v344
      %v348 = vld [vmem:[%s192] sm:$0xf]
      %v350 = vcombine.low %v348, %v348
      %351 = vrot.lane.b32.xlu0 %v350, 117
      %v352 = vpop.permute.xlu0 %351
      %vm354 = vcmask 786052
      %355 = vst.msk [vmem:[#allocation2] sm:$0xf0] %vm354, %v352
      %v356 = vld [vmem:[%s192] sm:$0xf]
      %v358 = vcombine.low %v356, %v356
      %359 = vrot.lane.b32.xlu0 %v358, 115
      %v360 = vpop.permute.xlu0 %359
      %vm362 = vcmask 917252
      %363 = vst.msk [vmem:[#allocation2] sm:$0xf0] %vm362, %v360
      %v364 = vld [vmem:[%s192] sm:$0xff]
      %v366 = vcombine.low %v364, %v364
      %367 = vrot.lane.b32.xlu0 %v366, 113
      %v368 = vpop.permute.xlu0 %367
      %369 = vrot.lane.b32.xlu0 %v364, 113
      %v370 = vpop.permute.xlu0 %369
      %vm371 = vcmask 924672
      %v372 = vsel %vm371, %v368, %v370
      %vm374 = vcmask 1048452
      %375 = vst.msk [vmem:[#allocation2] sm:$0xf0] %vm374, %v372
      %v376 = vld [vmem:[%s192 + $0x4] sm:$0xf]
      %v378 = vcombine.low %v376, %v376
      %379 = vrot.lane.b32.xlu0 %v378, 111
      %v380 = vpop.permute.xlu0 %379
      %382 = vst.msk [vmem:[#allocation2 + $0x8] sm:$0xf0] %vm314, %v380
      %v383 = vld [vmem:[%s192 + $0x4] sm:$0xf]
      %v385 = vcombine.low %v383, %v383
      %386 = vrot.lane.b32.xlu0 %v385, 109
      %v387 = vpop.permute.xlu0 %386
      %389 = vst.msk [vmem:[#allocation2 + $0x8] sm:$0xf0] %vm322, %v387
      %v390 = vld [vmem:[%s192 + $0x4] sm:$0xf]
      %v392 = vcombine.low %v390, %v390
      %393 = vrot.lane.b32.xlu0 %v392, 107
      %v394 = vpop.permute.xlu0 %393
      %396 = vst.msk [vmem:[#allocation2 + $0x8] sm:$0xf0] %vm330, %v394
      %v397 = vld [vmem:[%s192 + $0x4] sm:$0xf]
      %v399 = vcombine.low %v397, %v397
      %400 = vrot.lane.b32.xlu0 %v399, 105
      %v401 = vpop.permute.xlu0 %400
      %403 = vst.msk [vmem:[#allocation2 + $0x8] sm:$0xf0] %vm338, %v401
      %v404 = vld [vmem:[%s192 + $0x4] sm:$0xf]
      %v406 = vcombine.low %v404, %v404
      %407 = vrot.lane.b32.xlu0 %v406, 103
      %v408 = vpop.permute.xlu0 %407
      %410 = vst.msk [vmem:[#allocation2 + $0x8] sm:$0xf0] %vm346, %v408
      %v411 = vld [vmem:[%s192 + $0x4] sm:$0xf]
      %v413 = vcombine.low %v411, %v411
      %414 = vrot.lane.b32.xlu0 %v413, 101
      %v415 = vpop.permute.xlu0 %414
      %417 = vst.msk [vmem:[#allocation2 + $0x8] sm:$0xf0] %vm354, %v415
      %v418 = vld [vmem:[%s192 + $0x4] sm:$0xff]
      %v420 = vcombine.low %v418, %v418
      %421 = vrot.lane.b32.xlu0 %v420, 99
      %v422 = vpop.permute.xlu0 %421
      %423 = vrot.lane.b32.xlu0 %v418, 99
      %v424 = vpop.permute.xlu0 %423
      %vm425 = vcmask 809984
      %v426 = vsel %vm425, %v422, %v424
      %428 = vst.msk [vmem:[#allocation2 + $0x8] sm:$0xf0] %vm362, %v426
      %v429 = vld [vmem:[%s192 + $0x8] sm:$0xf]
      %v431 = vcombine.low %v429, %v429
      %432 = vrot.lane.b32.xlu0 %v431, 97
      %v433 = vpop.permute.xlu0 %432
      %435 = vst.msk [vmem:[#allocation2 + $0x8] sm:$0xf0] %vm374, %v433
      %v436 = vld [vmem:[%s192] sm:$0xf]
      %438 = vrot.lane.b32.xlu0 %v436, 126
      %v439 = vpop.permute.xlu0 %438
      %441 = vst.msk [vmem:[#allocation2 + $0x10] sm:$0xf] %vm199, %v439
      %v442 = vld [vmem:[%s192] sm:$0xf]
      %444 = vrot.lane.b32.xlu0 %v442, 124
      %v445 = vpop.permute.xlu0 %444
      %447 = vst.msk [vmem:[#allocation2 + $0x10] sm:$0xf] %vm206, %v445
      %v448 = vld [vmem:[%s192] sm:$0xf]
      %450 = vrot.lane.b32.xlu0 %v448, 122
      %v451 = vpop.permute.xlu0 %450
      %453 = vst.msk [vmem:[#allocation2 + $0x10] sm:$0xf] %vm213, %v451
      %v454 = vld [vmem:[%s192] sm:$0xf]
      %456 = vrot.lane.b32.xlu0 %v454, 120
      %v457 = vpop.permute.xlu0 %456
      %459 = vst.msk [vmem:[#allocation2 + $0x10] sm:$0xf] %vm220, %v457
      %v460 = vld [vmem:[%s192] sm:$0xf]
      %462 = vrot.lane.b32.xlu0 %v460, 118
      %v463 = vpop.permute.xlu0 %462
      %465 = vst.msk [vmem:[#allocation2 + $0x10] sm:$0xf] %vm227, %v463
      %v466 = vld [vmem:[%s192] sm:$0xf]
      %468 = vrot.lane.b32.xlu0 %v466, 116
      %v469 = vpop.permute.xlu0 %468
      %471 = vst.msk [vmem:[#allocation2 + $0x10] sm:$0xf] %vm234, %v469
      %v472 = vld [vmem:[%s192] sm:$0xf]
      %474 = vrot.lane.b32.xlu0 %v472, 114
      %v475 = vpop.permute.xlu0 %474
      %477 = vst.msk [vmem:[#allocation2 + $0x10] sm:$0xf] %vm241, %v475
      %v478 = vld [vmem:[%s192 + $0x4] sm:$0xf]
      %480 = vrot.lane.b32.xlu0 %v478, 112
      %v481 = vpop.permute.xlu0 %480
      %483 = vst.msk [vmem:[#allocation2 + $0x10] sm:$0xf] %vm253, %v481
      %v484 = vld [vmem:[%s192 + $0x4] sm:$0xf]
      %486 = vrot.lane.b32.xlu0 %v484, 110
      %v487 = vpop.permute.xlu0 %486
      %489 = vst.msk [vmem:[#allocation2 + $0x18] sm:$0xf] %vm199, %v487
      %v490 = vld [vmem:[%s192 + $0x4] sm:$0xf]
      %492 = vrot.lane.b32.xlu0 %v490, 108
      %v493 = vpop.permute.xlu0 %492
      %495 = vst.msk [vmem:[#allocation2 + $0x18] sm:$0xf] %vm206, %v493
      %v496 = vld [vmem:[%s192 + $0x4] sm:$0xf]
      %498 = vrot.lane.b32.xlu0 %v496, 106
      %v499 = vpop.permute.xlu0 %498
      %501 = vst.msk [vmem:[#allocation2 + $0x18] sm:$0xf] %vm213, %v499
      %v502 = vld [vmem:[%s192 + $0x4] sm:$0xf]
      %504 = vrot.lane.b32.xlu0 %v502, 104
      %v505 = vpop.permute.xlu0 %504
      %507 = vst.msk [vmem:[#allocation2 + $0x18] sm:$0xf] %vm220, %v505
      %v508 = vld [vmem:[%s192 + $0x4] sm:$0xf]
      %510 = vrot.lane.b32.xlu0 %v508, 102
      %v511 = vpop.permute.xlu0 %510
      %513 = vst.msk [vmem:[#allocation2 + $0x18] sm:$0xf] %vm227, %v511
      %v514 = vld [vmem:[%s192 + $0x4] sm:$0xf]
      %516 = vrot.lane.b32.xlu0 %v514, 100
      %v517 = vpop.permute.xlu0 %516
      %519 = vst.msk [vmem:[#allocation2 + $0x18] sm:$0xf] %vm234, %v517
      %v520 = vld [vmem:[%s192 + $0x4] sm:$0xff]
      %v522 = vcombine.high %v520, %v520
      %523 = vrot.lane.b32.xlu0 %v520, 98
      %v524 = vpop.permute.xlu0 %523
      %525 = vrot.lane.b32.xlu0 %v522, 98
      %v526 = vpop.permute.xlu0 %525
      %vm527 = vcmask 801792
      %v528 = vsel %vm527, %v524, %v526
      %530 = vst.msk [vmem:[#allocation2 + $0x18] sm:$0xf] %vm241, %v528
      %v531 = vld [vmem:[%s192 + $0x8] sm:$0xf]
      %533 = vrot.lane.b32.xlu0 %v531, 96
      %v534 = vpop.permute.xlu0 %533
      %536 = vst.msk [vmem:[#allocation2 + $0x18] sm:$0xf] %vm253, %v534
      %v537 = vld [vmem:[%s192] sm:$0xf]
      %v539 = vcombine.low %v537, %v537
      %540 = vrot.lane.b32.xlu0 %v539, 110
      %v541 = vpop.permute.xlu0 %540
      %543 = vst.msk [vmem:[#allocation2 + $0x10] sm:$0xf0] %vm314, %v541
      %v544 = vld [vmem:[%s192] sm:$0xf]
      %v546 = vcombine.low %v544, %v544
      %547 = vrot.lane.b32.xlu0 %v546, 108
      %v548 = vpop.permute.xlu0 %547
      %550 = vst.msk [vmem:[#allocation2 + $0x10] sm:$0xf0] %vm322, %v548
      %v551 = vld [vmem:[%s192] sm:$0xf]
      %v553 = vcombine.low %v551, %v551
      %554 = vrot.lane.b32.xlu0 %v553, 106
      %v555 = vpop.permute.xlu0 %554
      %557 = vst.msk [vmem:[#allocation2 + $0x10] sm:$0xf0] %vm330, %v555
      %v558 = vld [vmem:[%s192] sm:$0xf]
      %v560 = vcombine.low %v558, %v558
      %561 = vrot.lane.b32.xlu0 %v560, 104
      %v562 = vpop.permute.xlu0 %561
      %564 = vst.msk [vmem:[#allocation2 + $0x10] sm:$0xf0] %vm338, %v562
      %v565 = vld [vmem:[%s192] sm:$0xf]
      %v567 = vcombine.low %v565, %v565
      %568 = vrot.lane.b32.xlu0 %v567, 102
      %v569 = vpop.permute.xlu0 %568
      %571 = vst.msk [vmem:[#allocation2 + $0x10] sm:$0xf0] %vm346, %v569
      %v572 = vld [vmem:[%s192] sm:$0xf]
      %v574 = vcombine.low %v572, %v572
      %575 = vrot.lane.b32.xlu0 %v574, 100
      %v576 = vpop.permute.xlu0 %575
      %578 = vst.msk [vmem:[#allocation2 + $0x10] sm:$0xf0] %vm354, %v576
      %v579 = vld [vmem:[%s192] sm:$0xff]
      %v581 = vcombine.low %v579, %v579
      %582 = vrot.lane.b32.xlu0 %v581, 98
      %v583 = vpop.permute.xlu0 %582
      %584 = vrot.lane.b32.xlu0 %v579, 98
      %v585 = vpop.permute.xlu0 %584
      %v586 = vsel %vm527, %v583, %v585
      %588 = vst.msk [vmem:[#allocation2 + $0x10] sm:$0xf0] %vm362, %v586
      %v589 = vld [vmem:[%s192 + $0x4] sm:$0xf]
      %v591 = vcombine.low %v589, %v589
      %592 = vrot.lane.b32.xlu0 %v591, 96
      %v593 = vpop.permute.xlu0 %592
      %595 = vst.msk [vmem:[#allocation2 + $0x10] sm:$0xf0] %vm374, %v593
      %v596 = vld [vmem:[%s192 + $0x4] sm:$0xf]
      %v598 = vcombine.low %v596, %v596
      %599 = vrot.lane.b32.xlu0 %v598, 94
      %v600 = vpop.permute.xlu0 %599
      %602 = vst.msk [vmem:[#allocation2 + $0x18] sm:$0xf0] %vm314, %v600
      %v603 = vld [vmem:[%s192 + $0x4] sm:$0xf]
      %v605 = vcombine.low %v603, %v603
      %606 = vrot.lane.b32.xlu0 %v605, 92
      %v607 = vpop.permute.xlu0 %606
      %609 = vst.msk [vmem:[#allocation2 + $0x18] sm:$0xf0] %vm322, %v607
      %v610 = vld [vmem:[%s192 + $0x4] sm:$0xf]
      %v612 = vcombine.low %v610, %v610
      %613 = vrot.lane.b32.xlu0 %v612, 90
      %v614 = vpop.permute.xlu0 %613
      %616 = vst.msk [vmem:[#allocation2 + $0x18] sm:$0xf0] %vm330, %v614
      %v617 = vld [vmem:[%s192 + $0x4] sm:$0xf]
      %v619 = vcombine.low %v617, %v617
      %620 = vrot.lane.b32.xlu0 %v619, 88
      %v621 = vpop.permute.xlu0 %620
      %623 = vst.msk [vmem:[#allocation2 + $0x18] sm:$0xf0] %vm338, %v621
      %v624 = vld [vmem:[%s192 + $0x4] sm:$0xf]
      %v626 = vcombine.low %v624, %v624
      %627 = vrot.lane.b32.xlu0 %v626, 86
      %v628 = vpop.permute.xlu0 %627
      %630 = vst.msk [vmem:[#allocation2 + $0x18] sm:$0xf0] %vm346, %v628
      %v631 = vld [vmem:[%s192 + $0x4] sm:$0xff]
      %v633 = vcombine.low %v631, %v631
      %634 = vrot.lane.b32.xlu0 %v633, 84
      %v635 = vpop.permute.xlu0 %634
      %636 = vrot.lane.b32.xlu0 %v631, 84
      %v637 = vpop.permute.xlu0 %636
      %vm638 = vcmask 687104
      %v639 = vsel %vm638, %v635, %v637
      %641 = vst.msk [vmem:[#allocation2 + $0x18] sm:$0xf0] %vm354, %v639
      %v642 = vld [vmem:[%s192 + $0x8] sm:$0xf]
      %v644 = vcombine.low %v642, %v642
      %645 = vrot.lane.b32.xlu0 %v644, 82
      %v646 = vpop.permute.xlu0 %645
      %648 = vst.msk [vmem:[#allocation2 + $0x18] sm:$0xf0] %vm362, %v646
      %v649 = vld [vmem:[%s192 + $0x8] sm:$0xf]
      %v651 = vcombine.low %v649, %v649
      %652 = vrot.lane.b32.xlu0 %v651, 80
      %v653 = vpop.permute.xlu0 %652
      %655 = vst.msk [vmem:[#allocation2 + $0x18] sm:$0xf0] %vm374, %v653
      %v656 = vld [vmem:[%s192] sm:$0xf]
      %658 = vrot.lane.b32.xlu0 %v656, 109
      %v659 = vpop.permute.xlu0 %658
      %661 = vst.msk [vmem:[#allocation2 + $0x20] sm:$0xf] %vm199, %v659
      %v662 = vld [vmem:[%s192] sm:$0xf]
      %664 = vrot.lane.b32.xlu0 %v662, 107
      %v665 = vpop.permute.xlu0 %664
      %667 = vst.msk [vmem:[#allocation2 + $0x20] sm:$0xf] %vm206, %v665
      %v668 = vld [vmem:[%s192] sm:$0xf]
      %670 = vrot.lane.b32.xlu0 %v668, 105
      %v671 = vpop.permute.xlu0 %670
      %673 = vst.msk [vmem:[#allocation2 + $0x20] sm:$0xf] %vm213, %v671
      %v674 = vld [vmem:[%s192] sm:$0xf]
      %676 = vrot.lane.b32.xlu0 %v674, 103
      %v677 = vpop.permute.xlu0 %676
      %679 = vst.msk [vmem:[#allocation2 + $0x20] sm:$0xf] %vm220, %v677
      %v680 = vld [vmem:[%s192] sm:$0xf]
      %682 = vrot.lane.b32.xlu0 %v680, 101
      %v683 = vpop.permute.xlu0 %682
      %685 = vst.msk [vmem:[#allocation2 + $0x20] sm:$0xf] %vm227, %v683
      %v686 = vld [vmem:[%s192] sm:$0xf]
      %688 = vrot.lane.b32.xlu0 %v686, 99
      %v689 = vpop.permute.xlu0 %688
      %691 = vst.msk [vmem:[#allocation2 + $0x20] sm:$0xf] %vm234, %v689
      %v692 = vld [vmem:[%s192] sm:$0xff]
      %v694 = vcombine.high %v692, %v692
      %695 = vrot.lane.b32.xlu0 %v692, 97
      %v696 = vpop.permute.xlu0 %695
      %697 = vrot.lane.b32.xlu0 %v694, 97
      %v698 = vpop.permute.xlu0 %697
      %vm699 = vcmask 793600
      %v700 = vsel %vm699, %v696, %v698
      %702 = vst.msk [vmem:[#allocation2 + $0x20] sm:$0xf] %vm241, %v700
      %v703 = vld [vmem:[%s192 + $0x4] sm:$0xf]
      %705 = vrot.lane.b32.xlu0 %v703, 95
      %v706 = vpop.permute.xlu0 %705
      %708 = vst.msk [vmem:[#allocation2 + $0x20] sm:$0xf] %vm253, %v706
      %v709 = vld [vmem:[%s192 + $0x4] sm:$0xf]
      %711 = vrot.lane.b32.xlu0 %v709, 93
      %v712 = vpop.permute.xlu0 %711
      %714 = vst.msk [vmem:[#allocation2 + $0x28] sm:$0xf] %vm199, %v712
      %v715 = vld [vmem:[%s192 + $0x4] sm:$0xf]
      %717 = vrot.lane.b32.xlu0 %v715, 91
      %v718 = vpop.permute.xlu0 %717
      %720 = vst.msk [vmem:[#allocation2 + $0x28] sm:$0xf] %vm206, %v718
      %v721 = vld [vmem:[%s192 + $0x4] sm:$0xf]
      %723 = vrot.lane.b32.xlu0 %v721, 89
      %v724 = vpop.permute.xlu0 %723
      %726 = vst.msk [vmem:[#allocation2 + $0x28] sm:$0xf] %vm213, %v724
      %v727 = vld [vmem:[%s192 + $0x4] sm:$0xf]
      %729 = vrot.lane.b32.xlu0 %v727, 87
      %v730 = vpop.permute.xlu0 %729
      %732 = vst.msk [vmem:[#allocation2 + $0x28] sm:$0xf] %vm220, %v730
      %v733 = vld [vmem:[%s192 + $0x4] sm:$0xf]
      %735 = vrot.lane.b32.xlu0 %v733, 85
      %v736 = vpop.permute.xlu0 %735
      %738 = vst.msk [vmem:[#allocation2 + $0x28] sm:$0xf] %vm227, %v736
      %v739 = vld [vmem:[%s192 + $0x4] sm:$0xff]
      %v741 = vcombine.high %v739, %v739
      %742 = vrot.lane.b32.xlu0 %v739, 83
      %v743 = vpop.permute.xlu0 %742
      %744 = vrot.lane.b32.xlu0 %v741, 83
      %v745 = vpop.permute.xlu0 %744
      %vm746 = vcmask 678912
      %v747 = vsel %vm746, %v743, %v745
      %749 = vst.msk [vmem:[#allocation2 + $0x28] sm:$0xf] %vm234, %v747
      %v750 = vld [vmem:[%s192 + $0x8] sm:$0xf]
      %752 = vrot.lane.b32.xlu0 %v750, 81
      %v753 = vpop.permute.xlu0 %752
      %755 = vst.msk [vmem:[#allocation2 + $0x28] sm:$0xf] %vm241, %v753
      %v756 = vld [vmem:[%s192 + $0x8] sm:$0xf]
      %758 = vrot.lane.b32.xlu0 %v756, 79
      %v759 = vpop.permute.xlu0 %758
      %761 = vst.msk [vmem:[#allocation2 + $0x28] sm:$0xf] %vm253, %v759
      %v762 = vld [vmem:[%s192] sm:$0xf]
      %v764 = vcombine.low %v762, %v762
      %765 = vrot.lane.b32.xlu0 %v764, 108
      %v766 = vpop.permute.xlu0 %765
      %768 = vst.msk [vmem:[#allocation2 + $0x20] sm:$0xf0] %vm314, %v766
      %v769 = vld [vmem:[%s192] sm:$0xf]
      %v771 = vcombine.low %v769, %v769
      %772 = vrot.lane.b32.xlu0 %v771, 106
      %v773 = vpop.permute.xlu0 %772
      %775 = vst.msk [vmem:[#allocation2 + $0x20] sm:$0xf0] %vm322, %v773
      %v776 = vld [vmem:[%s192] sm:$0xf]
      %v778 = vcombine.low %v776, %v776
      %779 = vrot.lane.b32.xlu0 %v778, 104
      %v780 = vpop.permute.xlu0 %779
      %782 = vst.msk [vmem:[#allocation2 + $0x20] sm:$0xf0] %vm330, %v780
      %v783 = vld [vmem:[%s192] sm:$0xf]
      %v785 = vcombine.low %v783, %v783
      %786 = vrot.lane.b32.xlu0 %v785, 102
      %v787 = vpop.permute.xlu0 %786
      %789 = vst.msk [vmem:[#allocation2 + $0x20] sm:$0xf0] %vm338, %v787
      %v790 = vld [vmem:[%s192] sm:$0xf]
      %v792 = vcombine.low %v790, %v790
      %793 = vrot.lane.b32.xlu0 %v792, 100
      %v794 = vpop.permute.xlu0 %793
      %796 = vst.msk [vmem:[#allocation2 + $0x20] sm:$0xf0] %vm346, %v794
      %v797 = vld [vmem:[%s192] sm:$0xf]
      %v799 = vcombine.low %v797, %v797
      %800 = vrot.lane.b32.xlu0 %v799, 98
      %v801 = vpop.permute.xlu0 %800
      %803 = vst.msk [vmem:[#allocation2 + $0x20] sm:$0xf0] %vm354, %v801
      %v804 = vld [vmem:[%s192 + $0x4] sm:$0xf]
      %v806 = vcombine.low %v804, %v804
      %807 = vrot.lane.b32.xlu0 %v806, 96
      %v808 = vpop.permute.xlu0 %807
      %810 = vst.msk [vmem:[#allocation2 + $0x20] sm:$0xf0] %vm362, %v808
      %v811 = vld [vmem:[%s192 + $0x4] sm:$0xf]
      %v813 = vcombine.low %v811, %v811
      %814 = vrot.lane.b32.xlu0 %v813, 94
      %v815 = vpop.permute.xlu0 %814
      %817 = vst.msk [vmem:[#allocation2 + $0x20] sm:$0xf0] %vm374, %v815
      %v818 = vld [vmem:[%s192 + $0x4] sm:$0xf]
      %v820 = vcombine.low %v818, %v818
      %821 = vrot.lane.b32.xlu0 %v820, 92
      %v822 = vpop.permute.xlu0 %821
      %824 = vst.msk [vmem:[#allocation2 + $0x28] sm:$0xf0] %vm314, %v822
      %v825 = vld [vmem:[%s192 + $0x4] sm:$0xf]
      %v827 = vcombine.low %v825, %v825
      %828 = vrot.lane.b32.xlu0 %v827, 90
      %v829 = vpop.permute.xlu0 %828
      %831 = vst.msk [vmem:[#allocation2 + $0x28] sm:$0xf0] %vm322, %v829
      %v832 = vld [vmem:[%s192 + $0x4] sm:$0xf]
      %v834 = vcombine.low %v832, %v832
      %835 = vrot.lane.b32.xlu0 %v834, 88
      %v836 = vpop.permute.xlu0 %835
      %838 = vst.msk [vmem:[#allocation2 + $0x28] sm:$0xf0] %vm330, %v836
      %v839 = vld [vmem:[%s192 + $0x4] sm:$0xf]
      %v841 = vcombine.low %v839, %v839
      %842 = vrot.lane.b32.xlu0 %v841, 86
      %v843 = vpop.permute.xlu0 %842
      %845 = vst.msk [vmem:[#allocation2 + $0x28] sm:$0xf0] %vm338, %v843
      %v846 = vld [vmem:[%s192 + $0x4] sm:$0xf]
      %v848 = vcombine.low %v846, %v846
      %849 = vrot.lane.b32.xlu0 %v848, 84
      %v850 = vpop.permute.xlu0 %849
      %852 = vst.msk [vmem:[#allocation2 + $0x28] sm:$0xf0] %vm346, %v850
      %v853 = vld [vmem:[%s192 + $0x4] sm:$0xff]
      %v855 = vcombine.low %v853, %v853
      %856 = vrot.lane.b32.xlu0 %v855, 82
      %v857 = vpop.permute.xlu0 %856
      %858 = vrot.lane.b32.xlu0 %v853, 82
      %v859 = vpop.permute.xlu0 %858
      %vm860 = vcmask 670720
      %v861 = vsel %vm860, %v857, %v859
      %863 = vst.msk [vmem:[#allocation2 + $0x28] sm:$0xf0] %vm354, %v861
      %v864 = vld [vmem:[%s192 + $0x8] sm:$0xf]
      %v866 = vcombine.low %v864, %v864
      %867 = vrot.lane.b32.xlu0 %v866, 80
      %v868 = vpop.permute.xlu0 %867
      %870 = vst.msk [vmem:[#allocation2 + $0x28] sm:$0xf0] %vm362, %v868
      %v871 = vld [vmem:[%s192 + $0x8] sm:$0xf]
      %v873 = vcombine.low %v871, %v871
      %874 = vrot.lane.b32.xlu0 %v873, 78
      %v875 = vpop.permute.xlu0 %874
      %877 = vst.msk [vmem:[#allocation2 + $0x28] sm:$0xf0] %vm374, %v875
      %v878 = vld [vmem:[%s192] sm:$0xf]
      %880 = vrot.lane.b32.xlu0 %v878, 92
      %v881 = vpop.permute.xlu0 %880
      %883 = vst.msk [vmem:[#allocation2 + $0x30] sm:$0xf] %vm199, %v881
      %v884 = vld [vmem:[%s192] sm:$0xf]
      %886 = vrot.lane.b32.xlu0 %v884, 90
      %v887 = vpop.permute.xlu0 %886
      %889 = vst.msk [vmem:[#allocation2 + $0x30] sm:$0xf] %vm206, %v887
      %v890 = vld [vmem:[%s192] sm:$0xf]
      %892 = vrot.lane.b32.xlu0 %v890, 88
      %v893 = vpop.permute.xlu0 %892
      %895 = vst.msk [vmem:[#allocation2 + $0x30] sm:$0xf] %vm213, %v893
      %v896 = vld [vmem:[%s192] sm:$0xf]
      %898 = vrot.lane.b32.xlu0 %v896, 86
      %v899 = vpop.permute.xlu0 %898
      %901 = vst.msk [vmem:[#allocation2 + $0x30] sm:$0xf] %vm220, %v899
      %v902 = vld [vmem:[%s192] sm:$0xf]
      %904 = vrot.lane.b32.xlu0 %v902, 84
      %v905 = vpop.permute.xlu0 %904
      %907 = vst.msk [vmem:[#allocation2 + $0x30] sm:$0xf] %vm227, %v905
      %v908 = vld [vmem:[%s192] sm:$0xff]
      %v910 = vcombine.high %v908, %v908
      %911 = vrot.lane.b32.xlu0 %v908, 82
      %v912 = vpop.permute.xlu0 %911
      %913 = vrot.lane.b32.xlu0 %v910, 82
      %v914 = vpop.permute.xlu0 %913
      %v915 = vsel %vm860, %v912, %v914
      %917 = vst.msk [vmem:[#allocation2 + $0x30] sm:$0xf] %vm234, %v915
      %v918 = vld [vmem:[%s192 + $0x4] sm:$0xf]
      %920 = vrot.lane.b32.xlu0 %v918, 80
      %v921 = vpop.permute.xlu0 %920
      %923 = vst.msk [vmem:[#allocation2 + $0x30] sm:$0xf] %vm241, %v921
      %v924 = vld [vmem:[%s192 + $0x4] sm:$0xf]
      %926 = vrot.lane.b32.xlu0 %v924, 78
      %v927 = vpop.permute.xlu0 %926
      %929 = vst.msk [vmem:[#allocation2 + $0x30] sm:$0xf] %vm253, %v927
      %v930 = vld [vmem:[%s192 + $0x4] sm:$0xf]
      %932 = vrot.lane.b32.xlu0 %v930, 76
      %v933 = vpop.permute.xlu0 %932
      %935 = vst.msk [vmem:[#allocation2 + $0x38] sm:$0xf] %vm199, %v933
      %v936 = vld [vmem:[%s192 + $0x4] sm:$0xf]
      %938 = vrot.lane.b32.xlu0 %v936, 74
      %v939 = vpop.permute.xlu0 %938
      %941 = vst.msk [vmem:[#allocation2 + $0x38] sm:$0xf] %vm206, %v939
      %v942 = vld [vmem:[%s192 + $0x4] sm:$0xf]
      %944 = vrot.lane.b32.xlu0 %v942, 72
      %v945 = vpop.permute.xlu0 %944
      %947 = vst.msk [vmem:[#allocation2 + $0x38] sm:$0xf] %vm213, %v945
      %v948 = vld [vmem:[%s192 + $0x4] sm:$0xf]
      %950 = vrot.lane.b32.xlu0 %v948, 70
      %v951 = vpop.permute.xlu0 %950
      %953 = vst.msk [vmem:[#allocation2 + $0x38] sm:$0xf] %vm220, %v951
      %v954 = vld [vmem:[%s192 + $0x4] sm:$0xff]
      %v956 = vcombine.high %v954, %v954
      %957 = vrot.lane.b32.xlu0 %v954, 68
      %v958 = vpop.permute.xlu0 %957
      %959 = vrot.lane.b32.xlu0 %v956, 68
      %v960 = vpop.permute.xlu0 %959
      %vm961 = vcmask 556032
      %v962 = vsel %vm961, %v958, %v960
      %964 = vst.msk [vmem:[#allocation2 + $0x38] sm:$0xf] %vm227, %v962
      %v965 = vld [vmem:[%s192 + $0x8] sm:$0xf]
      %967 = vrot.lane.b32.xlu0 %v965, 66
      %v968 = vpop.permute.xlu0 %967
      %970 = vst.msk [vmem:[#allocation2 + $0x38] sm:$0xf] %vm234, %v968
      %v971 = vld [vmem:[%s192 + $0x8] sm:$0xf]
      %973 = vrot.lane.b32.xlu0 %v971, 64
      %v974 = vpop.permute.xlu0 %973
      %976 = vst.msk [vmem:[#allocation2 + $0x38] sm:$0xf] %vm241, %v974
      %v977 = vld [vmem:[%s192 + $0x8] sm:$0xf]
      %979 = vrot.lane.b32.xlu0 %v977, 62
      %v980 = vpop.permute.xlu0 %979
      %982 = vst.msk [vmem:[#allocation2 + $0x38] sm:$0xf] %vm253, %v980
      %v983 = vld [vmem:[%s192] sm:$0xf]
      %v985 = vcombine.low %v983, %v983
      %986 = vrot.lane.b32.xlu0 %v985, 91
      %v987 = vpop.permute.xlu0 %986
      %989 = vst.msk [vmem:[#allocation2 + $0x30] sm:$0xf0] %vm314, %v987
      %v990 = vld [vmem:[%s192] sm:$0xf]
      %v992 = vcombine.low %v990, %v990
      %993 = vrot.lane.b32.xlu0 %v992, 89
      %v994 = vpop.permute.xlu0 %993
      %996 = vst.msk [vmem:[#allocation2 + $0x30] sm:$0xf0] %vm322, %v994
      %v997 = vld [vmem:[%s192] sm:$0xf]
      %v999 = vcombine.low %v997, %v997
      %1000 = vrot.lane.b32.xlu0 %v999, 87
      %v1001 = vpop.permute.xlu0 %1000
      %1003 = vst.msk [vmem:[#allocation2 + $0x30] sm:$0xf0] %vm330, %v1001
      %v1004 = vld [vmem:[%s192] sm:$0xf]
      %v1006 = vcombine.low %v1004, %v1004
      %1007 = vrot.lane.b32.xlu0 %v1006, 85
      %v1008 = vpop.permute.xlu0 %1007
      %1010 = vst.msk [vmem:[#allocation2 + $0x30] sm:$0xf0] %vm338, %v1008
      %v1011 = vld [vmem:[%s192] sm:$0xf]
      %v1013 = vcombine.low %v1011, %v1011
      %1014 = vrot.lane.b32.xlu0 %v1013, 83
      %v1015 = vpop.permute.xlu0 %1014
      %1017 = vst.msk [vmem:[#allocation2 + $0x30] sm:$0xf0] %vm346, %v1015
      %v1018 = vld [vmem:[%s192] sm:$0xff]
      %v1020 = vcombine.low %v1018, %v1018
      %1021 = vrot.lane.b32.xlu0 %v1020, 81
      %v1022 = vpop.permute.xlu0 %1021
      %1023 = vrot.lane.b32.xlu0 %v1018, 81
      %v1024 = vpop.permute.xlu0 %1023
      %vm1025 = vcmask 662528
      %v1026 = vsel %vm1025, %v1022, %v1024
      %1028 = vst.msk [vmem:[#allocation2 + $0x30] sm:$0xf0] %vm354, %v1026
      %v1029 = vld [vmem:[%s192 + $0x4] sm:$0xf]
      %v1031 = vcombine.low %v1029, %v1029
      %1032 = vrot.lane.b32.xlu0 %v1031, 79
      %v1033 = vpop.permute.xlu0 %1032
      %1035 = vst.msk [vmem:[#allocation2 + $0x30] sm:$0xf0] %vm362, %v1033
      %v1036 = vld [vmem:[%s192 + $0x4] sm:$0xf]
      %v1038 = vcombine.low %v1036, %v1036
      %1039 = vrot.lane.b32.xlu0 %v1038, 77
      %v1040 = vpop.permute.xlu0 %1039
      %1042 = vst.msk [vmem:[#allocation2 + $0x30] sm:$0xf0] %vm374, %v1040
      %v1043 = vld [vmem:[%s192 + $0x4] sm:$0xf]
      %v1045 = vcombine.low %v1043, %v1043
      %1046 = vrot.lane.b32.xlu0 %v1045, 75
      %v1047 = vpop.permute.xlu0 %1046
      %1049 = vst.msk [vmem:[#allocation2 + $0x38] sm:$0xf0] %vm314, %v1047
      %v1050 = vld [vmem:[%s192 + $0x4] sm:$0xf]
      %v1052 = vcombine.low %v1050, %v1050
      %1053 = vrot.lane.b32.xlu0 %v1052, 73
      %v1054 = vpop.permute.xlu0 %1053
      %1056 = vst.msk [vmem:[#allocation2 + $0x38] sm:$0xf0] %vm322, %v1054
      %v1057 = vld [vmem:[%s192 + $0x4] sm:$0xf]
      %v1059 = vcombine.low %v1057, %v1057
      %1060 = vrot.lane.b32.xlu0 %v1059, 71
      %v1061 = vpop.permute.xlu0 %1060
      %1063 = vst.msk [vmem:[#allocation2 + $0x38] sm:$0xf0] %vm330, %v1061
      %v1064 = vld [vmem:[%s192 + $0x4] sm:$0xf]
      %v1066 = vcombine.low %v1064, %v1064
      %1067 = vrot.lane.b32.xlu0 %v1066, 69
      %v1068 = vpop.permute.xlu0 %1067
      %1070 = vst.msk [vmem:[#allocation2 + $0x38] sm:$0xf0] %vm338, %v1068
      %v1071 = vld [vmem:[%s192 + $0x4] sm:$0xff]
      %v1073 = vcombine.low %v1071, %v1071
      %1074 = vrot.lane.b32.xlu0 %v1073, 67
      %v1075 = vpop.permute.xlu0 %1074
      %1076 = vrot.lane.b32.xlu0 %v1071, 67
      %v1077 = vpop.permute.xlu0 %1076
      %vm1078 = vcmask 547840
      %v1079 = vsel %vm1078, %v1075, %v1077
      %1081 = vst.msk [vmem:[#allocation2 + $0x38] sm:$0xf0] %vm346, %v1079
      %v1082 = vld [vmem:[%s192 + $0x8] sm:$0xf]
      %v1084 = vcombine.low %v1082, %v1082
      %1085 = vrot.lane.b32.xlu0 %v1084, 65
      %v1086 = vpop.permute.xlu0 %1085
      %1088 = vst.msk [vmem:[#allocation2 + $0x38] sm:$0xf0] %vm354, %v1086
      %v1089 = vld [vmem:[%s192 + $0x8] sm:$0xf]
      %v1091 = vcombine.low %v1089, %v1089
      %1092 = vrot.lane.b32.xlu0 %v1091, 63
      %v1093 = vpop.permute.xlu0 %1092
      %1095 = vst.msk [vmem:[#allocation2 + $0x38] sm:$0xf0] %vm362, %v1093
      %v1096 = vld [vmem:[%s192 + $0x8] sm:$0xf]
      %v1098 = vcombine.low %v1096, %v1096
      %1099 = vrot.lane.b32.xlu0 %v1098, 61
      %v1100 = vpop.permute.xlu0 %1099
      %1102 = vst.msk [vmem:[#allocation2 + $0x38] sm:$0xf0] %vm374, %v1100
      %v1103 = vld [vmem:[%s192] sm:$0xf]
      %1105 = vrot.lane.b32.xlu0 %v1103, 90
      %v1106 = vpop.permute.xlu0 %1105
      %1108 = vst.msk [vmem:[#allocation2 + $0x40] sm:$0xf] %vm199, %v1106
      %v1109 = vld [vmem:[%s192] sm:$0xf]
      %1111 = vrot.lane.b32.xlu0 %v1109, 88
      %v1112 = vpop.permute.xlu0 %1111
      %1114 = vst.msk [vmem:[#allocation2 + $0x40] sm:$0xf] %vm206, %v1112
      %v1115 = vld [vmem:[%s192] sm:$0xf]
      %1117 = vrot.lane.b32.xlu0 %v1115, 86
      %v1118 = vpop.permute.xlu0 %1117
      %1120 = vst.msk [vmem:[#allocation2 + $0x40] sm:$0xf] %vm213, %v1118
      %v1121 = vld [vmem:[%s192] sm:$0xf]
      %1123 = vrot.lane.b32.xlu0 %v1121, 84
      %v1124 = vpop.permute.xlu0 %1123
      %1126 = vst.msk [vmem:[#allocation2 + $0x40] sm:$0xf] %vm220, %v1124
      %v1127 = vld [vmem:[%s192] sm:$0xf]
      %1129 = vrot.lane.b32.xlu0 %v1127, 82
      %v1130 = vpop.permute.xlu0 %1129
      %1132 = vst.msk [vmem:[#allocation2 + $0x40] sm:$0xf] %vm227, %v1130
      %v1133 = vld [vmem:[%s192 + $0x4] sm:$0xf]
      %1135 = vrot.lane.b32.xlu0 %v1133, 80
      %v1136 = vpop.permute.xlu0 %1135
      %1138 = vst.msk [vmem:[#allocation2 + $0x40] sm:$0xf] %vm234, %v1136
      %v1139 = vld [vmem:[%s192 + $0x4] sm:$0xf]
      %1141 = vrot.lane.b32.xlu0 %v1139, 78
      %v1142 = vpop.permute.xlu0 %1141
      %1144 = vst.msk [vmem:[#allocation2 + $0x40] sm:$0xf] %vm241, %v1142
      %v1145 = vld [vmem:[%s192 + $0x4] sm:$0xf]
      %1147 = vrot.lane.b32.xlu0 %v1145, 76
      %v1148 = vpop.permute.xlu0 %1147
      %1150 = vst.msk [vmem:[#allocation2 + $0x40] sm:$0xf] %vm253, %v1148
      %v1151 = vld [vmem:[%s192 + $0x4] sm:$0xf]
      %1153 = vrot.lane.b32.xlu0 %v1151, 74
      %v1154 = vpop.permute.xlu0 %1153
      %1156 = vst.msk [vmem:[#allocation2 + $0x48] sm:$0xf] %vm199, %v1154
      %v1157 = vld [vmem:[%s192 + $0x4] sm:$0xf]
      %1159 = vrot.lane.b32.xlu0 %v1157, 72
      %v1160 = vpop.permute.xlu0 %1159
      %1162 = vst.msk [vmem:[#allocation2 + $0x48] sm:$0xf] %vm206, %v1160
      %v1163 = vld [vmem:[%s192 + $0x4] sm:$0xf]
      %1165 = vrot.lane.b32.xlu0 %v1163, 70
      %v1166 = vpop.permute.xlu0 %1165
      %1168 = vst.msk [vmem:[#allocation2 + $0x48] sm:$0xf] %vm213, %v1166
      %v1169 = vld [vmem:[%s192 + $0x4] sm:$0xf]
      %1171 = vrot.lane.b32.xlu0 %v1169, 68
      %v1172 = vpop.permute.xlu0 %1171
      %1174 = vst.msk [vmem:[#allocation2 + $0x48] sm:$0xf] %vm220, %v1172
      %v1175 = vld [vmem:[%s192 + $0x4] sm:$0xff]
      %v1177 = vcombine.high %v1175, %v1175
      %1178 = vrot.lane.b32.xlu0 %v1175, 66
      %v1179 = vpop.permute.xlu0 %1178
      %1180 = vrot.lane.b32.xlu0 %v1177, 66
      %v1181 = vpop.permute.xlu0 %1180
      %vm1182 = vcmask 539648
      %v1183 = vsel %vm1182, %v1179, %v1181
      %1185 = vst.msk [vmem:[#allocation2 + $0x48] sm:$0xf] %vm227, %v1183
      %v1186 = vld [vmem:[%s192 + $0x8] sm:$0xf]
      %1188 = vrot.lane.b32.xlu0 %v1186, 64
      %v1189 = vpop.permute.xlu0 %1188
      %1191 = vst.msk [vmem:[#allocation2 + $0x48] sm:$0xf] %vm234, %v1189
      %v1192 = vld [vmem:[%s192 + $0x8] sm:$0xf]
      %1194 = vrot.lane.b32.xlu0 %v1192, 62
      %v1195 = vpop.permute.xlu0 %1194
      %1197 = vst.msk [vmem:[#allocation2 + $0x48] sm:$0xf] %vm241, %v1195
      %v1198 = vld [vmem:[%s192 + $0x8] sm:$0xf]
      %1200 = vrot.lane.b32.xlu0 %v1198, 60
      %v1201 = vpop.permute.xlu0 %1200
      %1203 = vst.msk [vmem:[#allocation2 + $0x48] sm:$0xf] %vm253, %v1201
      %v1204 = vld [vmem:[%s1] sm:$0xf]
      %v1205 = vld [vmem:[#allocation2] sm:$0xff]
      %v1206 = vld [vmem:[#allocation2 + $0x8] sm:$0xff]
      %v1207 = vld [vmem:[#allocation2 + $0x10] sm:$0xff]
      %v1208 = vld [vmem:[#allocation2 + $0x18] sm:$0xff]
      %v1209 = vld [vmem:[#allocation2 + $0x20] sm:$0xff]
      %v1210 = vld [vmem:[#allocation2 + $0x28] sm:$0xff]
      %v1211 = vld [vmem:[#allocation2 + $0x30] sm:$0xff]
      %v1212 = vld [vmem:[#allocation2 + $0x38] sm:$0xff]
      %v1213 = vld [vmem:[#allocation2 + $0x40] sm:$0xf]
      %v1214 = vld [vmem:[#allocation2 + $0x48] sm:$0xf]
      %vm1215 = vcmask 293888
      %v1217 = vsel %vm1215, %v1204, 0
      %vm1219 = vcmask 1043456
      %v1221 = vsel %vm1219, %v1213, 0
      %v1224 = vsel %vm1219, %v1214, 0
      %1226 = vmatprep.subr.mxu0 %v1206
      %1227 = vmatpush1.msra.mxu0 %v1205
      %1228 = vmatprep.subr.mxu0 %v1208
      %1229 = vmatpush1.msra.mxu0 %v1207
      %1230 = vmatprep.subr.mxu0 %v1210
      %1231 = vmatpush1.msra.mxu0 %v1209
      %1232 = vmatprep.subr.mxu0 %v1212
      %1233 = vmatpush1.msra.mxu0 %v1211
      %1234 = vmatprep.subr.mxu0 %v1224
      %1235 = vmatpush1.msra.mxu0 %v1221
      %1236 = vmatprep.subr.mxu0 0.0
      %1237 = vmatpush1.msra.mxu0 0.0
      %1238 = vmatprep.subr.mxu0 0.0
      %1239 = vmatpush1.msra.mxu0 0.0
      %1240 = vmatprep.subr.mxu0 0.0
      %1241 = vmatpush1.msra.mxu0 0.0
      %1242 = vmatprep.subr.mxu0 0.0
      %1243 = vmatpush1.msra.mxu0 0.0
      %1244 = vmatprep.subr.mxu0 0.0
      %1245 = vmatpush1.msra.mxu0 0.0
      %1246 = vmatprep.subr.mxu0 0.0
      %1247 = vmatpush1.msra.mxu0 0.0
      %1248 = vmatprep.subr.mxu0 0.0
      %1249 = vmatpush1.msra.mxu0 0.0
      %1250 = vmatprep.subr.mxu0 0.0
      %1251 = vmatpush1.msra.mxu0 0.0
      %1252 = vmatprep.subr.mxu0 0.0
      %1253 = vmatpush1.msra.mxu0 0.0
      %1254 = vmatprep.subr.mxu0 0.0
      %1255 = vmatpush1.msra.mxu0 0.0
      %1256 = vmatprep.subr.mxu0 0.0
      %1257 = vmatpush1.msra.mxu0 0.0
      %1258 = vmatprep.subr.mxu0 0.0
      %1259 = vmatpush1.msra.mxu0 0.0
      %1260 = vmatprep.subr.mxu0 0.0
      %1261 = vmatpush1.msra.mxu0 0.0
      %1262 = vmatprep.subr.mxu0 0.0
      %1263 = vmatpush1.msra.mxu0 0.0
      %1264 = vmatprep.subr.mxu0 0.0
      %1265 = vmatpush1.msra.mxu0 0.0
      %1266 = vmatprep.subr.mxu0 0.0
      %1267 = vmatpush1.msra.mxu0 0.0
      %1268 = vmatprep.subr.mxu0 0.0
      %1269 = vmatpush1.msra.mxu0 0.0
      %1270 = vmatprep.subr.mxu0 0.0
      %1271 = vmatpush1.msra.mxu0 0.0
      %1272 = vmatprep.subr.mxu0 0.0
      %1273 = vmatpush1.msra.mxu0 0.0
      %1274 = vmatprep.subr.mxu0 0.0
      %1275 = vmatpush1.msra.mxu0 0.0
      %1276 = vmatprep.subr.mxu0 0.0
      %1277 = vmatpush1.msra.mxu0 0.0
      %1278 = vmatprep.subr.mxu0 0.0
      %1279 = vmatpush1.msra.mxu0 0.0
      %1280 = vmatprep.subr.mxu0 0.0
      %1281 = vmatpush1.msra.mxu0 0.0
      %1282 = vmatprep.subr.mxu0 0.0
      %1283 = vmatpush1.msra.mxu0 0.0
      %1284 = vmatprep.subr.mxu0 0.0
      %1285 = vmatpush1.msra.mxu0 0.0
      %1286 = vmatprep.subr.mxu0 0.0
      %1287 = vmatpush1.msra.mxu0 0.0
      %1288 = vmatprep.subr.mxu0 0.0
      %1289 = vmatpush1.msra.mxu0 0.0
      %1290 = vmatprep.mubr.f32.mxu0 0.0
      %1291 = vmatmul.mubr.f32.gmra.mrb[0].mxu0 %v1217
      %v1292 = vpop.f32.mrb[0].mxu0
      %v1293 = vadd.f32 0.0, %v1292
      %v1294 = vpop.f32.mrb[0].mxu0
      %v1295 = vadd.f32 0.0, %v1294
      %1296 = vdwg.mxu0
      %v1297 = vld [vmem:[%s2] sm:$0xf]
      %1299 = vset.pattern.permute.xlu0 0
      %1300 = vperm.xlu0 %1299, %v1297
      %v1301 = vpop.permute.xlu0 %1300
      %v1303 = vmul.f32 %v1293, %v1301
      %v1304 = vmul.f32 %v1295, %v1301
      %v1305 = vld [vmem:[%s3] sm:$0xf]
      %1307 = vset.pattern.permute.xlu0 0
      %1308 = vperm.xlu0 %1307, %v1305
      %v1309 = vpop.permute.xlu0 %1308
      %v1311 = vadd.f32 %v1303, %v1309
      %v1312 = vadd.f32 %v1304, %v1309
      %vm1313 = vcmp.gt.f32.partialorder %v1311, 0.0
      %vm1314 = vcmp.gt.f32.partialorder %v1312, 0.0
      %v1315 = vmul.f32 %v1311, 0.1
      %v1316 = vmul.f32 %v1312, 0.1
      %v1317 = vsel %vm1313, %v1311, %v1315
      %v1318 = vsel %vm1314, %v1312, %v1316
      %v1319 = vld [vmem:[#allocation2 + $0x20] sm:$0xf]
      %v1320 = vld [vmem:[#allocation2 + $0x28] sm:$0xf]
      %v1321 = vadd.f32 %v1317, %v1319
      %v1322 = vadd.f32 %v1318, %v1320
      %v1325 = vcombine.low %v1321, %v1322
      %1327 = vst [vmem:[%s197] sm:$0xff] %v1325
      %p1328 = scmp.lt.s32.totalorder %s15, 1
      %s1329 = scalar_select %p1328, %s15, 1
      %s1330 = smul.addr %s1329, 2
      %s1331 = smul.addr %s1330, 4
      %s1332 = scalar_lea.vmem %s4, %s1331
      // Predicated region
      $region37: #{conv_block_forward.3} parent=35 // pred_check
        %p1333 = pneg %p122
      $region38: #{conv_block_forward.3} parent=35 // pred_check_branch
        %1335 = sbr.rel (%p1333) target = $region40
      $region39: #{conv_block_forward.3} parent=35 // pred_region
        _
      $region40: #{conv_block_forward.3} parent=35 // pred_fallthru
        _
    $region36: #{conv_block_forward.3} parent=5 // pred_fallthru
      _
    %p1336 = scmp.le.s32.totalorder 2, %s10
    // Predicated region
    $region41: #{conv_block_forward.3} parent=5 // pred_check
      %p1337 = pneg %p1336
    $region42: #{conv_block_forward.3} parent=5 // pred_check_branch
      %1339 = sbr.rel (%p1337) target = $region44
    $region43: #{conv_block_forward.3} parent=5 // pred_region
      %s1340 = ssub.s32 %s10, 2
      // Predicated region
      $region45: #{conv_block_forward.3} parent=43 // pred_check
        %p1341 = pneg %p128
      $region46: #{conv_block_forward.3} parent=43 // pred_check_branch
        %1343 = sbr.rel (%p1341) target = $region48
      $region47: #{conv_block_forward.3} parent=43 // pred_region
        %p1344 = scmp.lt.s32.totalorder %s16, 1
        %s1345 = scalar_select %p1344, %s16, 1
        %s1346 = smul.addr %s1345, 2
        %s1347 = smul.addr %s1346, 4
        %s1348 = scalar_lea.vmem %s4, %s1347
      $region48: #{conv_block_forward.3} parent=43 // pred_fallthru
        _
    $region44: #{conv_block_forward.3} parent=5 // pred_fallthru
      _
  $region6: #{conv_block_forward.3} parent=0 // loop_footer
    %s14 = sadd.s32 1, %s10
  $region7: #{conv_block_forward.3} parent=0 // loop_footer_branch
    %9 = sbr.rel target = $region3
  $region8: #{conv_block_forward.3} parent=0 // loop_exit
    _

// kernel: conv_block_forward.2
$region0: #{conv_block_forward.2}
  #allocation0 [shape = 'u32[]', space=smem, size = 0x4, offset = 0x4, fixed_abs, tag = 'smem constant byte address 0x4 - core index']
  #allocation1 [shape = 'u32[144,128]{1,0:T(1,128)}', space=vmem, size = 0x12000, scoped, tag = 'internal scratch']
  #allocation2 [shape = 'f32[36,256]{1,0:T(8,128)}', space=vmem, size = 0xa000, scoped, tag = 'scratch operand']
  %s0 = inlined_call_operand.vmem [shape: f32[2,4,384], index: 0, kind: input, shape index: {}]
  %s1 = inlined_call_operand.vmem [shape: f32[4,36], index: 1, kind: input, shape index: {}]
  %s2 = inlined_call_operand.vmem [shape: f32[2,4,2], index: 2, kind: output, shape index: {}]
  %s3 = sld [smem:[#allocation0]]
  $region41: #{conv_block_forward.2} parent=0
    _
  %s5 = ssub.s32 1, %s3
  %s6 = scalar_select 0, %s5, %s3
  loop: start=0, step=1, limit=4
  $region2: #{conv_block_forward.2} parent=0 // loop_pre_header
    _
  $region3: #{conv_block_forward.2} parent=0 // loop_header
    %s8 = sphi 0, %s12
    %p9 = scmp.ge.s32.totalorder %s8, 4
    %s18 = sphi 0, %s20
    %s21 = sphi 0, %s18
    %s22 = sphi 0, %s21
    %s38 = sphi 0, %s22
    %s42 = sphi 0, %s42
    %s44 = sphi 0, %s42
    %s45 = sphi 0, %s44
    %s59 = sphi 0, %s45
    %s65 = sphi 0, %s67
    %s68 = sphi 0, %s65
    %s69 = sphi 0, %s68
    %s85 = sphi 0, %s69
  $region4: #{conv_block_forward.2} parent=0 // loop_header_branch
    %11 = sbr.rel (%p9) target = $region8
  $region5: #{conv_block_forward.2} parent=0 // loop_body
    %s13 = ssub.s32 %s8, 1
    %s14 = ssub.s32 %s8, 2
    %s15 = sadd.s32 %s8, 1
    %s16 = ssub.s32 %s8, %s15
    %p17 = scmp.eq.s32.totalorder %s16, 0
    %s19 = sadd.s32 %s18, 1
    %s20 = scalar_select %p17, %s18, %s19
    %p23 = pneg %p17
    %p24 = scmp.eq.s32.totalorder %s8, 1
    %p25 = por %p23, %p24
    %p26 = scmp.ne.s32.totalorder %s18, %s21
    %p27 = scmp.eq.s32.totalorder %s8, 0
    %p28 = por %p26, %p27
    %p29 = scmp.ne.s32.totalorder %s18, %s21
    %p30 = scmp.eq.s32.totalorder %s13, 1
    %p31 = por %p29, %p30
    %p32 = scmp.ne.s32.totalorder %s21, %s22
    %p33 = scmp.eq.s32.totalorder %s13, 0
    %p34 = por %p32, %p33
    %p35 = scmp.ne.s32.totalorder %s21, %s22
    %p36 = scmp.eq.s32.totalorder %s14, 1
    %p37 = por %p35, %p36
    %p39 = scmp.ne.s32.totalorder %s22, %s38
    %p40 = scmp.eq.s32.totalorder %s14, 0
    %p41 = por %p39, %p40
    %s43 = sadd.s32 %s42, 1
    %p46 = scmp.eq.s32.totalorder %s8, 1
    %p47 = scmp.ne.s32.totalorder %s42, %s44
    %p48 = scmp.eq.s32.totalorder %s8, 0
    %p49 = por %p47, %p48
    %p50 = scmp.ne.s32.totalorder %s42, %s44
    %p51 = scmp.eq.s32.totalorder %s13, 1
    %p52 = por %p50, %p51
    %p53 = scmp.ne.s32.totalorder %s44, %s45
    %p54 = scmp.eq.s32.totalorder %s13, 0
    %p55 = por %p53, %p54
    %p56 = scmp.ne.s32.totalorder %s44, %s45
    %p57 = scmp.eq.s32.totalorder %s14, 1
    %p58 = por %p56, %p57
    %p60 = scmp.ne.s32.totalorder %s45, %s59
    %p61 = scmp.eq.s32.totalorder %s14, 0
    %p62 = por %p60, %p61
    %s63 = ssub.s32 %s8, %s15
    %p64 = scmp.eq.s32.totalorder %s63, 0
    %s66 = sadd.s32 %s65, 1
    %s67 = scalar_select %p64, %s65, %s66
    %p70 = pneg %p64
    %p71 = scmp.eq.s32.totalorder %s8, 1
    %p72 = por %p70, %p71
    %p73 = scmp.ne.s32.totalorder %s65, %s68
    %p74 = scmp.eq.s32.totalorder %s8, 0
    %p75 = por %p73, %p74
    %p76 = scmp.ne.s32.totalorder %s65, %s68
    %p77 = scmp.eq.s32.totalorder %s13, 1
    %p78 = por %p76, %p77
    %p79 = scmp.ne.s32.totalorder %s68, %s69
    %p80 = scmp.eq.s32.totalorder %s13, 0
    %p81 = por %p79, %p80
    %p82 = scmp.ne.s32.totalorder %s68, %s69
    %p83 = scmp.eq.s32.totalorder %s14, 1
    %p84 = por %p82, %p83
    %p86 = scmp.ne.s32.totalorder %s69, %s85
    %p87 = scmp.eq.s32.totalorder %s14, 0
    %p88 = por %p86, %p87
    %p89 = scmp.le.s32.totalorder 1, %s8
    %p90 = scmp.lt.s32.totalorder %s8, 3
    %p91 = pnand %p89, %p90
    %p92 = pneg %p91
    // Predicated region
    $region9: #{conv_block_forward.2} parent=5 // pred_check
      _
    $region10: #{conv_block_forward.2} parent=5 // pred_check_branch
      %94 = sbr.rel (%p91) target = $region12
    $region11: #{conv_block_forward.2} parent=5 // pred_region
      %s95 = ssub.s32 %s8, 1
      // Predicated region
      $region13: #{conv_block_forward.2} parent=11 // pred_check
        %p96 = pneg %p55
      $region14: #{conv_block_forward.2} parent=11 // pred_check_branch
        %98 = sbr.rel (%p96) target = $region16
      $region15: #{conv_block_forward.2} parent=11 // pred_region
        _
      $region16: #{conv_block_forward.2} parent=11 // pred_fallthru
        _
    $region12: #{conv_block_forward.2} parent=5 // pred_fallthru
      _
    %p99 = scmp.lt.s32.totalorder %s8, 2
    // Predicated region
    $region17: #{conv_block_forward.2} parent=5 // pred_check
      %p100 = pneg %p99
    $region18: #{conv_block_forward.2} parent=5 // pred_check_branch
      %102 = sbr.rel (%p100) target = $region20
    $region19: #{conv_block_forward.2} parent=5 // pred_region
      // Predicated region
      $region21: #{conv_block_forward.2} parent=19 // pred_check
        %p103 = pneg %p28
      $region22: #{conv_block_forward.2} parent=19 // pred_check_branch
        %105 = sbr.rel (%p103) target = $region24
      $region23: #{conv_block_forward.2} parent=19 // pred_region
        %p106 = scmp.lt.s32.totalorder %s8, 1
        %s107 = scalar_select %p106, %s8, 1
        %s108 = smul.addr %s107, 3
        %s109 = smul.addr %s108, 4
        %s110 = scalar_lea.vmem %s0, %s109
      $region24: #{conv_block_forward.2} parent=19 // pred_fallthru
        _
    $region20: #{conv_block_forward.2} parent=5 // pred_fallthru
      _
    %p111 = scmp.le.s32.totalorder 1, %s8
    %p112 = scmp.lt.s32.totalorder %s8, 3
    %p113 = pnand %p111, %p112
    %p114 = pneg %p113
    // Predicated region
    $region25: #{conv_block_forward.2} parent=5 // pred_check
      _
    $region26: #{conv_block_forward.2} parent=5 // pred_check_branch
      %116 = sbr.rel (%p113) target = $region28
    $region27: #{conv_block_forward.2} parent=5 // pred_region
      %s117 = ssub.s32 %s8, 1
      %p118 = scmp.lt.s32.totalorder %s13, 1
      %s119 = scalar_select %p118, %s13, 1
      %s120 = smul.addr %s119, 3
      %s121 = smul.addr %s120, 4
      %s122 = scalar_lea.vmem %s0, %s121
      %p123 = pneg %p34
      %p124 = pneg %p31
      %p125 = pneg %p55
      %p126 = pneg %p52
      %p127 = pneg %p81
      %p128 = pneg %p78
      %p129 = scmp.lt.s32.totalorder %s13, 1
      %s130 = scalar_select %p129, %s13, 1
      %s131 = smul.addr %s130, 4
      %s132 = scalar_lea.vmem %s2, %s131
      %p133 = scmp.lt.s32.totalorder %s13, 1
      %s134 = scalar_select %p133, %s13, 1
      %s135 = smul.addr %s134, 3
      %s136 = smul.addr %s135, 4
      %s137 = scalar_lea.vmem %s0, %s136
      %p138 = scmp.lt.s32.totalorder %s13, 1
      %s139 = scalar_select %p138, %s13, 1
      %s140 = smul.addr %s139, 4
      %s141 = scalar_lea.vmem %s2, %s140
      %v142 = vld [vmem:[%s137] sm:$0xf]
      %vm143 = vcmask 125952
      %144 = vst.msk [vmem:[#allocation2] sm:$0xf] %vm143, %v142
      %v145 = vld [vmem:[%s137] sm:$0xf]
      %147 = vrot.lane.b32.xlu0 %v145, 126
      %v148 = vpop.permute.xlu0 %147
      %vm150 = vcmask 257152
      %151 = vst.msk [vmem:[#allocation2] sm:$0xf] %vm150, %v148
      %v152 = vld [vmem:[%s137] sm:$0xf]
      %154 = vrot.lane.b32.xlu0 %v152, 124
      %v155 = vpop.permute.xlu0 %154
      %vm157 = vcmask 388352
      %158 = vst.msk [vmem:[#allocation2] sm:$0xf] %vm157, %v155
      %v159 = vld [vmem:[%s137] sm:$0xf]
      %161 = vrot.lane.b32.xlu0 %v159, 122
      %v162 = vpop.permute.xlu0 %161
      %vm164 = vcmask 519552
      %165 = vst.msk [vmem:[#allocation2] sm:$0xf] %vm164, %v162
      %v166 = vld [vmem:[%s137] sm:$0xf]
      %168 = vrot.lane.b32.xlu0 %v166, 120
      %v169 = vpop.permute.xlu0 %168
      %vm171 = vcmask 650752
      %172 = vst.msk [vmem:[#allocation2] sm:$0xf] %vm171, %v169
      %v173 = vld [vmem:[%s137] sm:$0xf]
      %175 = vrot.lane.b32.xlu0 %v173, 118
      %v176 = vpop.permute.xlu0 %175
      %vm178 = vcmask 781952
      %179 = vst.msk [vmem:[#allocation2] sm:$0xf] %vm178, %v176
      %v180 = vld [vmem:[%s137] sm:$0xf]
      %182 = vrot.lane.b32.xlu0 %v180, 116
      %v183 = vpop.permute.xlu0 %182
      %vm185 = vcmask 913152
      %186 = vst.msk [vmem:[#allocation2] sm:$0xf] %vm185, %v183
      %v187 = vld [vmem:[%s137] sm:$0xff]
      %v189 = vcombine.high %v187, %v187
      %190 = vrot.lane.b32.xlu0 %v187, 114
      %v191 = vpop.permute.xlu0 %190
      %192 = vrot.lane.b32.xlu0 %v189, 114
      %v193 = vpop.permute.xlu0 %192
      %vm194 = vcmask 932864
      %v195 = vsel %vm194, %v191, %v193
      %vm197 = vcmask 1044352
      %198 = vst.msk [vmem:[#allocation2] sm:$0xf] %vm197, %v195
      %v199 = vld [vmem:[%s137 + $0x4] sm:$0xf]
      %201 = vrot.lane.b32.xlu0 %v199, 112
      %v202 = vpop.permute.xlu0 %201
      %204 = vst.msk [vmem:[#allocation2 + $0x8] sm:$0xf] %vm143, %v202
      %v205 = vld [vmem:[%s137 + $0x4] sm:$0xf]
      %207 = vrot.lane.b32.xlu0 %v205, 110
      %v208 = vpop.permute.xlu0 %207
      %210 = vst.msk [vmem:[#allocation2 + $0x8] sm:$0xf] %vm150, %v208
      %v211 = vld [vmem:[%s137 + $0x4] sm:$0xf]
      %213 = vrot.lane.b32.xlu0 %v211, 108
      %v214 = vpop.permute.xlu0 %213
      %216 = vst.msk [vmem:[#allocation2 + $0x8] sm:$0xf] %vm157, %v214
      %v217 = vld [vmem:[%s137 + $0x4] sm:$0xf]
      %219 = vrot.lane.b32.xlu0 %v217, 106
      %v220 = vpop.permute.xlu0 %219
      %222 = vst.msk [vmem:[#allocation2 + $0x8] sm:$0xf] %vm164, %v220
      %v223 = vld [vmem:[%s137 + $0x4] sm:$0xf]
      %225 = vrot.lane.b32.xlu0 %v223, 104
      %v226 = vpop.permute.xlu0 %225
      %228 = vst.msk [vmem:[#allocation2 + $0x8] sm:$0xf] %vm171, %v226
      %v229 = vld [vmem:[%s137 + $0x4] sm:$0xf]
      %231 = vrot.lane.b32.xlu0 %v229, 102
      %v232 = vpop.permute.xlu0 %231
      %234 = vst.msk [vmem:[#allocation2 + $0x8] sm:$0xf] %vm178, %v232
      %v235 = vld [vmem:[%s137 + $0x4] sm:$0xff]
      %v237 = vcombine.high %v235, %v235
      %238 = vrot.lane.b32.xlu0 %v235, 100
      %v239 = vpop.permute.xlu0 %238
      %240 = vrot.lane.b32.xlu0 %v237, 100
      %v241 = vpop.permute.xlu0 %240
      %vm242 = vcmask 818176
      %v243 = vsel %vm242, %v239, %v241
      %245 = vst.msk [vmem:[#allocation2 + $0x8] sm:$0xf] %vm185, %v243
      %v246 = vld [vmem:[%s137 + $0x8] sm:$0xf]
      %248 = vrot.lane.b32.xlu0 %v246, 98
      %v249 = vpop.permute.xlu0 %248
      %251 = vst.msk [vmem:[#allocation2 + $0x8] sm:$0xf] %vm197, %v249
      %v252 = vld [vmem:[%s137] sm:$0xf]
      %v254 = vcombine.low %v252, %v252
      %255 = vrot.lane.b32.xlu0 %v254, 127
      %v256 = vpop.permute.xlu0 %255
      %vm258 = vcmask 130052
      %259 = vst.msk [vmem:[#allocation2] sm:$0xf0] %vm258, %v256
      %v260 = vld [vmem:[%s137] sm:$0xf]
      %v262 = vcombine.low %v260, %v260
      %263 = vrot.lane.b32.xlu0 %v262, 125
      %v264 = vpop.permute.xlu0 %263
      %vm266 = vcmask 261252
      %267 = vst.msk [vmem:[#allocation2] sm:$0xf0] %vm266, %v264
      %v268 = vld [vmem:[%s137] sm:$0xf]
      %v270 = vcombine.low %v268, %v268
      %271 = vrot.lane.b32.xlu0 %v270, 123
      %v272 = vpop.permute.xlu0 %271
      %vm274 = vcmask 392452
      %275 = vst.msk [vmem:[#allocation2] sm:$0xf0] %vm274, %v272
      %v276 = vld [vmem:[%s137] sm:$0xf]
      %v278 = vcombine.low %v276, %v276
      %279 = vrot.lane.b32.xlu0 %v278, 121
      %v280 = vpop.permute.xlu0 %279
      %vm282 = vcmask 523652
      %283 = vst.msk [vmem:[#allocation2] sm:$0xf0] %vm282, %v280
      %v284 = vld [vmem:[%s137] sm:$0xf]
      %v286 = vcombine.low %v284, %v284
      %287 = vrot.lane.b32.xlu0 %v286, 119
      %v288 = vpop.permute.xlu0 %287
      %vm290 = vcmask 654852
      %291 = vst.msk [vmem:[#allocation2] sm:$0xf0] %vm290, %v288
      %v292 = vld [vmem:[%s137] sm:$0xf]
      %v294 = vcombine.low %v292, %v292
      %295 = vrot.lane.b32.xlu0 %v294, 117
      %v296 = vpop.permute.xlu0 %295
      %vm298 = vcmask 786052
      %299 = vst.msk [vmem:[#allocation2] sm:$0xf0] %vm298, %v296
      %v300 = vld [vmem:[%s137] sm:$0xf]
      %v302 = vcombine.low %v300, %v300
      %303 = vrot.lane.b32.xlu0 %v302, 115
      %v304 = vpop.permute.xlu0 %303
      %vm306 = vcmask 917252
      %307 = vst.msk [vmem:[#allocation2] sm:$0xf0] %vm306, %v304
      %v308 = vld [vmem:[%s137] sm:$0xff]
      %v310 = vcombine.low %v308, %v308
      %311 = vrot.lane.b32.xlu0 %v310, 113
      %v312 = vpop.permute.xlu0 %311
      %313 = vrot.lane.b32.xlu0 %v308, 113
      %v314 = vpop.permute.xlu0 %313
      %vm315 = vcmask 924672
      %v316 = vsel %vm315, %v312, %v314
      %vm318 = vcmask 1048452
      %319 = vst.msk [vmem:[#allocation2] sm:$0xf0] %vm318, %v316
      %v320 = vld [vmem:[%s137 + $0x4] sm:$0xf]
      %v322 = vcombine.low %v320, %v320
      %323 = vrot.lane.b32.xlu0 %v322, 111
      %v324 = vpop.permute.xlu0 %323
      %326 = vst.msk [vmem:[#allocation2 + $0x8] sm:$0xf0] %vm258, %v324
      %v327 = vld [vmem:[%s137 + $0x4] sm:$0xf]
      %v329 = vcombine.low %v327, %v327
      %330 = vrot.lane.b32.xlu0 %v329, 109
      %v331 = vpop.permute.xlu0 %330
      %333 = vst.msk [vmem:[#allocation2 + $0x8] sm:$0xf0] %vm266, %v331
      %v334 = vld [vmem:[%s137 + $0x4] sm:$0xf]
      %v336 = vcombine.low %v334, %v334
      %337 = vrot.lane.b32.xlu0 %v336, 107
      %v338 = vpop.permute.xlu0 %337
      %340 = vst.msk [vmem:[#allocation2 + $0x8] sm:$0xf0] %vm274, %v338
      %v341 = vld [vmem:[%s137 + $0x4] sm:$0xf]
      %v343 = vcombine.low %v341, %v341
      %344 = vrot.lane.b32.xlu0 %v343, 105
      %v345 = vpop.permute.xlu0 %344
      %347 = vst.msk [vmem:[#allocation2 + $0x8] sm:$0xf0] %vm282, %v345
      %v348 = vld [vmem:[%s137 + $0x4] sm:$0xf]
      %v350 = vcombine.low %v348, %v348
      %351 = vrot.lane.b32.xlu0 %v350, 103
      %v352 = vpop.permute.xlu0 %351
      %354 = vst.msk [vmem:[#allocation2 + $0x8] sm:$0xf0] %vm290, %v352
      %v355 = vld [vmem:[%s137 + $0x4] sm:$0xf]
      %v357 = vcombine.low %v355, %v355
      %358 = vrot.lane.b32.xlu0 %v357, 101
      %v359 = vpop.permute.xlu0 %358
      %361 = vst.msk [vmem:[#allocation2 + $0x8] sm:$0xf0] %vm298, %v359
      %v362 = vld [vmem:[%s137 + $0x4] sm:$0xff]
      %v364 = vcombine.low %v362, %v362
      %365 = vrot.lane.b32.xlu0 %v364, 99
      %v366 = vpop.permute.xlu0 %365
      %367 = vrot.lane.b32.xlu0 %v362, 99
      %v368 = vpop.permute.xlu0 %367
      %vm369 = vcmask 809984
      %v370 = vsel %vm369, %v366, %v368
      %372 = vst.msk [vmem:[#allocation2 + $0x8] sm:$0xf0] %vm306, %v370
      %v373 = vld [vmem:[%s137 + $0x8] sm:$0xf]
      %v375 = vcombine.low %v373, %v373
      %376 = vrot.lane.b32.xlu0 %v375, 97
      %v377 = vpop.permute.xlu0 %376
      %379 = vst.msk [vmem:[#allocation2 + $0x8] sm:$0xf0] %vm318, %v377
      %v380 = vld [vmem:[%s137] sm:$0xf]
      %382 = vrot.lane.b32.xlu0 %v380, 126
      %v383 = vpop.permute.xlu0 %382
      %385 = vst.msk [vmem:[#allocation2 + $0x10] sm:$0xf] %vm143, %v383
      %v386 = vld [vmem:[%s137] sm:$0xf]
      %388 = vrot.lane.b32.xlu0 %v386, 124
      %v389 = vpop.permute.xlu0 %388
      %391 = vst.msk [vmem:[#allocation2 + $0x10] sm:$0xf] %vm150, %v389
      %v392 = vld [vmem:[%s137] sm:$0xf]
      %394 = vrot.lane.b32.xlu0 %v392, 122
      %v395 = vpop.permute.xlu0 %394
      %397 = vst.msk [vmem:[#allocation2 + $0x10] sm:$0xf] %vm157, %v395
      %v398 = vld [vmem:[%s137] sm:$0xf]
      %400 = vrot.lane.b32.xlu0 %v398, 120
      %v401 = vpop.permute.xlu0 %400
      %403 = vst.msk [vmem:[#allocation2 + $0x10] sm:$0xf] %vm164, %v401
      %v404 = vld [vmem:[%s137] sm:$0xf]
      %406 = vrot.lane.b32.xlu0 %v404, 118
      %v407 = vpop.permute.xlu0 %406
      %409 = vst.msk [vmem:[#allocation2 + $0x10] sm:$0xf] %vm171, %v407
      %v410 = vld [vmem:[%s137] sm:$0xf]
      %412 = vrot.lane.b32.xlu0 %v410, 116
      %v413 = vpop.permute.xlu0 %412
      %415 = vst.msk [vmem:[#allocation2 + $0x10] sm:$0xf] %vm178, %v413
      %v416 = vld [vmem:[%s137] sm:$0xf]
      %418 = vrot.lane.b32.xlu0 %v416, 114
      %v419 = vpop.permute.xlu0 %418
      %421 = vst.msk [vmem:[#allocation2 + $0x10] sm:$0xf] %vm185, %v419
      %v422 = vld [vmem:[%s137 + $0x4] sm:$0xf]
      %424 = vrot.lane.b32.xlu0 %v422, 112
      %v425 = vpop.permute.xlu0 %424
      %427 = vst.msk [vmem:[#allocation2 + $0x10] sm:$0xf] %vm197, %v425
      %v428 = vld [vmem:[%s137 + $0x4] sm:$0xf]
      %430 = vrot.lane.b32.xlu0 %v428, 110
      %v431 = vpop.permute.xlu0 %430
      %433 = vst.msk [vmem:[#allocation2 + $0x18] sm:$0xf] %vm143, %v431
      %v434 = vld [vmem:[%s137 + $0x4] sm:$0xf]
      %436 = vrot.lane.b32.xlu0 %v434, 108
      %v437 = vpop.permute.xlu0 %436
      %439 = vst.msk [vmem:[#allocation2 + $0x18] sm:$0xf] %vm150, %v437
      %v440 = vld [vmem:[%s137 + $0x4] sm:$0xf]
      %442 = vrot.lane.b32.xlu0 %v440, 106
      %v443 = vpop.permute.xlu0 %442
      %445 = vst.msk [vmem:[#allocation2 + $0x18] sm:$0xf] %vm157, %v443
      %v446 = vld [vmem:[%s137 + $0x4] sm:$0xf]
      %448 = vrot.lane.b32.xlu0 %v446, 104
      %v449 = vpop.permute.xlu0 %448
      %451 = vst.msk [vmem:[#allocation2 + $0x18] sm:$0xf] %vm164, %v449
      %v452 = vld [vmem:[%s137 + $0x4] sm:$0xf]
      %454 = vrot.lane.b32.xlu0 %v452, 102
      %v455 = vpop.permute.xlu0 %454
      %457 = vst.msk [vmem:[#allocation2 + $0x18] sm:$0xf] %vm171, %v455
      %v458 = vld [vmem:[%s137 + $0x4] sm:$0xf]
      %460 = vrot.lane.b32.xlu0 %v458, 100
      %v461 = vpop.permute.xlu0 %460
      %463 = vst.msk [vmem:[#allocation2 + $0x18] sm:$0xf] %vm178, %v461
      %v464 = vld [vmem:[%s137 + $0x4] sm:$0xff]
      %v466 = vcombine.high %v464, %v464
      %467 = vrot.lane.b32.xlu0 %v464, 98
      %v468 = vpop.permute.xlu0 %467
      %469 = vrot.lane.b32.xlu0 %v466, 98
      %v470 = vpop.permute.xlu0 %469
      %vm471 = vcmask 801792
      %v472 = vsel %vm471, %v468, %v470
      %474 = vst.msk [vmem:[#allocation2 + $0x18] sm:$0xf] %vm185, %v472
      %v475 = vld [vmem:[%s137 + $0x8] sm:$0xf]
      %477 = vrot.lane.b32.xlu0 %v475, 96
      %v478 = vpop.permute.xlu0 %477
      %480 = vst.msk [vmem:[#allocation2 + $0x18] sm:$0xf] %vm197, %v478
      %v481 = vld [vmem:[%s137] sm:$0xf]
      %v483 = vcombine.low %v481, %v481
      %484 = vrot.lane.b32.xlu0 %v483, 110
      %v485 = vpop.permute.xlu0 %484
      %487 = vst.msk [vmem:[#allocation2 + $0x10] sm:$0xf0] %vm258, %v485
      %v488 = vld [vmem:[%s137] sm:$0xf]
      %v490 = vcombine.low %v488, %v488
      %491 = vrot.lane.b32.xlu0 %v490, 108
      %v492 = vpop.permute.xlu0 %491
      %494 = vst.msk [vmem:[#allocation2 + $0x10] sm:$0xf0] %vm266, %v492
      %v495 = vld [vmem:[%s137] sm:$0xf]
      %v497 = vcombine.low %v495, %v495
      %498 = vrot.lane.b32.xlu0 %v497, 106
      %v499 = vpop.permute.xlu0 %498
      %501 = vst.msk [vmem:[#allocation2 + $0x10] sm:$0xf0] %vm274, %v499
      %v502 = vld [vmem:[%s137] sm:$0xf]
      %v504 = vcombine.low %v502, %v502
      %505 = vrot.lane.b32.xlu0 %v504, 104
      %v506 = vpop.permute.xlu0 %505
      %508 = vst.msk [vmem:[#allocation2 + $0x10] sm:$0xf0] %vm282, %v506
      %v509 = vld [vmem:[%s137] sm:$0xf]
      %v511 = vcombine.low %v509, %v509
      %512 = vrot.lane.b32.xlu0 %v511, 102
      %v513 = vpop.permute.xlu0 %512
      %515 = vst.msk [vmem:[#allocation2 + $0x10] sm:$0xf0] %vm290, %v513
      %v516 = vld [vmem:[%s137] sm:$0xf]
      %v518 = vcombine.low %v516, %v516
      %519 = vrot.lane.b32.xlu0 %v518, 100
      %v520 = vpop.permute.xlu0 %519
      %522 = vst.msk [vmem:[#allocation2 + $0x10] sm:$0xf0] %vm298, %v520
      %v523 = vld [vmem:[%s137] sm:$0xff]
      %v525 = vcombine.low %v523, %v523
      %526 = vrot.lane.b32.xlu0 %v525, 98
      %v527 = vpop.permute.xlu0 %526
      %528 = vrot.lane.b32.xlu0 %v523, 98
      %v529 = vpop.permute.xlu0 %528
      %v530 = vsel %vm471, %v527, %v529
      %532 = vst.msk [vmem:[#allocation2 + $0x10] sm:$0xf0] %vm306, %v530
      %v533 = vld [vmem:[%s137 + $0x4] sm:$0xf]
      %v535 = vcombine.low %v533, %v533
      %536 = vrot.lane.b32.xlu0 %v535, 96
      %v537 = vpop.permute.xlu0 %536
      %539 = vst.msk [vmem:[#allocation2 + $0x10] sm:$0xf0] %vm318, %v537
      %v540 = vld [vmem:[%s137 + $0x4] sm:$0xf]
      %v542 = vcombine.low %v540, %v540
      %543 = vrot.lane.b32.xlu0 %v542, 94
      %v544 = vpop.permute.xlu0 %543
      %546 = vst.msk [vmem:[#allocation2 + $0x18] sm:$0xf0] %vm258, %v544
      %v547 = vld [vmem:[%s137 + $0x4] sm:$0xf]
      %v549 = vcombine.low %v547, %v547
      %550 = vrot.lane.b32.xlu0 %v549, 92
      %v551 = vpop.permute.xlu0 %550
      %553 = vst.msk [vmem:[#allocation2 + $0x18] sm:$0xf0] %vm266, %v551
      %v554 = vld [vmem:[%s137 + $0x4] sm:$0xf]
      %v556 = vcombine.low %v554, %v554
      %557 = vrot.lane.b32.xlu0 %v556, 90
      %v558 = vpop.permute.xlu0 %557
      %560 = vst.msk [vmem:[#allocation2 + $0x18] sm:$0xf0] %vm274, %v558
      %v561 = vld [vmem:[%s137 + $0x4] sm:$0xf]
      %v563 = vcombine.low %v561, %v561
      %564 = vrot.lane.b32.xlu0 %v563, 88
      %v565 = vpop.permute.xlu0 %564
      %567 = vst.msk [vmem:[#allocation2 + $0x18] sm:$0xf0] %vm282, %v565
      %v568 = vld [vmem:[%s137 + $0x4] sm:$0xf]
      %v570 = vcombine.low %v568, %v568
      %571 = vrot.lane.b32.xlu0 %v570, 86
      %v572 = vpop.permute.xlu0 %571
      %574 = vst.msk [vmem:[#allocation2 + $0x18] sm:$0xf0] %vm290, %v572
      %v575 = vld [vmem:[%s137 + $0x4] sm:$0xff]
      %v577 = vcombine.low %v575, %v575
      %578 = vrot.lane.b32.xlu0 %v577, 84
      %v579 = vpop.permute.xlu0 %578
      %580 = vrot.lane.b32.xlu0 %v575, 84
      %v581 = vpop.permute.xlu0 %580
      %vm582 = vcmask 687104
      %v583 = vsel %vm582, %v579, %v581
      %585 = vst.msk [vmem:[#allocation2 + $0x18] sm:$0xf0] %vm298, %v583
      %v586 = vld [vmem:[%s137 + $0x8] sm:$0xf]
      %v588 = vcombine.low %v586, %v586
      %589 = vrot.lane.b32.xlu0 %v588, 82
      %v590 = vpop.permute.xlu0 %589
      %592 = vst.msk [vmem:[#allocation2 + $0x18] sm:$0xf0] %vm306, %v590
      %v593 = vld [vmem:[%s137 + $0x8] sm:$0xf]
      %v595 = vcombine.low %v593, %v593
      %596 = vrot.lane.b32.xlu0 %v595, 80
      %v597 = vpop.permute.xlu0 %596
      %599 = vst.msk [vmem:[#allocation2 + $0x18] sm:$0xf0] %vm318, %v597
      %v600 = vld [vmem:[%s137] sm:$0xf]
      %602 = vrot.lane.b32.xlu0 %v600, 109
      %v603 = vpop.permute.xlu0 %602
      %605 = vst.msk [vmem:[#allocation2 + $0x20] sm:$0xf] %vm143, %v603
      %v606 = vld [vmem:[%s137] sm:$0xf]
      %608 = vrot.lane.b32.xlu0 %v606, 107
      %v609 = vpop.permute.xlu0 %608
      %611 = vst.msk [vmem:[#allocation2 + $0x20] sm:$0xf] %vm150, %v609
      %v612 = vld [vmem:[%s137] sm:$0xf]
      %614 = vrot.lane.b32.xlu0 %v612, 105
      %v615 = vpop.permute.xlu0 %614
      %617 = vst.msk [vmem:[#allocation2 + $0x20] sm:$0xf] %vm157, %v615
      %v618 = vld [vmem:[%s137] sm:$0xf]
      %620 = vrot.lane.b32.xlu0 %v618, 103
      %v621 = vpop.permute.xlu0 %620
      %623 = vst.msk [vmem:[#allocation2 + $0x20] sm:$0xf] %vm164, %v621
      %v624 = vld [vmem:[%s137] sm:$0xf]
      %626 = vrot.lane.b32.xlu0 %v624, 101
      %v627 = vpop.permute.xlu0 %626
      %629 = vst.msk [vmem:[#allocation2 + $0x20] sm:$0xf] %vm171, %v627
      %v630 = vld [vmem:[%s137] sm:$0xf]
      %632 = vrot.lane.b32.xlu0 %v630, 99
      %v633 = vpop.permute.xlu0 %632
      %635 = vst.msk [vmem:[#allocation2 + $0x20] sm:$0xf] %vm178, %v633
      %v636 = vld [vmem:[%s137] sm:$0xff]
      %v638 = vcombine.high %v636, %v636
      %639 = vrot.lane.b32.xlu0 %v636, 97
      %v640 = vpop.permute.xlu0 %639
      %641 = vrot.lane.b32.xlu0 %v638, 97
      %v642 = vpop.permute.xlu0 %641
      %vm643 = vcmask 793600
      %v644 = vsel %vm643, %v640, %v642
      %646 = vst.msk [vmem:[#allocation2 + $0x20] sm:$0xf] %vm185, %v644
      %v647 = vld [vmem:[%s137 + $0x4] sm:$0xf]
      %649 = vrot.lane.b32.xlu0 %v647, 95
      %v650 = vpop.permute.xlu0 %649
      %652 = vst.msk [vmem:[#allocation2 + $0x20] sm:$0xf] %vm197, %v650
      %v653 = vld [vmem:[%s137 + $0x4] sm:$0xf]
      %655 = vrot.lane.b32.xlu0 %v653, 93
      %v656 = vpop.permute.xlu0 %655
      %658 = vst.msk [vmem:[#allocation2 + $0x28] sm:$0xf] %vm143, %v656
      %v659 = vld [vmem:[%s137 + $0x4] sm:$0xf]
      %661 = vrot.lane.b32.xlu0 %v659, 91
      %v662 = vpop.permute.xlu0 %661
      %664 = vst.msk [vmem:[#allocation2 + $0x28] sm:$0xf] %vm150, %v662
      %v665 = vld [vmem:[%s137 + $0x4] sm:$0xf]
      %667 = vrot.lane.b32.xlu0 %v665, 89
      %v668 = vpop.permute.xlu0 %667
      %670 = vst.msk [vmem:[#allocation2 + $0x28] sm:$0xf] %vm157, %v668
      %v671 = vld [vmem:[%s137 + $0x4] sm:$0xf]
      %673 = vrot.lane.b32.xlu0 %v671, 87
      %v674 = vpop.permute.xlu0 %673
      %676 = vst.msk [vmem:[#allocation2 + $0x28] sm:$0xf] %vm164, %v674
      %v677 = vld [vmem:[%s137 + $0x4] sm:$0xf]
      %679 = vrot.lane.b32.xlu0 %v677, 85
      %v680 = vpop.permute.xlu0 %679
      %682 = vst.msk [vmem:[#allocation2 + $0x28] sm:$0xf] %vm171, %v680
      %v683 = vld [vmem:[%s137 + $0x4] sm:$0xff]
      %v685 = vcombine.high %v683, %v683
      %686 = vrot.lane.b32.xlu0 %v683, 83
      %v687 = vpop.permute.xlu0 %686
      %688 = vrot.lane.b32.xlu0 %v685, 83
      %v689 = vpop.permute.xlu0 %688
      %vm690 = vcmask 678912
      %v691 = vsel %vm690, %v687, %v689
      %693 = vst.msk [vmem:[#allocation2 + $0x28] sm:$0xf] %vm178, %v691
      %v694 = vld [vmem:[%s137 + $0x8] sm:$0xf]
      %696 = vrot.lane.b32.xlu0 %v694, 81
      %v697 = vpop.permute.xlu0 %696
      %699 = vst.msk [vmem:[#allocation2 + $0x28] sm:$0xf] %vm185, %v697
      %v700 = vld [vmem:[%s137 + $0x8] sm:$0xf]
      %702 = vrot.lane.b32.xlu0 %v700, 79
      %v703 = vpop.permute.xlu0 %702
      %705 = vst.msk [vmem:[#allocation2 + $0x28] sm:$0xf] %vm197, %v703
      %v706 = vld [vmem:[%s137] sm:$0xf]
      %v708 = vcombine.low %v706, %v706
      %709 = vrot.lane.b32.xlu0 %v708, 108
      %v710 = vpop.permute.xlu0 %709
      %712 = vst.msk [vmem:[#allocation2 + $0x20] sm:$0xf0] %vm258, %v710
      %v713 = vld [vmem:[%s137] sm:$0xf]
      %v715 = vcombine.low %v713, %v713
      %716 = vrot.lane.b32.xlu0 %v715, 106
      %v717 = vpop.permute.xlu0 %716
      %719 = vst.msk [vmem:[#allocation2 + $0x20] sm:$0xf0] %vm266, %v717
      %v720 = vld [vmem:[%s137] sm:$0xf]
      %v722 = vcombine.low %v720, %v720
      %723 = vrot.lane.b32.xlu0 %v722, 104
      %v724 = vpop.permute.xlu0 %723
      %726 = vst.msk [vmem:[#allocation2 + $0x20] sm:$0xf0] %vm274, %v724
      %v727 = vld [vmem:[%s137] sm:$0xf]
      %v729 = vcombine.low %v727, %v727
      %730 = vrot.lane.b32.xlu0 %v729, 102
      %v731 = vpop.permute.xlu0 %730
      %733 = vst.msk [vmem:[#allocation2 + $0x20] sm:$0xf0] %vm282, %v731
      %v734 = vld [vmem:[%s137] sm:$0xf]
      %v736 = vcombine.low %v734, %v734
      %737 = vrot.lane.b32.xlu0 %v736, 100
      %v738 = vpop.permute.xlu0 %737
      %740 = vst.msk [vmem:[#allocation2 + $0x20] sm:$0xf0] %vm290, %v738
      %v741 = vld [vmem:[%s137] sm:$0xf]
      %v743 = vcombine.low %v741, %v741
      %744 = vrot.lane.b32.xlu0 %v743, 98
      %v745 = vpop.permute.xlu0 %744
      %747 = vst.msk [vmem:[#allocation2 + $0x20] sm:$0xf0] %vm298, %v745
      %v748 = vld [vmem:[%s137 + $0x4] sm:$0xf]
      %v750 = vcombine.low %v748, %v748
      %751 = vrot.lane.b32.xlu0 %v750, 96
      %v752 = vpop.permute.xlu0 %751
      %754 = vst.msk [vmem:[#allocation2 + $0x20] sm:$0xf0] %vm306, %v752
      %v755 = vld [vmem:[%s137 + $0x4] sm:$0xf]
      %v757 = vcombine.low %v755, %v755
      %758 = vrot.lane.b32.xlu0 %v757, 94
      %v759 = vpop.permute.xlu0 %758
      %761 = vst.msk [vmem:[#allocation2 + $0x20] sm:$0xf0] %vm318, %v759
      %v762 = vld [vmem:[%s137 + $0x4] sm:$0xf]
      %v764 = vcombine.low %v762, %v762
      %765 = vrot.lane.b32.xlu0 %v764, 92
      %v766 = vpop.permute.xlu0 %765
      %768 = vst.msk [vmem:[#allocation2 + $0x28] sm:$0xf0] %vm258, %v766
      %v769 = vld [vmem:[%s137 + $0x4] sm:$0xf]
      %v771 = vcombine.low %v769, %v769
      %772 = vrot.lane.b32.xlu0 %v771, 90
      %v773 = vpop.permute.xlu0 %772
      %775 = vst.msk [vmem:[#allocation2 + $0x28] sm:$0xf0] %vm266, %v773
      %v776 = vld [vmem:[%s137 + $0x4] sm:$0xf]
      %v778 = vcombine.low %v776, %v776
      %779 = vrot.lane.b32.xlu0 %v778, 88
      %v780 = vpop.permute.xlu0 %779
      %782 = vst.msk [vmem:[#allocation2 + $0x28] sm:$0xf0] %vm274, %v780
      %v783 = vld [vmem:[%s137 + $0x4] sm:$0xf]
      %v785 = vcombine.low %v783, %v783
      %786 = vrot.lane.b32.xlu0 %v785, 86
      %v787 = vpop.permute.xlu0 %786
      %789 = vst.msk [vmem:[#allocation2 + $0x28] sm:$0xf0] %vm282, %v787
      %v790 = vld [vmem:[%s137 + $0x4] sm:$0xf]
      %v792 = vcombine.low %v790, %v790
      %793 = vrot.lane.b32.xlu0 %v792, 84
      %v794 = vpop.permute.xlu0 %793
      %796 = vst.msk [vmem:[#allocation2 + $0x28] sm:$0xf0] %vm290, %v794
      %v797 = vld [vmem:[%s137 + $0x4] sm:$0xff]
      %v799 = vcombine.low %v797, %v797
      %800 = vrot.lane.b32.xlu0 %v799, 82
      %v801 = vpop.permute.xlu0 %800
      %802 = vrot.lane.b32.xlu0 %v797, 82
      %v803 = vpop.permute.xlu0 %802
      %vm804 = vcmask 670720
      %v805 = vsel %vm804, %v801, %v803
      %807 = vst.msk [vmem:[#allocation2 + $0x28] sm:$0xf0] %vm298, %v805
      %v808 = vld [vmem:[%s137 + $0x8] sm:$0xf]
      %v810 = vcombine.low %v808, %v808
      %811 = vrot.lane.b32.xlu0 %v810, 80
      %v812 = vpop.permute.xlu0 %811
      %814 = vst.msk [vmem:[#allocation2 + $0x28] sm:$0xf0] %vm306, %v812
      %v815 = vld [vmem:[%s137 + $0x8] sm:$0xf]
      %v817 = vcombine.low %v815, %v815
      %818 = vrot.lane.b32.xlu0 %v817, 78
      %v819 = vpop.permute.xlu0 %818
      %821 = vst.msk [vmem:[#allocation2 + $0x28] sm:$0xf0] %vm318, %v819
      %v822 = vld [vmem:[%s137] sm:$0xf]
      %824 = vrot.lane.b32.xlu0 %v822, 92
      %v825 = vpop.permute.xlu0 %824
      %827 = vst.msk [vmem:[#allocation2 + $0x30] sm:$0xf] %vm143, %v825
      %v828 = vld [vmem:[%s137] sm:$0xf]
      %830 = vrot.lane.b32.xlu0 %v828, 90
      %v831 = vpop.permute.xlu0 %830
      %833 = vst.msk [vmem:[#allocation2 + $0x30] sm:$0xf] %vm150, %v831
      %v834 = vld [vmem:[%s137] sm:$0xf]
      %836 = vrot.lane.b32.xlu0 %v834, 88
      %v837 = vpop.permute.xlu0 %836
      %839 = vst.msk [vmem:[#allocation2 + $0x30] sm:$0xf] %vm157, %v837
      %v840 = vld [vmem:[%s137] sm:$0xf]
      %842 = vrot.lane.b32.xlu0 %v840, 86
      %v843 = vpop.permute.xlu0 %842
      %845 = vst.msk [vmem:[#allocation2 + $0x30] sm:$0xf] %vm164, %v843
      %v846 = vld [vmem:[%s137] sm:$0xf]
      %848 = vrot.lane.b32.xlu0 %v846, 84
      %v849 = vpop.permute.xlu0 %848
      %851 = vst.msk [vmem:[#allocation2 + $0x30] sm:$0xf] %vm171, %v849
      %v852 = vld [vmem:[%s137] sm:$0xff]
      %v854 = vcombine.high %v852, %v852
      %855 = vrot.lane.b32.xlu0 %v852, 82
      %v856 = vpop.permute.xlu0 %855
      %857 = vrot.lane.b32.xlu0 %v854, 82
      %v858 = vpop.permute.xlu0 %857
      %v859 = vsel %vm804, %v856, %v858
      %861 = vst.msk [vmem:[#allocation2 + $0x30] sm:$0xf] %vm178, %v859
      %v862 = vld [vmem:[%s137 + $0x4] sm:$0xf]
      %864 = vrot.lane.b32.xlu0 %v862, 80
      %v865 = vpop.permute.xlu0 %864
      %867 = vst.msk [vmem:[#allocation2 + $0x30] sm:$0xf] %vm185, %v865
      %v868 = vld [vmem:[%s137 + $0x4] sm:$0xf]
      %870 = vrot.lane.b32.xlu0 %v868, 78
      %v871 = vpop.permute.xlu0 %870
      %873 = vst.msk [vmem:[#allocation2 + $0x30] sm:$0xf] %vm197, %v871
      %v874 = vld [vmem:[%s137 + $0x4] sm:$0xf]
      %876 = vrot.lane.b32.xlu0 %v874, 76
      %v877 = vpop.permute.xlu0 %876
      %879 = vst.msk [vmem:[#allocation2 + $0x38] sm:$0xf] %vm143, %v877
      %v880 = vld [vmem:[%s137 + $0x4] sm:$0xf]
      %882 = vrot.lane.b32.xlu0 %v880, 74
      %v883 = vpop.permute.xlu0 %882
      %885 = vst.msk [vmem:[#allocation2 + $0x38] sm:$0xf] %vm150, %v883
      %v886 = vld [vmem:[%s137 + $0x4] sm:$0xf]
      %888 = vrot.lane.b32.xlu0 %v886, 72
      %v889 = vpop.permute.xlu0 %888
      %891 = vst.msk [vmem:[#allocation2 + $0x38] sm:$0xf] %vm157, %v889
      %v892 = vld [vmem:[%s137 + $0x4] sm:$0xf]
      %894 = vrot.lane.b32.xlu0 %v892, 70
      %v895 = vpop.permute.xlu0 %894
      %897 = vst.msk [vmem:[#allocation2 + $0x38] sm:$0xf] %vm164, %v895
      %v898 = vld [vmem:[%s137 + $0x4] sm:$0xff]
      %v900 = vcombine.high %v898, %v898
      %901 = vrot.lane.b32.xlu0 %v898, 68
      %v902 = vpop.permute.xlu0 %901
      %903 = vrot.lane.b32.xlu0 %v900, 68
      %v904 = vpop.permute.xlu0 %903
      %vm905 = vcmask 556032
      %v906 = vsel %vm905, %v902, %v904
      %908 = vst.msk [vmem:[#allocation2 + $0x38] sm:$0xf] %vm171, %v906
      %v909 = vld [vmem:[%s137 + $0x8] sm:$0xf]
      %911 = vrot.lane.b32.xlu0 %v909, 66
      %v912 = vpop.permute.xlu0 %911
      %914 = vst.msk [vmem:[#allocation2 + $0x38] sm:$0xf] %vm178, %v912
      %v915 = vld [vmem:[%s137 + $0x8] sm:$0xf]
      %917 = vrot.lane.b32.xlu0 %v915, 64
      %v918 = vpop.permute.xlu0 %917
      %920 = vst.msk [vmem:[#allocation2 + $0x38] sm:$0xf] %vm185, %v918
      %v921 = vld [vmem:[%s137 + $0x8] sm:$0xf]
      %923 = vrot.lane.b32.xlu0 %v921, 62
      %v924 = vpop.permute.xlu0 %923
      %926 = vst.msk [vmem:[#allocation2 + $0x38] sm:$0xf] %vm197, %v924
      %v927 = vld [vmem:[%s137] sm:$0xf]
      %v929 = vcombine.low %v927, %v927
      %930 = vrot.lane.b32.xlu0 %v929, 91
      %v931 = vpop.permute.xlu0 %930
      %933 = vst.msk [vmem:[#allocation2 + $0x30] sm:$0xf0] %vm258, %v931
      %v934 = vld [vmem:[%s137] sm:$0xf]
      %v936 = vcombine.low %v934, %v934
      %937 = vrot.lane.b32.xlu0 %v936, 89
      %v938 = vpop.permute.xlu0 %937
      %940 = vst.msk [vmem:[#allocation2 + $0x30] sm:$0xf0] %vm266, %v938
      %v941 = vld [vmem:[%s137] sm:$0xf]
      %v943 = vcombine.low %v941, %v941
      %944 = vrot.lane.b32.xlu0 %v943, 87
      %v945 = vpop.permute.xlu0 %944
      %947 = vst.msk [vmem:[#allocation2 + $0x30] sm:$0xf0] %vm274, %v945
      %v948 = vld [vmem:[%s137] sm:$0xf]
      %v950 = vcombine.low %v948, %v948
      %951 = vrot.lane.b32.xlu0 %v950, 85
      %v952 = vpop.permute.xlu0 %951
      %954 = vst.msk [vmem:[#allocation2 + $0x30] sm:$0xf0] %vm282, %v952
      %v955 = vld [vmem:[%s137] sm:$0xf]
      %v957 = vcombine.low %v955, %v955
      %958 = vrot.lane.b32.xlu0 %v957, 83
      %v959 = vpop.permute.xlu0 %958
      %961 = vst.msk [vmem:[#allocation2 + $0x30] sm:$0xf0] %vm290, %v959
      %v962 = vld [vmem:[%s137] sm:$0xff]
      %v964 = vcombine.low %v962, %v962
      %965 = vrot.lane.b32.xlu0 %v964, 81
      %v966 = vpop.permute.xlu0 %965
      %967 = vrot.lane.b32.xlu0 %v962, 81
      %v968 = vpop.permute.xlu0 %967
      %vm969 = vcmask 662528
      %v970 = vsel %vm969, %v966, %v968
      %972 = vst.msk [vmem:[#allocation2 + $0x30] sm:$0xf0] %vm298, %v970
      %v973 = vld [vmem:[%s137 + $0x4] sm:$0xf]
      %v975 = vcombine.low %v973, %v973
      %976 = vrot.lane.b32.xlu0 %v975, 79
      %v977 = vpop.permute.xlu0 %976
      %979 = vst.msk [vmem:[#allocation2 + $0x30] sm:$0xf0] %vm306, %v977
      %v980 = vld [vmem:[%s137 + $0x4] sm:$0xf]
      %v982 = vcombine.low %v980, %v980
      %983 = vrot.lane.b32.xlu0 %v982, 77
      %v984 = vpop.permute.xlu0 %983
      %986 = vst.msk [vmem:[#allocation2 + $0x30] sm:$0xf0] %vm318, %v984
      %v987 = vld [vmem:[%s137 + $0x4] sm:$0xf]
      %v989 = vcombine.low %v987, %v987
      %990 = vrot.lane.b32.xlu0 %v989, 75
      %v991 = vpop.permute.xlu0 %990
      %993 = vst.msk [vmem:[#allocation2 + $0x38] sm:$0xf0] %vm258, %v991
      %v994 = vld [vmem:[%s137 + $0x4] sm:$0xf]
      %v996 = vcombine.low %v994, %v994
      %997 = vrot.lane.b32.xlu0 %v996, 73
      %v998 = vpop.permute.xlu0 %997
      %1000 = vst.msk [vmem:[#allocation2 + $0x38] sm:$0xf0] %vm266, %v998
      %v1001 = vld [vmem:[%s137 + $0x4] sm:$0xf]
      %v1003 = vcombine.low %v1001, %v1001
      %1004 = vrot.lane.b32.xlu0 %v1003, 71
      %v1005 = vpop.permute.xlu0 %1004
      %1007 = vst.msk [vmem:[#allocation2 + $0x38] sm:$0xf0] %vm274, %v1005
      %v1008 = vld [vmem:[%s137 + $0x4] sm:$0xf]
      %v1010 = vcombine.low %v1008, %v1008
      %1011 = vrot.lane.b32.xlu0 %v1010, 69
      %v1012 = vpop.permute.xlu0 %1011
      %1014 = vst.msk [vmem:[#allocation2 + $0x38] sm:$0xf0] %vm282, %v1012
      %v1015 = vld [vmem:[%s137 + $0x4] sm:$0xff]
      %v1017 = vcombine.low %v1015, %v1015
      %1018 = vrot.lane.b32.xlu0 %v1017, 67
      %v1019 = vpop.permute.xlu0 %1018
      %1020 = vrot.lane.b32.xlu0 %v1015, 67
      %v1021 = vpop.permute.xlu0 %1020
      %vm1022 = vcmask 547840
      %v1023 = vsel %vm1022, %v1019, %v1021
      %1025 = vst.msk [vmem:[#allocation2 + $0x38] sm:$0xf0] %vm290, %v1023
      %v1026 = vld [vmem:[%s137 + $0x8] sm:$0xf]
      %v1028 = vcombine.low %v1026, %v1026
      %1029 = vrot.lane.b32.xlu0 %v1028, 65
      %v1030 = vpop.permute.xlu0 %1029
      %1032 = vst.msk [vmem:[#allocation2 + $0x38] sm:$0xf0] %vm298, %v1030
      %v1033 = vld [vmem:[%s137 + $0x8] sm:$0xf]
      %v1035 = vcombine.low %v1033, %v1033
      %1036 = vrot.lane.b32.xlu0 %v1035, 63
      %v1037 = vpop.permute.xlu0 %1036
      %1039 = vst.msk [vmem:[#allocation2 + $0x38] sm:$0xf0] %vm306, %v1037
      %v1040 = vld [vmem:[%s137 + $0x8] sm:$0xf]
      %v1042 = vcombine.low %v1040, %v1040
      %1043 = vrot.lane.b32.xlu0 %v1042, 61
      %v1044 = vpop.permute.xlu0 %1043
      %1046 = vst.msk [vmem:[#allocation2 + $0x38] sm:$0xf0] %vm318, %v1044
      %v1047 = vld [vmem:[%s137] sm:$0xf]
      %1049 = vrot.lane.b32.xlu0 %v1047, 90
      %v1050 = vpop.permute.xlu0 %1049
      %1052 = vst.msk [vmem:[#allocation2 + $0x40] sm:$0xf] %vm143, %v1050
      %v1053 = vld [vmem:[%s137] sm:$0xf]
      %1055 = vrot.lane.b32.xlu0 %v1053, 88
      %v1056 = vpop.permute.xlu0 %1055
      %1058 = vst.msk [vmem:[#allocation2 + $0x40] sm:$0xf] %vm150, %v1056
      %v1059 = vld [vmem:[%s137] sm:$0xf]
      %1061 = vrot.lane.b32.xlu0 %v1059, 86
      %v1062 = vpop.permute.xlu0 %1061
      %1064 = vst.msk [vmem:[#allocation2 + $0x40] sm:$0xf] %vm157, %v1062
      %v1065 = vld [vmem:[%s137] sm:$0xf]
      %1067 = vrot.lane.b32.xlu0 %v1065, 84
      %v1068 = vpop.permute.xlu0 %1067
      %1070 = vst.msk [vmem:[#allocation2 + $0x40] sm:$0xf] %vm164, %v1068
      %v1071 = vld [vmem:[%s137] sm:$0xf]
      %1073 = vrot.lane.b32.xlu0 %v1071, 82
      %v1074 = vpop.permute.xlu0 %1073
      %1076 = vst.msk [vmem:[#allocation2 + $0x40] sm:$0xf] %vm171, %v1074
      %v1077 = vld [vmem:[%s137 + $0x4] sm:$0xf]
      %1079 = vrot.lane.b32.xlu0 %v1077, 80
      %v1080 = vpop.permute.xlu0 %1079
      %1082 = vst.msk [vmem:[#allocation2 + $0x40] sm:$0xf] %vm178, %v1080
      %v1083 = vld [vmem:[%s137 + $0x4] sm:$0xf]
      %1085 = vrot.lane.b32.xlu0 %v1083, 78
      %v1086 = vpop.permute.xlu0 %1085
      %1088 = vst.msk [vmem:[#allocation2 + $0x40] sm:$0xf] %vm185, %v1086
      %v1089 = vld [vmem:[%s137 + $0x4] sm:$0xf]
      %1091 = vrot.lane.b32.xlu0 %v1089, 76
      %v1092 = vpop.permute.xlu0 %1091
      %1094 = vst.msk [vmem:[#allocation2 + $0x40] sm:$0xf] %vm197, %v1092
      %v1095 = vld [vmem:[%s137 + $0x4] sm:$0xf]
      %1097 = vrot.lane.b32.xlu0 %v1095, 74
      %v1098 = vpop.permute.xlu0 %1097
      %1100 = vst.msk [vmem:[#allocation2 + $0x48] sm:$0xf] %vm143, %v1098
      %v1101 = vld [vmem:[%s137 + $0x4] sm:$0xf]
      %1103 = vrot.lane.b32.xlu0 %v1101, 72
      %v1104 = vpop.permute.xlu0 %1103
      %1106 = vst.msk [vmem:[#allocation2 + $0x48] sm:$0xf] %vm150, %v1104
      %v1107 = vld [vmem:[%s137 + $0x4] sm:$0xf]
      %1109 = vrot.lane.b32.xlu0 %v1107, 70
      %v1110 = vpop.permute.xlu0 %1109
      %1112 = vst.msk [vmem:[#allocation2 + $0x48] sm:$0xf] %vm157, %v1110
      %v1113 = vld [vmem:[%s137 + $0x4] sm:$0xf]
      %1115 = vrot.lane.b32.xlu0 %v1113, 68
      %v1116 = vpop.permute.xlu0 %1115
      %1118 = vst.msk [vmem:[#allocation2 + $0x48] sm:$0xf] %vm164, %v1116
      %v1119 = vld [vmem:[%s137 + $0x4] sm:$0xff]
      %v1121 = vcombine.high %v1119, %v1119
      %1122 = vrot.lane.b32.xlu0 %v1119, 66
      %v1123 = vpop.permute.xlu0 %1122
      %1124 = vrot.lane.b32.xlu0 %v1121, 66
      %v1125 = vpop.permute.xlu0 %1124
      %vm1126 = vcmask 539648
      %v1127 = vsel %vm1126, %v1123, %v1125
      %1129 = vst.msk [vmem:[#allocation2 + $0x48] sm:$0xf] %vm171, %v1127
      %v1130 = vld [vmem:[%s137 + $0x8] sm:$0xf]
      %1132 = vrot.lane.b32.xlu0 %v1130, 64
      %v1133 = vpop.permute.xlu0 %1132
      %1135 = vst.msk [vmem:[#allocation2 + $0x48] sm:$0xf] %vm178, %v1133
      %v1136 = vld [vmem:[%s137 + $0x8] sm:$0xf]
      %1138 = vrot.lane.b32.xlu0 %v1136, 62
      %v1139 = vpop.permute.xlu0 %1138
      %1141 = vst.msk [vmem:[#allocation2 + $0x48] sm:$0xf] %vm185, %v1139
      %v1142 = vld [vmem:[%s137 + $0x8] sm:$0xf]
      %1144 = vrot.lane.b32.xlu0 %v1142, 60
      %v1145 = vpop.permute.xlu0 %1144
      %1147 = vst.msk [vmem:[#allocation2 + $0x48] sm:$0xf] %vm197, %v1145
      %v1148 = vld [vmem:[%s1] sm:$0xf]
      %v1149 = vld [vmem:[#allocation2] sm:$0xff]
      %v1150 = vld [vmem:[#allocation2 + $0x8] sm:$0xff]
      %v1151 = vld [vmem:[#allocation2 + $0x10] sm:$0xff]
      %v1152 = vld [vmem:[#allocation2 + $0x18] sm:$0xff]
      %v1153 = vld [vmem:[#allocation2 + $0x20] sm:$0xff]
      %v1154 = vld [vmem:[#allocation2 + $0x28] sm:$0xff]
      %v1155 = vld [vmem:[#allocation2 + $0x30] sm:$0xff]
      %v1156 = vld [vmem:[#allocation2 + $0x38] sm:$0xff]
      %v1157 = vld [vmem:[#allocation2 + $0x40] sm:$0xf]
      %v1158 = vld [vmem:[#allocation2 + $0x48] sm:$0xf]
      %vm1159 = vcmask 293888
      %v1161 = vsel %vm1159, %v1148, 0
      %vm1163 = vcmask 1043456
      %v1165 = vsel %vm1163, %v1157, 0
      %v1168 = vsel %vm1163, %v1158, 0
      %1170 = vmatprep.subr.mxu0 %v1150
      %1171 = vmatpush1.msra.mxu0 %v1149
      %1172 = vmatprep.subr.mxu0 %v1152
      %1173 = vmatpush1.msra.mxu0 %v1151
      %1174 = vmatprep.subr.mxu0 %v1154
      %1175 = vmatpush1.msra.mxu0 %v1153
      %1176 = vmatprep.subr.mxu0 %v1156
      %1177 = vmatpush1.msra.mxu0 %v1155
      %1178 = vmatprep.subr.mxu0 %v1168
      %1179 = vmatpush1.msra.mxu0 %v1165
      %1180 = vmatprep.subr.mxu0 0.0
      %1181 = vmatpush1.msra.mxu0 0.0
      %1182 = vmatprep.subr.mxu0 0.0
      %1183 = vmatpush1.msra.mxu0 0.0
      %1184 = vmatprep.subr.mxu0 0.0
      %1185 = vmatpush1.msra.mxu0 0.0
      %1186 = vmatprep.subr.mxu0 0.0
      %1187 = vmatpush1.msra.mxu0 0.0
      %1188 = vmatprep.subr.mxu0 0.0
      %1189 = vmatpush1.msra.mxu0 0.0
      %1190 = vmatprep.subr.mxu0 0.0
      %1191 = vmatpush1.msra.mxu0 0.0
      %1192 = vmatprep.subr.mxu0 0.0
      %1193 = vmatpush1.msra.mxu0 0.0
      %1194 = vmatprep.subr.mxu0 0.0
      %1195 = vmatpush1.msra.mxu0 0.0
      %1196 = vmatprep.subr.mxu0 0.0
      %1197 = vmatpush1.msra.mxu0 0.0
      %1198 = vmatprep.subr.mxu0 0.0
      %1199 = vmatpush1.msra.mxu0 0.0
      %1200 = vmatprep.subr.mxu0 0.0
      %1201 = vmatpush1.msra.mxu0 0.0
      %1202 = vmatprep.subr.mxu0 0.0
      %1203 = vmatpush1.msra.mxu0 0.0
      %1204 = vmatprep.subr.mxu0 0.0
      %1205 = vmatpush1.msra.mxu0 0.0
      %1206 = vmatprep.subr.mxu0 0.0
      %1207 = vmatpush1.msra.mxu0 0.0
      %1208 = vmatprep.subr.mxu0 0.0
      %1209 = vmatpush1.msra.mxu0 0.0
      %1210 = vmatprep.subr.mxu0 0.0
      %1211 = vmatpush1.msra.mxu0 0.0
      %1212 = vmatprep.subr.mxu0 0.0
      %1213 = vmatpush1.msra.mxu0 0.0
      %1214 = vmatprep.subr.mxu0 0.0
      %1215 = vmatpush1.msra.mxu0 0.0
      %1216 = vmatprep.subr.mxu0 0.0
      %1217 = vmatpush1.msra.mxu0 0.0
      %1218 = vmatprep.subr.mxu0 0.0
      %1219 = vmatpush1.msra.mxu0 0.0
      %1220 = vmatprep.subr.mxu0 0.0
      %1221 = vmatpush1.msra.mxu0 0.0
      %1222 = vmatprep.subr.mxu0 0.0
      %1223 = vmatpush1.msra.mxu0 0.0
      %1224 = vmatprep.subr.mxu0 0.0
      %1225 = vmatpush1.msra.mxu0 0.0
      %1226 = vmatprep.subr.mxu0 0.0
      %1227 = vmatpush1.msra.mxu0 0.0
      %1228 = vmatprep.subr.mxu0 0.0
      %1229 = vmatpush1.msra.mxu0 0.0
      %1230 = vmatprep.subr.mxu0 0.0
      %1231 = vmatpush1.msra.mxu0 0.0
      %1232 = vmatprep.subr.mxu0 0.0
      %1233 = vmatpush1.msra.mxu0 0.0
      %1234 = vmatprep.mubr.f32.mxu0 0.0
      %1235 = vmatmul.mubr.f32.gmra.mrb[0].mxu0 %v1161
      %v1236 = vpop.f32.mrb[0].mxu0
      %v1237 = vadd.f32 0.0, %v1236
      %v1238 = vpop.f32.mrb[0].mxu0
      %v1239 = vadd.f32 0.0, %v1238
      %1240 = vdwg.mxu0
      %v1241 = vsel %vm1163, %v1237, 0.0
      %v1242 = vsel %vm1163, %v1239, 0.0
      %v1243 = vadd.f32 %v1241, %v1242
      %1244 = vadd.xlane.f32.xlu0 %v1243
      %v1245 = vpop.xlane.xlu0 %1244
      %vm1246 = vcmask 3072
      %1247 = vst.msk [vmem:[%s141] sm:$0xf] %vm1246, %v1245
      %v1248 = vmul.f32 %v1237, %v1237
      %v1249 = vmul.f32 %v1239, %v1239
      %v1250 = vsel %vm1163, %v1248, 0.0
      %v1251 = vsel %vm1163, %v1249, 0.0
      %v1252 = vadd.f32 %v1250, %v1251
      %1253 = vadd.xlane.f32.xlu0 %v1252
      %v1254 = vpop.xlane.xlu0 %1253
      %vm1255 = vcmask 11272
      %1256 = vst.msk [vmem:[%s141] sm:$0xf] %vm1255, %v1254
      %p1257 = scmp.lt.s32.totalorder %s13, 1
      %s1258 = scalar_select %p1257, %s13, 1
      %s1259 = smul.addr %s1258, 4
      %s1260 = scalar_lea.vmem %s2, %s1259
      // Predicated region
      $region29: #{conv_block_forward.2} parent=27 // pred_check
        %p1261 = pneg %p78
      $region30: #{conv_block_forward.2} parent=27 // pred_check_branch
        %1263 = sbr.rel (%p1261) target = $region32
      $region31: #{conv_block_forward.2} parent=27 // pred_region
        _
      $region32: #{conv_block_forward.2} parent=27 // pred_fallthru
        _
    $region28: #{conv_block_forward.2} parent=5 // pred_fallthru
      _
    %p1264 = scmp.le.s32.totalorder 2, %s8
    // Predicated region
    $region33: #{conv_block_forward.2} parent=5 // pred_check
      %p1265 = pneg %p1264
    $region34: #{conv_block_forward.2} parent=5 // pred_check_branch
      %1267 = sbr.rel (%p1265) target = $region36
    $region35: #{conv_block_forward.2} parent=5 // pred_region
      %s1268 = ssub.s32 %s8, 2
      // Predicated region
      $region37: #{conv_block_forward.2} parent=35 // pred_check
        %p1269 = pneg %p84
      $region38: #{conv_block_forward.2} parent=35 // pred_check_branch
        %1271 = sbr.rel (%p1269) target = $region40
      $region39: #{conv_block_forward.2} parent=35 // pred_region
        %p1272 = scmp.lt.s32.totalorder %s14, 1
        %s1273 = scalar_select %p1272, %s14, 1
        %s1274 = smul.addr %s1273, 4
        %s1275 = scalar_lea.vmem %s2, %s1274
      $region40: #{conv_block_forward.2} parent=35 // pred_fallthru
        _
    $region36: #{conv_block_forward.2} parent=5 // pred_fallthru
      _
  $region6: #{conv_block_forward.2} parent=0 // loop_footer
    %s12 = sadd.s32 1, %s8
  $region7: #{conv_block_forward.2} parent=0 // loop_footer_branch
    %7 = sbr.rel target = $region3
  $region8: #{conv_block_forward.2} parent=0 // loop_exit
    _

</llo_original>
